<compile_context>
chip_gen: v7x
topology: tpu7x:2x2x1
jax: 0.10.0
libtpu: 0.0.40
codegen_flags: <defaults>
</compile_context>

<pallas_src>
import functools

import jax
import jax.numpy as jnp
from jax.experimental import pallas as pl
from jax.experimental.pallas import tpu as pltpu

EPS = 1e-5
DILATIONS = (6, 12, 18)
LANE = 128


def _round_up(x, m):
    return (x + m - 1) // m * m


def _pick_tile_h(H, W, max_rows=1024):
    """Largest divisor of H with th*W <= max_rows, preferring >= 2 row tiles
    so the row axis can be megacore-sharded even when batch == 1."""
    divisors = [d for d in range(H, 0, -1) if H % d == 0 and d * W <= max_rows]
    for d in divisors:
        if H // d >= 2:
            return d
    return divisors[0] if divisors else 1


# ---------------------------------------------------------------------------
# Fused Pallas kernel: all branches + final 1x1 conv + BN + ReLU in one pass.
# ---------------------------------------------------------------------------
def _aspp_fused_kernel(x_hbm_ref, w1_ref, w3x3_ref, w3cat_ref, sbr_ref,
                       tbr_ref, s3_ref, t3_ref, pooled_ref, o_ref,
                       xwin_ref, hcat_ref, copy_sem, *,
                       th, W8, cin_p, hid_p, out_pad, pad, dils):
    """One (batch, row-tile) block of the full ASPP forward.

    x_hbm_ref  : (N, Hp, Wp8, cin_p) padded NHWC image, left in HBM (pl.ANY)
    w1_ref     : (cin_p, hid_p)        1x1 branch weight
    w3x3_ref   : (3, 9*cin_p, hid_p)   dilated-branch weights, tap-concat K
    w3cat_ref  : (4*hid_p, out_pad)    final 1x1 weight, branch-concat K
    sbr/tbr    : (4, 1, hid_p)  f32    folded BN scale/shift per branch
    s3/t3      : (1, out_pad)   f32    folded final BN scale/shift
    pooled_ref : (1, 1, out_pad) f32   per-image pooled-branch contribution
    o_ref      : (1, th, W8, out_pad)  output tile
    xwin_ref   : (th+2*pad, Wp8, cin_p) VMEM scratch — halo'd row window
    hcat_ref   : (th*W8, 4*hid_p)       VMEM scratch — branch-concat activations
    """
    b = pl.program_id(0)
    t = pl.program_id(1)
    cdt = w1_ref.dtype               # compute dtype (bf16 or f32)
    halo_h = th + 2 * pad
    m = th * W8

    # DMA only the halo'd row window of this tile (not the whole image).
    cp = pltpu.make_async_copy(
        x_hbm_ref.at[b, pl.ds(t * th, halo_h)], xwin_ref, copy_sem)
    cp.start()
    cp.wait()

    def load(dr, dc):
        # window rows [pad+dr, +th), cols [pad+dc, +W8), all input channels
        xs = xwin_ref[pl.ds(pad + dr, th), pl.ds(pad + dc, W8), :]
        return xs.reshape(m, cin_p)

    # ---- branch 0: 1x1 conv + folded BN + ReLU.
    pre = jnp.dot(load(0, 0), w1_ref[...], preferred_element_type=jnp.float32)
    h = jnp.maximum(pre * sbr_ref[0] + tbr_ref[0], 0.0)
    hcat_ref[:, 0:hid_p] = h.astype(cdt)

    # ---- branches 1..3: dilated 3x3 as ONE K=9*Cin matmul each; the
    #      (m, 9*cin_p) tap-concat tile lives only in VMEM.
    for bi, d in enumerate(dils):
        taps = [load((ky - 1) * d, (kx - 1) * d)
                for ky in range(3) for kx in range(3)]
        xcat = jnp.concatenate(taps, axis=-1)                  # (m, 9*cin_p)
        pre = jnp.dot(xcat, w3x3_ref[bi],
                      preferred_element_type=jnp.float32)
        h = jnp.maximum(pre * sbr_ref[bi + 1] + tbr_ref[bi + 1], 0.0)
        hcat_ref[:, (bi + 1) * hid_p:(bi + 2) * hid_p] = h.astype(cdt)

    # ---- final 1x1 over the 4 spatial branches as ONE K=4*hid matmul; the
    #      pooled branch enters as a per-image bias vector.  Final BN + ReLU.
    acc = jnp.dot(hcat_ref[...], w3cat_ref[...],
                  preferred_element_type=jnp.float32)
    out = jnp.maximum((acc + pooled_ref[0]) * s3_ref[...] + t3_ref[...], 0.0)
    o_ref[0] = out.reshape(th, W8, out_pad).astype(o_ref.dtype)


# ---------------------------------------------------------------------------
# ASPP forward (Pallas path)
# ---------------------------------------------------------------------------
def aspp_forward(x_nchw, params, compute_dtype=jnp.bfloat16, max_rows=1024,
                 return_nhwc=False):
    N, Cin, H, W = x_nchw.shape
    cin_p = params["cin_pad"]
    hid_p = params["hid_pad"]
    out_dim = params["out_dim"]
    out_pad = params["out_pad"]
    pad = max(DILATIONS)
    W8 = _round_up(W, 8)                 # sublane-aligned output width
    Hp = H + 2 * pad
    Wp8 = W8 + 2 * pad
    itemsize = jnp.dtype(compute_dtype).itemsize

    # Global-average-pool branch: tiny per-image work done as glue; its
    # contribution to the fused final 1x1 conv is a per-image bias vector.
    # (bilinear upsample from 1x1 with align_corners=False == broadcast.)
    pooled = jnp.mean(x_nchw.astype(jnp.float32), axis=(2, 3))        # (N, Cin)
    h_img = jnp.maximum(
        pooled @ params["w2"] * params["scale2"] + params["shift2"], 0.0)
    pooled_contrib = (h_img @ params["w3_img"]).astype(jnp.float32)
    pooled_contrib = pooled_contrib.reshape(N, 1, out_pad)

    # NCHW -> NHWC and halo/lane padding already in the compute dtype so the
    # prep pass moves half the bytes (bf16 path).
    x = jnp.transpose(x_nchw.astype(compute_dtype), (0, 2, 3, 1))      # NHWC
    x_pad = jnp.pad(x, ((0, 0), (pad, pad), (pad, W8 - W + pad),
                        (0, cin_p - Cin)))                             # zeros

    th = _pick_tile_h(H, W8, max_rows)
    assert H % th == 0
    n_th = H // th
    halo_h = th + 2 * pad
    m = th * W8

    # Explicit VMEM budget for the actual resident set (+50% headroom).
    est = (halo_h * Wp8 * cin_p * itemsize                  # halo window
           + m * 4 * hid_p * itemsize                       # hcat scratch
           + m * 9 * cin_p * itemsize                       # tap-concat temp
           + m * hid_p * 4 + m * out_pad * 4                # f32 pre / acc
           + 2 * (cin_p * hid_p + 3 * 9 * cin_p * hid_p
                  + 4 * hid_p * out_pad) * itemsize         # weights (x2 buf)
           + 2 * m * out_pad * itemsize)                    # output tile (x2)
    vmem_limit = int(min(max(int(est * 1.5), 32 << 20), 100 << 20))
    # TODO(synk): on v7x (64 MiB VMEM / TC) shrink max_rows and single-buffer
    #             the constant operands if this estimate exceeds ~48 MiB.

    kernel = functools.partial(
        _aspp_fused_kernel, th=th, W8=W8, cin_p=cin_p, hid_p=hid_p,
        out_pad=out_pad, pad=pad, dils=DILATIONS)

    out_nhwc = pl.pallas_call(
        kernel,
        out_shape=jax.ShapeDtypeStruct((N, H, W8, out_pad), compute_dtype),
        grid=(N, n_th),
        in_specs=[
            pl.BlockSpec(memory_space=pl.ANY),                      # x in HBM
            pl.BlockSpec((cin_p, hid_p), lambda b, t: (0, 0)),
            pl.BlockSpec((3, 9 * cin_p, hid_p), lambda b, t: (0, 0, 0)),
            pl.BlockSpec((4 * hid_p, out_pad), lambda b, t: (0, 0)),
            pl.BlockSpec((4, 1, hid_p), lambda b, t: (0, 0, 0)),
            pl.BlockSpec((4, 1, hid_p), lambda b, t: (0, 0, 0)),
            pl.BlockSpec((1, out_pad), lambda b, t: (0, 0)),
            pl.BlockSpec((1, out_pad), lambda b, t: (0, 0)),
            pl.BlockSpec((1, 1, out_pad), lambda b, t: (b, 0, 0)),
        ],
        out_specs=pl.BlockSpec((1, th, W8, out_pad), lambda b, t: (b, t, 0, 0)),
        scratch_shapes=[
            pltpu.VMEM((halo_h, Wp8, cin_p), compute_dtype),   # halo window
            pltpu.VMEM((m, 4 * hid_p), compute_dtype),         # branch concat
            pltpu.SemaphoreType.DMA,                           # window DMA sem
        ],
        compiler_params=pltpu.CompilerParams(
            dimension_semantics=("parallel", "parallel"),
            vmem_limit_bytes=vmem_limit),
    )(
        x_pad,
        params["w1"].astype(compute_dtype),
        params["w3x3"].astype(compute_dtype),
        params["w3_cat"].astype(compute_dtype),
        params["scale_br"], params["shift_br"],
        params["scale3"], params["shift3"],
        pooled_contrib,
    )

    out = out_nhwc
    if W8 != W or out_pad != out_dim:
        out = out[:, :, :W, :out_dim]
    if return_nhwc:                      # skip the epilogue transpose entirely
        return out
    return jnp.transpose(out, (0, 3, 1, 2))                           # NCHW


# ---------------------------------------------------------------------------
# Parameter setup (deterministic, PyTorch-shaped) + BN / bias folding
# ---------------------------------------------------------------------------
def init_raw_params(key, input_dim, hidden_dim, output_dim):
    specs = {
        "conv_1x1_1": (hidden_dim, input_dim, 1, 1),
        "conv_3x3_1": (hidden_dim, input_dim, 3, 3),
        "conv_3x3_2": (hidden_dim, input_dim, 3, 3),
        "conv_3x3_3": (hidden_dim, input_dim, 3, 3),
        "conv_1x1_2": (hidden_dim, input_dim, 1, 1),
        "conv_1x1_3": (output_dim, 5 * hidden_dim, 1, 1),
    }
    raw = {}
    for name, shape in specs.items():
        key, k1, k2, k3, k4, k5, k6 = jax.random.split(key, 7)
        cout = shape[0]
        w = 0.1 * jax.random.normal(k1, shape, jnp.float32)            # OIHW
        b = 0.1 * jax.random.normal(k2, (cout,), jnp.float32)
        gamma = 1.0 + 0.1 * jax.random.normal(k3, (cout,), jnp.float32)
        beta = 0.1 * jax.random.normal(k4, (cout,), jnp.float32)
        mean = 0.1 * jax.random.normal(k5, (cout,), jnp.float32)
        var = jax.random.uniform(k6, (cout,), jnp.float32, 0.5, 1.5)
        raw[name] = (w, b, gamma, beta, mean, var)
    return raw


def _fold_bn(b, gamma, beta, mean, var):
    scale = gamma / jnp.sqrt(var + EPS)
    shift = beta - mean * scale + b * scale      # conv bias folded into shift
    return scale, shift


def fold_params(raw):
    hid, cin = raw["conv_1x1_1"][0].shape[:2]
    out_dim = raw["conv_1x1_3"][0].shape[0]
    cin_p = _round_up(cin, LANE)
    hid_p = _round_up(hid, LANE)
    out_pad = _round_up(out_dim, LANE)

    params = {"out_dim": out_dim, "cin_pad": cin_p, "hid_pad": hid_p,
              "out_pad": out_pad}

    def pad2(a, r, c):
        return jnp.pad(a, ((0, r - a.shape[0]), (0, c - a.shape[1])))

    def pad1(a, n):
        return jnp.pad(a, (0, n - a.shape[0]))

    # branch 0: 1x1
    w, b, g, bt, mn, v = raw["conv_1x1_1"]
    params["w1"] = pad2(jnp.transpose(w[:, :, 0, 0], (1, 0)), cin_p, hid_p)
    s1, t1 = _fold_bn(b, g, bt, mn, v)

    # branches 1..3: dilated 3x3, K laid out tap-major / Cin-minor to match the
    # in-kernel tap concat (tap order ky*3 + kx).
    w3x3, s_list, t_list = [], [s1], [t1]
    for name in ("conv_3x3_1", "conv_3x3_2", "conv_3x3_3"):
        w, b, g, bt, mn, v = raw[name]
        wk = jnp.transpose(w, (2, 3, 1, 0)).reshape(9, cin, hid)
        wk = jnp.pad(wk, ((0, 0), (0, cin_p - cin), (0, hid_p - hid)))
        w3x3.append(wk.reshape(9 * cin_p, hid_p))
        s, t = _fold_bn(b, g, bt, mn, v)
        s_list.append(s)
        t_list.append(t)
    params["w3x3"] = jnp.stack(w3x3)                       # (3, 9*cin_p, hid_p)
    params["scale_br"] = jnp.stack([pad1(s, hid_p) for s in s_list]
                                   ).reshape(4, 1, hid_p)
    params["shift_br"] = jnp.stack([pad1(t, hid_p) for t in t_list]
                                   ).reshape(4, 1, hid_p)

    # pooled branch (computed as wrapper glue, unpadded)
    w, b, g, bt, mn, v = raw["conv_1x1_2"]
    params["w2"] = jnp.transpose(w[:, :, 0, 0], (1, 0))                # (Cin, hid)
    params["scale2"], params["shift2"] = _fold_bn(b, g, bt, mn, v)

    # final 1x1 over the concatenated branches: branches 0..3 concatenated
    # along K (hid-padded) for the single in-kernel matmul; pooled branch kept
    # separate (per-image bias vector).  Lane-pad the output dim.
    w, b, g, bt, mn, v = raw["conv_1x1_3"]
    w3 = jnp.transpose(w[:, :, 0, 0], (1, 0))                          # (5*hid, out)
    w3 = jnp.pad(w3, ((0, 0), (0, out_pad - out_dim)))
    w3 = w3.reshape(5, hid, out_pad)
    w3_br = jnp.pad(w3[:4], ((0, 0), (0, hid_p - hid), (0, 0)))
    params["w3_cat"] = w3_br.reshape(4 * hid_p, out_pad)               # (4*hid_p, out_pad)
    params["w3_img"] = w3[4]                                           # (hid, out_pad)
    s3, t3 = _fold_bn(b, g, bt, mn, v)
    params["scale3"] = jnp.pad(s3, (0, out_pad - out_dim)).reshape(1, out_pad)
    params["shift3"] = jnp.pad(t3, (0, out_pad - out_dim)).reshape(1, out_pad)
    return params


# ---------------------------------------------------------------------------
# Pure-JAX reference (correctness check)
# ---------------------------------------------------------------------------
def _conv_bn_relu_ref(x_nhwc, w_oihw, b, gamma, beta, mean, var,
                      dilation=1, padding=0):
    w_hwio = jnp.transpose(w_oihw, (2, 3, 1, 0))
    y = jax.lax.conv_general_dilated(
        x_nhwc, w_hwio, window_strides=(1, 1),
        padding=((padding, padding), (padding, padding)),
        rhs_dilation=(dilation, dilation),
        dimension_numbers=("NHWC", "HWIO", "NHWC"))
    y = y + b
    y = (y - mean) / jnp.sqrt(var + EPS) * gamma + beta
    return jnp.maximum(y, 0.0)


def aspp_reference(x_nchw, raw):
    x = jnp.transpose(x_nchw, (0, 2, 3, 1)).astype(jnp.float32)
    N, H, W, _ = x.shape
    o1 = _conv_bn_relu_ref(x, *raw["conv_1x1_1"])
    o2 = _conv_bn_relu_ref(x, *raw["conv_3x3_1"], dilation=6, padding=6)
    o3 = _conv_bn_relu_ref(x, *raw["conv_3x3_2"], dilation=12, padding=12)
    o4 = _conv_bn_relu_ref(x, *raw["conv_3x3_3"], dilation=18, padding=18)
    pooled = jnp.mean(x, axis=(1, 2), keepdims=True)
    o5 = _conv_bn_relu_ref(pooled, *raw["conv_1x1_2"])
    o5 = jnp.broadcast_to(o5, (N, H, W, o5.shape[-1]))
    cat = jnp.concatenate([o1, o2, o3, o4, o5], axis=-1)
    out = _conv_bn_relu_ref(cat, *raw["conv_1x1_3"])
    return jnp.transpose(out, (0, 3, 1, 2))


if __name__ == "__main__":
    key = jax.random.PRNGKey(0)
    kx, kp = jax.random.split(key)

    N, Cin, H, W = 2, 4, 16, 16
    hidden_dim, output_dim = 8, 8

    x = jax.random.normal(kx, (N, Cin, H, W), jnp.float32)
    raw = init_raw_params(kp, Cin, hidden_dim, output_dim)
    params = fold_params(raw)

    ref = jax.block_until_ready(aspp_reference(x, raw))

    # f32 compute path: tight numerical check against the XLA reference.
    out_f32 = jax.block_until_ready(
        aspp_forward(x, params, compute_dtype=jnp.float32))
    assert out_f32.shape == (N, output_dim, H, W), out_f32.shape
    err_f32 = float(jnp.max(jnp.abs(out_f32 - ref)))
    if err_f32 > 5e-3:
        raise AssertionError(f"f32 Pallas ASPP mismatch vs reference: {err_f32}")

    # bf16 fast path (default): looser tolerance for bf16 input/output rounding.
    out_bf16 = jax.block_until_ready(
        aspp_forward(x, params, compute_dtype=jnp.bfloat16))
    assert out_bf16.shape == (N, output_dim, H, W), out_bf16.shape
    err_bf16 = float(jnp.max(jnp.abs(out_bf16.astype(jnp.float32) - ref)))
    if err_bf16 > 1.5e-1:
        raise AssertionError(f"bf16 Pallas ASPP mismatch vs reference: {err_bf16}")

    print("KERNEL_OK")
</pallas_src>

<mosaic_0001>
module attributes {stable_mosaic.version = 11 : i64} {
  func.func @_aspp_fused_kernel(%arg0: i32, %arg1: i32, %arg2: memref<2x52x52x128xf32, #tpu.memory_space<any>>, %arg3: memref<128x128xf32, #tpu.memory_space<vmem>>, %arg4: memref<3x1152x128xf32, #tpu.memory_space<vmem>>, %arg5: memref<512x128xf32, #tpu.memory_space<vmem>>, %arg6: memref<4x1x128xf32, #tpu.memory_space<vmem>>, %arg7: memref<4x1x128xf32, #tpu.memory_space<vmem>>, %arg8: memref<1x128xf32, #tpu.memory_space<vmem>>, %arg9: memref<1x128xf32, #tpu.memory_space<vmem>>, %arg10: memref<1x1x128xf32, #tpu.memory_space<vmem>>, %arg11: memref<1x8x16x128xf32, #tpu.memory_space<vmem>>, %arg12: memref<44x52x128xf32, #tpu.memory_space<vmem>>, %arg13: memref<128x512xf32, #tpu.memory_space<vmem>>, %arg14: memref<!tpu.dma_semaphore, #tpu.memory_space<semaphore_mem>>) attributes {dimension_semantics = [#tpu.dimension_semantics<parallel>, #tpu.dimension_semantics<parallel>], iteration_bounds = array<i64: 2, 2>, scalar_prefetch = 0 : i64, scratch_operands = 3 : i64, tpu.core_type = #tpu.core_type<tc>, window_params = [{}, {pipeline_mode = #tpu.pipeline_mode<synchronous>, transform_indices = @transform_1, window_bounds = array<i64: 128, 128>}, {pipeline_mode = #tpu.pipeline_mode<synchronous>, transform_indices = @transform_2, window_bounds = array<i64: 3, 1152, 128>}, {pipeline_mode = #tpu.pipeline_mode<synchronous>, transform_indices = @transform_3, window_bounds = array<i64: 512, 128>}, {pipeline_mode = #tpu.pipeline_mode<synchronous>, transform_indices = @transform_4, window_bounds = array<i64: 4, 1, 128>}, {pipeline_mode = #tpu.pipeline_mode<synchronous>, transform_indices = @transform_5, window_bounds = array<i64: 4, 1, 128>}, {pipeline_mode = #tpu.pipeline_mode<synchronous>, transform_indices = @transform_6, window_bounds = array<i64: 1, 128>}, {pipeline_mode = #tpu.pipeline_mode<synchronous>, transform_indices = @transform_7, window_bounds = array<i64: 1, 128>}, {transform_indices = @transform_8, window_bounds = array<i64: 1, 1, 128>}, {transform_indices = @transform_9, window_bounds = array<i64: 1, 8, 16, 128>}]} {
    %c8_i32 = arith.constant 8 : i32
    %0 = arith.muli %arg1, %c8_i32 : i32
    %c0_i32 = arith.constant 0 : i32
    %c0_i32_0 = arith.constant 0 : i32
    %1 = tpu.memref_slice %arg2[%arg0, %0, %c0_i32, %c0_i32_0] : memref<2x52x52x128xf32, #tpu.memory_space<any>> -> memref<1x44x52x128xf32, #tpu.memory_space<any>>
    %2 = tpu.memref_squeeze %1 : memref<1x44x52x128xf32, #tpu.memory_space<any>> -> memref<44x52x128xf32, #tpu.memory_space<any>>
    tpu.enqueue_dma source(%2 : memref<44x52x128xf32, #tpu.memory_space<any>>) target(%arg12 : memref<44x52x128xf32, #tpu.memory_space<vmem>>) target_semaphore(%arg14 : memref<!tpu.dma_semaphore, #tpu.memory_space<semaphore_mem>>)
    %c0_i32_1 = arith.constant 0 : i32
    %c0_i32_2 = arith.constant 0 : i32
    %3 = tpu.memref_slice %arg2[%arg0, %0, %c0_i32_1, %c0_i32_2] : memref<2x52x52x128xf32, #tpu.memory_space<any>> -> memref<1x44x52x128xf32, #tpu.memory_space<any>>
    %4 = tpu.memref_squeeze %3 : memref<1x44x52x128xf32, #tpu.memory_space<any>> -> memref<44x52x128xf32, #tpu.memory_space<any>>
    tpu.wait_dma2 semaphore(%arg14 : memref<!tpu.dma_semaphore, #tpu.memory_space<semaphore_mem>>) src(%4 : memref<44x52x128xf32, #tpu.memory_space<any>>) dst(%arg12 : memref<44x52x128xf32, #tpu.memory_space<vmem>>)
    %c18 = arith.constant 18 : index
    %c18_3 = arith.constant 18 : index
    %c0 = arith.constant 0 : index
    %5 = vector.load %arg12[%c18, %c18_3, %c0] : memref<44x52x128xf32, #tpu.memory_space<vmem>>, vector<8x16x128xf32>
    %6 = vector.shape_cast %5 : vector<8x16x128xf32> to vector<128x128xf32>
    %c0_4 = arith.constant 0 : index
    %c0_5 = arith.constant 0 : index
    %7 = vector.load %arg3[%c0_4, %c0_5] : memref<128x128xf32, #tpu.memory_space<vmem>>, vector<128x128xf32>
    %cst = arith.constant dense<0.000000e+00> : vector<128x128xf32>
    %8 = tpu.matmul %6, %7, %cst {dimension_numbers = #tpu.dot_dimension_numbers<[1], [0], [0], [1], [0, 0, 1, 1], [], []>} : vector<128x128xf32>, vector<128x128xf32>, vector<128x128xf32> -> vector<128x128xf32>
    %c0_6 = arith.constant 0 : index
    %c0_7 = arith.constant 0 : index
    %c0_8 = arith.constant 0 : index
    %9 = vector.load %arg6[%c0_6, %c0_7, %c0_8] : memref<4x1x128xf32, #tpu.memory_space<vmem>>, vector<1x1x128xf32>
    %10 = vector.shape_cast %9 : vector<1x1x128xf32> to vector<1x128xf32>
    %11 = vector.broadcast %10 : vector<1x128xf32> to vector<128x128xf32>
    %12 = arith.mulf %8, %11 : vector<128x128xf32>
    %c0_9 = arith.constant 0 : index
    %c0_10 = arith.constant 0 : index
    %c0_11 = arith.constant 0 : index
    %13 = vector.load %arg7[%c0_9, %c0_10, %c0_11] : memref<4x1x128xf32, #tpu.memory_space<vmem>>, vector<1x1x128xf32>
    %14 = vector.shape_cast %13 : vector<1x1x128xf32> to vector<1x128xf32>
    %15 = vector.broadcast %14 : vector<1x128xf32> to vector<128x128xf32>
    %16 = arith.addf %12, %15 : vector<128x128xf32>
    %cst_12 = arith.constant 0.000000e+00 : f32
    %17 = vector.broadcast %cst_12 : f32 to vector<128x128xf32>
    %18 = arith.maximumf %16, %17 : vector<128x128xf32>
    %c0_13 = arith.constant 0 : index
    %c0_14 = arith.constant 0 : index
    %19 = vector.load %arg13[%c0_13, %c0_14] : memref<128x512xf32, #tpu.memory_space<vmem>>, vector<128x128xf32>
    tpu.vector_store %arg13[%c0_13, %c0_14], %18 {strides = array<i32>} : memref<128x512xf32, #tpu.memory_space<vmem>>, vector<128x128xf32>,
    %c12 = arith.constant 12 : index
    %c12_15 = arith.constant 12 : index
    %c0_16 = arith.constant 0 : index
    %20 = vector.load %arg12[%c12, %c12_15, %c0_16] : memref<44x52x128xf32, #tpu.memory_space<vmem>>, vector<8x16x128xf32>
    %21 = vector.shape_cast %20 : vector<8x16x128xf32> to vector<128x128xf32>
    %c12_17 = arith.constant 12 : index
    %c18_18 = arith.constant 18 : index
    %c0_19 = arith.constant 0 : index
    %22 = vector.load %arg12[%c12_17, %c18_18, %c0_19] : memref<44x52x128xf32, #tpu.memory_space<vmem>>, vector<8x16x128xf32>
    %23 = vector.shape_cast %22 : vector<8x16x128xf32> to vector<128x128xf32>
    %c12_20 = arith.constant 12 : index
    %c24 = arith.constant 24 : index
    %c0_21 = arith.constant 0 : index
    %24 = vector.load %arg12[%c12_20, %c24, %c0_21] : memref<44x52x128xf32, #tpu.memory_space<vmem>>, vector<8x16x128xf32>
    %25 = vector.shape_cast %24 : vector<8x16x128xf32> to vector<128x128xf32>
    %c18_22 = arith.constant 18 : index
    %c12_23 = arith.constant 12 : index
    %c0_24 = arith.constant 0 : index
    %26 = vector.load %arg12[%c18_22, %c12_23, %c0_24] : memref<44x52x128xf32, #tpu.memory_space<vmem>>, vector<8x16x128xf32>
    %27 = vector.shape_cast %26 : vector<8x16x128xf32> to vector<128x128xf32>
    %c18_25 = arith.constant 18 : index
    %c18_26 = arith.constant 18 : index
    %c0_27 = arith.constant 0 : index
    %28 = vector.load %arg12[%c18_25, %c18_26, %c0_27] : memref<44x52x128xf32, #tpu.memory_space<vmem>>, vector<8x16x128xf32>
    %29 = vector.shape_cast %28 : vector<8x16x128xf32> to vector<128x128xf32>
    %c18_28 = arith.constant 18 : index
    %c24_29 = arith.constant 24 : index
    %c0_30 = arith.constant 0 : index
    %30 = vector.load %arg12[%c18_28, %c24_29, %c0_30] : memref<44x52x128xf32, #tpu.memory_space<vmem>>, vector<8x16x128xf32>
    %31 = vector.shape_cast %30 : vector<8x16x128xf32> to vector<128x128xf32>
    %c24_31 = arith.constant 24 : index
    %c12_32 = arith.constant 12 : index
    %c0_33 = arith.constant 0 : index
    %32 = vector.load %arg12[%c24_31, %c12_32, %c0_33] : memref<44x52x128xf32, #tpu.memory_space<vmem>>, vector<8x16x128xf32>
    %33 = vector.shape_cast %32 : vector<8x16x128xf32> to vector<128x128xf32>
    %c24_34 = arith.constant 24 : index
    %c18_35 = arith.constant 18 : index
    %c0_36 = arith.constant 0 : index
    %34 = vector.load %arg12[%c24_34, %c18_35, %c0_36] : memref<44x52x128xf32, #tpu.memory_space<vmem>>, vector<8x16x128xf32>
    %35 = vector.shape_cast %34 : vector<8x16x128xf32> to vector<128x128xf32>
    %c24_37 = arith.constant 24 : index
    %c24_38 = arith.constant 24 : index
    %c0_39 = arith.constant 0 : index
    %36 = vector.load %arg12[%c24_37, %c24_38, %c0_39] : memref<44x52x128xf32, #tpu.memory_space<vmem>>, vector<8x16x128xf32>
    %37 = vector.shape_cast %36 : vector<8x16x128xf32> to vector<128x128xf32>
    %38 = tpu.concatenate %21, %23, %25, %27, %29, %31, %33, %35, %37 in 1 : vector<128x128xf32>, vector<128x128xf32>, vector<128x128xf32>, vector<128x128xf32>, vector<128x128xf32>, vector<128x128xf32>, vector<128x128xf32>, vector<128x128xf32>, vector<128x128xf32> -> vector<128x1152xf32>
    %c0_40 = arith.constant 0 : index
    %c0_41 = arith.constant 0 : index
    %c0_42 = arith.constant 0 : index
    %39 = vector.load %arg4[%c0_40, %c0_41, %c0_42] : memref<3x1152x128xf32, #tpu.memory_space<vmem>>, vector<1x1152x128xf32>
    %40 = vector.shape_cast %39 : vector<1x1152x128xf32> to vector<1152x128xf32>
    %cst_43 = arith.constant dense<0.000000e+00> : vector<128x128xf32>
    %41 = tpu.matmul %38, %40, %cst_43 {dimension_numbers = #tpu.dot_dimension_numbers<[1], [0], [0], [1], [0, 0, 1, 1], [], []>} : vector<128x1152xf32>, vector<1152x128xf32>, vector<128x128xf32> -> vector<128x128xf32>
    %c1 = arith.constant 1 : index
    %c0_44 = arith.constant 0 : index
    %c0_45 = arith.constant 0 : index
    %42 = vector.load %arg6[%c1, %c0_44, %c0_45] : memref<4x1x128xf32, #tpu.memory_space<vmem>>, vector<1x1x128xf32>
    %43 = vector.shape_cast %42 : vector<1x1x128xf32> to vector<1x128xf32>
    %44 = vector.broadcast %43 : vector<1x128xf32> to vector<128x128xf32>
    %45 = arith.mulf %41, %44 : vector<128x128xf32>
    %c1_46 = arith.constant 1 : index
    %c0_47 = arith.constant 0 : index
    %c0_48 = arith.constant 0 : index
    %46 = vector.load %arg7[%c1_46, %c0_47, %c0_48] : memref<4x1x128xf32, #tpu.memory_space<vmem>>, vector<1x1x128xf32>
    %47 = vector.shape_cast %46 : vector<1x1x128xf32> to vector<1x128xf32>
    %48 = vector.broadcast %47 : vector<1x128xf32> to vector<128x128xf32>
    %49 = arith.addf %45, %48 : vector<128x128xf32>
    %cst_49 = arith.constant 0.000000e+00 : f32
    %50 = vector.broadcast %cst_49 : f32 to vector<128x128xf32>
    %51 = arith.maximumf %49, %50 : vector<128x128xf32>
    %c0_50 = arith.constant 0 : index
    %c128 = arith.constant 128 : index
    %52 = vector.load %arg13[%c0_50, %c128] : memref<128x512xf32, #tpu.memory_space<vmem>>, vector<128x128xf32>
    tpu.vector_store %arg13[%c0_50, %c128], %51 {strides = array<i32>} : memref<128x512xf32, #tpu.memory_space<vmem>>, vector<128x128xf32>,
    %c6 = arith.constant 6 : index
    %c6_51 = arith.constant 6 : index
    %c0_52 = arith.constant 0 : index
    %53 = vector.load %arg12[%c6, %c6_51, %c0_52] : memref<44x52x128xf32, #tpu.memory_space<vmem>>, vector<8x16x128xf32>
    %54 = vector.shape_cast %53 : vector<8x16x128xf32> to vector<128x128xf32>
    %c6_53 = arith.constant 6 : index
    %c18_54 = arith.constant 18 : index
    %c0_55 = arith.constant 0 : index
    %55 = vector.load %arg12[%c6_53, %c18_54, %c0_55] : memref<44x52x128xf32, #tpu.memory_space<vmem>>, vector<8x16x128xf32>
    %56 = vector.shape_cast %55 : vector<8x16x128xf32> to vector<128x128xf32>
    %c6_56 = arith.constant 6 : index
    %c30 = arith.constant 30 : index
    %c0_57 = arith.constant 0 : index
    %57 = vector.load %arg12[%c6_56, %c30, %c0_57] : memref<44x52x128xf32, #tpu.memory_space<vmem>>, vector<8x16x128xf32>
    %58 = vector.shape_cast %57 : vector<8x16x128xf32> to vector<128x128xf32>
    %c18_58 = arith.constant 18 : index
    %c6_59 = arith.constant 6 : index
    %c0_60 = arith.constant 0 : index
    %59 = vector.load %arg12[%c18_58, %c6_59, %c0_60] : memref<44x52x128xf32, #tpu.memory_space<vmem>>, vector<8x16x128xf32>
    %60 = vector.shape_cast %59 : vector<8x16x128xf32> to vector<128x128xf32>
    %c18_61 = arith.constant 18 : index
    %c18_62 = arith.constant 18 : index
    %c0_63 = arith.constant 0 : index
    %61 = vector.load %arg12[%c18_61, %c18_62, %c0_63] : memref<44x52x128xf32, #tpu.memory_space<vmem>>, vector<8x16x128xf32>
    %62 = vector.shape_cast %61 : vector<8x16x128xf32> to vector<128x128xf32>
    %c18_64 = arith.constant 18 : index
    %c30_65 = arith.constant 30 : index
    %c0_66 = arith.constant 0 : index
    %63 = vector.load %arg12[%c18_64, %c30_65, %c0_66] : memref<44x52x128xf32, #tpu.memory_space<vmem>>, vector<8x16x128xf32>
    %64 = vector.shape_cast %63 : vector<8x16x128xf32> to vector<128x128xf32>
    %c30_67 = arith.constant 30 : index
    %c6_68 = arith.constant 6 : index
    %c0_69 = arith.constant 0 : index
    %65 = vector.load %arg12[%c30_67, %c6_68, %c0_69] : memref<44x52x128xf32, #tpu.memory_space<vmem>>, vector<8x16x128xf32>
    %66 = vector.shape_cast %65 : vector<8x16x128xf32> to vector<128x128xf32>
    %c30_70 = arith.constant 30 : index
    %c18_71 = arith.constant 18 : index
    %c0_72 = arith.constant 0 : index
    %67 = vector.load %arg12[%c30_70, %c18_71, %c0_72] : memref<44x52x128xf32, #tpu.memory_space<vmem>>, vector<8x16x128xf32>
    %68 = vector.shape_cast %67 : vector<8x16x128xf32> to vector<128x128xf32>
    %c30_73 = arith.constant 30 : index
    %c30_74 = arith.constant 30 : index
    %c0_75 = arith.constant 0 : index
    %69 = vector.load %arg12[%c30_73, %c30_74, %c0_75] : memref<44x52x128xf32, #tpu.memory_space<vmem>>, vector<8x16x128xf32>
    %70 = vector.shape_cast %69 : vector<8x16x128xf32> to vector<128x128xf32>
    %71 = tpu.concatenate %54, %56, %58, %60, %62, %64, %66, %68, %70 in 1 : vector<128x128xf32>, vector<128x128xf32>, vector<128x128xf32>, vector<128x128xf32>, vector<128x128xf32>, vector<128x128xf32>, vector<128x128xf32>, vector<128x128xf32>, vector<128x128xf32> -> vector<128x1152xf32>
    %c1_76 = arith.constant 1 : index
    %c0_77 = arith.constant 0 : index
    %c0_78 = arith.constant 0 : index
    %72 = vector.load %arg4[%c1_76, %c0_77, %c0_78] : memref<3x1152x128xf32, #tpu.memory_space<vmem>>, vector<1x1152x128xf32>
    %73 = vector.shape_cast %72 : vector<1x1152x128xf32> to vector<1152x128xf32>
    %cst_79 = arith.constant dense<0.000000e+00> : vector<128x128xf32>
    %74 = tpu.matmul %71, %73, %cst_79 {dimension_numbers = #tpu.dot_dimension_numbers<[1], [0], [0], [1], [0, 0, 1, 1], [], []>} : vector<128x1152xf32>, vector<1152x128xf32>, vector<128x128xf32> -> vector<128x128xf32>
    %c2 = arith.constant 2 : index
    %c0_80 = arith.constant 0 : index
    %c0_81 = arith.constant 0 : index
    %75 = vector.load %arg6[%c2, %c0_80, %c0_81] : memref<4x1x128xf32, #tpu.memory_space<vmem>>, vector<1x1x128xf32>
    %76 = vector.shape_cast %75 : vector<1x1x128xf32> to vector<1x128xf32>
    %77 = vector.broadcast %76 : vector<1x128xf32> to vector<128x128xf32>
    %78 = arith.mulf %74, %77 : vector<128x128xf32>
    %c2_82 = arith.constant 2 : index
    %c0_83 = arith.constant 0 : index
    %c0_84 = arith.constant 0 : index
    %79 = vector.load %arg7[%c2_82, %c0_83, %c0_84] : memref<4x1x128xf32, #tpu.memory_space<vmem>>, vector<1x1x128xf32>
    %80 = vector.shape_cast %79 : vector<1x1x128xf32> to vector<1x128xf32>
    %81 = vector.broadcast %80 : vector<1x128xf32> to vector<128x128xf32>
    %82 = arith.addf %78, %81 : vector<128x128xf32>
    %cst_85 = arith.constant 0.000000e+00 : f32
    %83 = vector.broadcast %cst_85 : f32 to vector<128x128xf32>
    %84 = arith.maximumf %82, %83 : vector<128x128xf32>
    %c0_86 = arith.constant 0 : index
    %c256 = arith.constant 256 : index
    %85 = vector.load %arg13[%c0_86, %c256] : memref<128x512xf32, #tpu.memory_space<vmem>>, vector<128x128xf32>
    tpu.vector_store %arg13[%c0_86, %c256], %84 {strides = array<i32>} : memref<128x512xf32, #tpu.memory_space<vmem>>, vector<128x128xf32>,
    %c0_87 = arith.constant 0 : index
    %c0_88 = arith.constant 0 : index
    %c0_89 = arith.constant 0 : index
    %86 = vector.load %arg12[%c0_87, %c0_88, %c0_89] : memref<44x52x128xf32, #tpu.memory_space<vmem>>, vector<8x16x128xf32>
    %87 = vector.shape_cast %86 : vector<8x16x128xf32> to vector<128x128xf32>
    %c0_90 = arith.constant 0 : index
    %c18_91 = arith.constant 18 : index
    %c0_92 = arith.constant 0 : index
    %88 = vector.load %arg12[%c0_90, %c18_91, %c0_92] : memref<44x52x128xf32, #tpu.memory_space<vmem>>, vector<8x16x128xf32>
    %89 = vector.shape_cast %88 : vector<8x16x128xf32> to vector<128x128xf32>
    %c0_93 = arith.constant 0 : index
    %c36 = arith.constant 36 : index
    %c0_94 = arith.constant 0 : index
    %90 = vector.load %arg12[%c0_93, %c36, %c0_94] : memref<44x52x128xf32, #tpu.memory_space<vmem>>, vector<8x16x128xf32>
    %91 = vector.shape_cast %90 : vector<8x16x128xf32> to vector<128x128xf32>
    %c18_95 = arith.constant 18 : index
    %c0_96 = arith.constant 0 : index
    %c0_97 = arith.constant 0 : index
    %92 = vector.load %arg12[%c18_95, %c0_96, %c0_97] : memref<44x52x128xf32, #tpu.memory_space<vmem>>, vector<8x16x128xf32>
    %93 = vector.shape_cast %92 : vector<8x16x128xf32> to vector<128x128xf32>
    %c18_98 = arith.constant 18 : index
    %c18_99 = arith.constant 18 : index
    %c0_100 = arith.constant 0 : index
    %94 = vector.load %arg12[%c18_98, %c18_99, %c0_100] : memref<44x52x128xf32, #tpu.memory_space<vmem>>, vector<8x16x128xf32>
    %95 = vector.shape_cast %94 : vector<8x16x128xf32> to vector<128x128xf32>
    %c18_101 = arith.constant 18 : index
    %c36_102 = arith.constant 36 : index
    %c0_103 = arith.constant 0 : index
    %96 = vector.load %arg12[%c18_101, %c36_102, %c0_103] : memref<44x52x128xf32, #tpu.memory_space<vmem>>, vector<8x16x128xf32>
    %97 = vector.shape_cast %96 : vector<8x16x128xf32> to vector<128x128xf32>
    %c36_104 = arith.constant 36 : index
    %c0_105 = arith.constant 0 : index
    %c0_106 = arith.constant 0 : index
    %98 = vector.load %arg12[%c36_104, %c0_105, %c0_106] : memref<44x52x128xf32, #tpu.memory_space<vmem>>, vector<8x16x128xf32>
    %99 = vector.shape_cast %98 : vector<8x16x128xf32> to vector<128x128xf32>
    %c36_107 = arith.constant 36 : index
    %c18_108 = arith.constant 18 : index
    %c0_109 = arith.constant 0 : index
    %100 = vector.load %arg12[%c36_107, %c18_108, %c0_109] : memref<44x52x128xf32, #tpu.memory_space<vmem>>, vector<8x16x128xf32>
    %101 = vector.shape_cast %100 : vector<8x16x128xf32> to vector<128x128xf32>
    %c36_110 = arith.constant 36 : index
    %c36_111 = arith.constant 36 : index
    %c0_112 = arith.constant 0 : index
    %102 = vector.load %arg12[%c36_110, %c36_111, %c0_112] : memref<44x52x128xf32, #tpu.memory_space<vmem>>, vector<8x16x128xf32>
    %103 = vector.shape_cast %102 : vector<8x16x128xf32> to vector<128x128xf32>
    %104 = tpu.concatenate %87, %89, %91, %93, %95, %97, %99, %101, %103 in 1 : vector<128x128xf32>, vector<128x128xf32>, vector<128x128xf32>, vector<128x128xf32>, vector<128x128xf32>, vector<128x128xf32>, vector<128x128xf32>, vector<128x128xf32>, vector<128x128xf32> -> vector<128x1152xf32>
    %c2_113 = arith.constant 2 : index
    %c0_114 = arith.constant 0 : index
    %c0_115 = arith.constant 0 : index
    %105 = vector.load %arg4[%c2_113, %c0_114, %c0_115] : memref<3x1152x128xf32, #tpu.memory_space<vmem>>, vector<1x1152x128xf32>
    %106 = vector.shape_cast %105 : vector<1x1152x128xf32> to vector<1152x128xf32>
    %cst_116 = arith.constant dense<0.000000e+00> : vector<128x128xf32>
    %107 = tpu.matmul %104, %106, %cst_116 {dimension_numbers = #tpu.dot_dimension_numbers<[1], [0], [0], [1], [0, 0, 1, 1], [], []>} : vector<128x1152xf32>, vector<1152x128xf32>, vector<128x128xf32> -> vector<128x128xf32>
    %c3 = arith.constant 3 : index
    %c0_117 = arith.constant 0 : index
    %c0_118 = arith.constant 0 : index
    %108 = vector.load %arg6[%c3, %c0_117, %c0_118] : memref<4x1x128xf32, #tpu.memory_space<vmem>>, vector<1x1x128xf32>
    %109 = vector.shape_cast %108 : vector<1x1x128xf32> to vector<1x128xf32>
    %110 = vector.broadcast %109 : vector<1x128xf32> to vector<128x128xf32>
    %111 = arith.mulf %107, %110 : vector<128x128xf32>
    %c3_119 = arith.constant 3 : index
    %c0_120 = arith.constant 0 : index
    %c0_121 = arith.constant 0 : index
    %112 = vector.load %arg7[%c3_119, %c0_120, %c0_121] : memref<4x1x128xf32, #tpu.memory_space<vmem>>, vector<1x1x128xf32>
    %113 = vector.shape_cast %112 : vector<1x1x128xf32> to vector<1x128xf32>
    %114 = vector.broadcast %113 : vector<1x128xf32> to vector<128x128xf32>
    %115 = arith.addf %111, %114 : vector<128x128xf32>
    %cst_122 = arith.constant 0.000000e+00 : f32
    %116 = vector.broadcast %cst_122 : f32 to vector<128x128xf32>
    %117 = arith.maximumf %115, %116 : vector<128x128xf32>
    %c0_123 = arith.constant 0 : index
    %c384 = arith.constant 384 : index
    %118 = vector.load %arg13[%c0_123, %c384] : memref<128x512xf32, #tpu.memory_space<vmem>>, vector<128x128xf32>
    tpu.vector_store %arg13[%c0_123, %c384], %117 {strides = array<i32>} : memref<128x512xf32, #tpu.memory_space<vmem>>, vector<128x128xf32>,
    %c0_124 = arith.constant 0 : index
    %c0_125 = arith.constant 0 : index
    %119 = vector.load %arg13[%c0_124, %c0_125] : memref<128x512xf32, #tpu.memory_space<vmem>>, vector<128x512xf32>
    %c0_126 = arith.constant 0 : index
    %c0_127 = arith.constant 0 : index
    %120 = vector.load %arg5[%c0_126, %c0_127] : memref<512x128xf32, #tpu.memory_space<vmem>>, vector<512x128xf32>
    %cst_128 = arith.constant dense<0.000000e+00> : vector<128x128xf32>
    %121 = tpu.matmul %119, %120, %cst_128 {dimension_numbers = #tpu.dot_dimension_numbers<[1], [0], [0], [1], [0, 0, 1, 1], [], []>} : vector<128x512xf32>, vector<512x128xf32>, vector<128x128xf32> -> vector<128x128xf32>
    %c0_129 = arith.constant 0 : index
    %c0_130 = arith.constant 0 : index
    %c0_131 = arith.constant 0 : index
    %122 = vector.load %arg10[%c0_129, %c0_130, %c0_131] : memref<1x1x128xf32, #tpu.memory_space<vmem>>, vector<1x1x128xf32>
    %123 = vector.shape_cast %122 : vector<1x1x128xf32> to vector<1x128xf32>
    %124 = vector.broadcast %123 : vector<1x128xf32> to vector<128x128xf32>
    %125 = arith.addf %121, %124 : vector<128x128xf32>
    %c0_132 = arith.constant 0 : index
    %c0_133 = arith.constant 0 : index
    %126 = vector.load %arg8[%c0_132, %c0_133] : memref<1x128xf32, #tpu.memory_space<vmem>>, vector<1x128xf32>
    %127 = vector.broadcast %126 : vector<1x128xf32> to vector<128x128xf32>
    %128 = arith.mulf %125, %127 : vector<128x128xf32>
    %c0_134 = arith.constant 0 : index
    %c0_135 = arith.constant 0 : index
    %129 = vector.load %arg9[%c0_134, %c0_135] : memref<1x128xf32, #tpu.memory_space<vmem>>, vector<1x128xf32>
    %130 = vector.broadcast %129 : vector<1x128xf32> to vector<128x128xf32>
    %131 = arith.addf %128, %130 : vector<128x128xf32>
    %cst_136 = arith.constant 0.000000e+00 : f32
    %132 = vector.broadcast %cst_136 : f32 to vector<128x128xf32>
    %133 = arith.maximumf %131, %132 : vector<128x128xf32>
    %134 = vector.shape_cast %133 : vector<128x128xf32> to vector<8x16x128xf32>
    %c0_137 = arith.constant 0 : index
    %c0_138 = arith.constant 0 : index
    %c0_139 = arith.constant 0 : index
    %c0_140 = arith.constant 0 : index
    %135 = vector.load %arg11[%c0_137, %c0_138, %c0_139, %c0_140] : memref<1x8x16x128xf32, #tpu.memory_space<vmem>>, vector<1x8x16x128xf32>
    %136 = vector.shape_cast %135 : vector<1x8x16x128xf32> to vector<8x16x128xf32>
    %137 = vector.shape_cast %134 : vector<8x16x128xf32> to vector<1x8x16x128xf32>
    tpu.vector_store %arg11[%c0_137, %c0_138, %c0_139, %c0_140], %137 {strides = array<i32>} : memref<1x8x16x128xf32, #tpu.memory_space<vmem>>, vector<1x8x16x128xf32>,
    return
  }
  func.func @transform_1(%arg0: i32, %arg1: i32) -> (i32, i32) {
    %c0_i32 = arith.constant 0 : i32
    %c0_i32_0 = arith.constant 0 : i32
    %c0_i32_1 = arith.constant 0 : i32
    return %c0_i32, %c0_i32_0 : i32, i32
  }
  func.func @transform_2(%arg0: i32, %arg1: i32) -> (i32, i32, i32) {
    %c0_i32 = arith.constant 0 : i32
    %c0_i32_0 = arith.constant 0 : i32
    %c0_i32_1 = arith.constant 0 : i32
    %c0_i32_2 = arith.constant 0 : i32
    return %c0_i32, %c0_i32_0, %c0_i32_1 : i32, i32, i32
  }
  func.func @transform_3(%arg0: i32, %arg1: i32) -> (i32, i32) {
    %c0_i32 = arith.constant 0 : i32
    %c0_i32_0 = arith.constant 0 : i32
    %c0_i32_1 = arith.constant 0 : i32
    return %c0_i32, %c0_i32_0 : i32, i32
  }
  func.func @transform_4(%arg0: i32, %arg1: i32) -> (i32, i32, i32) {
    %c0_i32 = arith.constant 0 : i32
    %c0_i32_0 = arith.constant 0 : i32
    %c0_i32_1 = arith.constant 0 : i32
    %c0_i32_2 = arith.constant 0 : i32
    return %c0_i32, %c0_i32_0, %c0_i32_1 : i32, i32, i32
  }
  func.func @transform_5(%arg0: i32, %arg1: i32) -> (i32, i32, i32) {
    %c0_i32 = arith.constant 0 : i32
    %c0_i32_0 = arith.constant 0 : i32
    %c0_i32_1 = arith.constant 0 : i32
    %c0_i32_2 = arith.constant 0 : i32
    return %c0_i32, %c0_i32_0, %c0_i32_1 : i32, i32, i32
  }
  func.func @transform_6(%arg0: i32, %arg1: i32) -> (i32, i32) {
    %c0_i32 = arith.constant 0 : i32
    %c0_i32_0 = arith.constant 0 : i32
    %c0_i32_1 = arith.constant 0 : i32
    return %c0_i32, %c0_i32_0 : i32, i32
  }
  func.func @transform_7(%arg0: i32, %arg1: i32) -> (i32, i32) {
    %c0_i32 = arith.constant 0 : i32
    %c0_i32_0 = arith.constant 0 : i32
    %c0_i32_1 = arith.constant 0 : i32
    return %c0_i32, %c0_i32_0 : i32, i32
  }
  func.func @transform_8(%arg0: i32, %arg1: i32) -> (i32, i32, i32) {
    %c0_i32 = arith.constant 0 : i32
    %c0_i32_0 = arith.constant 0 : i32
    %c0_i32_1 = arith.constant 0 : i32
    return %arg0, %c0_i32, %c0_i32_0 : i32, i32, i32
  }
  func.func @transform_9(%arg0: i32, %arg1: i32) -> (i32, i32, i32, i32) {
    %c0_i32 = arith.constant 0 : i32
    %c0_i32_0 = arith.constant 0 : i32
    %c0_i32_1 = arith.constant 0 : i32
    return %arg0, %arg1, %c0_i32, %c0_i32_0 : i32, i32, i32, i32
  }
}

</mosaic_0001>

<llo_original>
// kernel: tpu_custom_call.1
$region0: #{tpu_custom_call.1}
  #allocation0 [shape = 'u32[]', space=smem, size = 0x4, offset = 0x4, fixed_abs, tag = 'smem constant byte address 0x4 - core index']
  #allocation1 [shape = 'u32[144,128]{1,0:T(1,128)}', space=vmem, size = 0x12000, scoped, tag = 'internal scratch']
  #allocation2 [shape = 'f32[44,52,128]{2,1,0:T(8,128)}', space=vmem, size = 0x134000, scoped, tag = 'scratch operand']
  #allocation3 [shape = 'f32[128,512]{1,0:T(8,128)}', space=vmem, size = 0x40000, scoped, tag = 'scratch operand']
  #allocation4 [shape = 's32[1]{0}', space=sflag, size = 0x4, scoped, tag = 'scratch operand']
  #allocation7 [shape = 's32[]', space=sflag, size = 0x4, offset = 0, fixed_abs, tag = 'sflag constant byte address 0x0 - dummy sync flag']
  %s0 = inlined_call_operand.vmem [shape: f32[2,52,52,128], index: 0, kind: input, shape index: {}]
  %s1 = inlined_call_operand.vmem [shape: f32[128,128], index: 1, kind: input, shape index: {}]
  %s2 = inlined_call_operand.vmem [shape: f32[3,1152,128], index: 2, kind: input, shape index: {}]
  %s3 = inlined_call_operand.vmem [shape: f32[512,128], index: 3, kind: input, shape index: {}]
  %s4 = inlined_call_operand.vmem [shape: f32[4,1,128], index: 4, kind: input, shape index: {}]
  %s5 = inlined_call_operand.vmem [shape: f32[4,1,128], index: 5, kind: input, shape index: {}]
  %s6 = inlined_call_operand.vmem [shape: f32[1,128], index: 6, kind: input, shape index: {}]
  %s7 = inlined_call_operand.vmem [shape: f32[1,128], index: 7, kind: input, shape index: {}]
  %s8 = inlined_call_operand.vmem [shape: f32[2,1,128], index: 8, kind: input, shape index: {}]
  %s9 = inlined_call_operand.hbm [shape: f32[2,16,16,128], index: 9, kind: output, shape index: {}]
  %s10 = sld [smem:[#allocation0]]
  $region102: #{tpu_custom_call.1} parent=0
    _
  %s12 = ssub.s32 1, %s10
  %s13 = scalar_select 0, %s12, %s10
  $region1: #{tpu_custom_call.1} parent=0
    #allocation5 [shape = 'u8[131072]{0}', space=vmem, size = 0x20000, scoped, tag = 'output window, operand 0']
    #allocation6 [shape = 's32[2]{0}', space=sflag, size = 0x8, scoped, tag = 'scoped memory for tpu_custom_call.1']
    %14 = vsyncpa [#allocation6], 0
    %s15 = scalar_lea.sflag [#allocation6], 1
    %16 = vsyncpa %s15, 0
    loop: start=0, step=1, limit=6
    $region2: #{tpu_custom_call.1} parent=1 // loop_pre_header
      _
    $region3: #{tpu_custom_call.1} parent=1 // loop_header
      %s18 = sphi 0, %s22
      %p19 = scmp.ge.s32.totalorder %s18, 6
      %s25 = sphi 0, %s37
      %s26 = sphi 0, %s33
      %s27 = sphi 0, %s25
      %s28 = sphi 0, %s26
      %s29 = sphi 0, %s27
      %s30 = sphi 0, %s28
      %s38 = sphi 0, %s38
      %s40 = sphi 0, %s38
      %s41 = sphi 0, %s40
      %s55 = sphi 0, %s41
      %s59 = sphi 0, %s59
      %s61 = sphi 0, %s59
      %s62 = sphi 0, %s61
      %s76 = sphi 0, %s62
      %s80 = sphi 0, %s80
      %s82 = sphi 0, %s80
      %s83 = sphi 0, %s82
      %s97 = sphi 0, %s83
      %s101 = sphi 0, %s101
      %s103 = sphi 0, %s101
      %s104 = sphi 0, %s103
      %s118 = sphi 0, %s104
      %s122 = sphi 0, %s122
      %s124 = sphi 0, %s122
      %s125 = sphi 0, %s124
      %s139 = sphi 0, %s125
      %s143 = sphi 0, %s143
      %s145 = sphi 0, %s143
      %s146 = sphi 0, %s145
      %s160 = sphi 0, %s146
      %s164 = sphi 0, %s164
      %s166 = sphi 0, %s164
      %s167 = sphi 0, %s166
      %s181 = sphi 0, %s167
      %s187 = sphi 0, %s189
      %s190 = sphi 0, %s187
      %s191 = sphi 0, %s190
      %s207 = sphi 0, %s191
      %s215 = sphi 0, %s217
      %s218 = sphi 0, %s215
      %s219 = sphi 0, %s218
      %s235 = sphi 0, %s219
    $region4: #{tpu_custom_call.1} parent=1 // loop_header_branch
      %21 = sbr.rel (%p19) target = $region8
    $region5: #{tpu_custom_call.1} parent=1 // loop_body
      %s23 = ssub.s32 %s18, 1
      %s24 = ssub.s32 %s18, 2
      %s31 = sadd.s32 1, %s26
      %p32 = scmp.ge.s32.totalorder %s31, 2
      %s33 = scalar_select %p32, 0, %s31
      %s34 = sadd.s32 1, %s25
      %s35 = scalar_select %p32, %s34, %s25
      %p36 = scmp.ge.s32.totalorder %s35, 2
      %s37 = scalar_select %p36, 0, %s35
      %s39 = sadd.s32 %s38, 1
      %p42 = scmp.eq.s32.totalorder %s18, 3
      %p43 = scmp.ne.s32.totalorder %s38, %s40
      %p44 = scmp.eq.s32.totalorder %s18, 0
      %p45 = por %p43, %p44
      %p46 = scmp.ne.s32.totalorder %s38, %s40
      %p47 = scmp.eq.s32.totalorder %s23, 3
      %p48 = por %p46, %p47
      %p49 = scmp.ne.s32.totalorder %s40, %s41
      %p50 = scmp.eq.s32.totalorder %s23, 0
      %p51 = por %p49, %p50
      %p52 = scmp.ne.s32.totalorder %s40, %s41
      %p53 = scmp.eq.s32.totalorder %s24, 3
      %p54 = por %p52, %p53
      %p56 = scmp.ne.s32.totalorder %s41, %s55
      %p57 = scmp.eq.s32.totalorder %s24, 0
      %p58 = por %p56, %p57
      %s60 = sadd.s32 %s59, 1
      %p63 = scmp.eq.s32.totalorder %s18, 3
      %p64 = scmp.ne.s32.totalorder %s59, %s61
      %p65 = scmp.eq.s32.totalorder %s18, 0
      %p66 = por %p64, %p65
      %p67 = scmp.ne.s32.totalorder %s59, %s61
      %p68 = scmp.eq.s32.totalorder %s23, 3
      %p69 = por %p67, %p68
      %p70 = scmp.ne.s32.totalorder %s61, %s62
      %p71 = scmp.eq.s32.totalorder %s23, 0
      %p72 = por %p70, %p71
      %p73 = scmp.ne.s32.totalorder %s61, %s62
      %p74 = scmp.eq.s32.totalorder %s24, 3
      %p75 = por %p73, %p74
      %p77 = scmp.ne.s32.totalorder %s62, %s76
      %p78 = scmp.eq.s32.totalorder %s24, 0
      %p79 = por %p77, %p78
      %s81 = sadd.s32 %s80, 1
      %p84 = scmp.eq.s32.totalorder %s18, 3
      %p85 = scmp.ne.s32.totalorder %s80, %s82
      %p86 = scmp.eq.s32.totalorder %s18, 0
      %p87 = por %p85, %p86
      %p88 = scmp.ne.s32.totalorder %s80, %s82
      %p89 = scmp.eq.s32.totalorder %s23, 3
      %p90 = por %p88, %p89
      %p91 = scmp.ne.s32.totalorder %s82, %s83
      %p92 = scmp.eq.s32.totalorder %s23, 0
      %p93 = por %p91, %p92
      %p94 = scmp.ne.s32.totalorder %s82, %s83
      %p95 = scmp.eq.s32.totalorder %s24, 3
      %p96 = por %p94, %p95
      %p98 = scmp.ne.s32.totalorder %s83, %s97
      %p99 = scmp.eq.s32.totalorder %s24, 0
      %p100 = por %p98, %p99
      %s102 = sadd.s32 %s101, 1
      %p105 = scmp.eq.s32.totalorder %s18, 3
      %p106 = scmp.ne.s32.totalorder %s101, %s103
      %p107 = scmp.eq.s32.totalorder %s18, 0
      %p108 = por %p106, %p107
      %p109 = scmp.ne.s32.totalorder %s101, %s103
      %p110 = scmp.eq.s32.totalorder %s23, 3
      %p111 = por %p109, %p110
      %p112 = scmp.ne.s32.totalorder %s103, %s104
      %p113 = scmp.eq.s32.totalorder %s23, 0
      %p114 = por %p112, %p113
      %p115 = scmp.ne.s32.totalorder %s103, %s104
      %p116 = scmp.eq.s32.totalorder %s24, 3
      %p117 = por %p115, %p116
      %p119 = scmp.ne.s32.totalorder %s104, %s118
      %p120 = scmp.eq.s32.totalorder %s24, 0
      %p121 = por %p119, %p120
      %s123 = sadd.s32 %s122, 1
      %p126 = scmp.eq.s32.totalorder %s18, 3
      %p127 = scmp.ne.s32.totalorder %s122, %s124
      %p128 = scmp.eq.s32.totalorder %s18, 0
      %p129 = por %p127, %p128
      %p130 = scmp.ne.s32.totalorder %s122, %s124
      %p131 = scmp.eq.s32.totalorder %s23, 3
      %p132 = por %p130, %p131
      %p133 = scmp.ne.s32.totalorder %s124, %s125
      %p134 = scmp.eq.s32.totalorder %s23, 0
      %p135 = por %p133, %p134
      %p136 = scmp.ne.s32.totalorder %s124, %s125
      %p137 = scmp.eq.s32.totalorder %s24, 3
      %p138 = por %p136, %p137
      %p140 = scmp.ne.s32.totalorder %s125, %s139
      %p141 = scmp.eq.s32.totalorder %s24, 0
      %p142 = por %p140, %p141
      %s144 = sadd.s32 %s143, 1
      %p147 = scmp.eq.s32.totalorder %s18, 3
      %p148 = scmp.ne.s32.totalorder %s143, %s145
      %p149 = scmp.eq.s32.totalorder %s18, 0
      %p150 = por %p148, %p149
      %p151 = scmp.ne.s32.totalorder %s143, %s145
      %p152 = scmp.eq.s32.totalorder %s23, 3
      %p153 = por %p151, %p152
      %p154 = scmp.ne.s32.totalorder %s145, %s146
      %p155 = scmp.eq.s32.totalorder %s23, 0
      %p156 = por %p154, %p155
      %p157 = scmp.ne.s32.totalorder %s145, %s146
      %p158 = scmp.eq.s32.totalorder %s24, 3
      %p159 = por %p157, %p158
      %p161 = scmp.ne.s32.totalorder %s146, %s160
      %p162 = scmp.eq.s32.totalorder %s24, 0
      %p163 = por %p161, %p162
      %s165 = sadd.s32 %s164, 1
      %p168 = scmp.eq.s32.totalorder %s18, 3
      %p169 = scmp.ne.s32.totalorder %s164, %s166
      %p170 = scmp.eq.s32.totalorder %s18, 0
      %p171 = por %p169, %p170
      %p172 = scmp.ne.s32.totalorder %s164, %s166
      %p173 = scmp.eq.s32.totalorder %s23, 3
      %p174 = por %p172, %p173
      %p175 = scmp.ne.s32.totalorder %s166, %s167
      %p176 = scmp.eq.s32.totalorder %s23, 0
      %p177 = por %p175, %p176
      %p178 = scmp.ne.s32.totalorder %s166, %s167
      %p179 = scmp.eq.s32.totalorder %s24, 3
      %p180 = por %p178, %p179
      %p182 = scmp.ne.s32.totalorder %s167, %s181
      %p183 = scmp.eq.s32.totalorder %s24, 0
      %p184 = por %p182, %p183
      %s185 = ssub.s32 %s25, %s37
      %p186 = scmp.eq.s32.totalorder %s185, 0
      %s188 = sadd.s32 %s187, 1
      %s189 = scalar_select %p186, %s187, %s188
      %p192 = pneg %p186
      %p193 = scmp.eq.s32.totalorder %s18, 3
      %p194 = por %p192, %p193
      %p195 = scmp.ne.s32.totalorder %s187, %s190
      %p196 = scmp.eq.s32.totalorder %s18, 0
      %p197 = por %p195, %p196
      %p198 = scmp.ne.s32.totalorder %s187, %s190
      %p199 = scmp.eq.s32.totalorder %s23, 3
      %p200 = por %p198, %p199
      %p201 = scmp.ne.s32.totalorder %s190, %s191
      %p202 = scmp.eq.s32.totalorder %s23, 0
      %p203 = por %p201, %p202
      %p204 = scmp.ne.s32.totalorder %s190, %s191
      %p205 = scmp.eq.s32.totalorder %s24, 3
      %p206 = por %p204, %p205
      %p208 = scmp.ne.s32.totalorder %s191, %s207
      %p209 = scmp.eq.s32.totalorder %s24, 0
      %p210 = por %p208, %p209
      %s211 = ssub.s32 %s25, %s37
      %s212 = ssub.s32 %s26, %s33
      %s213 = sor.u32 %s211, %s212
      %p214 = scmp.eq.s32.totalorder %s213, 0
      %s216 = sadd.s32 %s215, 1
      %s217 = scalar_select %p214, %s215, %s216
      %p220 = pneg %p214
      %p221 = scmp.eq.s32.totalorder %s18, 3
      %p222 = por %p220, %p221
      %p223 = scmp.ne.s32.totalorder %s215, %s218
      %p224 = scmp.eq.s32.totalorder %s18, 0
      %p225 = por %p223, %p224
      %p226 = scmp.ne.s32.totalorder %s215, %s218
      %p227 = scmp.eq.s32.totalorder %s23, 3
      %p228 = por %p226, %p227
      %p229 = scmp.ne.s32.totalorder %s218, %s219
      %p230 = scmp.eq.s32.totalorder %s23, 0
      %p231 = por %p229, %p230
      %p232 = scmp.ne.s32.totalorder %s218, %s219
      %p233 = scmp.eq.s32.totalorder %s24, 3
      %p234 = por %p232, %p233
      %p236 = scmp.ne.s32.totalorder %s219, %s235
      %p237 = scmp.eq.s32.totalorder %s24, 0
      %p238 = por %p236, %p237
      %p239 = scmp.le.s32.totalorder 1, %s18
      %p240 = scmp.lt.s32.totalorder %s18, 5
      %p241 = pnand %p239, %p240
      %p242 = pneg %p241
      // Predicated region
      $region9: #{tpu_custom_call.1} parent=5 // pred_check
        _
      $region10: #{tpu_custom_call.1} parent=5 // pred_check_branch
        %244 = sbr.rel (%p241) target = $region12
      $region11: #{tpu_custom_call.1} parent=5 // pred_region
        %s245 = ssub.s32 %s18, 1
        // Predicated region
        $region13: #{tpu_custom_call.1} parent=11 // pred_check
          %p246 = pneg %p51
        $region14: #{tpu_custom_call.1} parent=11 // pred_check_branch
          %248 = sbr.rel (%p246) target = $region16
        $region15: #{tpu_custom_call.1} parent=11 // pred_region
          _
        $region16: #{tpu_custom_call.1} parent=11 // pred_fallthru
          _
        // Predicated region
        $region17: #{tpu_custom_call.1} parent=11 // pred_check
          %p249 = pneg %p72
        $region18: #{tpu_custom_call.1} parent=11 // pred_check_branch
          %251 = sbr.rel (%p249) target = $region20
        $region19: #{tpu_custom_call.1} parent=11 // pred_region
          _
        $region20: #{tpu_custom_call.1} parent=11 // pred_fallthru
          _
        // Predicated region
        $region21: #{tpu_custom_call.1} parent=11 // pred_check
          %p252 = pneg %p93
        $region22: #{tpu_custom_call.1} parent=11 // pred_check_branch
          %254 = sbr.rel (%p252) target = $region24
        $region23: #{tpu_custom_call.1} parent=11 // pred_region
          _
        $region24: #{tpu_custom_call.1} parent=11 // pred_fallthru
          _
        // Predicated region
        $region25: #{tpu_custom_call.1} parent=11 // pred_check
          %p255 = pneg %p114
        $region26: #{tpu_custom_call.1} parent=11 // pred_check_branch
          %257 = sbr.rel (%p255) target = $region28
        $region27: #{tpu_custom_call.1} parent=11 // pred_region
          _
        $region28: #{tpu_custom_call.1} parent=11 // pred_fallthru
          _
        // Predicated region
        $region29: #{tpu_custom_call.1} parent=11 // pred_check
          %p258 = pneg %p135
        $region30: #{tpu_custom_call.1} parent=11 // pred_check_branch
          %260 = sbr.rel (%p258) target = $region32
        $region31: #{tpu_custom_call.1} parent=11 // pred_region
          _
        $region32: #{tpu_custom_call.1} parent=11 // pred_fallthru
          _
        // Predicated region
        $region33: #{tpu_custom_call.1} parent=11 // pred_check
          %p261 = pneg %p156
        $region34: #{tpu_custom_call.1} parent=11 // pred_check_branch
          %263 = sbr.rel (%p261) target = $region36
        $region35: #{tpu_custom_call.1} parent=11 // pred_region
          _
        $region36: #{tpu_custom_call.1} parent=11 // pred_fallthru
          _
        // Predicated region
        $region37: #{tpu_custom_call.1} parent=11 // pred_check
          %p264 = pneg %p177
        $region38: #{tpu_custom_call.1} parent=11 // pred_check_branch
          %266 = sbr.rel (%p264) target = $region40
        $region39: #{tpu_custom_call.1} parent=11 // pred_region
          _
        $region40: #{tpu_custom_call.1} parent=11 // pred_fallthru
          _
      $region12: #{tpu_custom_call.1} parent=5 // pred_fallthru
        _
      %p267 = scmp.lt.s32.totalorder %s18, 4
      // Predicated region
      $region41: #{tpu_custom_call.1} parent=5 // pred_check
        %p268 = pneg %p267
      $region42: #{tpu_custom_call.1} parent=5 // pred_check_branch
        %270 = sbr.rel (%p268) target = $region44
      $region43: #{tpu_custom_call.1} parent=5 // pred_region
        // Predicated region
        $region45: #{tpu_custom_call.1} parent=43 // pred_check
          %p271 = pneg %p197
        $region46: #{tpu_custom_call.1} parent=43 // pred_check_branch
          %273 = sbr.rel (%p271) target = $region48
        $region47: #{tpu_custom_call.1} parent=43 // pred_region
          %p274 = scmp.lt.s32.totalorder %s25, 1
          %s275 = scalar_select %p274, %s25, 1
          %s276 = scalar_lea.vmem %s8, %s275
        $region48: #{tpu_custom_call.1} parent=43 // pred_fallthru
          _
      $region44: #{tpu_custom_call.1} parent=5 // pred_fallthru
        _
      %p277 = scmp.le.s32.totalorder 1, %s18
      %p278 = scmp.lt.s32.totalorder %s18, 5
      %p279 = pnand %p277, %p278
      %p280 = pneg %p279
      // Predicated region
      $region49: #{tpu_custom_call.1} parent=5 // pred_check
        _
      $region50: #{tpu_custom_call.1} parent=5 // pred_check_branch
        %282 = sbr.rel (%p279) target = $region52
      $region51: #{tpu_custom_call.1} parent=5 // pred_region
        %s283 = ssub.s32 %s18, 1
        %p284 = pneg %p51
        %p285 = pneg %p48
        %p286 = pneg %p72
        %p287 = pneg %p69
        %p288 = pneg %p93
        %p289 = pneg %p90
        %p290 = pneg %p114
        %p291 = pneg %p111
        %p292 = pneg %p135
        %p293 = pneg %p132
        %p294 = pneg %p156
        %p295 = pneg %p153
        %p296 = pneg %p177
        %p297 = pneg %p174
        %p298 = scmp.lt.s32.totalorder %s27, 1
        %s299 = scalar_select %p298, %s27, 1
        %s300 = scalar_lea.vmem %s8, %s299
        %p301 = pneg %p203
        %p302 = pneg %p200
        %p303 = pneg %p231
        %p304 = pneg %p228
        %s305 = sand.u32 %s218, 1
        %s306 = scalar_lea.sflag [#allocation6], %s305
        %s307 = sand.u32 %s218, 1
        %s308 = smul.addr %s307, 128
        %s309 = scalar_lea.vmem [#allocation5], %s308
        %p310 = scmp.lt.s32.totalorder %s27, 1
        %s311 = scalar_select %p310, %s27, 1
        %s312 = scalar_lea.vmem %s8, %s311
        %s313 = smul.u32 8, %s28
        %s314 = smul.u32 %s28, 8
        %s315 = smul.u32 %s314, 56
        %s316 = smul.u32 %s27, 2912
        %s317 = sadd.s32 %s315, %s316
        %s318 = scalar_lea.vmem %s0, %s317
        %p320 = scmp.lt.u32.totalorder 52, 8
        %p321 = pneg %p320
        // Predicated region
        $region53: #{tpu_custom_call.1} parent=51 // pred_check
          _
        $region54: #{tpu_custom_call.1} parent=51 // pred_check_branch
          %323 = sbr.rel (%p320) target = $region56
        $region55: #{tpu_custom_call.1} parent=51 // pred_region
          %s424 = sand.u32 52, 7
          %p425 = scmp.eq.s32.totalorder %s424, 0
          %p426 = pneg %p425
          // Predicated region
          $region68: #{tpu_custom_call.1} parent=55 // pred_check
            _
          $region69: #{tpu_custom_call.1} parent=55 // pred_check_branch
            %428 = sbr.rel (%p425) target = $region71
          $region70: #{tpu_custom_call.1} parent=55 // pred_region
            %s429 = sand.u32 52, 7
            %s430 = ssub.s32 52, %s429
            %s431 = scalar_lea.vmem %s318, %s430
            %s432 = ssub.s32 52, %s429
            %s433 = scalar_lea.vmem [#allocation2], %s432
            loop: start=0, step=1, limit=1
            $region72: #{tpu_custom_call.1} parent=70 // loop_pre_header
              _
            $region73: #{tpu_custom_call.1} parent=70 // loop_header
              %s435 = sphi 0, %s439
              %p436 = scmp.ge.s32.totalorder %s435, 1
              %s440 = sphi %s318, %s318
              %s441 = sphi [#allocation2], [#allocation2]
            $region74: #{tpu_custom_call.1} parent=70 // loop_header_branch
              %438 = sbr.rel (%p436) target = $region78
            $region75: #{tpu_custom_call.1} parent=70 // loop_body
              %v442 = vld [vmem:[%s440] sm:$0xff]
              %443 = vst [vmem:[%s441] sm:$0xff] %v442
              %v444 = vld [vmem:[%s440 + $0x8] sm:$0xff]
              %445 = vst [vmem:[%s441 + $0x8] sm:$0xff] %v444
              %v446 = vld [vmem:[%s440 + $0x10] sm:$0xff]
              %447 = vst [vmem:[%s441 + $0x10] sm:$0xff] %v446
              %v448 = vld [vmem:[%s440 + $0x18] sm:$0xff]
              %449 = vst [vmem:[%s441 + $0x18] sm:$0xff] %v448
              %v450 = vld [vmem:[%s440 + $0x20] sm:$0xff]
              %451 = vst [vmem:[%s441 + $0x20] sm:$0xff] %v450
              %v452 = vld [vmem:[%s440 + $0x28] sm:$0xff]
              %453 = vst [vmem:[%s441 + $0x28] sm:$0xff] %v452
              %v454 = vld [vmem:[%s440 + $0x38] sm:$0xff]
              %455 = vst [vmem:[%s441 + $0x38] sm:$0xff] %v454
              %v456 = vld [vmem:[%s440 + $0x40] sm:$0xff]
              %457 = vst [vmem:[%s441 + $0x40] sm:$0xff] %v456
              %v458 = vld [vmem:[%s440 + $0x48] sm:$0xff]
              %459 = vst [vmem:[%s441 + $0x48] sm:$0xff] %v458
              %v460 = vld [vmem:[%s440 + $0x50] sm:$0xff]
              %461 = vst [vmem:[%s441 + $0x50] sm:$0xff] %v460
              %v462 = vld [vmem:[%s440 + $0x58] sm:$0xff]
              %463 = vst [vmem:[%s441 + $0x58] sm:$0xff] %v462
              %v464 = vld [vmem:[%s440 + $0x60] sm:$0xff]
              %465 = vst [vmem:[%s441 + $0x60] sm:$0xff] %v464
              %v466 = vld [vmem:[%s440 + $0x70] sm:$0xff]
              %467 = vst [vmem:[%s441 + $0x70] sm:$0xff] %v466
              %v468 = vld [vmem:[%s440 + $0x78] sm:$0xff]
              %469 = vst [vmem:[%s441 + $0x78] sm:$0xff] %v468
              %v470 = vld [vmem:[%s440 + $0x80] sm:$0xff]
              %471 = vst [vmem:[%s441 + $0x80] sm:$0xff] %v470
              %v472 = vld [vmem:[%s440 + $0x88] sm:$0xff]
              %473 = vst [vmem:[%s441 + $0x88] sm:$0xff] %v472
              %v474 = vld [vmem:[%s440 + $0x90] sm:$0xff]
              %475 = vst [vmem:[%s441 + $0x90] sm:$0xff] %v474
              %v476 = vld [vmem:[%s440 + $0x98] sm:$0xff]
              %477 = vst [vmem:[%s441 + $0x98] sm:$0xff] %v476
              %v478 = vld [vmem:[%s440 + $0xa8] sm:$0xff]
              %479 = vst [vmem:[%s441 + $0xa8] sm:$0xff] %v478
              %v480 = vld [vmem:[%s440 + $0xb0] sm:$0xff]
              %481 = vst [vmem:[%s441 + $0xb0] sm:$0xff] %v480
              %v482 = vld [vmem:[%s440 + $0xb8] sm:$0xff]
              %483 = vst [vmem:[%s441 + $0xb8] sm:$0xff] %v482
              %v484 = vld [vmem:[%s440 + $0xc0] sm:$0xff]
              %485 = vst [vmem:[%s441 + $0xc0] sm:$0xff] %v484
              %v486 = vld [vmem:[%s440 + $0xc8] sm:$0xff]
              %487 = vst [vmem:[%s441 + $0xc8] sm:$0xff] %v486
              %v488 = vld [vmem:[%s440 + $0xd0] sm:$0xff]
              %489 = vst [vmem:[%s441 + $0xd0] sm:$0xff] %v488
              %v490 = vld [vmem:[%s440 + $0xe0] sm:$0xff]
              %491 = vst [vmem:[%s441 + $0xe0] sm:$0xff] %v490
              %v492 = vld [vmem:[%s440 + $0xe8] sm:$0xff]
              %493 = vst [vmem:[%s441 + $0xe8] sm:$0xff] %v492
              %v494 = vld [vmem:[%s440 + $0xf0] sm:$0xff]
              %495 = vst [vmem:[%s441 + $0xf0] sm:$0xff] %v494
              %v496 = vld [vmem:[%s440 + $0xf8] sm:$0xff]
              %497 = vst [vmem:[%s441 + $0xf8] sm:$0xff] %v496
              %v498 = vld [vmem:[%s440 + $0x100] sm:$0xff]
              %499 = vst [vmem:[%s441 + $0x100] sm:$0xff] %v498
              %v500 = vld [vmem:[%s440 + $0x108] sm:$0xff]
              %501 = vst [vmem:[%s441 + $0x108] sm:$0xff] %v500
              %v502 = vld [vmem:[%s440 + $0x118] sm:$0xff]
              %503 = vst [vmem:[%s441 + $0x118] sm:$0xff] %v502
              %v504 = vld [vmem:[%s440 + $0x120] sm:$0xff]
              %505 = vst [vmem:[%s441 + $0x120] sm:$0xff] %v504
              %v506 = vld [vmem:[%s440 + $0x128] sm:$0xff]
              %507 = vst [vmem:[%s441 + $0x128] sm:$0xff] %v506
              %v508 = vld [vmem:[%s440 + $0x130] sm:$0xff]
              %509 = vst [vmem:[%s441 + $0x130] sm:$0xff] %v508
              %v510 = vld [vmem:[%s440 + $0x138] sm:$0xff]
              %511 = vst [vmem:[%s441 + $0x138] sm:$0xff] %v510
              %v512 = vld [vmem:[%s440 + $0x140] sm:$0xff]
              %513 = vst [vmem:[%s441 + $0x140] sm:$0xff] %v512
              %v514 = vld [vmem:[%s440 + $0x150] sm:$0xff]
              %515 = vst [vmem:[%s441 + $0x150] sm:$0xff] %v514
              %v516 = vld [vmem:[%s440 + $0x158] sm:$0xff]
              %517 = vst [vmem:[%s441 + $0x158] sm:$0xff] %v516
              %v518 = vld [vmem:[%s440 + $0x160] sm:$0xff]
              %519 = vst [vmem:[%s441 + $0x160] sm:$0xff] %v518
              %v520 = vld [vmem:[%s440 + $0x168] sm:$0xff]
              %521 = vst [vmem:[%s441 + $0x168] sm:$0xff] %v520
              %v522 = vld [vmem:[%s440 + $0x170] sm:$0xff]
              %523 = vst [vmem:[%s441 + $0x170] sm:$0xff] %v522
              %v524 = vld [vmem:[%s440 + $0x178] sm:$0xff]
              %525 = vst [vmem:[%s441 + $0x178] sm:$0xff] %v524
              %v526 = vld [vmem:[%s440 + $0x188] sm:$0xff]
              %527 = vst [vmem:[%s441 + $0x188] sm:$0xff] %v526
              %v528 = vld [vmem:[%s440 + $0x190] sm:$0xff]
              %529 = vst [vmem:[%s441 + $0x190] sm:$0xff] %v528
              %v530 = vld [vmem:[%s440 + $0x198] sm:$0xff]
              %531 = vst [vmem:[%s441 + $0x198] sm:$0xff] %v530
              %v532 = vld [vmem:[%s440 + $0x1a0] sm:$0xff]
              %533 = vst [vmem:[%s441 + $0x1a0] sm:$0xff] %v532
              %v534 = vld [vmem:[%s440 + $0x1a8] sm:$0xff]
              %535 = vst [vmem:[%s441 + $0x1a8] sm:$0xff] %v534
              %v536 = vld [vmem:[%s440 + $0x1b0] sm:$0xff]
              %537 = vst [vmem:[%s441 + $0x1b0] sm:$0xff] %v536
              %v538 = vld [vmem:[%s440 + $0x1c0] sm:$0xff]
              %539 = vst [vmem:[%s441 + $0x1c0] sm:$0xff] %v538
              %v540 = vld [vmem:[%s440 + $0x1c8] sm:$0xff]
              %541 = vst [vmem:[%s441 + $0x1c8] sm:$0xff] %v540
              %v542 = vld [vmem:[%s440 + $0x1d0] sm:$0xff]
              %543 = vst [vmem:[%s441 + $0x1d0] sm:$0xff] %v542
              %v544 = vld [vmem:[%s440 + $0x1d8] sm:$0xff]
              %545 = vst [vmem:[%s441 + $0x1d8] sm:$0xff] %v544
              %v546 = vld [vmem:[%s440 + $0x1e0] sm:$0xff]
              %547 = vst [vmem:[%s441 + $0x1e0] sm:$0xff] %v546
              %v548 = vld [vmem:[%s440 + $0x1e8] sm:$0xff]
              %549 = vst [vmem:[%s441 + $0x1e8] sm:$0xff] %v548
              %v550 = vld [vmem:[%s440 + $0x1f8] sm:$0xff]
              %551 = vst [vmem:[%s441 + $0x1f8] sm:$0xff] %v550
              %v552 = vld [vmem:[%s440 + $0x200] sm:$0xff]
              %553 = vst [vmem:[%s441 + $0x200] sm:$0xff] %v552
              %v554 = vld [vmem:[%s440 + $0x208] sm:$0xff]
              %555 = vst [vmem:[%s441 + $0x208] sm:$0xff] %v554
              %v556 = vld [vmem:[%s440 + $0x210] sm:$0xff]
              %557 = vst [vmem:[%s441 + $0x210] sm:$0xff] %v556
              %v558 = vld [vmem:[%s440 + $0x218] sm:$0xff]
              %559 = vst [vmem:[%s441 + $0x218] sm:$0xff] %v558
              %v560 = vld [vmem:[%s440 + $0x220] sm:$0xff]
              %561 = vst [vmem:[%s441 + $0x220] sm:$0xff] %v560
              %v562 = vld [vmem:[%s440 + $0x230] sm:$0xff]
              %563 = vst [vmem:[%s441 + $0x230] sm:$0xff] %v562
              %v564 = vld [vmem:[%s440 + $0x238] sm:$0xff]
              %565 = vst [vmem:[%s441 + $0x238] sm:$0xff] %v564
              %v566 = vld [vmem:[%s440 + $0x240] sm:$0xff]
              %567 = vst [vmem:[%s441 + $0x240] sm:$0xff] %v566
              %v568 = vld [vmem:[%s440 + $0x248] sm:$0xff]
              %569 = vst [vmem:[%s441 + $0x248] sm:$0xff] %v568
              %v570 = vld [vmem:[%s440 + $0x250] sm:$0xff]
              %571 = vst [vmem:[%s441 + $0x250] sm:$0xff] %v570
              %v572 = vld [vmem:[%s440 + $0x258] sm:$0xff]
              %573 = vst [vmem:[%s441 + $0x258] sm:$0xff] %v572
              %v574 = vld [vmem:[%s440 + $0x268] sm:$0xff]
              %575 = vst [vmem:[%s441 + $0x268] sm:$0xff] %v574
              %v576 = vld [vmem:[%s440 + $0x270] sm:$0xff]
              %577 = vst [vmem:[%s441 + $0x270] sm:$0xff] %v576
              %v578 = vld [vmem:[%s440 + $0x278] sm:$0xff]
              %579 = vst [vmem:[%s441 + $0x278] sm:$0xff] %v578
              %v580 = vld [vmem:[%s440 + $0x280] sm:$0xff]
              %581 = vst [vmem:[%s441 + $0x280] sm:$0xff] %v580
              %v582 = vld [vmem:[%s440 + $0x288] sm:$0xff]
              %583 = vst [vmem:[%s441 + $0x288] sm:$0xff] %v582
              %v584 = vld [vmem:[%s440 + $0x290] sm:$0xff]
              %585 = vst [vmem:[%s441 + $0x290] sm:$0xff] %v584
              %v586 = vld [vmem:[%s440 + $0x2a0] sm:$0xff]
              %587 = vst [vmem:[%s441 + $0x2a0] sm:$0xff] %v586
              %v588 = vld [vmem:[%s440 + $0x2a8] sm:$0xff]
              %589 = vst [vmem:[%s441 + $0x2a8] sm:$0xff] %v588
              %v590 = vld [vmem:[%s440 + $0x2b0] sm:$0xff]
              %591 = vst [vmem:[%s441 + $0x2b0] sm:$0xff] %v590
              %v592 = vld [vmem:[%s440 + $0x2b8] sm:$0xff]
              %593 = vst [vmem:[%s441 + $0x2b8] sm:$0xff] %v592
              %v594 = vld [vmem:[%s440 + $0x2c0] sm:$0xff]
              %595 = vst [vmem:[%s441 + $0x2c0] sm:$0xff] %v594
              %v596 = vld [vmem:[%s440 + $0x2c8] sm:$0xff]
              %597 = vst [vmem:[%s441 + $0x2c8] sm:$0xff] %v596
              %v598 = vld [vmem:[%s440 + $0x2d8] sm:$0xff]
              %599 = vst [vmem:[%s441 + $0x2d8] sm:$0xff] %v598
              %v600 = vld [vmem:[%s440 + $0x2e0] sm:$0xff]
              %601 = vst [vmem:[%s441 + $0x2e0] sm:$0xff] %v600
              %v602 = vld [vmem:[%s440 + $0x2e8] sm:$0xff]
              %603 = vst [vmem:[%s441 + $0x2e8] sm:$0xff] %v602
              %v604 = vld [vmem:[%s440 + $0x2f0] sm:$0xff]
              %605 = vst [vmem:[%s441 + $0x2f0] sm:$0xff] %v604
              %v606 = vld [vmem:[%s440 + $0x2f8] sm:$0xff]
              %607 = vst [vmem:[%s441 + $0x2f8] sm:$0xff] %v606
              %v608 = vld [vmem:[%s440 + $0x300] sm:$0xff]
              %609 = vst [vmem:[%s441 + $0x300] sm:$0xff] %v608
              %v610 = vld [vmem:[%s440 + $0x310] sm:$0xff]
              %611 = vst [vmem:[%s441 + $0x310] sm:$0xff] %v610
              %v612 = vld [vmem:[%s440 + $0x318] sm:$0xff]
              %613 = vst [vmem:[%s441 + $0x318] sm:$0xff] %v612
              %v614 = vld [vmem:[%s440 + $0x320] sm:$0xff]
              %615 = vst [vmem:[%s441 + $0x320] sm:$0xff] %v614
              %v616 = vld [vmem:[%s440 + $0x328] sm:$0xff]
              %617 = vst [vmem:[%s441 + $0x328] sm:$0xff] %v616
              %v618 = vld [vmem:[%s440 + $0x330] sm:$0xff]
              %619 = vst [vmem:[%s441 + $0x330] sm:$0xff] %v618
              %v620 = vld [vmem:[%s440 + $0x338] sm:$0xff]
              %621 = vst [vmem:[%s441 + $0x338] sm:$0xff] %v620
              %v622 = vld [vmem:[%s440 + $0x348] sm:$0xff]
              %623 = vst [vmem:[%s441 + $0x348] sm:$0xff] %v622
              %v624 = vld [vmem:[%s440 + $0x350] sm:$0xff]
              %625 = vst [vmem:[%s441 + $0x350] sm:$0xff] %v624
              %v626 = vld [vmem:[%s440 + $0x358] sm:$0xff]
              %627 = vst [vmem:[%s441 + $0x358] sm:$0xff] %v626
              %v628 = vld [vmem:[%s440 + $0x360] sm:$0xff]
              %629 = vst [vmem:[%s441 + $0x360] sm:$0xff] %v628
              %v630 = vld [vmem:[%s440 + $0x368] sm:$0xff]
              %631 = vst [vmem:[%s441 + $0x368] sm:$0xff] %v630
              %v632 = vld [vmem:[%s440 + $0x370] sm:$0xff]
              %633 = vst [vmem:[%s441 + $0x370] sm:$0xff] %v632
              %v634 = vld [vmem:[%s440 + $0x380] sm:$0xff]
              %635 = vst [vmem:[%s441 + $0x380] sm:$0xff] %v634
              %v636 = vld [vmem:[%s440 + $0x388] sm:$0xff]
              %637 = vst [vmem:[%s441 + $0x388] sm:$0xff] %v636
              %v638 = vld [vmem:[%s440 + $0x390] sm:$0xff]
              %639 = vst [vmem:[%s441 + $0x390] sm:$0xff] %v638
              %v640 = vld [vmem:[%s440 + $0x398] sm:$0xff]
              %641 = vst [vmem:[%s441 + $0x398] sm:$0xff] %v640
              %v642 = vld [vmem:[%s440 + $0x3a0] sm:$0xff]
              %643 = vst [vmem:[%s441 + $0x3a0] sm:$0xff] %v642
              %v644 = vld [vmem:[%s440 + $0x3a8] sm:$0xff]
              %645 = vst [vmem:[%s441 + $0x3a8] sm:$0xff] %v644
              %v646 = vld [vmem:[%s440 + $0x3b8] sm:$0xff]
              %647 = vst [vmem:[%s441 + $0x3b8] sm:$0xff] %v646
              %v648 = vld [vmem:[%s440 + $0x3c0] sm:$0xff]
              %649 = vst [vmem:[%s441 + $0x3c0] sm:$0xff] %v648
              %v650 = vld [vmem:[%s440 + $0x3c8] sm:$0xff]
              %651 = vst [vmem:[%s441 + $0x3c8] sm:$0xff] %v650
              %v652 = vld [vmem:[%s440 + $0x3d0] sm:$0xff]
              %653 = vst [vmem:[%s441 + $0x3d0] sm:$0xff] %v652
              %v654 = vld [vmem:[%s440 + $0x3d8] sm:$0xff]
              %655 = vst [vmem:[%s441 + $0x3d8] sm:$0xff] %v654
              %v656 = vld [vmem:[%s440 + $0x3e0] sm:$0xff]
              %657 = vst [vmem:[%s441 + $0x3e0] sm:$0xff] %v656
              %v658 = vld [vmem:[%s440 + $0x3f0] sm:$0xff]
              %659 = vst [vmem:[%s441 + $0x3f0] sm:$0xff] %v658
              %v660 = vld [vmem:[%s440 + $0x3f8] sm:$0xff]
              %661 = vst [vmem:[%s441 + $0x3f8] sm:$0xff] %v660
              %v662 = vld [vmem:[%s440 + $0x400] sm:$0xff]
              %663 = vst [vmem:[%s441 + $0x400] sm:$0xff] %v662
              %v664 = vld [vmem:[%s440 + $0x408] sm:$0xff]
              %665 = vst [vmem:[%s441 + $0x408] sm:$0xff] %v664
              %v666 = vld [vmem:[%s440 + $0x410] sm:$0xff]
              %667 = vst [vmem:[%s441 + $0x410] sm:$0xff] %v666
              %v668 = vld [vmem:[%s440 + $0x418] sm:$0xff]
              %669 = vst [vmem:[%s441 + $0x418] sm:$0xff] %v668
              %v670 = vld [vmem:[%s440 + $0x428] sm:$0xff]
              %671 = vst [vmem:[%s441 + $0x428] sm:$0xff] %v670
              %v672 = vld [vmem:[%s440 + $0x430] sm:$0xff]
              %673 = vst [vmem:[%s441 + $0x430] sm:$0xff] %v672
              %v674 = vld [vmem:[%s440 + $0x438] sm:$0xff]
              %675 = vst [vmem:[%s441 + $0x438] sm:$0xff] %v674
              %v676 = vld [vmem:[%s440 + $0x440] sm:$0xff]
              %677 = vst [vmem:[%s441 + $0x440] sm:$0xff] %v676
              %v678 = vld [vmem:[%s440 + $0x448] sm:$0xff]
              %679 = vst [vmem:[%s441 + $0x448] sm:$0xff] %v678
              %v680 = vld [vmem:[%s440 + $0x450] sm:$0xff]
              %681 = vst [vmem:[%s441 + $0x450] sm:$0xff] %v680
              %v682 = vld [vmem:[%s440 + $0x460] sm:$0xff]
              %683 = vst [vmem:[%s441 + $0x460] sm:$0xff] %v682
              %v684 = vld [vmem:[%s440 + $0x468] sm:$0xff]
              %685 = vst [vmem:[%s441 + $0x468] sm:$0xff] %v684
              %v686 = vld [vmem:[%s440 + $0x470] sm:$0xff]
              %687 = vst [vmem:[%s441 + $0x470] sm:$0xff] %v686
              %v688 = vld [vmem:[%s440 + $0x478] sm:$0xff]
              %689 = vst [vmem:[%s441 + $0x478] sm:$0xff] %v688
              %v690 = vld [vmem:[%s440 + $0x480] sm:$0xff]
              %691 = vst [vmem:[%s441 + $0x480] sm:$0xff] %v690
              %v692 = vld [vmem:[%s440 + $0x488] sm:$0xff]
              %693 = vst [vmem:[%s441 + $0x488] sm:$0xff] %v692
              %v694 = vld [vmem:[%s440 + $0x498] sm:$0xff]
              %695 = vst [vmem:[%s441 + $0x498] sm:$0xff] %v694
              %v696 = vld [vmem:[%s440 + $0x4a0] sm:$0xff]
              %697 = vst [vmem:[%s441 + $0x4a0] sm:$0xff] %v696
              %v698 = vld [vmem:[%s440 + $0x4a8] sm:$0xff]
              %699 = vst [vmem:[%s441 + $0x4a8] sm:$0xff] %v698
              %v700 = vld [vmem:[%s440 + $0x4b0] sm:$0xff]
              %701 = vst [vmem:[%s441 + $0x4b0] sm:$0xff] %v700
              %v702 = vld [vmem:[%s440 + $0x4b8] sm:$0xff]
              %703 = vst [vmem:[%s441 + $0x4b8] sm:$0xff] %v702
              %v704 = vld [vmem:[%s440 + $0x4c0] sm:$0xff]
              %705 = vst [vmem:[%s441 + $0x4c0] sm:$0xff] %v704
              %v706 = vld [vmem:[%s440 + $0x4d0] sm:$0xff]
              %707 = vst [vmem:[%s441 + $0x4d0] sm:$0xff] %v706
              %v708 = vld [vmem:[%s440 + $0x4d8] sm:$0xff]
              %709 = vst [vmem:[%s441 + $0x4d8] sm:$0xff] %v708
              %v710 = vld [vmem:[%s440 + $0x4e0] sm:$0xff]
              %711 = vst [vmem:[%s441 + $0x4e0] sm:$0xff] %v710
              %v712 = vld [vmem:[%s440 + $0x4e8] sm:$0xff]
              %713 = vst [vmem:[%s441 + $0x4e8] sm:$0xff] %v712
              %v714 = vld [vmem:[%s440 + $0x4f0] sm:$0xff]
              %715 = vst [vmem:[%s441 + $0x4f0] sm:$0xff] %v714
              %v716 = vld [vmem:[%s440 + $0x4f8] sm:$0xff]
              %717 = vst [vmem:[%s441 + $0x4f8] sm:$0xff] %v716
              %v718 = vld [vmem:[%s440 + $0x508] sm:$0xff]
              %719 = vst [vmem:[%s441 + $0x508] sm:$0xff] %v718
              %v720 = vld [vmem:[%s440 + $0x510] sm:$0xff]
              %721 = vst [vmem:[%s441 + $0x510] sm:$0xff] %v720
              %v722 = vld [vmem:[%s440 + $0x518] sm:$0xff]
              %723 = vst [vmem:[%s441 + $0x518] sm:$0xff] %v722
              %v724 = vld [vmem:[%s440 + $0x520] sm:$0xff]
              %725 = vst [vmem:[%s441 + $0x520] sm:$0xff] %v724
              %v726 = vld [vmem:[%s440 + $0x528] sm:$0xff]
              %727 = vst [vmem:[%s441 + $0x528] sm:$0xff] %v726
              %v728 = vld [vmem:[%s440 + $0x530] sm:$0xff]
              %729 = vst [vmem:[%s441 + $0x530] sm:$0xff] %v728
              %v730 = vld [vmem:[%s440 + $0x540] sm:$0xff]
              %731 = vst [vmem:[%s441 + $0x540] sm:$0xff] %v730
              %v732 = vld [vmem:[%s440 + $0x548] sm:$0xff]
              %733 = vst [vmem:[%s441 + $0x548] sm:$0xff] %v732
              %v734 = vld [vmem:[%s440 + $0x550] sm:$0xff]
              %735 = vst [vmem:[%s441 + $0x550] sm:$0xff] %v734
              %v736 = vld [vmem:[%s440 + $0x558] sm:$0xff]
              %737 = vst [vmem:[%s441 + $0x558] sm:$0xff] %v736
              %v738 = vld [vmem:[%s440 + $0x560] sm:$0xff]
              %739 = vst [vmem:[%s441 + $0x560] sm:$0xff] %v738
              %v740 = vld [vmem:[%s440 + $0x568] sm:$0xff]
              %741 = vst [vmem:[%s441 + $0x568] sm:$0xff] %v740
              %v742 = vld [vmem:[%s440 + $0x578] sm:$0xff]
              %743 = vst [vmem:[%s441 + $0x578] sm:$0xff] %v742
              %v744 = vld [vmem:[%s440 + $0x580] sm:$0xff]
              %745 = vst [vmem:[%s441 + $0x580] sm:$0xff] %v744
              %v746 = vld [vmem:[%s440 + $0x588] sm:$0xff]
              %747 = vst [vmem:[%s441 + $0x588] sm:$0xff] %v746
              %v748 = vld [vmem:[%s440 + $0x590] sm:$0xff]
              %749 = vst [vmem:[%s441 + $0x590] sm:$0xff] %v748
              %v750 = vld [vmem:[%s440 + $0x598] sm:$0xff]
              %751 = vst [vmem:[%s441 + $0x598] sm:$0xff] %v750
              %v752 = vld [vmem:[%s440 + $0x5a0] sm:$0xff]
              %753 = vst [vmem:[%s441 + $0x5a0] sm:$0xff] %v752
              %v754 = vld [vmem:[%s440 + $0x5b0] sm:$0xff]
              %755 = vst [vmem:[%s441 + $0x5b0] sm:$0xff] %v754
              %v756 = vld [vmem:[%s440 + $0x5b8] sm:$0xff]
              %757 = vst [vmem:[%s441 + $0x5b8] sm:$0xff] %v756
              %v758 = vld [vmem:[%s440 + $0x5c0] sm:$0xff]
              %759 = vst [vmem:[%s441 + $0x5c0] sm:$0xff] %v758
              %v760 = vld [vmem:[%s440 + $0x5c8] sm:$0xff]
              %761 = vst [vmem:[%s441 + $0x5c8] sm:$0xff] %v760
              %v762 = vld [vmem:[%s440 + $0x5d0] sm:$0xff]
              %763 = vst [vmem:[%s441 + $0x5d0] sm:$0xff] %v762
              %v764 = vld [vmem:[%s440 + $0x5d8] sm:$0xff]
              %765 = vst [vmem:[%s441 + $0x5d8] sm:$0xff] %v764
              %v766 = vld [vmem:[%s440 + $0x5e8] sm:$0xff]
              %767 = vst [vmem:[%s441 + $0x5e8] sm:$0xff] %v766
              %v768 = vld [vmem:[%s440 + $0x5f0] sm:$0xff]
              %769 = vst [vmem:[%s441 + $0x5f0] sm:$0xff] %v768
              %v770 = vld [vmem:[%s440 + $0x5f8] sm:$0xff]
              %771 = vst [vmem:[%s441 + $0x5f8] sm:$0xff] %v770
              %v772 = vld [vmem:[%s440 + $0x600] sm:$0xff]
              %773 = vst [vmem:[%s441 + $0x600] sm:$0xff] %v772
              %v774 = vld [vmem:[%s440 + $0x608] sm:$0xff]
              %775 = vst [vmem:[%s441 + $0x608] sm:$0xff] %v774
              %v776 = vld [vmem:[%s440 + $0x610] sm:$0xff]
              %777 = vst [vmem:[%s441 + $0x610] sm:$0xff] %v776
              %v778 = vld [vmem:[%s440 + $0x620] sm:$0xff]
              %779 = vst [vmem:[%s441 + $0x620] sm:$0xff] %v778
              %v780 = vld [vmem:[%s440 + $0x628] sm:$0xff]
              %781 = vst [vmem:[%s441 + $0x628] sm:$0xff] %v780
              %v782 = vld [vmem:[%s440 + $0x630] sm:$0xff]
              %783 = vst [vmem:[%s441 + $0x630] sm:$0xff] %v782
              %v784 = vld [vmem:[%s440 + $0x638] sm:$0xff]
              %785 = vst [vmem:[%s441 + $0x638] sm:$0xff] %v784
              %v786 = vld [vmem:[%s440 + $0x640] sm:$0xff]
              %787 = vst [vmem:[%s441 + $0x640] sm:$0xff] %v786
              %v788 = vld [vmem:[%s440 + $0x648] sm:$0xff]
              %789 = vst [vmem:[%s441 + $0x648] sm:$0xff] %v788
              %v790 = vld [vmem:[%s440 + $0x658] sm:$0xff]
              %791 = vst [vmem:[%s441 + $0x658] sm:$0xff] %v790
              %v792 = vld [vmem:[%s440 + $0x660] sm:$0xff]
              %793 = vst [vmem:[%s441 + $0x660] sm:$0xff] %v792
              %v794 = vld [vmem:[%s440 + $0x668] sm:$0xff]
              %795 = vst [vmem:[%s441 + $0x668] sm:$0xff] %v794
              %v796 = vld [vmem:[%s440 + $0x670] sm:$0xff]
              %797 = vst [vmem:[%s441 + $0x670] sm:$0xff] %v796
              %v798 = vld [vmem:[%s440 + $0x678] sm:$0xff]
              %799 = vst [vmem:[%s441 + $0x678] sm:$0xff] %v798
              %v800 = vld [vmem:[%s440 + $0x680] sm:$0xff]
              %801 = vst [vmem:[%s441 + $0x680] sm:$0xff] %v800
              %v802 = vld [vmem:[%s440 + $0x690] sm:$0xff]
              %803 = vst [vmem:[%s441 + $0x690] sm:$0xff] %v802
              %v804 = vld [vmem:[%s440 + $0x698] sm:$0xff]
              %805 = vst [vmem:[%s441 + $0x698] sm:$0xff] %v804
              %v806 = vld [vmem:[%s440 + $0x6a0] sm:$0xff]
              %807 = vst [vmem:[%s441 + $0x6a0] sm:$0xff] %v806
              %v808 = vld [vmem:[%s440 + $0x6a8] sm:$0xff]
              %809 = vst [vmem:[%s441 + $0x6a8] sm:$0xff] %v808
              %v810 = vld [vmem:[%s440 + $0x6b0] sm:$0xff]
              %811 = vst [vmem:[%s441 + $0x6b0] sm:$0xff] %v810
              %v812 = vld [vmem:[%s440 + $0x6b8] sm:$0xff]
              %813 = vst [vmem:[%s441 + $0x6b8] sm:$0xff] %v812
              %v814 = vld [vmem:[%s440 + $0x6c8] sm:$0xff]
              %815 = vst [vmem:[%s441 + $0x6c8] sm:$0xff] %v814
              %v816 = vld [vmem:[%s440 + $0x6d0] sm:$0xff]
              %817 = vst [vmem:[%s441 + $0x6d0] sm:$0xff] %v816
              %v818 = vld [vmem:[%s440 + $0x6d8] sm:$0xff]
              %819 = vst [vmem:[%s441 + $0x6d8] sm:$0xff] %v818
              %v820 = vld [vmem:[%s440 + $0x6e0] sm:$0xff]
              %821 = vst [vmem:[%s441 + $0x6e0] sm:$0xff] %v820
              %v822 = vld [vmem:[%s440 + $0x6e8] sm:$0xff]
              %823 = vst [vmem:[%s441 + $0x6e8] sm:$0xff] %v822
              %v824 = vld [vmem:[%s440 + $0x6f0] sm:$0xff]
              %825 = vst [vmem:[%s441 + $0x6f0] sm:$0xff] %v824
              %v826 = vld [vmem:[%s440 + $0x700] sm:$0xff]
              %827 = vst [vmem:[%s441 + $0x700] sm:$0xff] %v826
              %v828 = vld [vmem:[%s440 + $0x708] sm:$0xff]
              %829 = vst [vmem:[%s441 + $0x708] sm:$0xff] %v828
              %v830 = vld [vmem:[%s440 + $0x710] sm:$0xff]
              %831 = vst [vmem:[%s441 + $0x710] sm:$0xff] %v830
              %v832 = vld [vmem:[%s440 + $0x718] sm:$0xff]
              %833 = vst [vmem:[%s441 + $0x718] sm:$0xff] %v832
              %v834 = vld [vmem:[%s440 + $0x720] sm:$0xff]
              %835 = vst [vmem:[%s441 + $0x720] sm:$0xff] %v834
              %v836 = vld [vmem:[%s440 + $0x728] sm:$0xff]
              %837 = vst [vmem:[%s441 + $0x728] sm:$0xff] %v836
              %v838 = vld [vmem:[%s440 + $0x738] sm:$0xff]
              %839 = vst [vmem:[%s441 + $0x738] sm:$0xff] %v838
              %v840 = vld [vmem:[%s440 + $0x740] sm:$0xff]
              %841 = vst [vmem:[%s441 + $0x740] sm:$0xff] %v840
              %v842 = vld [vmem:[%s440 + $0x748] sm:$0xff]
              %843 = vst [vmem:[%s441 + $0x748] sm:$0xff] %v842
              %v844 = vld [vmem:[%s440 + $0x750] sm:$0xff]
              %845 = vst [vmem:[%s441 + $0x750] sm:$0xff] %v844
              %v846 = vld [vmem:[%s440 + $0x758] sm:$0xff]
              %847 = vst [vmem:[%s441 + $0x758] sm:$0xff] %v846
              %v848 = vld [vmem:[%s440 + $0x760] sm:$0xff]
              %849 = vst [vmem:[%s441 + $0x760] sm:$0xff] %v848
              %v850 = vld [vmem:[%s440 + $0x770] sm:$0xff]
              %851 = vst [vmem:[%s441 + $0x770] sm:$0xff] %v850
              %v852 = vld [vmem:[%s440 + $0x778] sm:$0xff]
              %853 = vst [vmem:[%s441 + $0x778] sm:$0xff] %v852
              %v854 = vld [vmem:[%s440 + $0x780] sm:$0xff]
              %855 = vst [vmem:[%s441 + $0x780] sm:$0xff] %v854
              %v856 = vld [vmem:[%s440 + $0x788] sm:$0xff]
              %857 = vst [vmem:[%s441 + $0x788] sm:$0xff] %v856
              %v858 = vld [vmem:[%s440 + $0x790] sm:$0xff]
              %859 = vst [vmem:[%s441 + $0x790] sm:$0xff] %v858
              %v860 = vld [vmem:[%s440 + $0x798] sm:$0xff]
              %861 = vst [vmem:[%s441 + $0x798] sm:$0xff] %v860
              %v862 = vld [vmem:[%s440 + $0x7a8] sm:$0xff]
              %863 = vst [vmem:[%s441 + $0x7a8] sm:$0xff] %v862
              %v864 = vld [vmem:[%s440 + $0x7b0] sm:$0xff]
              %865 = vst [vmem:[%s441 + $0x7b0] sm:$0xff] %v864
              %v866 = vld [vmem:[%s440 + $0x7b8] sm:$0xff]
              %867 = vst [vmem:[%s441 + $0x7b8] sm:$0xff] %v866
              %v868 = vld [vmem:[%s440 + $0x7c0] sm:$0xff]
              %869 = vst [vmem:[%s441 + $0x7c0] sm:$0xff] %v868
              %v870 = vld [vmem:[%s440 + $0x7c8] sm:$0xff]
              %871 = vst [vmem:[%s441 + $0x7c8] sm:$0xff] %v870
              %v872 = vld [vmem:[%s440 + $0x7d0] sm:$0xff]
              %873 = vst [vmem:[%s441 + $0x7d0] sm:$0xff] %v872
              %v874 = vld [vmem:[%s440 + $0x7e0] sm:$0xff]
              %875 = vst [vmem:[%s441 + $0x7e0] sm:$0xff] %v874
              %v876 = vld [vmem:[%s440 + $0x7e8] sm:$0xff]
              %877 = vst [vmem:[%s441 + $0x7e8] sm:$0xff] %v876
              %v878 = vld [vmem:[%s440 + $0x7f0] sm:$0xff]
              %879 = vst [vmem:[%s441 + $0x7f0] sm:$0xff] %v878
              %v880 = vld [vmem:[%s440 + $0x7f8] sm:$0xff]
              %881 = vst [vmem:[%s441 + $0x7f8] sm:$0xff] %v880
              %v882 = vld [vmem:[%s440 + $0x800] sm:$0xff]
              %883 = vst [vmem:[%s441 + $0x800] sm:$0xff] %v882
              %v884 = vld [vmem:[%s440 + $0x808] sm:$0xff]
              %885 = vst [vmem:[%s441 + $0x808] sm:$0xff] %v884
              %v886 = vld [vmem:[%s440 + $0x818] sm:$0xff]
              %887 = vst [vmem:[%s441 + $0x818] sm:$0xff] %v886
              %v888 = vld [vmem:[%s440 + $0x820] sm:$0xff]
              %889 = vst [vmem:[%s441 + $0x820] sm:$0xff] %v888
              %v890 = vld [vmem:[%s440 + $0x828] sm:$0xff]
              %891 = vst [vmem:[%s441 + $0x828] sm:$0xff] %v890
              %v892 = vld [vmem:[%s440 + $0x830] sm:$0xff]
              %893 = vst [vmem:[%s441 + $0x830] sm:$0xff] %v892
              %v894 = vld [vmem:[%s440 + $0x838] sm:$0xff]
              %895 = vst [vmem:[%s441 + $0x838] sm:$0xff] %v894
              %v896 = vld [vmem:[%s440 + $0x840] sm:$0xff]
              %897 = vst [vmem:[%s441 + $0x840] sm:$0xff] %v896
              %v898 = vld [vmem:[%s440 + $0x850] sm:$0xff]
              %899 = vst [vmem:[%s441 + $0x850] sm:$0xff] %v898
              %v900 = vld [vmem:[%s440 + $0x858] sm:$0xff]
              %901 = vst [vmem:[%s441 + $0x858] sm:$0xff] %v900
              %v902 = vld [vmem:[%s440 + $0x860] sm:$0xff]
              %903 = vst [vmem:[%s441 + $0x860] sm:$0xff] %v902
              %v904 = vld [vmem:[%s440 + $0x868] sm:$0xff]
              %905 = vst [vmem:[%s441 + $0x868] sm:$0xff] %v904
              %v906 = vld [vmem:[%s440 + $0x870] sm:$0xff]
              %907 = vst [vmem:[%s441 + $0x870] sm:$0xff] %v906
              %v908 = vld [vmem:[%s440 + $0x878] sm:$0xff]
              %909 = vst [vmem:[%s441 + $0x878] sm:$0xff] %v908
              %v910 = vld [vmem:[%s440 + $0x888] sm:$0xff]
              %911 = vst [vmem:[%s441 + $0x888] sm:$0xff] %v910
              %v912 = vld [vmem:[%s440 + $0x890] sm:$0xff]
              %913 = vst [vmem:[%s441 + $0x890] sm:$0xff] %v912
              %v914 = vld [vmem:[%s440 + $0x898] sm:$0xff]
              %915 = vst [vmem:[%s441 + $0x898] sm:$0xff] %v914
              %v916 = vld [vmem:[%s440 + $0x8a0] sm:$0xff]
              %917 = vst [vmem:[%s441 + $0x8a0] sm:$0xff] %v916
              %v918 = vld [vmem:[%s440 + $0x8a8] sm:$0xff]
              %919 = vst [vmem:[%s441 + $0x8a8] sm:$0xff] %v918
              %v920 = vld [vmem:[%s440 + $0x8b0] sm:$0xff]
              %921 = vst [vmem:[%s441 + $0x8b0] sm:$0xff] %v920
              %v922 = vld [vmem:[%s440 + $0x8c0] sm:$0xff]
              %923 = vst [vmem:[%s441 + $0x8c0] sm:$0xff] %v922
              %v924 = vld [vmem:[%s440 + $0x8c8] sm:$0xff]
              %925 = vst [vmem:[%s441 + $0x8c8] sm:$0xff] %v924
              %v926 = vld [vmem:[%s440 + $0x8d0] sm:$0xff]
              %927 = vst [vmem:[%s441 + $0x8d0] sm:$0xff] %v926
              %v928 = vld [vmem:[%s440 + $0x8d8] sm:$0xff]
              %929 = vst [vmem:[%s441 + $0x8d8] sm:$0xff] %v928
              %v930 = vld [vmem:[%s440 + $0x8e0] sm:$0xff]
              %931 = vst [vmem:[%s441 + $0x8e0] sm:$0xff] %v930
              %v932 = vld [vmem:[%s440 + $0x8e8] sm:$0xff]
              %933 = vst [vmem:[%s441 + $0x8e8] sm:$0xff] %v932
              %v934 = vld [vmem:[%s440 + $0x8f8] sm:$0xff]
              %935 = vst [vmem:[%s441 + $0x8f8] sm:$0xff] %v934
              %v936 = vld [vmem:[%s440 + $0x900] sm:$0xff]
              %937 = vst [vmem:[%s441 + $0x900] sm:$0xff] %v936
              %v938 = vld [vmem:[%s440 + $0x908] sm:$0xff]
              %939 = vst [vmem:[%s441 + $0x908] sm:$0xff] %v938
              %v940 = vld [vmem:[%s440 + $0x910] sm:$0xff]
              %941 = vst [vmem:[%s441 + $0x910] sm:$0xff] %v940
              %v942 = vld [vmem:[%s440 + $0x918] sm:$0xff]
              %943 = vst [vmem:[%s441 + $0x918] sm:$0xff] %v942
              %v944 = vld [vmem:[%s440 + $0x920] sm:$0xff]
              %945 = vst [vmem:[%s441 + $0x920] sm:$0xff] %v944
              %v946 = vld [vmem:[%s440 + $0x930] sm:$0xff]
              %947 = vst [vmem:[%s441 + $0x930] sm:$0xff] %v946
              %v948 = vld [vmem:[%s440 + $0x938] sm:$0xff]
              %949 = vst [vmem:[%s441 + $0x938] sm:$0xff] %v948
              %v950 = vld [vmem:[%s440 + $0x940] sm:$0xff]
              %951 = vst [vmem:[%s441 + $0x940] sm:$0xff] %v950
              %v952 = vld [vmem:[%s440 + $0x948] sm:$0xff]
              %953 = vst [vmem:[%s441 + $0x948] sm:$0xff] %v952
              %v954 = vld [vmem:[%s440 + $0x950] sm:$0xff]
              %955 = vst [vmem:[%s441 + $0x950] sm:$0xff] %v954
              %v956 = vld [vmem:[%s440 + $0x958] sm:$0xff]
              %957 = vst [vmem:[%s441 + $0x958] sm:$0xff] %v956
              %v958 = vld [vmem:[%s440 + $0x968] sm:$0xff]
              %959 = vst [vmem:[%s441 + $0x968] sm:$0xff] %v958
              %v960 = vld [vmem:[%s440 + $0x970] sm:$0xff]
              %961 = vst [vmem:[%s441 + $0x970] sm:$0xff] %v960
              %v962 = vld [vmem:[%s440 + $0x978] sm:$0xff]
              %963 = vst [vmem:[%s441 + $0x978] sm:$0xff] %v962
              %v964 = vld [vmem:[%s440 + $0x980] sm:$0xff]
              %965 = vst [vmem:[%s441 + $0x980] sm:$0xff] %v964
              %v966 = vld [vmem:[%s440 + $0x988] sm:$0xff]
              %967 = vst [vmem:[%s441 + $0x988] sm:$0xff] %v966
              %v968 = vld [vmem:[%s440 + $0x990] sm:$0xff]
              %969 = vst [vmem:[%s441 + $0x990] sm:$0xff] %v968
            $region76: #{tpu_custom_call.1} parent=70 // loop_footer
              %s439 = sadd.s32 1, %s435
            $region77: #{tpu_custom_call.1} parent=70 // loop_footer_branch
              %434 = sbr.rel target = $region73
            $region78: #{tpu_custom_call.1} parent=70 // loop_exit
              _
            %s970 = sshllo.u32 0, %s429
            loop: start=0, step=1, limit=1
            $region79: #{tpu_custom_call.1} parent=70 // loop_pre_header
              _
            $region80: #{tpu_custom_call.1} parent=70 // loop_header
              %s972 = sphi 0, %s976
              %p973 = scmp.ge.s32.totalorder %s972, 1
              %s977 = sphi %s431, %s431
              %s978 = sphi %s433, %s433
            $region81: #{tpu_custom_call.1} parent=70 // loop_header_branch
              %975 = sbr.rel (%p973) target = $region85
            $region82: #{tpu_custom_call.1} parent=70 // loop_body
              %v979 = vld [vmem:[%s977] sm:%s970]
              %980 = vst [vmem:[%s978] sm:%s970] %v979
              %v981 = vld [vmem:[%s977 + $0x38] sm:%s970]
              %982 = vst [vmem:[%s978 + $0x38] sm:%s970] %v981
              %v983 = vld [vmem:[%s977 + $0x70] sm:%s970]
              %984 = vst [vmem:[%s978 + $0x70] sm:%s970] %v983
              %v985 = vld [vmem:[%s977 + $0xa8] sm:%s970]
              %986 = vst [vmem:[%s978 + $0xa8] sm:%s970] %v985
              %v987 = vld [vmem:[%s977 + $0xe0] sm:%s970]
              %988 = vst [vmem:[%s978 + $0xe0] sm:%s970] %v987
              %v989 = vld [vmem:[%s977 + $0x118] sm:%s970]
              %990 = vst [vmem:[%s978 + $0x118] sm:%s970] %v989
              %v991 = vld [vmem:[%s977 + $0x150] sm:%s970]
              %992 = vst [vmem:[%s978 + $0x150] sm:%s970] %v991
              %v993 = vld [vmem:[%s977 + $0x188] sm:%s970]
              %994 = vst [vmem:[%s978 + $0x188] sm:%s970] %v993
              %v995 = vld [vmem:[%s977 + $0x1c0] sm:%s970]
              %996 = vst [vmem:[%s978 + $0x1c0] sm:%s970] %v995
              %v997 = vld [vmem:[%s977 + $0x1f8] sm:%s970]
              %998 = vst [vmem:[%s978 + $0x1f8] sm:%s970] %v997
              %v999 = vld [vmem:[%s977 + $0x230] sm:%s970]
              %1000 = vst [vmem:[%s978 + $0x230] sm:%s970] %v999
              %v1001 = vld [vmem:[%s977 + $0x268] sm:%s970]
              %1002 = vst [vmem:[%s978 + $0x268] sm:%s970] %v1001
              %v1003 = vld [vmem:[%s977 + $0x2a0] sm:%s970]
              %1004 = vst [vmem:[%s978 + $0x2a0] sm:%s970] %v1003
              %v1005 = vld [vmem:[%s977 + $0x2d8] sm:%s970]
              %1006 = vst [vmem:[%s978 + $0x2d8] sm:%s970] %v1005
              %v1007 = vld [vmem:[%s977 + $0x310] sm:%s970]
              %1008 = vst [vmem:[%s978 + $0x310] sm:%s970] %v1007
              %v1009 = vld [vmem:[%s977 + $0x348] sm:%s970]
              %1010 = vst [vmem:[%s978 + $0x348] sm:%s970] %v1009
              %v1011 = vld [vmem:[%s977 + $0x380] sm:%s970]
              %1012 = vst [vmem:[%s978 + $0x380] sm:%s970] %v1011
              %v1013 = vld [vmem:[%s977 + $0x3b8] sm:%s970]
              %1014 = vst [vmem:[%s978 + $0x3b8] sm:%s970] %v1013
              %v1015 = vld [vmem:[%s977 + $0x3f0] sm:%s970]
              %1016 = vst [vmem:[%s978 + $0x3f0] sm:%s970] %v1015
              %v1017 = vld [vmem:[%s977 + $0x428] sm:%s970]
              %1018 = vst [vmem:[%s978 + $0x428] sm:%s970] %v1017
              %v1019 = vld [vmem:[%s977 + $0x460] sm:%s970]
              %1020 = vst [vmem:[%s978 + $0x460] sm:%s970] %v1019
              %v1021 = vld [vmem:[%s977 + $0x498] sm:%s970]
              %1022 = vst [vmem:[%s978 + $0x498] sm:%s970] %v1021
              %v1023 = vld [vmem:[%s977 + $0x4d0] sm:%s970]
              %1024 = vst [vmem:[%s978 + $0x4d0] sm:%s970] %v1023
              %v1025 = vld [vmem:[%s977 + $0x508] sm:%s970]
              %1026 = vst [vmem:[%s978 + $0x508] sm:%s970] %v1025
              %v1027 = vld [vmem:[%s977 + $0x540] sm:%s970]
              %1028 = vst [vmem:[%s978 + $0x540] sm:%s970] %v1027
              %v1029 = vld [vmem:[%s977 + $0x578] sm:%s970]
              %1030 = vst [vmem:[%s978 + $0x578] sm:%s970] %v1029
              %v1031 = vld [vmem:[%s977 + $0x5b0] sm:%s970]
              %1032 = vst [vmem:[%s978 + $0x5b0] sm:%s970] %v1031
              %v1033 = vld [vmem:[%s977 + $0x5e8] sm:%s970]
              %1034 = vst [vmem:[%s978 + $0x5e8] sm:%s970] %v1033
              %v1035 = vld [vmem:[%s977 + $0x620] sm:%s970]
              %1036 = vst [vmem:[%s978 + $0x620] sm:%s970] %v1035
              %v1037 = vld [vmem:[%s977 + $0x658] sm:%s970]
              %1038 = vst [vmem:[%s978 + $0x658] sm:%s970] %v1037
              %v1039 = vld [vmem:[%s977 + $0x690] sm:%s970]
              %1040 = vst [vmem:[%s978 + $0x690] sm:%s970] %v1039
              %v1041 = vld [vmem:[%s977 + $0x6c8] sm:%s970]
              %1042 = vst [vmem:[%s978 + $0x6c8] sm:%s970] %v1041
              %v1043 = vld [vmem:[%s977 + $0x700] sm:%s970]
              %1044 = vst [vmem:[%s978 + $0x700] sm:%s970] %v1043
              %v1045 = vld [vmem:[%s977 + $0x738] sm:%s970]
              %1046 = vst [vmem:[%s978 + $0x738] sm:%s970] %v1045
              %v1047 = vld [vmem:[%s977 + $0x770] sm:%s970]
              %1048 = vst [vmem:[%s978 + $0x770] sm:%s970] %v1047
              %v1049 = vld [vmem:[%s977 + $0x7a8] sm:%s970]
              %1050 = vst [vmem:[%s978 + $0x7a8] sm:%s970] %v1049
              %v1051 = vld [vmem:[%s977 + $0x7e0] sm:%s970]
              %1052 = vst [vmem:[%s978 + $0x7e0] sm:%s970] %v1051
              %v1053 = vld [vmem:[%s977 + $0x818] sm:%s970]
              %1054 = vst [vmem:[%s978 + $0x818] sm:%s970] %v1053
              %v1055 = vld [vmem:[%s977 + $0x850] sm:%s970]
              %1056 = vst [vmem:[%s978 + $0x850] sm:%s970] %v1055
              %v1057 = vld [vmem:[%s977 + $0x888] sm:%s970]
              %1058 = vst [vmem:[%s978 + $0x888] sm:%s970] %v1057
              %v1059 = vld [vmem:[%s977 + $0x8c0] sm:%s970]
              %1060 = vst [vmem:[%s978 + $0x8c0] sm:%s970] %v1059
              %v1061 = vld [vmem:[%s977 + $0x8f8] sm:%s970]
              %1062 = vst [vmem:[%s978 + $0x8f8] sm:%s970] %v1061
              %v1063 = vld [vmem:[%s977 + $0x930] sm:%s970]
              %1064 = vst [vmem:[%s978 + $0x930] sm:%s970] %v1063
              %v1065 = vld [vmem:[%s977 + $0x968] sm:%s970]
              %1066 = vst [vmem:[%s978 + $0x968] sm:%s970] %v1065
            $region83: #{tpu_custom_call.1} parent=70 // loop_footer
              %s976 = sadd.s32 1, %s972
            $region84: #{tpu_custom_call.1} parent=70 // loop_footer_branch
              %971 = sbr.rel target = $region80
            $region85: #{tpu_custom_call.1} parent=70 // loop_exit
              _
          $region71: #{tpu_custom_call.1} parent=55 // pred_fallthru
            _
        $region56: #{tpu_custom_call.1} parent=51 // pred_fallthru
          _
        // Predicated region
        $region57: #{tpu_custom_call.1} parent=51 // pred_check
          %p324 = pneg %p320
        $region58: #{tpu_custom_call.1} parent=51 // pred_check_branch
          %326 = sbr.rel (%p324) target = $region60
        $region59: #{tpu_custom_call.1} parent=51 // pred_region
          %s327 = sshllo.u32 0, 52
          loop: start=0, step=1, limit=1
          $region61: #{tpu_custom_call.1} parent=59 // loop_pre_header
            _
          $region62: #{tpu_custom_call.1} parent=59 // loop_header
            %s329 = sphi 0, %s333
            %p330 = scmp.ge.s32.totalorder %s329, 1
            %s334 = sphi %s318, %s318
            %s335 = sphi [#allocation2], [#allocation2]
          $region63: #{tpu_custom_call.1} parent=59 // loop_header_branch
            %332 = sbr.rel (%p330) target = $region67
          $region64: #{tpu_custom_call.1} parent=59 // loop_body
            %v336 = vld [vmem:[%s334] sm:%s327]
            %337 = vst [vmem:[%s335] sm:%s327] %v336
            %v338 = vld [vmem:[%s334 + $0x38] sm:%s327]
            %339 = vst [vmem:[%s335 + $0x38] sm:%s327] %v338
            %v340 = vld [vmem:[%s334 + $0x70] sm:%s327]
            %341 = vst [vmem:[%s335 + $0x70] sm:%s327] %v340
            %v342 = vld [vmem:[%s334 + $0xa8] sm:%s327]
            %343 = vst [vmem:[%s335 + $0xa8] sm:%s327] %v342
            %v344 = vld [vmem:[%s334 + $0xe0] sm:%s327]
            %345 = vst [vmem:[%s335 + $0xe0] sm:%s327] %v344
            %v346 = vld [vmem:[%s334 + $0x118] sm:%s327]
            %347 = vst [vmem:[%s335 + $0x118] sm:%s327] %v346
            %v348 = vld [vmem:[%s334 + $0x150] sm:%s327]
            %349 = vst [vmem:[%s335 + $0x150] sm:%s327] %v348
            %v350 = vld [vmem:[%s334 + $0x188] sm:%s327]
            %351 = vst [vmem:[%s335 + $0x188] sm:%s327] %v350
            %v352 = vld [vmem:[%s334 + $0x1c0] sm:%s327]
            %353 = vst [vmem:[%s335 + $0x1c0] sm:%s327] %v352
            %v354 = vld [vmem:[%s334 + $0x1f8] sm:%s327]
            %355 = vst [vmem:[%s335 + $0x1f8] sm:%s327] %v354
            %v356 = vld [vmem:[%s334 + $0x230] sm:%s327]
            %357 = vst [vmem:[%s335 + $0x230] sm:%s327] %v356
            %v358 = vld [vmem:[%s334 + $0x268] sm:%s327]
            %359 = vst [vmem:[%s335 + $0x268] sm:%s327] %v358
            %v360 = vld [vmem:[%s334 + $0x2a0] sm:%s327]
            %361 = vst [vmem:[%s335 + $0x2a0] sm:%s327] %v360
            %v362 = vld [vmem:[%s334 + $0x2d8] sm:%s327]
            %363 = vst [vmem:[%s335 + $0x2d8] sm:%s327] %v362
            %v364 = vld [vmem:[%s334 + $0x310] sm:%s327]
            %365 = vst [vmem:[%s335 + $0x310] sm:%s327] %v364
            %v366 = vld [vmem:[%s334 + $0x348] sm:%s327]
            %367 = vst [vmem:[%s335 + $0x348] sm:%s327] %v366
            %v368 = vld [vmem:[%s334 + $0x380] sm:%s327]
            %369 = vst [vmem:[%s335 + $0x380] sm:%s327] %v368
            %v370 = vld [vmem:[%s334 + $0x3b8] sm:%s327]
            %371 = vst [vmem:[%s335 + $0x3b8] sm:%s327] %v370
            %v372 = vld [vmem:[%s334 + $0x3f0] sm:%s327]
            %373 = vst [vmem:[%s335 + $0x3f0] sm:%s327] %v372
            %v374 = vld [vmem:[%s334 + $0x428] sm:%s327]
            %375 = vst [vmem:[%s335 + $0x428] sm:%s327] %v374
            %v376 = vld [vmem:[%s334 + $0x460] sm:%s327]
            %377 = vst [vmem:[%s335 + $0x460] sm:%s327] %v376
            %v378 = vld [vmem:[%s334 + $0x498] sm:%s327]
            %379 = vst [vmem:[%s335 + $0x498] sm:%s327] %v378
            %v380 = vld [vmem:[%s334 + $0x4d0] sm:%s327]
            %381 = vst [vmem:[%s335 + $0x4d0] sm:%s327] %v380
            %v382 = vld [vmem:[%s334 + $0x508] sm:%s327]
            %383 = vst [vmem:[%s335 + $0x508] sm:%s327] %v382
            %v384 = vld [vmem:[%s334 + $0x540] sm:%s327]
            %385 = vst [vmem:[%s335 + $0x540] sm:%s327] %v384
            %v386 = vld [vmem:[%s334 + $0x578] sm:%s327]
            %387 = vst [vmem:[%s335 + $0x578] sm:%s327] %v386
            %v388 = vld [vmem:[%s334 + $0x5b0] sm:%s327]
            %389 = vst [vmem:[%s335 + $0x5b0] sm:%s327] %v388
            %v390 = vld [vmem:[%s334 + $0x5e8] sm:%s327]
            %391 = vst [vmem:[%s335 + $0x5e8] sm:%s327] %v390
            %v392 = vld [vmem:[%s334 + $0x620] sm:%s327]
            %393 = vst [vmem:[%s335 + $0x620] sm:%s327] %v392
            %v394 = vld [vmem:[%s334 + $0x658] sm:%s327]
            %395 = vst [vmem:[%s335 + $0x658] sm:%s327] %v394
            %v396 = vld [vmem:[%s334 + $0x690] sm:%s327]
            %397 = vst [vmem:[%s335 + $0x690] sm:%s327] %v396
            %v398 = vld [vmem:[%s334 + $0x6c8] sm:%s327]
            %399 = vst [vmem:[%s335 + $0x6c8] sm:%s327] %v398
            %v400 = vld [vmem:[%s334 + $0x700] sm:%s327]
            %401 = vst [vmem:[%s335 + $0x700] sm:%s327] %v400
            %v402 = vld [vmem:[%s334 + $0x738] sm:%s327]
            %403 = vst [vmem:[%s335 + $0x738] sm:%s327] %v402
            %v404 = vld [vmem:[%s334 + $0x770] sm:%s327]
            %405 = vst [vmem:[%s335 + $0x770] sm:%s327] %v404
            %v406 = vld [vmem:[%s334 + $0x7a8] sm:%s327]
            %407 = vst [vmem:[%s335 + $0x7a8] sm:%s327] %v406
            %v408 = vld [vmem:[%s334 + $0x7e0] sm:%s327]
            %409 = vst [vmem:[%s335 + $0x7e0] sm:%s327] %v408
            %v410 = vld [vmem:[%s334 + $0x818] sm:%s327]
            %411 = vst [vmem:[%s335 + $0x818] sm:%s327] %v410
            %v412 = vld [vmem:[%s334 + $0x850] sm:%s327]
            %413 = vst [vmem:[%s335 + $0x850] sm:%s327] %v412
            %v414 = vld [vmem:[%s334 + $0x888] sm:%s327]
            %415 = vst [vmem:[%s335 + $0x888] sm:%s327] %v414
            %v416 = vld [vmem:[%s334 + $0x8c0] sm:%s327]
            %417 = vst [vmem:[%s335 + $0x8c0] sm:%s327] %v416
            %v418 = vld [vmem:[%s334 + $0x8f8] sm:%s327]
            %419 = vst [vmem:[%s335 + $0x8f8] sm:%s327] %v418
            %v420 = vld [vmem:[%s334 + $0x930] sm:%s327]
            %421 = vst [vmem:[%s335 + $0x930] sm:%s327] %v420
            %v422 = vld [vmem:[%s334 + $0x968] sm:%s327]
            %423 = vst [vmem:[%s335 + $0x968] sm:%s327] %v422
          $region65: #{tpu_custom_call.1} parent=59 // loop_footer
            %s333 = sadd.s32 1, %s329
          $region66: #{tpu_custom_call.1} parent=59 // loop_footer_branch
            %328 = sbr.rel target = $region62
          $region67: #{tpu_custom_call.1} parent=59 // loop_exit
            _
        $region60: #{tpu_custom_call.1} parent=51 // pred_fallthru
          _
        // Predicated region
        $region86: #{tpu_custom_call.1} parent=51 // pred_check
          _
        $region87: #{tpu_custom_call.1} parent=51 // pred_check_branch
          %1069 = sbr.rel (0) target = $region89
        $region88: #{tpu_custom_call.1} parent=51 // pred_region
          %1070 = vsyncadd [#allocation4], 36608
        $region89: #{tpu_custom_call.1} parent=51 // pred_fallthru
          _
        %s1071 = smul.u32 44, 52
        %s1072 = smul.u32 %s1071, 1
        %s1073 = sshll.u32 %s1072, 4
        %1074 = dma.done [#allocation4], %s1073
        %s1075 = scalar_lea.vmem [#allocation2], 1008
        %v1076 = vld [vmem:[%s1075 + $0x12] sm:$0xff]
        %v1077 = vld [vmem:[%s1075 + $0x1a] sm:$0xff]
        %v1078 = vld [vmem:[%s1075 + $0x4a] sm:$0xff]
        %v1079 = vld [vmem:[%s1075 + $0x52] sm:$0xff]
        %v1080 = vld [vmem:[%s1075 + $0x82] sm:$0xff]
        %v1081 = vld [vmem:[%s1075 + $0x8a] sm:$0xff]
        %v1082 = vld [vmem:[%s1075 + $0xba] sm:$0xff]
        %v1083 = vld [vmem:[%s1075 + $0xc2] sm:$0xff]
        %v1084 = vld [vmem:[%s1075 + $0xf2] sm:$0xff]
        %v1085 = vld [vmem:[%s1075 + $0xfa] sm:$0xff]
        %v1086 = vld [vmem:[%s1075 + $0x12a] sm:$0xff]
        %v1087 = vld [vmem:[%s1075 + $0x132] sm:$0xff]
        %v1088 = vld [vmem:[%s1075 + $0x162] sm:$0xff]
        %v1089 = vld [vmem:[%s1075 + $0x16a] sm:$0xff]
        %v1090 = vld [vmem:[%s1075 + $0x19a] sm:$0xff]
        %v1091 = vld [vmem:[%s1075 + $0x1a2] sm:$0xff]
        %v1092 = vld [vmem:[%s1] sm:$0xff]
        %v1093 = vld [vmem:[%s1 + $0x8] sm:$0xff]
        %v1094 = vld [vmem:[%s1 + $0x10] sm:$0xff]
        %v1095 = vld [vmem:[%s1 + $0x18] sm:$0xff]
        %v1096 = vld [vmem:[%s1 + $0x20] sm:$0xff]
        %v1097 = vld [vmem:[%s1 + $0x28] sm:$0xff]
        %v1098 = vld [vmem:[%s1 + $0x30] sm:$0xff]
        %v1099 = vld [vmem:[%s1 + $0x38] sm:$0xff]
        %v1100 = vld [vmem:[%s1 + $0x40] sm:$0xff]
        %v1101 = vld [vmem:[%s1 + $0x48] sm:$0xff]
        %v1102 = vld [vmem:[%s1 + $0x50] sm:$0xff]
        %v1103 = vld [vmem:[%s1 + $0x58] sm:$0xff]
        %v1104 = vld [vmem:[%s1 + $0x60] sm:$0xff]
        %v1105 = vld [vmem:[%s1 + $0x68] sm:$0xff]
        %v1106 = vld [vmem:[%s1 + $0x70] sm:$0xff]
        %v1107 = vld [vmem:[%s1 + $0x78] sm:$0xff]
        %1108 = vmatprep.subr.mxu0 0.0
        %1109 = vmatpush1.msra.mxu0 %v1092
        %1110 = vmatprep.subr.mxu0 0.0
        %1111 = vmatpush1.msra.mxu0 %v1093
        %1112 = vmatprep.subr.mxu0 0.0
        %1113 = vmatpush1.msra.mxu0 %v1094
        %1114 = vmatprep.subr.mxu0 0.0
        %1115 = vmatpush1.msra.mxu0 %v1095
        %1116 = vmatprep.subr.mxu0 0.0
        %1117 = vmatpush1.msra.mxu0 %v1096
        %1118 = vmatprep.subr.mxu0 0.0
        %1119 = vmatpush1.msra.mxu0 %v1097
        %1120 = vmatprep.subr.mxu0 0.0
        %1121 = vmatpush1.msra.mxu0 %v1098
        %1122 = vmatprep.subr.mxu0 0.0
        %1123 = vmatpush1.msra.mxu0 %v1099
        %1124 = vmatprep.subr.mxu0 0.0
        %1125 = vmatpush1.msra.mxu0 %v1100
        %1126 = vmatprep.subr.mxu0 0.0
        %1127 = vmatpush1.msra.mxu0 %v1101
        %1128 = vmatprep.subr.mxu0 0.0
        %1129 = vmatpush1.msra.mxu0 %v1102
        %1130 = vmatprep.subr.mxu0 0.0
        %1131 = vmatpush1.msra.mxu0 %v1103
        %1132 = vmatprep.subr.mxu0 0.0
        %1133 = vmatpush1.msra.mxu0 %v1104
        %1134 = vmatprep.subr.mxu0 0.0
        %1135 = vmatpush1.msra.mxu0 %v1105
        %1136 = vmatprep.subr.mxu0 0.0
        %1137 = vmatpush1.msra.mxu0 %v1106
        %1138 = vmatprep.subr.mxu0 0.0
        %1139 = vmatpush1.msra.mxu0 %v1107
        %1140 = vmatprep.subr.mxu0 0.0
        %1141 = vmatpush1.msra.mxu0 0.0
        %1142 = vmatprep.subr.mxu0 0.0
        %1143 = vmatpush1.msra.mxu0 0.0
        %1144 = vmatprep.subr.mxu0 0.0
        %1145 = vmatpush1.msra.mxu0 0.0
        %1146 = vmatprep.subr.mxu0 0.0
        %1147 = vmatpush1.msra.mxu0 0.0
        %1148 = vmatprep.subr.mxu0 0.0
        %1149 = vmatpush1.msra.mxu0 0.0
        %1150 = vmatprep.subr.mxu0 0.0
        %1151 = vmatpush1.msra.mxu0 0.0
        %1152 = vmatprep.subr.mxu0 0.0
        %1153 = vmatpush1.msra.mxu0 0.0
        %1154 = vmatprep.subr.mxu0 0.0
        %1155 = vmatpush1.msra.mxu0 0.0
        %1156 = vmatprep.subr.mxu0 0.0
        %1157 = vmatpush1.msra.mxu0 0.0
        %1158 = vmatprep.subr.mxu0 0.0
        %1159 = vmatpush1.msra.mxu0 0.0
        %1160 = vmatprep.subr.mxu0 0.0
        %1161 = vmatpush1.msra.mxu0 0.0
        %1162 = vmatprep.subr.mxu0 0.0
        %1163 = vmatpush1.msra.mxu0 0.0
        %1164 = vmatprep.subr.mxu0 0.0
        %1165 = vmatpush1.msra.mxu0 0.0
        %1166 = vmatprep.subr.mxu0 0.0
        %1167 = vmatpush1.msra.mxu0 0.0
        %1168 = vmatprep.subr.mxu0 0.0
        %1169 = vmatpush1.msra.mxu0 0.0
        %1170 = vmatprep.subr.mxu0 0.0
        %1171 = vmatpush1.msra.mxu0 0.0
        %1172 = vmatprep.mubr.f32.mxu0 0.0
        %1173 = vmatmul.mubr.f32.gmra.mrb[0].mxu0 %v1076
        %v1174 = vpop.f32.mrb[0].mxu0
        %v1175 = vadd.f32 0.0, %v1174
        %v1176 = vpop.f32.mrb[0].mxu0
        %1177 = vmatprep.mubr.f32.mxu0 0.0
        %1178 = vmatmul.mubr.f32.gmra.mrb[0].mxu0 %v1077
        %v1179 = vpop.f32.mrb[0].mxu0
        %v1180 = vadd.f32 0.0, %v1179
        %v1181 = vpop.f32.mrb[0].mxu0
        %1182 = vmatprep.mubr.f32.mxu0 0.0
        %1183 = vmatmul.mubr.f32.gmra.mrb[0].mxu0 %v1078
        %v1184 = vpop.f32.mrb[0].mxu0
        %v1185 = vadd.f32 0.0, %v1184
        %v1186 = vpop.f32.mrb[0].mxu0
        %1187 = vmatprep.mubr.f32.mxu0 0.0
        %1188 = vmatmul.mubr.f32.gmra.mrb[0].mxu0 %v1079
        %v1189 = vpop.f32.mrb[0].mxu0
        %v1190 = vadd.f32 0.0, %v1189
        %v1191 = vpop.f32.mrb[0].mxu0
        %1192 = vmatprep.mubr.f32.mxu0 0.0
        %1193 = vmatmul.mubr.f32.gmra.mrb[0].mxu0 %v1080
        %v1194 = vpop.f32.mrb[0].mxu0
        %v1195 = vadd.f32 0.0, %v1194
        %v1196 = vpop.f32.mrb[0].mxu0
        %1197 = vmatprep.mubr.f32.mxu0 0.0
        %1198 = vmatmul.mubr.f32.gmra.mrb[0].mxu0 %v1081
        %v1199 = vpop.f32.mrb[0].mxu0
        %v1200 = vadd.f32 0.0, %v1199
        %v1201 = vpop.f32.mrb[0].mxu0
        %1202 = vmatprep.mubr.f32.mxu0 0.0
        %1203 = vmatmul.mubr.f32.gmra.mrb[0].mxu0 %v1082
        %v1204 = vpop.f32.mrb[0].mxu0
        %v1205 = vadd.f32 0.0, %v1204
        %v1206 = vpop.f32.mrb[0].mxu0
        %1207 = vmatprep.mubr.f32.mxu0 0.0
        %1208 = vmatmul.mubr.f32.gmra.mrb[0].mxu0 %v1083
        %v1209 = vpop.f32.mrb[0].mxu0
        %v1210 = vadd.f32 0.0, %v1209
        %v1211 = vpop.f32.mrb[0].mxu0
        %1212 = vmatprep.mubr.f32.mxu0 0.0
        %1213 = vmatmul.mubr.f32.gmra.mrb[0].mxu0 %v1084
        %v1214 = vpop.f32.mrb[0].mxu0
        %v1215 = vadd.f32 0.0, %v1214
        %v1216 = vpop.f32.mrb[0].mxu0
        %1217 = vmatprep.mubr.f32.mxu0 0.0
        %1218 = vmatmul.mubr.f32.gmra.mrb[0].mxu0 %v1085
        %v1219 = vpop.f32.mrb[0].mxu0
        %v1220 = vadd.f32 0.0, %v1219
        %v1221 = vpop.f32.mrb[0].mxu0
        %1222 = vmatprep.mubr.f32.mxu0 0.0
        %1223 = vmatmul.mubr.f32.gmra.mrb[0].mxu0 %v1086
        %v1224 = vpop.f32.mrb[0].mxu0
        %v1225 = vadd.f32 0.0, %v1224
        %v1226 = vpop.f32.mrb[0].mxu0
        %1227 = vmatprep.mubr.f32.mxu0 0.0
        %1228 = vmatmul.mubr.f32.gmra.mrb[0].mxu0 %v1087
        %v1229 = vpop.f32.mrb[0].mxu0
        %v1230 = vadd.f32 0.0, %v1229
        %v1231 = vpop.f32.mrb[0].mxu0
        %1232 = vmatprep.mubr.f32.mxu0 0.0
        %1233 = vmatmul.mubr.f32.gmra.mrb[0].mxu0 %v1088
        %v1234 = vpop.f32.mrb[0].mxu0
        %v1235 = vadd.f32 0.0, %v1234
        %v1236 = vpop.f32.mrb[0].mxu0
        %1237 = vmatprep.mubr.f32.mxu0 0.0
        %1238 = vmatmul.mubr.f32.gmra.mrb[0].mxu0 %v1089
        %v1239 = vpop.f32.mrb[0].mxu0
        %v1240 = vadd.f32 0.0, %v1239
        %v1241 = vpop.f32.mrb[0].mxu0
        %1242 = vmatprep.mubr.f32.mxu0 0.0
        %1243 = vmatmul.mubr.f32.gmra.mrb[0].mxu0 %v1090
        %v1244 = vpop.f32.mrb[0].mxu0
        %v1245 = vadd.f32 0.0, %v1244
        %v1246 = vpop.f32.mrb[0].mxu0
        %1247 = vmatprep.mubr.f32.mxu0 0.0
        %1248 = vmatmul.mubr.f32.gmra.mrb[0].mxu0 %v1091
        %v1249 = vpop.f32.mrb[0].mxu0
        %v1250 = vadd.f32 0.0, %v1249
        %v1251 = vpop.f32.mrb[0].mxu0
        %1252 = vdwg.mxu0
        %v1253 = vld [vmem:[%s4] sm:$0x1]
        %v1255 = vlaneseq
        %v1256 = vshrl.u32 %v1255, 7
        %v1257 = vsub.s32 0, %v1256
        %v1258 = vrot.slane %v1253, %v1257
        %v1260 = vmul.f32 %v1175, %v1258
        %v1261 = vmul.f32 %v1180, %v1258
        %v1262 = vmul.f32 %v1185, %v1258
        %v1263 = vmul.f32 %v1190, %v1258
        %v1264 = vmul.f32 %v1195, %v1258
        %v1265 = vmul.f32 %v1200, %v1258
        %v1266 = vmul.f32 %v1205, %v1258
        %v1267 = vmul.f32 %v1210, %v1258
        %v1268 = vmul.f32 %v1215, %v1258
        %v1269 = vmul.f32 %v1220, %v1258
        %v1270 = vmul.f32 %v1225, %v1258
        %v1271 = vmul.f32 %v1230, %v1258
        %v1272 = vmul.f32 %v1235, %v1258
        %v1273 = vmul.f32 %v1240, %v1258
        %v1274 = vmul.f32 %v1245, %v1258
        %v1275 = vmul.f32 %v1250, %v1258
        %v1276 = vld [vmem:[%s5] sm:$0x1]
        %v1278 = vlaneseq
        %v1279 = vshrl.u32 %v1278, 7
        %v1280 = vsub.s32 0, %v1279
        %v1281 = vrot.slane %v1276, %v1280
        %v1283 = vadd.f32 %v1260, %v1281
        %v1284 = vadd.f32 %v1261, %v1281
        %v1285 = vadd.f32 %v1262, %v1281
        %v1286 = vadd.f32 %v1263, %v1281
        %v1287 = vadd.f32 %v1264, %v1281
        %v1288 = vadd.f32 %v1265, %v1281
        %v1289 = vadd.f32 %v1266, %v1281
        %v1290 = vadd.f32 %v1267, %v1281
        %v1291 = vadd.f32 %v1268, %v1281
        %v1292 = vadd.f32 %v1269, %v1281
        %v1293 = vadd.f32 %v1270, %v1281
        %v1294 = vadd.f32 %v1271, %v1281
        %v1295 = vadd.f32 %v1272, %v1281
        %v1296 = vadd.f32 %v1273, %v1281
        %v1297 = vadd.f32 %v1274, %v1281
        %v1298 = vadd.f32 %v1275, %v1281
        %v1299 = vmax.f32 %v1283, 0.0
        %v1300 = vmax.f32 %v1284, 0.0
        %v1301 = vmax.f32 %v1285, 0.0
        %v1302 = vmax.f32 %v1286, 0.0
        %v1303 = vmax.f32 %v1287, 0.0
        %v1304 = vmax.f32 %v1288, 0.0
        %v1305 = vmax.f32 %v1289, 0.0
        %v1306 = vmax.f32 %v1290, 0.0
        %v1307 = vmax.f32 %v1291, 0.0
        %v1308 = vmax.f32 %v1292, 0.0
        %v1309 = vmax.f32 %v1293, 0.0
        %v1310 = vmax.f32 %v1294, 0.0
        %v1311 = vmax.f32 %v1295, 0.0
        %v1312 = vmax.f32 %v1296, 0.0
        %v1313 = vmax.f32 %v1297, 0.0
        %v1314 = vmax.f32 %v1298, 0.0
        %1315 = vst [vmem:[#allocation3] sm:$0xff] %v1299
        %1316 = vst [vmem:[#allocation3 + $0x20] sm:$0xff] %v1300
        %1317 = vst [vmem:[#allocation3 + $0x40] sm:$0xff] %v1301
        %1318 = vst [vmem:[#allocation3 + $0x60] sm:$0xff] %v1302
        %1319 = vst [vmem:[#allocation3 + $0x80] sm:$0xff] %v1303
        %1320 = vst [vmem:[#allocation3 + $0xa0] sm:$0xff] %v1304
        %1321 = vst [vmem:[#allocation3 + $0xc0] sm:$0xff] %v1305
        %1322 = vst [vmem:[#allocation3 + $0xe0] sm:$0xff] %v1306
        %1323 = vst [vmem:[#allocation3 + $0x100] sm:$0xff] %v1307
        %1324 = vst [vmem:[#allocation3 + $0x120] sm:$0xff] %v1308
        %1325 = vst [vmem:[#allocation3 + $0x140] sm:$0xff] %v1309
        %1326 = vst [vmem:[#allocation3 + $0x160] sm:$0xff] %v1310
        %1327 = vst [vmem:[#allocation3 + $0x180] sm:$0xff] %v1311
        %1328 = vst [vmem:[#allocation3 + $0x1a0] sm:$0xff] %v1312
        %1329 = vst [vmem:[#allocation3 + $0x1c0] sm:$0xff] %v1313
        %1330 = vst [vmem:[#allocation3 + $0x1e0] sm:$0xff] %v1314
        %s1331 = scalar_lea.vmem [#allocation2], 672
        %v1332 = vld [vmem:[%s1331 + $0xc] sm:$0xff]
        %v1333 = vld [vmem:[%s1331 + $0x14] sm:$0xff]
        %v1334 = vld [vmem:[%s1331 + $0x44] sm:$0xff]
        %v1335 = vld [vmem:[%s1331 + $0x4c] sm:$0xff]
        %v1336 = vld [vmem:[%s1331 + $0x7c] sm:$0xff]
        %v1337 = vld [vmem:[%s1331 + $0x84] sm:$0xff]
        %v1338 = vld [vmem:[%s1331 + $0xb4] sm:$0xff]
        %v1339 = vld [vmem:[%s1331 + $0xbc] sm:$0xff]
        %v1340 = vld [vmem:[%s1331 + $0xec] sm:$0xff]
        %v1341 = vld [vmem:[%s1331 + $0xf4] sm:$0xff]
        %v1342 = vld [vmem:[%s1331 + $0x124] sm:$0xff]
        %v1343 = vld [vmem:[%s1331 + $0x12c] sm:$0xff]
        %v1344 = vld [vmem:[%s1331 + $0x15c] sm:$0xff]
        %v1345 = vld [vmem:[%s1331 + $0x164] sm:$0xff]
        %v1346 = vld [vmem:[%s1331 + $0x194] sm:$0xff]
        %v1347 = vld [vmem:[%s1331 + $0x19c] sm:$0xff]
        %v1348 = vld [vmem:[%s1331 + $0x12] sm:$0xff]
        %v1349 = vld [vmem:[%s1331 + $0x1a] sm:$0xff]
        %v1350 = vld [vmem:[%s1331 + $0x4a] sm:$0xff]
        %v1351 = vld [vmem:[%s1331 + $0x52] sm:$0xff]
        %v1352 = vld [vmem:[%s1331 + $0x82] sm:$0xff]
        %v1353 = vld [vmem:[%s1331 + $0x8a] sm:$0xff]
        %v1354 = vld [vmem:[%s1331 + $0xba] sm:$0xff]
        %v1355 = vld [vmem:[%s1331 + $0xc2] sm:$0xff]
        %v1356 = vld [vmem:[%s1331 + $0xf2] sm:$0xff]
        %v1357 = vld [vmem:[%s1331 + $0xfa] sm:$0xff]
        %v1358 = vld [vmem:[%s1331 + $0x12a] sm:$0xff]
        %v1359 = vld [vmem:[%s1331 + $0x132] sm:$0xff]
        %v1360 = vld [vmem:[%s1331 + $0x162] sm:$0xff]
        %v1361 = vld [vmem:[%s1331 + $0x16a] sm:$0xff]
        %v1362 = vld [vmem:[%s1331 + $0x19a] sm:$0xff]
        %v1363 = vld [vmem:[%s1331 + $0x1a2] sm:$0xff]
        %v1364 = vld [vmem:[%s1331 + $0x18] sm:$0xff]
        %v1365 = vld [vmem:[%s1331 + $0x20] sm:$0xff]
        %v1366 = vld [vmem:[%s1331 + $0x50] sm:$0xff]
        %v1367 = vld [vmem:[%s1331 + $0x58] sm:$0xff]
        %v1368 = vld [vmem:[%s1331 + $0x88] sm:$0xff]
        %v1369 = vld [vmem:[%s1331 + $0x90] sm:$0xff]
        %v1370 = vld [vmem:[%s1331 + $0xc0] sm:$0xff]
        %v1371 = vld [vmem:[%s1331 + $0xc8] sm:$0xff]
        %v1372 = vld [vmem:[%s1331 + $0xf8] sm:$0xff]
        %v1373 = vld [vmem:[%s1331 + $0x100] sm:$0xff]
        %v1374 = vld [vmem:[%s1331 + $0x130] sm:$0xff]
        %v1375 = vld [vmem:[%s1331 + $0x138] sm:$0xff]
        %v1376 = vld [vmem:[%s1331 + $0x168] sm:$0xff]
        %v1377 = vld [vmem:[%s1331 + $0x170] sm:$0xff]
        %v1378 = vld [vmem:[%s1331 + $0x1a0] sm:$0xff]
        %v1379 = vld [vmem:[%s1331 + $0x1a8] sm:$0xff]
        %v1380 = vld [vmem:[%s1075 + $0xc] sm:$0xff]
        %v1381 = vld [vmem:[%s1075 + $0x14] sm:$0xff]
        %v1382 = vld [vmem:[%s1075 + $0x44] sm:$0xff]
        %v1383 = vld [vmem:[%s1075 + $0x4c] sm:$0xff]
        %v1384 = vld [vmem:[%s1075 + $0x7c] sm:$0xff]
        %v1385 = vld [vmem:[%s1075 + $0x84] sm:$0xff]
        %v1386 = vld [vmem:[%s1075 + $0xb4] sm:$0xff]
        %v1387 = vld [vmem:[%s1075 + $0xbc] sm:$0xff]
        %v1388 = vld [vmem:[%s1075 + $0xec] sm:$0xff]
        %v1389 = vld [vmem:[%s1075 + $0xf4] sm:$0xff]
        %v1390 = vld [vmem:[%s1075 + $0x124] sm:$0xff]
        %v1391 = vld [vmem:[%s1075 + $0x12c] sm:$0xff]
        %v1392 = vld [vmem:[%s1075 + $0x15c] sm:$0xff]
        %v1393 = vld [vmem:[%s1075 + $0x164] sm:$0xff]
        %v1394 = vld [vmem:[%s1075 + $0x194] sm:$0xff]
        %v1395 = vld [vmem:[%s1075 + $0x19c] sm:$0xff]
        %v1396 = vld [vmem:[%s1075 + $0x12] sm:$0xff]
        %v1397 = vld [vmem:[%s1075 + $0x1a] sm:$0xff]
        %v1398 = vld [vmem:[%s1075 + $0x4a] sm:$0xff]
        %v1399 = vld [vmem:[%s1075 + $0x52] sm:$0xff]
        %v1400 = vld [vmem:[%s1075 + $0x82] sm:$0xff]
        %v1401 = vld [vmem:[%s1075 + $0x8a] sm:$0xff]
        %v1402 = vld [vmem:[%s1075 + $0xba] sm:$0xff]
        %v1403 = vld [vmem:[%s1075 + $0xc2] sm:$0xff]
        %v1404 = vld [vmem:[%s1075 + $0xf2] sm:$0xff]
        %v1405 = vld [vmem:[%s1075 + $0xfa] sm:$0xff]
        %v1406 = vld [vmem:[%s1075 + $0x12a] sm:$0xff]
        %v1407 = vld [vmem:[%s1075 + $0x132] sm:$0xff]
        %v1408 = vld [vmem:[%s1075 + $0x162] sm:$0xff]
        %v1409 = vld [vmem:[%s1075 + $0x16a] sm:$0xff]
        %v1410 = vld [vmem:[%s1075 + $0x19a] sm:$0xff]
        %v1411 = vld [vmem:[%s1075 + $0x1a2] sm:$0xff]
        %v1412 = vld [vmem:[%s1075 + $0x18] sm:$0xff]
        %v1413 = vld [vmem:[%s1075 + $0x20] sm:$0xff]
        %v1414 = vld [vmem:[%s1075 + $0x50] sm:$0xff]
        %v1415 = vld [vmem:[%s1075 + $0x58] sm:$0xff]
        %v1416 = vld [vmem:[%s1075 + $0x88] sm:$0xff]
        %v1417 = vld [vmem:[%s1075 + $0x90] sm:$0xff]
        %v1418 = vld [vmem:[%s1075 + $0xc0] sm:$0xff]
        %v1419 = vld [vmem:[%s1075 + $0xc8] sm:$0xff]
        %v1420 = vld [vmem:[%s1075 + $0xf8] sm:$0xff]
        %v1421 = vld [vmem:[%s1075 + $0x100] sm:$0xff]
        %v1422 = vld [vmem:[%s1075 + $0x130] sm:$0xff]
        %v1423 = vld [vmem:[%s1075 + $0x138] sm:$0xff]
        %v1424 = vld [vmem:[%s1075 + $0x168] sm:$0xff]
        %v1425 = vld [vmem:[%s1075 + $0x170] sm:$0xff]
        %v1426 = vld [vmem:[%s1075 + $0x1a0] sm:$0xff]
        %v1427 = vld [vmem:[%s1075 + $0x1a8] sm:$0xff]
        %s1428 = scalar_lea.vmem [#allocation2], 1344
        %v1429 = vld [vmem:[%s1428 + $0xc] sm:$0xff]
        %v1430 = vld [vmem:[%s1428 + $0x14] sm:$0xff]
        %v1431 = vld [vmem:[%s1428 + $0x44] sm:$0xff]
        %v1432 = vld [vmem:[%s1428 + $0x4c] sm:$0xff]
        %v1433 = vld [vmem:[%s1428 + $0x7c] sm:$0xff]
        %v1434 = vld [vmem:[%s1428 + $0x84] sm:$0xff]
        %v1435 = vld [vmem:[%s1428 + $0xb4] sm:$0xff]
        %v1436 = vld [vmem:[%s1428 + $0xbc] sm:$0xff]
        %v1437 = vld [vmem:[%s1428 + $0xec] sm:$0xff]
        %v1438 = vld [vmem:[%s1428 + $0xf4] sm:$0xff]
        %v1439 = vld [vmem:[%s1428 + $0x124] sm:$0xff]
        %v1440 = vld [vmem:[%s1428 + $0x12c] sm:$0xff]
        %v1441 = vld [vmem:[%s1428 + $0x15c] sm:$0xff]
        %v1442 = vld [vmem:[%s1428 + $0x164] sm:$0xff]
        %v1443 = vld [vmem:[%s1428 + $0x194] sm:$0xff]
        %v1444 = vld [vmem:[%s1428 + $0x19c] sm:$0xff]
        %v1445 = vld [vmem:[%s1428 + $0x12] sm:$0xff]
        %v1446 = vld [vmem:[%s1428 + $0x1a] sm:$0xff]
        %v1447 = vld [vmem:[%s1428 + $0x4a] sm:$0xff]
        %v1448 = vld [vmem:[%s1428 + $0x52] sm:$0xff]
        %v1449 = vld [vmem:[%s1428 + $0x82] sm:$0xff]
        %v1450 = vld [vmem:[%s1428 + $0x8a] sm:$0xff]
        %v1451 = vld [vmem:[%s1428 + $0xba] sm:$0xff]
        %v1452 = vld [vmem:[%s1428 + $0xc2] sm:$0xff]
        %v1453 = vld [vmem:[%s1428 + $0xf2] sm:$0xff]
        %v1454 = vld [vmem:[%s1428 + $0xfa] sm:$0xff]
        %v1455 = vld [vmem:[%s1428 + $0x12a] sm:$0xff]
        %v1456 = vld [vmem:[%s1428 + $0x132] sm:$0xff]
        %v1457 = vld [vmem:[%s1428 + $0x162] sm:$0xff]
        %v1458 = vld [vmem:[%s1428 + $0x16a] sm:$0xff]
        %v1459 = vld [vmem:[%s1428 + $0x19a] sm:$0xff]
        %v1460 = vld [vmem:[%s1428 + $0x1a2] sm:$0xff]
        %v1461 = vld [vmem:[%s1428 + $0x18] sm:$0xff]
        %v1462 = vld [vmem:[%s1428 + $0x20] sm:$0xff]
        %v1463 = vld [vmem:[%s1428 + $0x50] sm:$0xff]
        %v1464 = vld [vmem:[%s1428 + $0x58] sm:$0xff]
        %v1465 = vld [vmem:[%s1428 + $0x88] sm:$0xff]
        %v1466 = vld [vmem:[%s1428 + $0x90] sm:$0xff]
        %v1467 = vld [vmem:[%s1428 + $0xc0] sm:$0xff]
        %v1468 = vld [vmem:[%s1428 + $0xc8] sm:$0xff]
        %v1469 = vld [vmem:[%s1428 + $0xf8] sm:$0xff]
        %v1470 = vld [vmem:[%s1428 + $0x100] sm:$0xff]
        %v1471 = vld [vmem:[%s1428 + $0x130] sm:$0xff]
        %v1472 = vld [vmem:[%s1428 + $0x138] sm:$0xff]
        %v1473 = vld [vmem:[%s1428 + $0x168] sm:$0xff]
        %v1474 = vld [vmem:[%s1428 + $0x170] sm:$0xff]
        %v1475 = vld [vmem:[%s1428 + $0x1a0] sm:$0xff]
        %v1476 = vld [vmem:[%s1428 + $0x1a8] sm:$0xff]
        %v1477 = vld [vmem:[%s2] sm:$0xff]
        %v1478 = vld [vmem:[%s2 + $0x8] sm:$0xff]
        %v1479 = vld [vmem:[%s2 + $0x10] sm:$0xff]
        %v1480 = vld [vmem:[%s2 + $0x18] sm:$0xff]
        %v1481 = vld [vmem:[%s2 + $0x20] sm:$0xff]
        %v1482 = vld [vmem:[%s2 + $0x28] sm:$0xff]
        %v1483 = vld [vmem:[%s2 + $0x30] sm:$0xff]
        %v1484 = vld [vmem:[%s2 + $0x38] sm:$0xff]
        %v1485 = vld [vmem:[%s2 + $0x40] sm:$0xff]
        %v1486 = vld [vmem:[%s2 + $0x48] sm:$0xff]
        %v1487 = vld [vmem:[%s2 + $0x50] sm:$0xff]
        %v1488 = vld [vmem:[%s2 + $0x58] sm:$0xff]
        %v1489 = vld [vmem:[%s2 + $0x60] sm:$0xff]
        %v1490 = vld [vmem:[%s2 + $0x68] sm:$0xff]
        %v1491 = vld [vmem:[%s2 + $0x70] sm:$0xff]
        %v1492 = vld [vmem:[%s2 + $0x78] sm:$0xff]
        %v1493 = vld [vmem:[%s2 + $0x80] sm:$0xff]
        %v1494 = vld [vmem:[%s2 + $0x88] sm:$0xff]
        %v1495 = vld [vmem:[%s2 + $0x90] sm:$0xff]
        %v1496 = vld [vmem:[%s2 + $0x98] sm:$0xff]
        %v1497 = vld [vmem:[%s2 + $0xa0] sm:$0xff]
        %v1498 = vld [vmem:[%s2 + $0xa8] sm:$0xff]
        %v1499 = vld [vmem:[%s2 + $0xb0] sm:$0xff]
        %v1500 = vld [vmem:[%s2 + $0xb8] sm:$0xff]
        %v1501 = vld [vmem:[%s2 + $0xc0] sm:$0xff]
        %v1502 = vld [vmem:[%s2 + $0xc8] sm:$0xff]
        %v1503 = vld [vmem:[%s2 + $0xd0] sm:$0xff]
        %v1504 = vld [vmem:[%s2 + $0xd8] sm:$0xff]
        %v1505 = vld [vmem:[%s2 + $0xe0] sm:$0xff]
        %v1506 = vld [vmem:[%s2 + $0xe8] sm:$0xff]
        %v1507 = vld [vmem:[%s2 + $0xf0] sm:$0xff]
        %v1508 = vld [vmem:[%s2 + $0xf8] sm:$0xff]
        %v1509 = vld [vmem:[%s2 + $0x100] sm:$0xff]
        %v1510 = vld [vmem:[%s2 + $0x108] sm:$0xff]
        %v1511 = vld [vmem:[%s2 + $0x110] sm:$0xff]
        %v1512 = vld [vmem:[%s2 + $0x118] sm:$0xff]
        %v1513 = vld [vmem:[%s2 + $0x120] sm:$0xff]
        %v1514 = vld [vmem:[%s2 + $0x128] sm:$0xff]
        %v1515 = vld [vmem:[%s2 + $0x130] sm:$0xff]
        %v1516 = vld [vmem:[%s2 + $0x138] sm:$0xff]
        %v1517 = vld [vmem:[%s2 + $0x140] sm:$0xff]
        %v1518 = vld [vmem:[%s2 + $0x148] sm:$0xff]
        %v1519 = vld [vmem:[%s2 + $0x150] sm:$0xff]
        %v1520 = vld [vmem:[%s2 + $0x158] sm:$0xff]
        %v1521 = vld [vmem:[%s2 + $0x160] sm:$0xff]
        %v1522 = vld [vmem:[%s2 + $0x168] sm:$0xff]
        %v1523 = vld [vmem:[%s2 + $0x170] sm:$0xff]
        %v1524 = vld [vmem:[%s2 + $0x178] sm:$0xff]
        %v1525 = vld [vmem:[%s2 + $0x180] sm:$0xff]
        %v1526 = vld [vmem:[%s2 + $0x188] sm:$0xff]
        %v1527 = vld [vmem:[%s2 + $0x190] sm:$0xff]
        %v1528 = vld [vmem:[%s2 + $0x198] sm:$0xff]
        %v1529 = vld [vmem:[%s2 + $0x1a0] sm:$0xff]
        %v1530 = vld [vmem:[%s2 + $0x1a8] sm:$0xff]
        %v1531 = vld [vmem:[%s2 + $0x1b0] sm:$0xff]
        %v1532 = vld [vmem:[%s2 + $0x1b8] sm:$0xff]
        %v1533 = vld [vmem:[%s2 + $0x1c0] sm:$0xff]
        %v1534 = vld [vmem:[%s2 + $0x1c8] sm:$0xff]
        %v1535 = vld [vmem:[%s2 + $0x1d0] sm:$0xff]
        %v1536 = vld [vmem:[%s2 + $0x1d8] sm:$0xff]
        %v1537 = vld [vmem:[%s2 + $0x1e0] sm:$0xff]
        %v1538 = vld [vmem:[%s2 + $0x1e8] sm:$0xff]
        %v1539 = vld [vmem:[%s2 + $0x1f0] sm:$0xff]
        %v1540 = vld [vmem:[%s2 + $0x1f8] sm:$0xff]
        %v1541 = vld [vmem:[%s2 + $0x200] sm:$0xff]
        %v1542 = vld [vmem:[%s2 + $0x208] sm:$0xff]
        %v1543 = vld [vmem:[%s2 + $0x210] sm:$0xff]
        %v1544 = vld [vmem:[%s2 + $0x218] sm:$0xff]
        %v1545 = vld [vmem:[%s2 + $0x220] sm:$0xff]
        %v1546 = vld [vmem:[%s2 + $0x228] sm:$0xff]
        %v1547 = vld [vmem:[%s2 + $0x230] sm:$0xff]
        %v1548 = vld [vmem:[%s2 + $0x238] sm:$0xff]
        %v1549 = vld [vmem:[%s2 + $0x240] sm:$0xff]
        %v1550 = vld [vmem:[%s2 + $0x248] sm:$0xff]
        %v1551 = vld [vmem:[%s2 + $0x250] sm:$0xff]
        %v1552 = vld [vmem:[%s2 + $0x258] sm:$0xff]
        %v1553 = vld [vmem:[%s2 + $0x260] sm:$0xff]
        %v1554 = vld [vmem:[%s2 + $0x268] sm:$0xff]
        %v1555 = vld [vmem:[%s2 + $0x270] sm:$0xff]
        %v1556 = vld [vmem:[%s2 + $0x278] sm:$0xff]
        %v1557 = vld [vmem:[%s2 + $0x280] sm:$0xff]
        %v1558 = vld [vmem:[%s2 + $0x288] sm:$0xff]
        %v1559 = vld [vmem:[%s2 + $0x290] sm:$0xff]
        %v1560 = vld [vmem:[%s2 + $0x298] sm:$0xff]
        %v1561 = vld [vmem:[%s2 + $0x2a0] sm:$0xff]
        %v1562 = vld [vmem:[%s2 + $0x2a8] sm:$0xff]
        %v1563 = vld [vmem:[%s2 + $0x2b0] sm:$0xff]
        %v1564 = vld [vmem:[%s2 + $0x2b8] sm:$0xff]
        %v1565 = vld [vmem:[%s2 + $0x2c0] sm:$0xff]
        %v1566 = vld [vmem:[%s2 + $0x2c8] sm:$0xff]
        %v1567 = vld [vmem:[%s2 + $0x2d0] sm:$0xff]
        %v1568 = vld [vmem:[%s2 + $0x2d8] sm:$0xff]
        %v1569 = vld [vmem:[%s2 + $0x2e0] sm:$0xff]
        %v1570 = vld [vmem:[%s2 + $0x2e8] sm:$0xff]
        %v1571 = vld [vmem:[%s2 + $0x2f0] sm:$0xff]
        %v1572 = vld [vmem:[%s2 + $0x2f8] sm:$0xff]
        %v1573 = vld [vmem:[%s2 + $0x300] sm:$0xff]
        %v1574 = vld [vmem:[%s2 + $0x308] sm:$0xff]
        %v1575 = vld [vmem:[%s2 + $0x310] sm:$0xff]
        %v1576 = vld [vmem:[%s2 + $0x318] sm:$0xff]
        %v1577 = vld [vmem:[%s2 + $0x320] sm:$0xff]
        %v1578 = vld [vmem:[%s2 + $0x328] sm:$0xff]
        %v1579 = vld [vmem:[%s2 + $0x330] sm:$0xff]
        %v1580 = vld [vmem:[%s2 + $0x338] sm:$0xff]
        %v1581 = vld [vmem:[%s2 + $0x340] sm:$0xff]
        %v1582 = vld [vmem:[%s2 + $0x348] sm:$0xff]
        %v1583 = vld [vmem:[%s2 + $0x350] sm:$0xff]
        %v1584 = vld [vmem:[%s2 + $0x358] sm:$0xff]
        %v1585 = vld [vmem:[%s2 + $0x360] sm:$0xff]
        %v1586 = vld [vmem:[%s2 + $0x368] sm:$0xff]
        %v1587 = vld [vmem:[%s2 + $0x370] sm:$0xff]
        %v1588 = vld [vmem:[%s2 + $0x378] sm:$0xff]
        %v1589 = vld [vmem:[%s2 + $0x380] sm:$0xff]
        %v1590 = vld [vmem:[%s2 + $0x388] sm:$0xff]
        %v1591 = vld [vmem:[%s2 + $0x390] sm:$0xff]
        %v1592 = vld [vmem:[%s2 + $0x398] sm:$0xff]
        %v1593 = vld [vmem:[%s2 + $0x3a0] sm:$0xff]
        %v1594 = vld [vmem:[%s2 + $0x3a8] sm:$0xff]
        %v1595 = vld [vmem:[%s2 + $0x3b0] sm:$0xff]
        %v1596 = vld [vmem:[%s2 + $0x3b8] sm:$0xff]
        %v1597 = vld [vmem:[%s2 + $0x3c0] sm:$0xff]
        %v1598 = vld [vmem:[%s2 + $0x3c8] sm:$0xff]
        %v1599 = vld [vmem:[%s2 + $0x3d0] sm:$0xff]
        %v1600 = vld [vmem:[%s2 + $0x3d8] sm:$0xff]
        %v1601 = vld [vmem:[%s2 + $0x3e0] sm:$0xff]
        %v1602 = vld [vmem:[%s2 + $0x3e8] sm:$0xff]
        %v1603 = vld [vmem:[%s2 + $0x3f0] sm:$0xff]
        %v1604 = vld [vmem:[%s2 + $0x3f8] sm:$0xff]
        %v1605 = vld [vmem:[%s2 + $0x400] sm:$0xff]
        %v1606 = vld [vmem:[%s2 + $0x408] sm:$0xff]
        %v1607 = vld [vmem:[%s2 + $0x410] sm:$0xff]
        %v1608 = vld [vmem:[%s2 + $0x418] sm:$0xff]
        %v1609 = vld [vmem:[%s2 + $0x420] sm:$0xff]
        %v1610 = vld [vmem:[%s2 + $0x428] sm:$0xff]
        %v1611 = vld [vmem:[%s2 + $0x430] sm:$0xff]
        %v1612 = vld [vmem:[%s2 + $0x438] sm:$0xff]
        %v1613 = vld [vmem:[%s2 + $0x440] sm:$0xff]
        %v1614 = vld [vmem:[%s2 + $0x448] sm:$0xff]
        %v1615 = vld [vmem:[%s2 + $0x450] sm:$0xff]
        %v1616 = vld [vmem:[%s2 + $0x458] sm:$0xff]
        %v1617 = vld [vmem:[%s2 + $0x460] sm:$0xff]
        %v1618 = vld [vmem:[%s2 + $0x468] sm:$0xff]
        %v1619 = vld [vmem:[%s2 + $0x470] sm:$0xff]
        %v1620 = vld [vmem:[%s2 + $0x478] sm:$0xff]
        %1621 = vmatprep.subr.mxu0 0.0
        %1622 = vmatpush1.msra.mxu0 %v1477
        %1623 = vmatprep.subr.mxu0 0.0
        %1624 = vmatpush1.msra.mxu0 %v1478
        %1625 = vmatprep.subr.mxu0 0.0
        %1626 = vmatpush1.msra.mxu0 %v1479
        %1627 = vmatprep.subr.mxu0 0.0
        %1628 = vmatpush1.msra.mxu0 %v1480
        %1629 = vmatprep.subr.mxu0 0.0
        %1630 = vmatpush1.msra.mxu0 %v1481
        %1631 = vmatprep.subr.mxu0 0.0
        %1632 = vmatpush1.msra.mxu0 %v1482
        %1633 = vmatprep.subr.mxu0 0.0
        %1634 = vmatpush1.msra.mxu0 %v1483
        %1635 = vmatprep.subr.mxu0 0.0
        %1636 = vmatpush1.msra.mxu0 %v1484
        %1637 = vmatprep.subr.mxu0 0.0
        %1638 = vmatpush1.msra.mxu0 %v1485
        %1639 = vmatprep.subr.mxu0 0.0
        %1640 = vmatpush1.msra.mxu0 %v1486
        %1641 = vmatprep.subr.mxu0 0.0
        %1642 = vmatpush1.msra.mxu0 %v1487
        %1643 = vmatprep.subr.mxu0 0.0
        %1644 = vmatpush1.msra.mxu0 %v1488
        %1645 = vmatprep.subr.mxu0 0.0
        %1646 = vmatpush1.msra.mxu0 %v1489
        %1647 = vmatprep.subr.mxu0 0.0
        %1648 = vmatpush1.msra.mxu0 %v1490
        %1649 = vmatprep.subr.mxu0 0.0
        %1650 = vmatpush1.msra.mxu0 %v1491
        %1651 = vmatprep.subr.mxu0 0.0
        %1652 = vmatpush1.msra.mxu0 %v1492
        %1653 = vmatprep.subr.mxu0 0.0
        %1654 = vmatpush1.msra.mxu0 %v1493
        %1655 = vmatprep.subr.mxu0 0.0
        %1656 = vmatpush1.msra.mxu0 %v1494
        %1657 = vmatprep.subr.mxu0 0.0
        %1658 = vmatpush1.msra.mxu0 %v1495
        %1659 = vmatprep.subr.mxu0 0.0
        %1660 = vmatpush1.msra.mxu0 %v1496
        %1661 = vmatprep.subr.mxu0 0.0
        %1662 = vmatpush1.msra.mxu0 %v1497
        %1663 = vmatprep.subr.mxu0 0.0
        %1664 = vmatpush1.msra.mxu0 %v1498
        %1665 = vmatprep.subr.mxu0 0.0
        %1666 = vmatpush1.msra.mxu0 %v1499
        %1667 = vmatprep.subr.mxu0 0.0
        %1668 = vmatpush1.msra.mxu0 %v1500
        %1669 = vmatprep.subr.mxu0 0.0
        %1670 = vmatpush1.msra.mxu0 %v1501
        %1671 = vmatprep.subr.mxu0 0.0
        %1672 = vmatpush1.msra.mxu0 %v1502
        %1673 = vmatprep.subr.mxu0 0.0
        %1674 = vmatpush1.msra.mxu0 %v1503
        %1675 = vmatprep.subr.mxu0 0.0
        %1676 = vmatpush1.msra.mxu0 %v1504
        %1677 = vmatprep.subr.mxu0 0.0
        %1678 = vmatpush1.msra.mxu0 %v1505
        %1679 = vmatprep.subr.mxu0 0.0
        %1680 = vmatpush1.msra.mxu0 %v1506
        %1681 = vmatprep.subr.mxu0 0.0
        %1682 = vmatpush1.msra.mxu0 %v1507
        %1683 = vmatprep.subr.mxu0 0.0
        %1684 = vmatpush1.msra.mxu0 %v1508
        %1685 = vmatprep.mubr.f32.mxu0 %v1348
        %1686 = vmatmul.mubr.f32.gmra.mrb[0].mxu0 %v1332
        %v1687 = vpop.f32.mrb[0].mxu0
        %v1688 = vadd.f32 0.0, %v1687
        %v1689 = vpop.f32.mrb[0].mxu0
        %1690 = vmatprep.mubr.f32.mxu0 %v1349
        %1691 = vmatmul.mubr.f32.gmra.mrb[0].mxu0 %v1333
        %v1692 = vpop.f32.mrb[0].mxu0
        %v1693 = vadd.f32 0.0, %v1692
        %v1694 = vpop.f32.mrb[0].mxu0
        %1695 = vmatprep.mubr.f32.mxu0 %v1350
        %1696 = vmatmul.mubr.f32.gmra.mrb[0].mxu0 %v1334
        %v1697 = vpop.f32.mrb[0].mxu0
        %v1698 = vadd.f32 0.0, %v1697
        %v1699 = vpop.f32.mrb[0].mxu0
        %1700 = vmatprep.mubr.f32.mxu0 %v1351
        %1701 = vmatmul.mubr.f32.gmra.mrb[0].mxu0 %v1335
        %v1702 = vpop.f32.mrb[0].mxu0
        %v1703 = vadd.f32 0.0, %v1702
        %v1704 = vpop.f32.mrb[0].mxu0
        %1705 = vmatprep.mubr.f32.mxu0 %v1352
        %1706 = vmatmul.mubr.f32.gmra.mrb[0].mxu0 %v1336
        %v1707 = vpop.f32.mrb[0].mxu0
        %v1708 = vadd.f32 0.0, %v1707
        %v1709 = vpop.f32.mrb[0].mxu0
        %1710 = vmatprep.mubr.f32.mxu0 %v1353
        %1711 = vmatmul.mubr.f32.gmra.mrb[0].mxu0 %v1337
        %v1712 = vpop.f32.mrb[0].mxu0
        %v1713 = vadd.f32 0.0, %v1712
        %v1714 = vpop.f32.mrb[0].mxu0
        %1715 = vmatprep.mubr.f32.mxu0 %v1354
        %1716 = vmatmul.mubr.f32.gmra.mrb[0].mxu0 %v1338
        %v1717 = vpop.f32.mrb[0].mxu0
        %v1718 = vadd.f32 0.0, %v1717
        %v1719 = vpop.f32.mrb[0].mxu0
        %1720 = vmatprep.mubr.f32.mxu0 %v1355
        %1721 = vmatmul.mubr.f32.gmra.mrb[0].mxu0 %v1339
        %v1722 = vpop.f32.mrb[0].mxu0
        %v1723 = vadd.f32 0.0, %v1722
        %v1724 = vpop.f32.mrb[0].mxu0
        %1725 = vmatprep.mubr.f32.mxu0 %v1356
        %1726 = vmatmul.mubr.f32.gmra.mrb[0].mxu0 %v1340
        %v1727 = vpop.f32.mrb[0].mxu0
        %v1728 = vadd.f32 0.0, %v1727
        %v1729 = vpop.f32.mrb[0].mxu0
        %1730 = vmatprep.mubr.f32.mxu0 %v1357
        %1731 = vmatmul.mubr.f32.gmra.mrb[0].mxu0 %v1341
        %v1732 = vpop.f32.mrb[0].mxu0
        %v1733 = vadd.f32 0.0, %v1732
        %v1734 = vpop.f32.mrb[0].mxu0
        %1735 = vmatprep.mubr.f32.mxu0 %v1358
        %1736 = vmatmul.mubr.f32.gmra.mrb[0].mxu0 %v1342
        %v1737 = vpop.f32.mrb[0].mxu0
        %v1738 = vadd.f32 0.0, %v1737
        %v1739 = vpop.f32.mrb[0].mxu0
        %1740 = vmatprep.mubr.f32.mxu0 %v1359
        %1741 = vmatmul.mubr.f32.gmra.mrb[0].mxu0 %v1343
        %v1742 = vpop.f32.mrb[0].mxu0
        %v1743 = vadd.f32 0.0, %v1742
        %v1744 = vpop.f32.mrb[0].mxu0
        %1745 = vmatprep.mubr.f32.mxu0 %v1360
        %1746 = vmatmul.mubr.f32.gmra.mrb[0].mxu0 %v1344
        %v1747 = vpop.f32.mrb[0].mxu0
        %v1748 = vadd.f32 0.0, %v1747
        %v1749 = vpop.f32.mrb[0].mxu0
        %1750 = vmatprep.mubr.f32.mxu0 %v1361
        %1751 = vmatmul.mubr.f32.gmra.mrb[0].mxu0 %v1345
        %v1752 = vpop.f32.mrb[0].mxu0
        %v1753 = vadd.f32 0.0, %v1752
        %v1754 = vpop.f32.mrb[0].mxu0
        %1755 = vmatprep.mubr.f32.mxu0 %v1362
        %1756 = vmatmul.mubr.f32.gmra.mrb[0].mxu0 %v1346
        %v1757 = vpop.f32.mrb[0].mxu0
        %v1758 = vadd.f32 0.0, %v1757
        %v1759 = vpop.f32.mrb[0].mxu0
        %1760 = vmatprep.mubr.f32.mxu0 %v1363
        %1761 = vmatmul.mubr.f32.gmra.mrb[0].mxu0 %v1347
        %v1762 = vpop.f32.mrb[0].mxu0
        %v1763 = vadd.f32 0.0, %v1762
        %v1764 = vpop.f32.mrb[0].mxu0
        %1765 = vdwg.mxu0
        %1766 = vmatprep.subr.mxu0 0.0
        %1767 = vmatpush1.msra.mxu0 %v1509
        %1768 = vmatprep.subr.mxu0 0.0
        %1769 = vmatpush1.msra.mxu0 %v1510
        %1770 = vmatprep.subr.mxu0 0.0
        %1771 = vmatpush1.msra.mxu0 %v1511
        %1772 = vmatprep.subr.mxu0 0.0
        %1773 = vmatpush1.msra.mxu0 %v1512
        %1774 = vmatprep.subr.mxu0 0.0
        %1775 = vmatpush1.msra.mxu0 %v1513
        %1776 = vmatprep.subr.mxu0 0.0
        %1777 = vmatpush1.msra.mxu0 %v1514
        %1778 = vmatprep.subr.mxu0 0.0
        %1779 = vmatpush1.msra.mxu0 %v1515
        %1780 = vmatprep.subr.mxu0 0.0
        %1781 = vmatpush1.msra.mxu0 %v1516
        %1782 = vmatprep.subr.mxu0 0.0
        %1783 = vmatpush1.msra.mxu0 %v1517
        %1784 = vmatprep.subr.mxu0 0.0
        %1785 = vmatpush1.msra.mxu0 %v1518
        %1786 = vmatprep.subr.mxu0 0.0
        %1787 = vmatpush1.msra.mxu0 %v1519
        %1788 = vmatprep.subr.mxu0 0.0
        %1789 = vmatpush1.msra.mxu0 %v1520
        %1790 = vmatprep.subr.mxu0 0.0
        %1791 = vmatpush1.msra.mxu0 %v1521
        %1792 = vmatprep.subr.mxu0 0.0
        %1793 = vmatpush1.msra.mxu0 %v1522
        %1794 = vmatprep.subr.mxu0 0.0
        %1795 = vmatpush1.msra.mxu0 %v1523
        %1796 = vmatprep.subr.mxu0 0.0
        %1797 = vmatpush1.msra.mxu0 %v1524
        %1798 = vmatprep.subr.mxu0 0.0
        %1799 = vmatpush1.msra.mxu0 %v1525
        %1800 = vmatprep.subr.mxu0 0.0
        %1801 = vmatpush1.msra.mxu0 %v1526
        %1802 = vmatprep.subr.mxu0 0.0
        %1803 = vmatpush1.msra.mxu0 %v1527
        %1804 = vmatprep.subr.mxu0 0.0
        %1805 = vmatpush1.msra.mxu0 %v1528
        %1806 = vmatprep.subr.mxu0 0.0
        %1807 = vmatpush1.msra.mxu0 %v1529
        %1808 = vmatprep.subr.mxu0 0.0
        %1809 = vmatpush1.msra.mxu0 %v1530
        %1810 = vmatprep.subr.mxu0 0.0
        %1811 = vmatpush1.msra.mxu0 %v1531
        %1812 = vmatprep.subr.mxu0 0.0
        %1813 = vmatpush1.msra.mxu0 %v1532
        %1814 = vmatprep.subr.mxu0 0.0
        %1815 = vmatpush1.msra.mxu0 %v1533
        %1816 = vmatprep.subr.mxu0 0.0
        %1817 = vmatpush1.msra.mxu0 %v1534
        %1818 = vmatprep.subr.mxu0 0.0
        %1819 = vmatpush1.msra.mxu0 %v1535
        %1820 = vmatprep.subr.mxu0 0.0
        %1821 = vmatpush1.msra.mxu0 %v1536
        %1822 = vmatprep.subr.mxu0 0.0
        %1823 = vmatpush1.msra.mxu0 %v1537
        %1824 = vmatprep.subr.mxu0 0.0
        %1825 = vmatpush1.msra.mxu0 %v1538
        %1826 = vmatprep.subr.mxu0 0.0
        %1827 = vmatpush1.msra.mxu0 %v1539
        %1828 = vmatprep.subr.mxu0 0.0
        %1829 = vmatpush1.msra.mxu0 %v1540
        %1830 = vmatprep.mubr.f32.mxu0 %v1380
        %1831 = vmatmul.mubr.f32.gmra.mrb[0].mxu0 %v1364
        %v1832 = vpop.f32.mrb[0].mxu0
        %v1833 = vadd.f32 %v1688, %v1832
        %v1834 = vpop.f32.mrb[0].mxu0
        %1835 = vmatprep.mubr.f32.mxu0 %v1381
        %1836 = vmatmul.mubr.f32.gmra.mrb[0].mxu0 %v1365
        %v1837 = vpop.f32.mrb[0].mxu0
        %v1838 = vadd.f32 %v1693, %v1837
        %v1839 = vpop.f32.mrb[0].mxu0
        %1840 = vmatprep.mubr.f32.mxu0 %v1382
        %1841 = vmatmul.mubr.f32.gmra.mrb[0].mxu0 %v1366
        %v1842 = vpop.f32.mrb[0].mxu0
        %v1843 = vadd.f32 %v1698, %v1842
        %v1844 = vpop.f32.mrb[0].mxu0
        %1845 = vmatprep.mubr.f32.mxu0 %v1383
        %1846 = vmatmul.mubr.f32.gmra.mrb[0].mxu0 %v1367
        %v1847 = vpop.f32.mrb[0].mxu0
        %v1848 = vadd.f32 %v1703, %v1847
        %v1849 = vpop.f32.mrb[0].mxu0
        %1850 = vmatprep.mubr.f32.mxu0 %v1384
        %1851 = vmatmul.mubr.f32.gmra.mrb[0].mxu0 %v1368
        %v1852 = vpop.f32.mrb[0].mxu0
        %v1853 = vadd.f32 %v1708, %v1852
        %v1854 = vpop.f32.mrb[0].mxu0
        %1855 = vmatprep.mubr.f32.mxu0 %v1385
        %1856 = vmatmul.mubr.f32.gmra.mrb[0].mxu0 %v1369
        %v1857 = vpop.f32.mrb[0].mxu0
        %v1858 = vadd.f32 %v1713, %v1857
        %v1859 = vpop.f32.mrb[0].mxu0
        %1860 = vmatprep.mubr.f32.mxu0 %v1386
        %1861 = vmatmul.mubr.f32.gmra.mrb[0].mxu0 %v1370
        %v1862 = vpop.f32.mrb[0].mxu0
        %v1863 = vadd.f32 %v1718, %v1862
        %v1864 = vpop.f32.mrb[0].mxu0
        %1865 = vmatprep.mubr.f32.mxu0 %v1387
        %1866 = vmatmul.mubr.f32.gmra.mrb[0].mxu0 %v1371
        %v1867 = vpop.f32.mrb[0].mxu0
        %v1868 = vadd.f32 %v1723, %v1867
        %v1869 = vpop.f32.mrb[0].mxu0
        %1870 = vmatprep.mubr.f32.mxu0 %v1388
        %1871 = vmatmul.mubr.f32.gmra.mrb[0].mxu0 %v1372
        %v1872 = vpop.f32.mrb[0].mxu0
        %v1873 = vadd.f32 %v1728, %v1872
        %v1874 = vpop.f32.mrb[0].mxu0
        %1875 = vmatprep.mubr.f32.mxu0 %v1389
        %1876 = vmatmul.mubr.f32.gmra.mrb[0].mxu0 %v1373
        %v1877 = vpop.f32.mrb[0].mxu0
        %v1878 = vadd.f32 %v1733, %v1877
        %v1879 = vpop.f32.mrb[0].mxu0
        %1880 = vmatprep.mubr.f32.mxu0 %v1390
        %1881 = vmatmul.mubr.f32.gmra.mrb[0].mxu0 %v1374
        %v1882 = vpop.f32.mrb[0].mxu0
        %v1883 = vadd.f32 %v1738, %v1882
        %v1884 = vpop.f32.mrb[0].mxu0
        %1885 = vmatprep.mubr.f32.mxu0 %v1391
        %1886 = vmatmul.mubr.f32.gmra.mrb[0].mxu0 %v1375
        %v1887 = vpop.f32.mrb[0].mxu0
        %v1888 = vadd.f32 %v1743, %v1887
        %v1889 = vpop.f32.mrb[0].mxu0
        %1890 = vmatprep.mubr.f32.mxu0 %v1392
        %1891 = vmatmul.mubr.f32.gmra.mrb[0].mxu0 %v1376
        %v1892 = vpop.f32.mrb[0].mxu0
        %v1893 = vadd.f32 %v1748, %v1892
        %v1894 = vpop.f32.mrb[0].mxu0
        %1895 = vmatprep.mubr.f32.mxu0 %v1393
        %1896 = vmatmul.mubr.f32.gmra.mrb[0].mxu0 %v1377
        %v1897 = vpop.f32.mrb[0].mxu0
        %v1898 = vadd.f32 %v1753, %v1897
        %v1899 = vpop.f32.mrb[0].mxu0
        %1900 = vmatprep.mubr.f32.mxu0 %v1394
        %1901 = vmatmul.mubr.f32.gmra.mrb[0].mxu0 %v1378
        %v1902 = vpop.f32.mrb[0].mxu0
        %v1903 = vadd.f32 %v1758, %v1902
        %v1904 = vpop.f32.mrb[0].mxu0
        %1905 = vmatprep.mubr.f32.mxu0 %v1395
        %1906 = vmatmul.mubr.f32.gmra.mrb[0].mxu0 %v1379
        %v1907 = vpop.f32.mrb[0].mxu0
        %v1908 = vadd.f32 %v1763, %v1907
        %v1909 = vpop.f32.mrb[0].mxu0
        %1910 = vdwg.mxu0
        %1911 = vmatprep.subr.mxu0 0.0
        %1912 = vmatpush1.msra.mxu0 %v1541
        %1913 = vmatprep.subr.mxu0 0.0
        %1914 = vmatpush1.msra.mxu0 %v1542
        %1915 = vmatprep.subr.mxu0 0.0
        %1916 = vmatpush1.msra.mxu0 %v1543
        %1917 = vmatprep.subr.mxu0 0.0
        %1918 = vmatpush1.msra.mxu0 %v1544
        %1919 = vmatprep.subr.mxu0 0.0
        %1920 = vmatpush1.msra.mxu0 %v1545
        %1921 = vmatprep.subr.mxu0 0.0
        %1922 = vmatpush1.msra.mxu0 %v1546
        %1923 = vmatprep.subr.mxu0 0.0
        %1924 = vmatpush1.msra.mxu0 %v1547
        %1925 = vmatprep.subr.mxu0 0.0
        %1926 = vmatpush1.msra.mxu0 %v1548
        %1927 = vmatprep.subr.mxu0 0.0
        %1928 = vmatpush1.msra.mxu0 %v1549
        %1929 = vmatprep.subr.mxu0 0.0
        %1930 = vmatpush1.msra.mxu0 %v1550
        %1931 = vmatprep.subr.mxu0 0.0
        %1932 = vmatpush1.msra.mxu0 %v1551
        %1933 = vmatprep.subr.mxu0 0.0
        %1934 = vmatpush1.msra.mxu0 %v1552
        %1935 = vmatprep.subr.mxu0 0.0
        %1936 = vmatpush1.msra.mxu0 %v1553
        %1937 = vmatprep.subr.mxu0 0.0
        %1938 = vmatpush1.msra.mxu0 %v1554
        %1939 = vmatprep.subr.mxu0 0.0
        %1940 = vmatpush1.msra.mxu0 %v1555
        %1941 = vmatprep.subr.mxu0 0.0
        %1942 = vmatpush1.msra.mxu0 %v1556
        %1943 = vmatprep.subr.mxu0 0.0
        %1944 = vmatpush1.msra.mxu0 %v1557
        %1945 = vmatprep.subr.mxu0 0.0
        %1946 = vmatpush1.msra.mxu0 %v1558
        %1947 = vmatprep.subr.mxu0 0.0
        %1948 = vmatpush1.msra.mxu0 %v1559
        %1949 = vmatprep.subr.mxu0 0.0
        %1950 = vmatpush1.msra.mxu0 %v1560
        %1951 = vmatprep.subr.mxu0 0.0
        %1952 = vmatpush1.msra.mxu0 %v1561
        %1953 = vmatprep.subr.mxu0 0.0
        %1954 = vmatpush1.msra.mxu0 %v1562
        %1955 = vmatprep.subr.mxu0 0.0
        %1956 = vmatpush1.msra.mxu0 %v1563
        %1957 = vmatprep.subr.mxu0 0.0
        %1958 = vmatpush1.msra.mxu0 %v1564
        %1959 = vmatprep.subr.mxu0 0.0
        %1960 = vmatpush1.msra.mxu0 %v1565
        %1961 = vmatprep.subr.mxu0 0.0
        %1962 = vmatpush1.msra.mxu0 %v1566
        %1963 = vmatprep.subr.mxu0 0.0
        %1964 = vmatpush1.msra.mxu0 %v1567
        %1965 = vmatprep.subr.mxu0 0.0
        %1966 = vmatpush1.msra.mxu0 %v1568
        %1967 = vmatprep.subr.mxu0 0.0
        %1968 = vmatpush1.msra.mxu0 %v1569
        %1969 = vmatprep.subr.mxu0 0.0
        %1970 = vmatpush1.msra.mxu0 %v1570
        %1971 = vmatprep.subr.mxu0 0.0
        %1972 = vmatpush1.msra.mxu0 %v1571
        %1973 = vmatprep.subr.mxu0 0.0
        %1974 = vmatpush1.msra.mxu0 %v1572
        %1975 = vmatprep.mubr.f32.mxu0 %v1412
        %1976 = vmatmul.mubr.f32.gmra.mrb[0].mxu0 %v1396
        %v1977 = vpop.f32.mrb[0].mxu0
        %v1978 = vadd.f32 %v1833, %v1977
        %v1979 = vpop.f32.mrb[0].mxu0
        %1980 = vmatprep.mubr.f32.mxu0 %v1413
        %1981 = vmatmul.mubr.f32.gmra.mrb[0].mxu0 %v1397
        %v1982 = vpop.f32.mrb[0].mxu0
        %v1983 = vadd.f32 %v1838, %v1982
        %v1984 = vpop.f32.mrb[0].mxu0
        %1985 = vmatprep.mubr.f32.mxu0 %v1414
        %1986 = vmatmul.mubr.f32.gmra.mrb[0].mxu0 %v1398
        %v1987 = vpop.f32.mrb[0].mxu0
        %v1988 = vadd.f32 %v1843, %v1987
        %v1989 = vpop.f32.mrb[0].mxu0
        %1990 = vmatprep.mubr.f32.mxu0 %v1415
        %1991 = vmatmul.mubr.f32.gmra.mrb[0].mxu0 %v1399
        %v1992 = vpop.f32.mrb[0].mxu0
        %v1993 = vadd.f32 %v1848, %v1992
        %v1994 = vpop.f32.mrb[0].mxu0
        %1995 = vmatprep.mubr.f32.mxu0 %v1416
        %1996 = vmatmul.mubr.f32.gmra.mrb[0].mxu0 %v1400
        %v1997 = vpop.f32.mrb[0].mxu0
        %v1998 = vadd.f32 %v1853, %v1997
        %v1999 = vpop.f32.mrb[0].mxu0
        %2000 = vmatprep.mubr.f32.mxu0 %v1417
        %2001 = vmatmul.mubr.f32.gmra.mrb[0].mxu0 %v1401
        %v2002 = vpop.f32.mrb[0].mxu0
        %v2003 = vadd.f32 %v1858, %v2002
        %v2004 = vpop.f32.mrb[0].mxu0
        %2005 = vmatprep.mubr.f32.mxu0 %v1418
        %2006 = vmatmul.mubr.f32.gmra.mrb[0].mxu0 %v1402
        %v2007 = vpop.f32.mrb[0].mxu0
        %v2008 = vadd.f32 %v1863, %v2007
        %v2009 = vpop.f32.mrb[0].mxu0
        %2010 = vmatprep.mubr.f32.mxu0 %v1419
        %2011 = vmatmul.mubr.f32.gmra.mrb[0].mxu0 %v1403
        %v2012 = vpop.f32.mrb[0].mxu0
        %v2013 = vadd.f32 %v1868, %v2012
        %v2014 = vpop.f32.mrb[0].mxu0
        %2015 = vmatprep.mubr.f32.mxu0 %v1420
        %2016 = vmatmul.mubr.f32.gmra.mrb[0].mxu0 %v1404
        %v2017 = vpop.f32.mrb[0].mxu0
        %v2018 = vadd.f32 %v1873, %v2017
        %v2019 = vpop.f32.mrb[0].mxu0
        %2020 = vmatprep.mubr.f32.mxu0 %v1421
        %2021 = vmatmul.mubr.f32.gmra.mrb[0].mxu0 %v1405
        %v2022 = vpop.f32.mrb[0].mxu0
        %v2023 = vadd.f32 %v1878, %v2022
        %v2024 = vpop.f32.mrb[0].mxu0
        %2025 = vmatprep.mubr.f32.mxu0 %v1422
        %2026 = vmatmul.mubr.f32.gmra.mrb[0].mxu0 %v1406
        %v2027 = vpop.f32.mrb[0].mxu0
        %v2028 = vadd.f32 %v1883, %v2027
        %v2029 = vpop.f32.mrb[0].mxu0
        %2030 = vmatprep.mubr.f32.mxu0 %v1423
        %2031 = vmatmul.mubr.f32.gmra.mrb[0].mxu0 %v1407
        %v2032 = vpop.f32.mrb[0].mxu0
        %v2033 = vadd.f32 %v1888, %v2032
        %v2034 = vpop.f32.mrb[0].mxu0
        %2035 = vmatprep.mubr.f32.mxu0 %v1424
        %2036 = vmatmul.mubr.f32.gmra.mrb[0].mxu0 %v1408
        %v2037 = vpop.f32.mrb[0].mxu0
        %v2038 = vadd.f32 %v1893, %v2037
        %v2039 = vpop.f32.mrb[0].mxu0
        %2040 = vmatprep.mubr.f32.mxu0 %v1425
        %2041 = vmatmul.mubr.f32.gmra.mrb[0].mxu0 %v1409
        %v2042 = vpop.f32.mrb[0].mxu0
        %v2043 = vadd.f32 %v1898, %v2042
        %v2044 = vpop.f32.mrb[0].mxu0
        %2045 = vmatprep.mubr.f32.mxu0 %v1426
        %2046 = vmatmul.mubr.f32.gmra.mrb[0].mxu0 %v1410
        %v2047 = vpop.f32.mrb[0].mxu0
        %v2048 = vadd.f32 %v1903, %v2047
        %v2049 = vpop.f32.mrb[0].mxu0
        %2050 = vmatprep.mubr.f32.mxu0 %v1427
        %2051 = vmatmul.mubr.f32.gmra.mrb[0].mxu0 %v1411
        %v2052 = vpop.f32.mrb[0].mxu0
        %v2053 = vadd.f32 %v1908, %v2052
        %v2054 = vpop.f32.mrb[0].mxu0
        %2055 = vdwg.mxu0
        %2056 = vmatprep.subr.mxu0 0.0
        %2057 = vmatpush1.msra.mxu0 %v1573
        %2058 = vmatprep.subr.mxu0 0.0
        %2059 = vmatpush1.msra.mxu0 %v1574
        %2060 = vmatprep.subr.mxu0 0.0
        %2061 = vmatpush1.msra.mxu0 %v1575
        %2062 = vmatprep.subr.mxu0 0.0
        %2063 = vmatpush1.msra.mxu0 %v1576
        %2064 = vmatprep.subr.mxu0 0.0
        %2065 = vmatpush1.msra.mxu0 %v1577
        %2066 = vmatprep.subr.mxu0 0.0
        %2067 = vmatpush1.msra.mxu0 %v1578
        %2068 = vmatprep.subr.mxu0 0.0
        %2069 = vmatpush1.msra.mxu0 %v1579
        %2070 = vmatprep.subr.mxu0 0.0
        %2071 = vmatpush1.msra.mxu0 %v1580
        %2072 = vmatprep.subr.mxu0 0.0
        %2073 = vmatpush1.msra.mxu0 %v1581
        %2074 = vmatprep.subr.mxu0 0.0
        %2075 = vmatpush1.msra.mxu0 %v1582
        %2076 = vmatprep.subr.mxu0 0.0
        %2077 = vmatpush1.msra.mxu0 %v1583
        %2078 = vmatprep.subr.mxu0 0.0
        %2079 = vmatpush1.msra.mxu0 %v1584
        %2080 = vmatprep.subr.mxu0 0.0
        %2081 = vmatpush1.msra.mxu0 %v1585
        %2082 = vmatprep.subr.mxu0 0.0
        %2083 = vmatpush1.msra.mxu0 %v1586
        %2084 = vmatprep.subr.mxu0 0.0
        %2085 = vmatpush1.msra.mxu0 %v1587
        %2086 = vmatprep.subr.mxu0 0.0
        %2087 = vmatpush1.msra.mxu0 %v1588
        %2088 = vmatprep.subr.mxu0 0.0
        %2089 = vmatpush1.msra.mxu0 %v1589
        %2090 = vmatprep.subr.mxu0 0.0
        %2091 = vmatpush1.msra.mxu0 %v1590
        %2092 = vmatprep.subr.mxu0 0.0
        %2093 = vmatpush1.msra.mxu0 %v1591
        %2094 = vmatprep.subr.mxu0 0.0
        %2095 = vmatpush1.msra.mxu0 %v1592
        %2096 = vmatprep.subr.mxu0 0.0
        %2097 = vmatpush1.msra.mxu0 %v1593
        %2098 = vmatprep.subr.mxu0 0.0
        %2099 = vmatpush1.msra.mxu0 %v1594
        %2100 = vmatprep.subr.mxu0 0.0
        %2101 = vmatpush1.msra.mxu0 %v1595
        %2102 = vmatprep.subr.mxu0 0.0
        %2103 = vmatpush1.msra.mxu0 %v1596
        %2104 = vmatprep.subr.mxu0 0.0
        %2105 = vmatpush1.msra.mxu0 %v1597
        %2106 = vmatprep.subr.mxu0 0.0
        %2107 = vmatpush1.msra.mxu0 %v1598
        %2108 = vmatprep.subr.mxu0 0.0
        %2109 = vmatpush1.msra.mxu0 %v1599
        %2110 = vmatprep.subr.mxu0 0.0
        %2111 = vmatpush1.msra.mxu0 %v1600
        %2112 = vmatprep.subr.mxu0 0.0
        %2113 = vmatpush1.msra.mxu0 %v1601
        %2114 = vmatprep.subr.mxu0 0.0
        %2115 = vmatpush1.msra.mxu0 %v1602
        %2116 = vmatprep.subr.mxu0 0.0
        %2117 = vmatpush1.msra.mxu0 %v1603
        %2118 = vmatprep.subr.mxu0 0.0
        %2119 = vmatpush1.msra.mxu0 %v1604
        %2120 = vmatprep.mubr.f32.mxu0 %v1445
        %2121 = vmatmul.mubr.f32.gmra.mrb[0].mxu0 %v1429
        %v2122 = vpop.f32.mrb[0].mxu0
        %v2123 = vadd.f32 %v1978, %v2122
        %v2124 = vpop.f32.mrb[0].mxu0
        %2125 = vmatprep.mubr.f32.mxu0 %v1446
        %2126 = vmatmul.mubr.f32.gmra.mrb[0].mxu0 %v1430
        %v2127 = vpop.f32.mrb[0].mxu0
        %v2128 = vadd.f32 %v1983, %v2127
        %v2129 = vpop.f32.mrb[0].mxu0
        %2130 = vmatprep.mubr.f32.mxu0 %v1447
        %2131 = vmatmul.mubr.f32.gmra.mrb[0].mxu0 %v1431
        %v2132 = vpop.f32.mrb[0].mxu0
        %v2133 = vadd.f32 %v1988, %v2132
        %v2134 = vpop.f32.mrb[0].mxu0
        %2135 = vmatprep.mubr.f32.mxu0 %v1448
        %2136 = vmatmul.mubr.f32.gmra.mrb[0].mxu0 %v1432
        %v2137 = vpop.f32.mrb[0].mxu0
        %v2138 = vadd.f32 %v1993, %v2137
        %v2139 = vpop.f32.mrb[0].mxu0
        %2140 = vmatprep.mubr.f32.mxu0 %v1449
        %2141 = vmatmul.mubr.f32.gmra.mrb[0].mxu0 %v1433
        %v2142 = vpop.f32.mrb[0].mxu0
        %v2143 = vadd.f32 %v1998, %v2142
        %v2144 = vpop.f32.mrb[0].mxu0
        %2145 = vmatprep.mubr.f32.mxu0 %v1450
        %2146 = vmatmul.mubr.f32.gmra.mrb[0].mxu0 %v1434
        %v2147 = vpop.f32.mrb[0].mxu0
        %v2148 = vadd.f32 %v2003, %v2147
        %v2149 = vpop.f32.mrb[0].mxu0
        %2150 = vmatprep.mubr.f32.mxu0 %v1451
        %2151 = vmatmul.mubr.f32.gmra.mrb[0].mxu0 %v1435
        %v2152 = vpop.f32.mrb[0].mxu0
        %v2153 = vadd.f32 %v2008, %v2152
        %v2154 = vpop.f32.mrb[0].mxu0
        %2155 = vmatprep.mubr.f32.mxu0 %v1452
        %2156 = vmatmul.mubr.f32.gmra.mrb[0].mxu0 %v1436
        %v2157 = vpop.f32.mrb[0].mxu0
        %v2158 = vadd.f32 %v2013, %v2157
        %v2159 = vpop.f32.mrb[0].mxu0
        %2160 = vmatprep.mubr.f32.mxu0 %v1453
        %2161 = vmatmul.mubr.f32.gmra.mrb[0].mxu0 %v1437
        %v2162 = vpop.f32.mrb[0].mxu0
        %v2163 = vadd.f32 %v2018, %v2162
        %v2164 = vpop.f32.mrb[0].mxu0
        %2165 = vmatprep.mubr.f32.mxu0 %v1454
        %2166 = vmatmul.mubr.f32.gmra.mrb[0].mxu0 %v1438
        %v2167 = vpop.f32.mrb[0].mxu0
        %v2168 = vadd.f32 %v2023, %v2167
        %v2169 = vpop.f32.mrb[0].mxu0
        %2170 = vmatprep.mubr.f32.mxu0 %v1455
        %2171 = vmatmul.mubr.f32.gmra.mrb[0].mxu0 %v1439
        %v2172 = vpop.f32.mrb[0].mxu0
        %v2173 = vadd.f32 %v2028, %v2172
        %v2174 = vpop.f32.mrb[0].mxu0
        %2175 = vmatprep.mubr.f32.mxu0 %v1456
        %2176 = vmatmul.mubr.f32.gmra.mrb[0].mxu0 %v1440
        %v2177 = vpop.f32.mrb[0].mxu0
        %v2178 = vadd.f32 %v2033, %v2177
        %v2179 = vpop.f32.mrb[0].mxu0
        %2180 = vmatprep.mubr.f32.mxu0 %v1457
        %2181 = vmatmul.mubr.f32.gmra.mrb[0].mxu0 %v1441
        %v2182 = vpop.f32.mrb[0].mxu0
        %v2183 = vadd.f32 %v2038, %v2182
        %v2184 = vpop.f32.mrb[0].mxu0
        %2185 = vmatprep.mubr.f32.mxu0 %v1458
        %2186 = vmatmul.mubr.f32.gmra.mrb[0].mxu0 %v1442
        %v2187 = vpop.f32.mrb[0].mxu0
        %v2188 = vadd.f32 %v2043, %v2187
        %v2189 = vpop.f32.mrb[0].mxu0
        %2190 = vmatprep.mubr.f32.mxu0 %v1459
        %2191 = vmatmul.mubr.f32.gmra.mrb[0].mxu0 %v1443
        %v2192 = vpop.f32.mrb[0].mxu0
        %v2193 = vadd.f32 %v2048, %v2192
        %v2194 = vpop.f32.mrb[0].mxu0
        %2195 = vmatprep.mubr.f32.mxu0 %v1460
        %2196 = vmatmul.mubr.f32.gmra.mrb[0].mxu0 %v1444
        %v2197 = vpop.f32.mrb[0].mxu0
        %v2198 = vadd.f32 %v2053, %v2197
        %v2199 = vpop.f32.mrb[0].mxu0
        %2200 = vdwg.mxu0
        %2201 = vmatprep.subr.mxu0 0.0
        %2202 = vmatpush1.msra.mxu0 %v1605
        %2203 = vmatprep.subr.mxu0 0.0
        %2204 = vmatpush1.msra.mxu0 %v1606
        %2205 = vmatprep.subr.mxu0 0.0
        %2206 = vmatpush1.msra.mxu0 %v1607
        %2207 = vmatprep.subr.mxu0 0.0
        %2208 = vmatpush1.msra.mxu0 %v1608
        %2209 = vmatprep.subr.mxu0 0.0
        %2210 = vmatpush1.msra.mxu0 %v1609
        %2211 = vmatprep.subr.mxu0 0.0
        %2212 = vmatpush1.msra.mxu0 %v1610
        %2213 = vmatprep.subr.mxu0 0.0
        %2214 = vmatpush1.msra.mxu0 %v1611
        %2215 = vmatprep.subr.mxu0 0.0
        %2216 = vmatpush1.msra.mxu0 %v1612
        %2217 = vmatprep.subr.mxu0 0.0
        %2218 = vmatpush1.msra.mxu0 %v1613
        %2219 = vmatprep.subr.mxu0 0.0
        %2220 = vmatpush1.msra.mxu0 %v1614
        %2221 = vmatprep.subr.mxu0 0.0
        %2222 = vmatpush1.msra.mxu0 %v1615
        %2223 = vmatprep.subr.mxu0 0.0
        %2224 = vmatpush1.msra.mxu0 %v1616
        %2225 = vmatprep.subr.mxu0 0.0
        %2226 = vmatpush1.msra.mxu0 %v1617
        %2227 = vmatprep.subr.mxu0 0.0
        %2228 = vmatpush1.msra.mxu0 %v1618
        %2229 = vmatprep.subr.mxu0 0.0
        %2230 = vmatpush1.msra.mxu0 %v1619
        %2231 = vmatprep.subr.mxu0 0.0
        %2232 = vmatpush1.msra.mxu0 %v1620
        %2233 = vmatprep.subr.mxu0 0.0
        %2234 = vmatpush1.msra.mxu0 0.0
        %2235 = vmatprep.subr.mxu0 0.0
        %2236 = vmatpush1.msra.mxu0 0.0
        %2237 = vmatprep.subr.mxu0 0.0
        %2238 = vmatpush1.msra.mxu0 0.0
        %2239 = vmatprep.subr.mxu0 0.0
        %2240 = vmatpush1.msra.mxu0 0.0
        %2241 = vmatprep.subr.mxu0 0.0
        %2242 = vmatpush1.msra.mxu0 0.0
        %2243 = vmatprep.subr.mxu0 0.0
        %2244 = vmatpush1.msra.mxu0 0.0
        %2245 = vmatprep.subr.mxu0 0.0
        %2246 = vmatpush1.msra.mxu0 0.0
        %2247 = vmatprep.subr.mxu0 0.0
        %2248 = vmatpush1.msra.mxu0 0.0
        %2249 = vmatprep.subr.mxu0 0.0
        %2250 = vmatpush1.msra.mxu0 0.0
        %2251 = vmatprep.subr.mxu0 0.0
        %2252 = vmatpush1.msra.mxu0 0.0
        %2253 = vmatprep.subr.mxu0 0.0
        %2254 = vmatpush1.msra.mxu0 0.0
        %2255 = vmatprep.subr.mxu0 0.0
        %2256 = vmatpush1.msra.mxu0 0.0
        %2257 = vmatprep.subr.mxu0 0.0
        %2258 = vmatpush1.msra.mxu0 0.0
        %2259 = vmatprep.subr.mxu0 0.0
        %2260 = vmatpush1.msra.mxu0 0.0
        %2261 = vmatprep.subr.mxu0 0.0
        %2262 = vmatpush1.msra.mxu0 0.0
        %2263 = vmatprep.subr.mxu0 0.0
        %2264 = vmatpush1.msra.mxu0 0.0
        %2265 = vmatprep.mubr.f32.mxu0 0.0
        %2266 = vmatmul.mubr.f32.gmra.mrb[0].mxu0 %v1461
        %v2267 = vpop.f32.mrb[0].mxu0
        %v2268 = vadd.f32 %v2123, %v2267
        %v2269 = vpop.f32.mrb[0].mxu0
        %2270 = vmatprep.mubr.f32.mxu0 0.0
        %2271 = vmatmul.mubr.f32.gmra.mrb[0].mxu0 %v1462
        %v2272 = vpop.f32.mrb[0].mxu0
        %v2273 = vadd.f32 %v2128, %v2272
        %v2274 = vpop.f32.mrb[0].mxu0
        %2275 = vmatprep.mubr.f32.mxu0 0.0
        %2276 = vmatmul.mubr.f32.gmra.mrb[0].mxu0 %v1463
        %v2277 = vpop.f32.mrb[0].mxu0
        %v2278 = vadd.f32 %v2133, %v2277
        %v2279 = vpop.f32.mrb[0].mxu0
        %2280 = vmatprep.mubr.f32.mxu0 0.0
        %2281 = vmatmul.mubr.f32.gmra.mrb[0].mxu0 %v1464
        %v2282 = vpop.f32.mrb[0].mxu0
        %v2283 = vadd.f32 %v2138, %v2282
        %v2284 = vpop.f32.mrb[0].mxu0
        %2285 = vmatprep.mubr.f32.mxu0 0.0
        %2286 = vmatmul.mubr.f32.gmra.mrb[0].mxu0 %v1465
        %v2287 = vpop.f32.mrb[0].mxu0
        %v2288 = vadd.f32 %v2143, %v2287
        %v2289 = vpop.f32.mrb[0].mxu0
        %2290 = vmatprep.mubr.f32.mxu0 0.0
        %2291 = vmatmul.mubr.f32.gmra.mrb[0].mxu0 %v1466
        %v2292 = vpop.f32.mrb[0].mxu0
        %v2293 = vadd.f32 %v2148, %v2292
        %v2294 = vpop.f32.mrb[0].mxu0
        %2295 = vmatprep.mubr.f32.mxu0 0.0
        %2296 = vmatmul.mubr.f32.gmra.mrb[0].mxu0 %v1467
        %v2297 = vpop.f32.mrb[0].mxu0
        %v2298 = vadd.f32 %v2153, %v2297
        %v2299 = vpop.f32.mrb[0].mxu0
        %2300 = vmatprep.mubr.f32.mxu0 0.0
        %2301 = vmatmul.mubr.f32.gmra.mrb[0].mxu0 %v1468
        %v2302 = vpop.f32.mrb[0].mxu0
        %v2303 = vadd.f32 %v2158, %v2302
        %v2304 = vpop.f32.mrb[0].mxu0
        %2305 = vmatprep.mubr.f32.mxu0 0.0
        %2306 = vmatmul.mubr.f32.gmra.mrb[0].mxu0 %v1469
        %v2307 = vpop.f32.mrb[0].mxu0
        %v2308 = vadd.f32 %v2163, %v2307
        %v2309 = vpop.f32.mrb[0].mxu0
        %2310 = vmatprep.mubr.f32.mxu0 0.0
        %2311 = vmatmul.mubr.f32.gmra.mrb[0].mxu0 %v1470
        %v2312 = vpop.f32.mrb[0].mxu0
        %v2313 = vadd.f32 %v2168, %v2312
        %v2314 = vpop.f32.mrb[0].mxu0
        %2315 = vmatprep.mubr.f32.mxu0 0.0
        %2316 = vmatmul.mubr.f32.gmra.mrb[0].mxu0 %v1471
        %v2317 = vpop.f32.mrb[0].mxu0
        %v2318 = vadd.f32 %v2173, %v2317
        %v2319 = vpop.f32.mrb[0].mxu0
        %2320 = vmatprep.mubr.f32.mxu0 0.0
        %2321 = vmatmul.mubr.f32.gmra.mrb[0].mxu0 %v1472
        %v2322 = vpop.f32.mrb[0].mxu0
        %v2323 = vadd.f32 %v2178, %v2322
        %v2324 = vpop.f32.mrb[0].mxu0
        %2325 = vmatprep.mubr.f32.mxu0 0.0
        %2326 = vmatmul.mubr.f32.gmra.mrb[0].mxu0 %v1473
        %v2327 = vpop.f32.mrb[0].mxu0
        %v2328 = vadd.f32 %v2183, %v2327
        %v2329 = vpop.f32.mrb[0].mxu0
        %2330 = vmatprep.mubr.f32.mxu0 0.0
        %2331 = vmatmul.mubr.f32.gmra.mrb[0].mxu0 %v1474
        %v2332 = vpop.f32.mrb[0].mxu0
        %v2333 = vadd.f32 %v2188, %v2332
        %v2334 = vpop.f32.mrb[0].mxu0
        %2335 = vmatprep.mubr.f32.mxu0 0.0
        %2336 = vmatmul.mubr.f32.gmra.mrb[0].mxu0 %v1475
        %v2337 = vpop.f32.mrb[0].mxu0
        %v2338 = vadd.f32 %v2193, %v2337
        %v2339 = vpop.f32.mrb[0].mxu0
        %2340 = vmatprep.mubr.f32.mxu0 0.0
        %2341 = vmatmul.mubr.f32.gmra.mrb[0].mxu0 %v1476
        %v2342 = vpop.f32.mrb[0].mxu0
        %v2343 = vadd.f32 %v2198, %v2342
        %v2344 = vpop.f32.mrb[0].mxu0
        %2345 = vdwg.mxu0
        %s2346 = scalar_lea.vmem %s4, 1
        %v2347 = vld [vmem:[%s2346] sm:$0x1]
        %v2349 = vlaneseq
        %v2350 = vshrl.u32 %v2349, 7
        %v2351 = vsub.s32 0, %v2350
        %v2352 = vrot.slane %v2347, %v2351
        %v2354 = vmul.f32 %v2268, %v2352
        %v2355 = vmul.f32 %v2273, %v2352
        %v2356 = vmul.f32 %v2278, %v2352
        %v2357 = vmul.f32 %v2283, %v2352
        %v2358 = vmul.f32 %v2288, %v2352
        %v2359 = vmul.f32 %v2293, %v2352
        %v2360 = vmul.f32 %v2298, %v2352
        %v2361 = vmul.f32 %v2303, %v2352
        %v2362 = vmul.f32 %v2308, %v2352
        %v2363 = vmul.f32 %v2313, %v2352
        %v2364 = vmul.f32 %v2318, %v2352
        %v2365 = vmul.f32 %v2323, %v2352
        %v2366 = vmul.f32 %v2328, %v2352
        %v2367 = vmul.f32 %v2333, %v2352
        %v2368 = vmul.f32 %v2338, %v2352
        %v2369 = vmul.f32 %v2343, %v2352
        %s2370 = scalar_lea.vmem %s5, 1
        %v2371 = vld [vmem:[%s2370] sm:$0x1]
        %v2373 = vlaneseq
        %v2374 = vshrl.u32 %v2373, 7
        %v2375 = vsub.s32 0, %v2374
        %v2376 = vrot.slane %v2371, %v2375
        %v2378 = vadd.f32 %v2354, %v2376
        %v2379 = vadd.f32 %v2355, %v2376
        %v2380 = vadd.f32 %v2356, %v2376
        %v2381 = vadd.f32 %v2357, %v2376
        %v2382 = vadd.f32 %v2358, %v2376
        %v2383 = vadd.f32 %v2359, %v2376
        %v2384 = vadd.f32 %v2360, %v2376
        %v2385 = vadd.f32 %v2361, %v2376
        %v2386 = vadd.f32 %v2362, %v2376
        %v2387 = vadd.f32 %v2363, %v2376
        %v2388 = vadd.f32 %v2364, %v2376
        %v2389 = vadd.f32 %v2365, %v2376
        %v2390 = vadd.f32 %v2366, %v2376
        %v2391 = vadd.f32 %v2367, %v2376
        %v2392 = vadd.f32 %v2368, %v2376
        %v2393 = vadd.f32 %v2369, %v2376
        %v2394 = vmax.f32 %v2378, 0.0
        %v2395 = vmax.f32 %v2379, 0.0
        %v2396 = vmax.f32 %v2380, 0.0
        %v2397 = vmax.f32 %v2381, 0.0
        %v2398 = vmax.f32 %v2382, 0.0
        %v2399 = vmax.f32 %v2383, 0.0
        %v2400 = vmax.f32 %v2384, 0.0
        %v2401 = vmax.f32 %v2385, 0.0
        %v2402 = vmax.f32 %v2386, 0.0
        %v2403 = vmax.f32 %v2387, 0.0
        %v2404 = vmax.f32 %v2388, 0.0
        %v2405 = vmax.f32 %v2389, 0.0
        %v2406 = vmax.f32 %v2390, 0.0
        %v2407 = vmax.f32 %v2391, 0.0
        %v2408 = vmax.f32 %v2392, 0.0
        %v2409 = vmax.f32 %v2393, 0.0
        %2410 = vst [vmem:[#allocation3 + $0x8] sm:$0xff] %v2394
        %2411 = vst [vmem:[#allocation3 + $0x28] sm:$0xff] %v2395
        %2412 = vst [vmem:[#allocation3 + $0x48] sm:$0xff] %v2396
        %2413 = vst [vmem:[#allocation3 + $0x68] sm:$0xff] %v2397
        %2414 = vst [vmem:[#allocation3 + $0x88] sm:$0xff] %v2398
        %2415 = vst [vmem:[#allocation3 + $0xa8] sm:$0xff] %v2399
        %2416 = vst [vmem:[#allocation3 + $0xc8] sm:$0xff] %v2400
        %2417 = vst [vmem:[#allocation3 + $0xe8] sm:$0xff] %v2401
        %2418 = vst [vmem:[#allocation3 + $0x108] sm:$0xff] %v2402
        %2419 = vst [vmem:[#allocation3 + $0x128] sm:$0xff] %v2403
        %2420 = vst [vmem:[#allocation3 + $0x148] sm:$0xff] %v2404
        %2421 = vst [vmem:[#allocation3 + $0x168] sm:$0xff] %v2405
        %2422 = vst [vmem:[#allocation3 + $0x188] sm:$0xff] %v2406
        %2423 = vst [vmem:[#allocation3 + $0x1a8] sm:$0xff] %v2407
        %2424 = vst [vmem:[#allocation3 + $0x1c8] sm:$0xff] %v2408
        %2425 = vst [vmem:[#allocation3 + $0x1e8] sm:$0xff] %v2409
        %s2426 = scalar_lea.vmem [#allocation2], 336
        %v2427 = vld [vmem:[%s2426 + $0x6] sm:$0xff]
        %v2428 = vld [vmem:[%s2426 + $0xe] sm:$0xff]
        %v2429 = vld [vmem:[%s2426 + $0x3e] sm:$0xff]
        %v2430 = vld [vmem:[%s2426 + $0x46] sm:$0xff]
        %v2431 = vld [vmem:[%s2426 + $0x76] sm:$0xff]
        %v2432 = vld [vmem:[%s2426 + $0x7e] sm:$0xff]
        %v2433 = vld [vmem:[%s2426 + $0xae] sm:$0xff]
        %v2434 = vld [vmem:[%s2426 + $0xb6] sm:$0xff]
        %v2435 = vld [vmem:[%s2426 + $0xe6] sm:$0xff]
        %v2436 = vld [vmem:[%s2426 + $0xee] sm:$0xff]
        %v2437 = vld [vmem:[%s2426 + $0x11e] sm:$0xff]
        %v2438 = vld [vmem:[%s2426 + $0x126] sm:$0xff]
        %v2439 = vld [vmem:[%s2426 + $0x156] sm:$0xff]
        %v2440 = vld [vmem:[%s2426 + $0x15e] sm:$0xff]
        %v2441 = vld [vmem:[%s2426 + $0x18e] sm:$0xff]
        %v2442 = vld [vmem:[%s2426 + $0x196] sm:$0xff]
        %v2443 = vld [vmem:[%s2426 + $0x12] sm:$0xff]
        %v2444 = vld [vmem:[%s2426 + $0x1a] sm:$0xff]
        %v2445 = vld [vmem:[%s2426 + $0x4a] sm:$0xff]
        %v2446 = vld [vmem:[%s2426 + $0x52] sm:$0xff]
        %v2447 = vld [vmem:[%s2426 + $0x82] sm:$0xff]
        %v2448 = vld [vmem:[%s2426 + $0x8a] sm:$0xff]
        %v2449 = vld [vmem:[%s2426 + $0xba] sm:$0xff]
        %v2450 = vld [vmem:[%s2426 + $0xc2] sm:$0xff]
        %v2451 = vld [vmem:[%s2426 + $0xf2] sm:$0xff]
        %v2452 = vld [vmem:[%s2426 + $0xfa] sm:$0xff]
        %v2453 = vld [vmem:[%s2426 + $0x12a] sm:$0xff]
        %v2454 = vld [vmem:[%s2426 + $0x132] sm:$0xff]
        %v2455 = vld [vmem:[%s2426 + $0x162] sm:$0xff]
        %v2456 = vld [vmem:[%s2426 + $0x16a] sm:$0xff]
        %v2457 = vld [vmem:[%s2426 + $0x19a] sm:$0xff]
        %v2458 = vld [vmem:[%s2426 + $0x1a2] sm:$0xff]
        %v2459 = vld [vmem:[%s2426 + $0x1e] sm:$0xff]
        %v2460 = vld [vmem:[%s2426 + $0x26] sm:$0xff]
        %v2461 = vld [vmem:[%s2426 + $0x56] sm:$0xff]
        %v2462 = vld [vmem:[%s2426 + $0x5e] sm:$0xff]
        %v2463 = vld [vmem:[%s2426 + $0x8e] sm:$0xff]
        %v2464 = vld [vmem:[%s2426 + $0x96] sm:$0xff]
        %v2465 = vld [vmem:[%s2426 + $0xc6] sm:$0xff]
        %v2466 = vld [vmem:[%s2426 + $0xce] sm:$0xff]
        %v2467 = vld [vmem:[%s2426 + $0xfe] sm:$0xff]
        %v2468 = vld [vmem:[%s2426 + $0x106] sm:$0xff]
        %v2469 = vld [vmem:[%s2426 + $0x136] sm:$0xff]
        %v2470 = vld [vmem:[%s2426 + $0x13e] sm:$0xff]
        %v2471 = vld [vmem:[%s2426 + $0x16e] sm:$0xff]
        %v2472 = vld [vmem:[%s2426 + $0x176] sm:$0xff]
        %v2473 = vld [vmem:[%s2426 + $0x1a6] sm:$0xff]
        %v2474 = vld [vmem:[%s2426 + $0x1ae] sm:$0xff]
        %v2475 = vld [vmem:[%s1075 + $0x6] sm:$0xff]
        %v2476 = vld [vmem:[%s1075 + $0xe] sm:$0xff]
        %v2477 = vld [vmem:[%s1075 + $0x3e] sm:$0xff]
        %v2478 = vld [vmem:[%s1075 + $0x46] sm:$0xff]
        %v2479 = vld [vmem:[%s1075 + $0x76] sm:$0xff]
        %v2480 = vld [vmem:[%s1075 + $0x7e] sm:$0xff]
        %v2481 = vld [vmem:[%s1075 + $0xae] sm:$0xff]
        %v2482 = vld [vmem:[%s1075 + $0xb6] sm:$0xff]
        %v2483 = vld [vmem:[%s1075 + $0xe6] sm:$0xff]
        %v2484 = vld [vmem:[%s1075 + $0xee] sm:$0xff]
        %v2485 = vld [vmem:[%s1075 + $0x11e] sm:$0xff]
        %v2486 = vld [vmem:[%s1075 + $0x126] sm:$0xff]
        %v2487 = vld [vmem:[%s1075 + $0x156] sm:$0xff]
        %v2488 = vld [vmem:[%s1075 + $0x15e] sm:$0xff]
        %v2489 = vld [vmem:[%s1075 + $0x18e] sm:$0xff]
        %v2490 = vld [vmem:[%s1075 + $0x196] sm:$0xff]
        %v2491 = vld [vmem:[%s1075 + $0x12] sm:$0xff]
        %v2492 = vld [vmem:[%s1075 + $0x1a] sm:$0xff]
        %v2493 = vld [vmem:[%s1075 + $0x4a] sm:$0xff]
        %v2494 = vld [vmem:[%s1075 + $0x52] sm:$0xff]
        %v2495 = vld [vmem:[%s1075 + $0x82] sm:$0xff]
        %v2496 = vld [vmem:[%s1075 + $0x8a] sm:$0xff]
        %v2497 = vld [vmem:[%s1075 + $0xba] sm:$0xff]
        %v2498 = vld [vmem:[%s1075 + $0xc2] sm:$0xff]
        %v2499 = vld [vmem:[%s1075 + $0xf2] sm:$0xff]
        %v2500 = vld [vmem:[%s1075 + $0xfa] sm:$0xff]
        %v2501 = vld [vmem:[%s1075 + $0x12a] sm:$0xff]
        %v2502 = vld [vmem:[%s1075 + $0x132] sm:$0xff]
        %v2503 = vld [vmem:[%s1075 + $0x162] sm:$0xff]
        %v2504 = vld [vmem:[%s1075 + $0x16a] sm:$0xff]
        %v2505 = vld [vmem:[%s1075 + $0x19a] sm:$0xff]
        %v2506 = vld [vmem:[%s1075 + $0x1a2] sm:$0xff]
        %v2507 = vld [vmem:[%s1075 + $0x1e] sm:$0xff]
        %v2508 = vld [vmem:[%s1075 + $0x26] sm:$0xff]
        %v2509 = vld [vmem:[%s1075 + $0x56] sm:$0xff]
        %v2510 = vld [vmem:[%s1075 + $0x5e] sm:$0xff]
        %v2511 = vld [vmem:[%s1075 + $0x8e] sm:$0xff]
        %v2512 = vld [vmem:[%s1075 + $0x96] sm:$0xff]
        %v2513 = vld [vmem:[%s1075 + $0xc6] sm:$0xff]
        %v2514 = vld [vmem:[%s1075 + $0xce] sm:$0xff]
        %v2515 = vld [vmem:[%s1075 + $0xfe] sm:$0xff]
        %v2516 = vld [vmem:[%s1075 + $0x106] sm:$0xff]
        %v2517 = vld [vmem:[%s1075 + $0x136] sm:$0xff]
        %v2518 = vld [vmem:[%s1075 + $0x13e] sm:$0xff]
        %v2519 = vld [vmem:[%s1075 + $0x16e] sm:$0xff]
        %v2520 = vld [vmem:[%s1075 + $0x176] sm:$0xff]
        %v2521 = vld [vmem:[%s1075 + $0x1a6] sm:$0xff]
        %v2522 = vld [vmem:[%s1075 + $0x1ae] sm:$0xff]
        %s2523 = scalar_lea.vmem [#allocation2], 1680
        %v2524 = vld [vmem:[%s2523 + $0x6] sm:$0xff]
        %v2525 = vld [vmem:[%s2523 + $0xe] sm:$0xff]
        %v2526 = vld [vmem:[%s2523 + $0x3e] sm:$0xff]
        %v2527 = vld [vmem:[%s2523 + $0x46] sm:$0xff]
        %v2528 = vld [vmem:[%s2523 + $0x76] sm:$0xff]
        %v2529 = vld [vmem:[%s2523 + $0x7e] sm:$0xff]
        %v2530 = vld [vmem:[%s2523 + $0xae] sm:$0xff]
        %v2531 = vld [vmem:[%s2523 + $0xb6] sm:$0xff]
        %v2532 = vld [vmem:[%s2523 + $0xe6] sm:$0xff]
        %v2533 = vld [vmem:[%s2523 + $0xee] sm:$0xff]
        %v2534 = vld [vmem:[%s2523 + $0x11e] sm:$0xff]
        %v2535 = vld [vmem:[%s2523 + $0x126] sm:$0xff]
        %v2536 = vld [vmem:[%s2523 + $0x156] sm:$0xff]
        %v2537 = vld [vmem:[%s2523 + $0x15e] sm:$0xff]
        %v2538 = vld [vmem:[%s2523 + $0x18e] sm:$0xff]
        %v2539 = vld [vmem:[%s2523 + $0x196] sm:$0xff]
        %v2540 = vld [vmem:[%s2523 + $0x12] sm:$0xff]
        %v2541 = vld [vmem:[%s2523 + $0x1a] sm:$0xff]
        %v2542 = vld [vmem:[%s2523 + $0x4a] sm:$0xff]
        %v2543 = vld [vmem:[%s2523 + $0x52] sm:$0xff]
        %v2544 = vld [vmem:[%s2523 + $0x82] sm:$0xff]
        %v2545 = vld [vmem:[%s2523 + $0x8a] sm:$0xff]
        %v2546 = vld [vmem:[%s2523 + $0xba] sm:$0xff]
        %v2547 = vld [vmem:[%s2523 + $0xc2] sm:$0xff]
        %v2548 = vld [vmem:[%s2523 + $0xf2] sm:$0xff]
        %v2549 = vld [vmem:[%s2523 + $0xfa] sm:$0xff]
        %v2550 = vld [vmem:[%s2523 + $0x12a] sm:$0xff]
        %v2551 = vld [vmem:[%s2523 + $0x132] sm:$0xff]
        %v2552 = vld [vmem:[%s2523 + $0x162] sm:$0xff]
        %v2553 = vld [vmem:[%s2523 + $0x16a] sm:$0xff]
        %v2554 = vld [vmem:[%s2523 + $0x19a] sm:$0xff]
        %v2555 = vld [vmem:[%s2523 + $0x1a2] sm:$0xff]
        %v2556 = vld [vmem:[%s2523 + $0x1e] sm:$0xff]
        %v2557 = vld [vmem:[%s2523 + $0x26] sm:$0xff]
        %v2558 = vld [vmem:[%s2523 + $0x56] sm:$0xff]
        %v2559 = vld [vmem:[%s2523 + $0x5e] sm:$0xff]
        %v2560 = vld [vmem:[%s2523 + $0x8e] sm:$0xff]
        %v2561 = vld [vmem:[%s2523 + $0x96] sm:$0xff]
        %v2562 = vld [vmem:[%s2523 + $0xc6] sm:$0xff]
        %v2563 = vld [vmem:[%s2523 + $0xce] sm:$0xff]
        %v2564 = vld [vmem:[%s2523 + $0xfe] sm:$0xff]
        %v2565 = vld [vmem:[%s2523 + $0x106] sm:$0xff]
        %v2566 = vld [vmem:[%s2523 + $0x136] sm:$0xff]
        %v2567 = vld [vmem:[%s2523 + $0x13e] sm:$0xff]
        %v2568 = vld [vmem:[%s2523 + $0x16e] sm:$0xff]
        %v2569 = vld [vmem:[%s2523 + $0x176] sm:$0xff]
        %v2570 = vld [vmem:[%s2523 + $0x1a6] sm:$0xff]
        %v2571 = vld [vmem:[%s2523 + $0x1ae] sm:$0xff]
        %s2572 = scalar_lea.vmem %s2, 1152
        %v2573 = vld [vmem:[%s2572] sm:$0xff]
        %v2574 = vld [vmem:[%s2572 + $0x8] sm:$0xff]
        %v2575 = vld [vmem:[%s2572 + $0x10] sm:$0xff]
        %v2576 = vld [vmem:[%s2572 + $0x18] sm:$0xff]
        %v2577 = vld [vmem:[%s2572 + $0x20] sm:$0xff]
        %v2578 = vld [vmem:[%s2572 + $0x28] sm:$0xff]
        %v2579 = vld [vmem:[%s2572 + $0x30] sm:$0xff]
        %v2580 = vld [vmem:[%s2572 + $0x38] sm:$0xff]
        %v2581 = vld [vmem:[%s2572 + $0x40] sm:$0xff]
        %v2582 = vld [vmem:[%s2572 + $0x48] sm:$0xff]
        %v2583 = vld [vmem:[%s2572 + $0x50] sm:$0xff]
        %v2584 = vld [vmem:[%s2572 + $0x58] sm:$0xff]
        %v2585 = vld [vmem:[%s2572 + $0x60] sm:$0xff]
        %v2586 = vld [vmem:[%s2572 + $0x68] sm:$0xff]
        %v2587 = vld [vmem:[%s2572 + $0x70] sm:$0xff]
        %v2588 = vld [vmem:[%s2572 + $0x78] sm:$0xff]
        %v2589 = vld [vmem:[%s2572 + $0x80] sm:$0xff]
        %v2590 = vld [vmem:[%s2572 + $0x88] sm:$0xff]
        %v2591 = vld [vmem:[%s2572 + $0x90] sm:$0xff]
        %v2592 = vld [vmem:[%s2572 + $0x98] sm:$0xff]
        %v2593 = vld [vmem:[%s2572 + $0xa0] sm:$0xff]
        %v2594 = vld [vmem:[%s2572 + $0xa8] sm:$0xff]
        %v2595 = vld [vmem:[%s2572 + $0xb0] sm:$0xff]
        %v2596 = vld [vmem:[%s2572 + $0xb8] sm:$0xff]
        %v2597 = vld [vmem:[%s2572 + $0xc0] sm:$0xff]
        %v2598 = vld [vmem:[%s2572 + $0xc8] sm:$0xff]
        %v2599 = vld [vmem:[%s2572 + $0xd0] sm:$0xff]
        %v2600 = vld [vmem:[%s2572 + $0xd8] sm:$0xff]
        %v2601 = vld [vmem:[%s2572 + $0xe0] sm:$0xff]
        %v2602 = vld [vmem:[%s2572 + $0xe8] sm:$0xff]
        %v2603 = vld [vmem:[%s2572 + $0xf0] sm:$0xff]
        %v2604 = vld [vmem:[%s2572 + $0xf8] sm:$0xff]
        %v2605 = vld [vmem:[%s2572 + $0x100] sm:$0xff]
        %v2606 = vld [vmem:[%s2572 + $0x108] sm:$0xff]
        %v2607 = vld [vmem:[%s2572 + $0x110] sm:$0xff]
        %v2608 = vld [vmem:[%s2572 + $0x118] sm:$0xff]
        %v2609 = vld [vmem:[%s2572 + $0x120] sm:$0xff]
        %v2610 = vld [vmem:[%s2572 + $0x128] sm:$0xff]
        %v2611 = vld [vmem:[%s2572 + $0x130] sm:$0xff]
        %v2612 = vld [vmem:[%s2572 + $0x138] sm:$0xff]
        %v2613 = vld [vmem:[%s2572 + $0x140] sm:$0xff]
        %v2614 = vld [vmem:[%s2572 + $0x148] sm:$0xff]
        %v2615 = vld [vmem:[%s2572 + $0x150] sm:$0xff]
        %v2616 = vld [vmem:[%s2572 + $0x158] sm:$0xff]
        %v2617 = vld [vmem:[%s2572 + $0x160] sm:$0xff]
        %v2618 = vld [vmem:[%s2572 + $0x168] sm:$0xff]
        %v2619 = vld [vmem:[%s2572 + $0x170] sm:$0xff]
        %v2620 = vld [vmem:[%s2572 + $0x178] sm:$0xff]
        %v2621 = vld [vmem:[%s2572 + $0x180] sm:$0xff]
        %v2622 = vld [vmem:[%s2572 + $0x188] sm:$0xff]
        %v2623 = vld [vmem:[%s2572 + $0x190] sm:$0xff]
        %v2624 = vld [vmem:[%s2572 + $0x198] sm:$0xff]
        %v2625 = vld [vmem:[%s2572 + $0x1a0] sm:$0xff]
        %v2626 = vld [vmem:[%s2572 + $0x1a8] sm:$0xff]
        %v2627 = vld [vmem:[%s2572 + $0x1b0] sm:$0xff]
        %v2628 = vld [vmem:[%s2572 + $0x1b8] sm:$0xff]
        %v2629 = vld [vmem:[%s2572 + $0x1c0] sm:$0xff]
        %v2630 = vld [vmem:[%s2572 + $0x1c8] sm:$0xff]
        %v2631 = vld [vmem:[%s2572 + $0x1d0] sm:$0xff]
        %v2632 = vld [vmem:[%s2572 + $0x1d8] sm:$0xff]
        %v2633 = vld [vmem:[%s2572 + $0x1e0] sm:$0xff]
        %v2634 = vld [vmem:[%s2572 + $0x1e8] sm:$0xff]
        %v2635 = vld [vmem:[%s2572 + $0x1f0] sm:$0xff]
        %v2636 = vld [vmem:[%s2572 + $0x1f8] sm:$0xff]
        %v2637 = vld [vmem:[%s2572 + $0x200] sm:$0xff]
        %v2638 = vld [vmem:[%s2572 + $0x208] sm:$0xff]
        %v2639 = vld [vmem:[%s2572 + $0x210] sm:$0xff]
        %v2640 = vld [vmem:[%s2572 + $0x218] sm:$0xff]
        %v2641 = vld [vmem:[%s2572 + $0x220] sm:$0xff]
        %v2642 = vld [vmem:[%s2572 + $0x228] sm:$0xff]
        %v2643 = vld [vmem:[%s2572 + $0x230] sm:$0xff]
        %v2644 = vld [vmem:[%s2572 + $0x238] sm:$0xff]
        %v2645 = vld [vmem:[%s2572 + $0x240] sm:$0xff]
        %v2646 = vld [vmem:[%s2572 + $0x248] sm:$0xff]
        %v2647 = vld [vmem:[%s2572 + $0x250] sm:$0xff]
        %v2648 = vld [vmem:[%s2572 + $0x258] sm:$0xff]
        %v2649 = vld [vmem:[%s2572 + $0x260] sm:$0xff]
        %v2650 = vld [vmem:[%s2572 + $0x268] sm:$0xff]
        %v2651 = vld [vmem:[%s2572 + $0x270] sm:$0xff]
        %v2652 = vld [vmem:[%s2572 + $0x278] sm:$0xff]
        %v2653 = vld [vmem:[%s2572 + $0x280] sm:$0xff]
        %v2654 = vld [vmem:[%s2572 + $0x288] sm:$0xff]
        %v2655 = vld [vmem:[%s2572 + $0x290] sm:$0xff]
        %v2656 = vld [vmem:[%s2572 + $0x298] sm:$0xff]
        %v2657 = vld [vmem:[%s2572 + $0x2a0] sm:$0xff]
        %v2658 = vld [vmem:[%s2572 + $0x2a8] sm:$0xff]
        %v2659 = vld [vmem:[%s2572 + $0x2b0] sm:$0xff]
        %v2660 = vld [vmem:[%s2572 + $0x2b8] sm:$0xff]
        %v2661 = vld [vmem:[%s2572 + $0x2c0] sm:$0xff]
        %v2662 = vld [vmem:[%s2572 + $0x2c8] sm:$0xff]
        %v2663 = vld [vmem:[%s2572 + $0x2d0] sm:$0xff]
        %v2664 = vld [vmem:[%s2572 + $0x2d8] sm:$0xff]
        %v2665 = vld [vmem:[%s2572 + $0x2e0] sm:$0xff]
        %v2666 = vld [vmem:[%s2572 + $0x2e8] sm:$0xff]
        %v2667 = vld [vmem:[%s2572 + $0x2f0] sm:$0xff]
        %v2668 = vld [vmem:[%s2572 + $0x2f8] sm:$0xff]
        %v2669 = vld [vmem:[%s2572 + $0x300] sm:$0xff]
        %v2670 = vld [vmem:[%s2572 + $0x308] sm:$0xff]
        %v2671 = vld [vmem:[%s2572 + $0x310] sm:$0xff]
        %v2672 = vld [vmem:[%s2572 + $0x318] sm:$0xff]
        %v2673 = vld [vmem:[%s2572 + $0x320] sm:$0xff]
        %v2674 = vld [vmem:[%s2572 + $0x328] sm:$0xff]
        %v2675 = vld [vmem:[%s2572 + $0x330] sm:$0xff]
        %v2676 = vld [vmem:[%s2572 + $0x338] sm:$0xff]
        %v2677 = vld [vmem:[%s2572 + $0x340] sm:$0xff]
        %v2678 = vld [vmem:[%s2572 + $0x348] sm:$0xff]
        %v2679 = vld [vmem:[%s2572 + $0x350] sm:$0xff]
        %v2680 = vld [vmem:[%s2572 + $0x358] sm:$0xff]
        %v2681 = vld [vmem:[%s2572 + $0x360] sm:$0xff]
        %v2682 = vld [vmem:[%s2572 + $0x368] sm:$0xff]
        %v2683 = vld [vmem:[%s2572 + $0x370] sm:$0xff]
        %v2684 = vld [vmem:[%s2572 + $0x378] sm:$0xff]
        %v2685 = vld [vmem:[%s2572 + $0x380] sm:$0xff]
        %v2686 = vld [vmem:[%s2572 + $0x388] sm:$0xff]
        %v2687 = vld [vmem:[%s2572 + $0x390] sm:$0xff]
        %v2688 = vld [vmem:[%s2572 + $0x398] sm:$0xff]
        %v2689 = vld [vmem:[%s2572 + $0x3a0] sm:$0xff]
        %v2690 = vld [vmem:[%s2572 + $0x3a8] sm:$0xff]
        %v2691 = vld [vmem:[%s2572 + $0x3b0] sm:$0xff]
        %v2692 = vld [vmem:[%s2572 + $0x3b8] sm:$0xff]
        %v2693 = vld [vmem:[%s2572 + $0x3c0] sm:$0xff]
        %v2694 = vld [vmem:[%s2572 + $0x3c8] sm:$0xff]
        %v2695 = vld [vmem:[%s2572 + $0x3d0] sm:$0xff]
        %v2696 = vld [vmem:[%s2572 + $0x3d8] sm:$0xff]
        %v2697 = vld [vmem:[%s2572 + $0x3e0] sm:$0xff]
        %v2698 = vld [vmem:[%s2572 + $0x3e8] sm:$0xff]
        %v2699 = vld [vmem:[%s2572 + $0x3f0] sm:$0xff]
        %v2700 = vld [vmem:[%s2572 + $0x3f8] sm:$0xff]
        %v2701 = vld [vmem:[%s2572 + $0x400] sm:$0xff]
        %v2702 = vld [vmem:[%s2572 + $0x408] sm:$0xff]
        %v2703 = vld [vmem:[%s2572 + $0x410] sm:$0xff]
        %v2704 = vld [vmem:[%s2572 + $0x418] sm:$0xff]
        %v2705 = vld [vmem:[%s2572 + $0x420] sm:$0xff]
        %v2706 = vld [vmem:[%s2572 + $0x428] sm:$0xff]
        %v2707 = vld [vmem:[%s2572 + $0x430] sm:$0xff]
        %v2708 = vld [vmem:[%s2572 + $0x438] sm:$0xff]
        %v2709 = vld [vmem:[%s2572 + $0x440] sm:$0xff]
        %v2710 = vld [vmem:[%s2572 + $0x448] sm:$0xff]
        %v2711 = vld [vmem:[%s2572 + $0x450] sm:$0xff]
        %v2712 = vld [vmem:[%s2572 + $0x458] sm:$0xff]
        %v2713 = vld [vmem:[%s2572 + $0x460] sm:$0xff]
        %v2714 = vld [vmem:[%s2572 + $0x468] sm:$0xff]
        %v2715 = vld [vmem:[%s2572 + $0x470] sm:$0xff]
        %v2716 = vld [vmem:[%s2572 + $0x478] sm:$0xff]
        %2717 = vmatprep.subr.mxu0 0.0
        %2718 = vmatpush1.msra.mxu0 %v2573
        %2719 = vmatprep.subr.mxu0 0.0
        %2720 = vmatpush1.msra.mxu0 %v2574
        %2721 = vmatprep.subr.mxu0 0.0
        %2722 = vmatpush1.msra.mxu0 %v2575
        %2723 = vmatprep.subr.mxu0 0.0
        %2724 = vmatpush1.msra.mxu0 %v2576
        %2725 = vmatprep.subr.mxu0 0.0
        %2726 = vmatpush1.msra.mxu0 %v2577
        %2727 = vmatprep.subr.mxu0 0.0
        %2728 = vmatpush1.msra.mxu0 %v2578
        %2729 = vmatprep.subr.mxu0 0.0
        %2730 = vmatpush1.msra.mxu0 %v2579
        %2731 = vmatprep.subr.mxu0 0.0
        %2732 = vmatpush1.msra.mxu0 %v2580
        %2733 = vmatprep.subr.mxu0 0.0
        %2734 = vmatpush1.msra.mxu0 %v2581
        %2735 = vmatprep.subr.mxu0 0.0
        %2736 = vmatpush1.msra.mxu0 %v2582
        %2737 = vmatprep.subr.mxu0 0.0
        %2738 = vmatpush1.msra.mxu0 %v2583
        %2739 = vmatprep.subr.mxu0 0.0
        %2740 = vmatpush1.msra.mxu0 %v2584
        %2741 = vmatprep.subr.mxu0 0.0
        %2742 = vmatpush1.msra.mxu0 %v2585
        %2743 = vmatprep.subr.mxu0 0.0
        %2744 = vmatpush1.msra.mxu0 %v2586
        %2745 = vmatprep.subr.mxu0 0.0
        %2746 = vmatpush1.msra.mxu0 %v2587
        %2747 = vmatprep.subr.mxu0 0.0
        %2748 = vmatpush1.msra.mxu0 %v2588
        %2749 = vmatprep.subr.mxu0 0.0
        %2750 = vmatpush1.msra.mxu0 %v2589
        %2751 = vmatprep.subr.mxu0 0.0
        %2752 = vmatpush1.msra.mxu0 %v2590
        %2753 = vmatprep.subr.mxu0 0.0
        %2754 = vmatpush1.msra.mxu0 %v2591
        %2755 = vmatprep.subr.mxu0 0.0
        %2756 = vmatpush1.msra.mxu0 %v2592
        %2757 = vmatprep.subr.mxu0 0.0
        %2758 = vmatpush1.msra.mxu0 %v2593
        %2759 = vmatprep.subr.mxu0 0.0
        %2760 = vmatpush1.msra.mxu0 %v2594
        %2761 = vmatprep.subr.mxu0 0.0
        %2762 = vmatpush1.msra.mxu0 %v2595
        %2763 = vmatprep.subr.mxu0 0.0
        %2764 = vmatpush1.msra.mxu0 %v2596
        %2765 = vmatprep.subr.mxu0 0.0
        %2766 = vmatpush1.msra.mxu0 %v2597
        %2767 = vmatprep.subr.mxu0 0.0
        %2768 = vmatpush1.msra.mxu0 %v2598
        %2769 = vmatprep.subr.mxu0 0.0
        %2770 = vmatpush1.msra.mxu0 %v2599
        %2771 = vmatprep.subr.mxu0 0.0
        %2772 = vmatpush1.msra.mxu0 %v2600
        %2773 = vmatprep.subr.mxu0 0.0
        %2774 = vmatpush1.msra.mxu0 %v2601
        %2775 = vmatprep.subr.mxu0 0.0
        %2776 = vmatpush1.msra.mxu0 %v2602
        %2777 = vmatprep.subr.mxu0 0.0
        %2778 = vmatpush1.msra.mxu0 %v2603
        %2779 = vmatprep.subr.mxu0 0.0
        %2780 = vmatpush1.msra.mxu0 %v2604
        %2781 = vmatprep.mubr.f32.mxu0 %v2443
        %2782 = vmatmul.mubr.f32.gmra.mrb[0].mxu0 %v2427
        %v2783 = vpop.f32.mrb[0].mxu0
        %v2784 = vadd.f32 0.0, %v2783
        %v2785 = vpop.f32.mrb[0].mxu0
        %2786 = vmatprep.mubr.f32.mxu0 %v2444
        %2787 = vmatmul.mubr.f32.gmra.mrb[0].mxu0 %v2428
        %v2788 = vpop.f32.mrb[0].mxu0
        %v2789 = vadd.f32 0.0, %v2788
        %v2790 = vpop.f32.mrb[0].mxu0
        %2791 = vmatprep.mubr.f32.mxu0 %v2445
        %2792 = vmatmul.mubr.f32.gmra.mrb[0].mxu0 %v2429
        %v2793 = vpop.f32.mrb[0].mxu0
        %v2794 = vadd.f32 0.0, %v2793
        %v2795 = vpop.f32.mrb[0].mxu0
        %2796 = vmatprep.mubr.f32.mxu0 %v2446
        %2797 = vmatmul.mubr.f32.gmra.mrb[0].mxu0 %v2430
        %v2798 = vpop.f32.mrb[0].mxu0
        %v2799 = vadd.f32 0.0, %v2798
        %v2800 = vpop.f32.mrb[0].mxu0
        %2801 = vmatprep.mubr.f32.mxu0 %v2447
        %2802 = vmatmul.mubr.f32.gmra.mrb[0].mxu0 %v2431
        %v2803 = vpop.f32.mrb[0].mxu0
        %v2804 = vadd.f32 0.0, %v2803
        %v2805 = vpop.f32.mrb[0].mxu0
        %2806 = vmatprep.mubr.f32.mxu0 %v2448
        %2807 = vmatmul.mubr.f32.gmra.mrb[0].mxu0 %v2432
        %v2808 = vpop.f32.mrb[0].mxu0
        %v2809 = vadd.f32 0.0, %v2808
        %v2810 = vpop.f32.mrb[0].mxu0
        %2811 = vmatprep.mubr.f32.mxu0 %v2449
        %2812 = vmatmul.mubr.f32.gmra.mrb[0].mxu0 %v2433
        %v2813 = vpop.f32.mrb[0].mxu0
        %v2814 = vadd.f32 0.0, %v2813
        %v2815 = vpop.f32.mrb[0].mxu0
        %2816 = vmatprep.mubr.f32.mxu0 %v2450
        %2817 = vmatmul.mubr.f32.gmra.mrb[0].mxu0 %v2434
        %v2818 = vpop.f32.mrb[0].mxu0
        %v2819 = vadd.f32 0.0, %v2818
        %v2820 = vpop.f32.mrb[0].mxu0
        %2821 = vmatprep.mubr.f32.mxu0 %v2451
        %2822 = vmatmul.mubr.f32.gmra.mrb[0].mxu0 %v2435
        %v2823 = vpop.f32.mrb[0].mxu0
        %v2824 = vadd.f32 0.0, %v2823
        %v2825 = vpop.f32.mrb[0].mxu0
        %2826 = vmatprep.mubr.f32.mxu0 %v2452
        %2827 = vmatmul.mubr.f32.gmra.mrb[0].mxu0 %v2436
        %v2828 = vpop.f32.mrb[0].mxu0
        %v2829 = vadd.f32 0.0, %v2828
        %v2830 = vpop.f32.mrb[0].mxu0
        %2831 = vmatprep.mubr.f32.mxu0 %v2453
        %2832 = vmatmul.mubr.f32.gmra.mrb[0].mxu0 %v2437
        %v2833 = vpop.f32.mrb[0].mxu0
        %v2834 = vadd.f32 0.0, %v2833
        %v2835 = vpop.f32.mrb[0].mxu0
        %2836 = vmatprep.mubr.f32.mxu0 %v2454
        %2837 = vmatmul.mubr.f32.gmra.mrb[0].mxu0 %v2438
        %v2838 = vpop.f32.mrb[0].mxu0
        %v2839 = vadd.f32 0.0, %v2838
        %v2840 = vpop.f32.mrb[0].mxu0
        %2841 = vmatprep.mubr.f32.mxu0 %v2455
        %2842 = vmatmul.mubr.f32.gmra.mrb[0].mxu0 %v2439
        %v2843 = vpop.f32.mrb[0].mxu0
        %v2844 = vadd.f32 0.0, %v2843
        %v2845 = vpop.f32.mrb[0].mxu0
        %2846 = vmatprep.mubr.f32.mxu0 %v2456
        %2847 = vmatmul.mubr.f32.gmra.mrb[0].mxu0 %v2440
        %v2848 = vpop.f32.mrb[0].mxu0
        %v2849 = vadd.f32 0.0, %v2848
        %v2850 = vpop.f32.mrb[0].mxu0
        %2851 = vmatprep.mubr.f32.mxu0 %v2457
        %2852 = vmatmul.mubr.f32.gmra.mrb[0].mxu0 %v2441
        %v2853 = vpop.f32.mrb[0].mxu0
        %v2854 = vadd.f32 0.0, %v2853
        %v2855 = vpop.f32.mrb[0].mxu0
        %2856 = vmatprep.mubr.f32.mxu0 %v2458
        %2857 = vmatmul.mubr.f32.gmra.mrb[0].mxu0 %v2442
        %v2858 = vpop.f32.mrb[0].mxu0
        %v2859 = vadd.f32 0.0, %v2858
        %v2860 = vpop.f32.mrb[0].mxu0
        %2861 = vdwg.mxu0
        %2862 = vmatprep.subr.mxu0 0.0
        %2863 = vmatpush1.msra.mxu0 %v2605
        %2864 = vmatprep.subr.mxu0 0.0
        %2865 = vmatpush1.msra.mxu0 %v2606
        %2866 = vmatprep.subr.mxu0 0.0
        %2867 = vmatpush1.msra.mxu0 %v2607
        %2868 = vmatprep.subr.mxu0 0.0
        %2869 = vmatpush1.msra.mxu0 %v2608
        %2870 = vmatprep.subr.mxu0 0.0
        %2871 = vmatpush1.msra.mxu0 %v2609
        %2872 = vmatprep.subr.mxu0 0.0
        %2873 = vmatpush1.msra.mxu0 %v2610
        %2874 = vmatprep.subr.mxu0 0.0
        %2875 = vmatpush1.msra.mxu0 %v2611
        %2876 = vmatprep.subr.mxu0 0.0
        %2877 = vmatpush1.msra.mxu0 %v2612
        %2878 = vmatprep.subr.mxu0 0.0
        %2879 = vmatpush1.msra.mxu0 %v2613
        %2880 = vmatprep.subr.mxu0 0.0
        %2881 = vmatpush1.msra.mxu0 %v2614
        %2882 = vmatprep.subr.mxu0 0.0
        %2883 = vmatpush1.msra.mxu0 %v2615
        %2884 = vmatprep.subr.mxu0 0.0
        %2885 = vmatpush1.msra.mxu0 %v2616
        %2886 = vmatprep.subr.mxu0 0.0
        %2887 = vmatpush1.msra.mxu0 %v2617
        %2888 = vmatprep.subr.mxu0 0.0
        %2889 = vmatpush1.msra.mxu0 %v2618
        %2890 = vmatprep.subr.mxu0 0.0
        %2891 = vmatpush1.msra.mxu0 %v2619
        %2892 = vmatprep.subr.mxu0 0.0
        %2893 = vmatpush1.msra.mxu0 %v2620
        %2894 = vmatprep.subr.mxu0 0.0
        %2895 = vmatpush1.msra.mxu0 %v2621
        %2896 = vmatprep.subr.mxu0 0.0
        %2897 = vmatpush1.msra.mxu0 %v2622
        %2898 = vmatprep.subr.mxu0 0.0
        %2899 = vmatpush1.msra.mxu0 %v2623
        %2900 = vmatprep.subr.mxu0 0.0
        %2901 = vmatpush1.msra.mxu0 %v2624
        %2902 = vmatprep.subr.mxu0 0.0
        %2903 = vmatpush1.msra.mxu0 %v2625
        %2904 = vmatprep.subr.mxu0 0.0
        %2905 = vmatpush1.msra.mxu0 %v2626
        %2906 = vmatprep.subr.mxu0 0.0
        %2907 = vmatpush1.msra.mxu0 %v2627
        %2908 = vmatprep.subr.mxu0 0.0
        %2909 = vmatpush1.msra.mxu0 %v2628
        %2910 = vmatprep.subr.mxu0 0.0
        %2911 = vmatpush1.msra.mxu0 %v2629
        %2912 = vmatprep.subr.mxu0 0.0
        %2913 = vmatpush1.msra.mxu0 %v2630
        %2914 = vmatprep.subr.mxu0 0.0
        %2915 = vmatpush1.msra.mxu0 %v2631
        %2916 = vmatprep.subr.mxu0 0.0
        %2917 = vmatpush1.msra.mxu0 %v2632
        %2918 = vmatprep.subr.mxu0 0.0
        %2919 = vmatpush1.msra.mxu0 %v2633
        %2920 = vmatprep.subr.mxu0 0.0
        %2921 = vmatpush1.msra.mxu0 %v2634
        %2922 = vmatprep.subr.mxu0 0.0
        %2923 = vmatpush1.msra.mxu0 %v2635
        %2924 = vmatprep.subr.mxu0 0.0
        %2925 = vmatpush1.msra.mxu0 %v2636
        %2926 = vmatprep.mubr.f32.mxu0 %v2475
        %2927 = vmatmul.mubr.f32.gmra.mrb[0].mxu0 %v2459
        %v2928 = vpop.f32.mrb[0].mxu0
        %v2929 = vadd.f32 %v2784, %v2928
        %v2930 = vpop.f32.mrb[0].mxu0
        %2931 = vmatprep.mubr.f32.mxu0 %v2476
        %2932 = vmatmul.mubr.f32.gmra.mrb[0].mxu0 %v2460
        %v2933 = vpop.f32.mrb[0].mxu0
        %v2934 = vadd.f32 %v2789, %v2933
        %v2935 = vpop.f32.mrb[0].mxu0
        %2936 = vmatprep.mubr.f32.mxu0 %v2477
        %2937 = vmatmul.mubr.f32.gmra.mrb[0].mxu0 %v2461
        %v2938 = vpop.f32.mrb[0].mxu0
        %v2939 = vadd.f32 %v2794, %v2938
        %v2940 = vpop.f32.mrb[0].mxu0
        %2941 = vmatprep.mubr.f32.mxu0 %v2478
        %2942 = vmatmul.mubr.f32.gmra.mrb[0].mxu0 %v2462
        %v2943 = vpop.f32.mrb[0].mxu0
        %v2944 = vadd.f32 %v2799, %v2943
        %v2945 = vpop.f32.mrb[0].mxu0
        %2946 = vmatprep.mubr.f32.mxu0 %v2479
        %2947 = vmatmul.mubr.f32.gmra.mrb[0].mxu0 %v2463
        %v2948 = vpop.f32.mrb[0].mxu0
        %v2949 = vadd.f32 %v2804, %v2948
        %v2950 = vpop.f32.mrb[0].mxu0
        %2951 = vmatprep.mubr.f32.mxu0 %v2480
        %2952 = vmatmul.mubr.f32.gmra.mrb[0].mxu0 %v2464
        %v2953 = vpop.f32.mrb[0].mxu0
        %v2954 = vadd.f32 %v2809, %v2953
        %v2955 = vpop.f32.mrb[0].mxu0
        %2956 = vmatprep.mubr.f32.mxu0 %v2481
        %2957 = vmatmul.mubr.f32.gmra.mrb[0].mxu0 %v2465
        %v2958 = vpop.f32.mrb[0].mxu0
        %v2959 = vadd.f32 %v2814, %v2958
        %v2960 = vpop.f32.mrb[0].mxu0
        %2961 = vmatprep.mubr.f32.mxu0 %v2482
        %2962 = vmatmul.mubr.f32.gmra.mrb[0].mxu0 %v2466
        %v2963 = vpop.f32.mrb[0].mxu0
        %v2964 = vadd.f32 %v2819, %v2963
        %v2965 = vpop.f32.mrb[0].mxu0
        %2966 = vmatprep.mubr.f32.mxu0 %v2483
        %2967 = vmatmul.mubr.f32.gmra.mrb[0].mxu0 %v2467
        %v2968 = vpop.f32.mrb[0].mxu0
        %v2969 = vadd.f32 %v2824, %v2968
        %v2970 = vpop.f32.mrb[0].mxu0
        %2971 = vmatprep.mubr.f32.mxu0 %v2484
        %2972 = vmatmul.mubr.f32.gmra.mrb[0].mxu0 %v2468
        %v2973 = vpop.f32.mrb[0].mxu0
        %v2974 = vadd.f32 %v2829, %v2973
        %v2975 = vpop.f32.mrb[0].mxu0
        %2976 = vmatprep.mubr.f32.mxu0 %v2485
        %2977 = vmatmul.mubr.f32.gmra.mrb[0].mxu0 %v2469
        %v2978 = vpop.f32.mrb[0].mxu0
        %v2979 = vadd.f32 %v2834, %v2978
        %v2980 = vpop.f32.mrb[0].mxu0
        %2981 = vmatprep.mubr.f32.mxu0 %v2486
        %2982 = vmatmul.mubr.f32.gmra.mrb[0].mxu0 %v2470
        %v2983 = vpop.f32.mrb[0].mxu0
        %v2984 = vadd.f32 %v2839, %v2983
        %v2985 = vpop.f32.mrb[0].mxu0
        %2986 = vmatprep.mubr.f32.mxu0 %v2487
        %2987 = vmatmul.mubr.f32.gmra.mrb[0].mxu0 %v2471
        %v2988 = vpop.f32.mrb[0].mxu0
        %v2989 = vadd.f32 %v2844, %v2988
        %v2990 = vpop.f32.mrb[0].mxu0
        %2991 = vmatprep.mubr.f32.mxu0 %v2488
        %2992 = vmatmul.mubr.f32.gmra.mrb[0].mxu0 %v2472
        %v2993 = vpop.f32.mrb[0].mxu0
        %v2994 = vadd.f32 %v2849, %v2993
        %v2995 = vpop.f32.mrb[0].mxu0
        %2996 = vmatprep.mubr.f32.mxu0 %v2489
        %2997 = vmatmul.mubr.f32.gmra.mrb[0].mxu0 %v2473
        %v2998 = vpop.f32.mrb[0].mxu0
        %v2999 = vadd.f32 %v2854, %v2998
        %v3000 = vpop.f32.mrb[0].mxu0
        %3001 = vmatprep.mubr.f32.mxu0 %v2490
        %3002 = vmatmul.mubr.f32.gmra.mrb[0].mxu0 %v2474
        %v3003 = vpop.f32.mrb[0].mxu0
        %v3004 = vadd.f32 %v2859, %v3003
        %v3005 = vpop.f32.mrb[0].mxu0
        %3006 = vdwg.mxu0
        %3007 = vmatprep.subr.mxu0 0.0
        %3008 = vmatpush1.msra.mxu0 %v2637
        %3009 = vmatprep.subr.mxu0 0.0
        %3010 = vmatpush1.msra.mxu0 %v2638
        %3011 = vmatprep.subr.mxu0 0.0
        %3012 = vmatpush1.msra.mxu0 %v2639
        %3013 = vmatprep.subr.mxu0 0.0
        %3014 = vmatpush1.msra.mxu0 %v2640
        %3015 = vmatprep.subr.mxu0 0.0
        %3016 = vmatpush1.msra.mxu0 %v2641
        %3017 = vmatprep.subr.mxu0 0.0
        %3018 = vmatpush1.msra.mxu0 %v2642
        %3019 = vmatprep.subr.mxu0 0.0
        %3020 = vmatpush1.msra.mxu0 %v2643
        %3021 = vmatprep.subr.mxu0 0.0
        %3022 = vmatpush1.msra.mxu0 %v2644
        %3023 = vmatprep.subr.mxu0 0.0
        %3024 = vmatpush1.msra.mxu0 %v2645
        %3025 = vmatprep.subr.mxu0 0.0
        %3026 = vmatpush1.msra.mxu0 %v2646
        %3027 = vmatprep.subr.mxu0 0.0
        %3028 = vmatpush1.msra.mxu0 %v2647
        %3029 = vmatprep.subr.mxu0 0.0
        %3030 = vmatpush1.msra.mxu0 %v2648
        %3031 = vmatprep.subr.mxu0 0.0
        %3032 = vmatpush1.msra.mxu0 %v2649
        %3033 = vmatprep.subr.mxu0 0.0
        %3034 = vmatpush1.msra.mxu0 %v2650
        %3035 = vmatprep.subr.mxu0 0.0
        %3036 = vmatpush1.msra.mxu0 %v2651
        %3037 = vmatprep.subr.mxu0 0.0
        %3038 = vmatpush1.msra.mxu0 %v2652
        %3039 = vmatprep.subr.mxu0 0.0
        %3040 = vmatpush1.msra.mxu0 %v2653
        %3041 = vmatprep.subr.mxu0 0.0
        %3042 = vmatpush1.msra.mxu0 %v2654
        %3043 = vmatprep.subr.mxu0 0.0
        %3044 = vmatpush1.msra.mxu0 %v2655
        %3045 = vmatprep.subr.mxu0 0.0
        %3046 = vmatpush1.msra.mxu0 %v2656
        %3047 = vmatprep.subr.mxu0 0.0
        %3048 = vmatpush1.msra.mxu0 %v2657
        %3049 = vmatprep.subr.mxu0 0.0
        %3050 = vmatpush1.msra.mxu0 %v2658
        %3051 = vmatprep.subr.mxu0 0.0
        %3052 = vmatpush1.msra.mxu0 %v2659
        %3053 = vmatprep.subr.mxu0 0.0
        %3054 = vmatpush1.msra.mxu0 %v2660
        %3055 = vmatprep.subr.mxu0 0.0
        %3056 = vmatpush1.msra.mxu0 %v2661
        %3057 = vmatprep.subr.mxu0 0.0
        %3058 = vmatpush1.msra.mxu0 %v2662
        %3059 = vmatprep.subr.mxu0 0.0
        %3060 = vmatpush1.msra.mxu0 %v2663
        %3061 = vmatprep.subr.mxu0 0.0
        %3062 = vmatpush1.msra.mxu0 %v2664
        %3063 = vmatprep.subr.mxu0 0.0
        %3064 = vmatpush1.msra.mxu0 %v2665
        %3065 = vmatprep.subr.mxu0 0.0
        %3066 = vmatpush1.msra.mxu0 %v2666
        %3067 = vmatprep.subr.mxu0 0.0
        %3068 = vmatpush1.msra.mxu0 %v2667
        %3069 = vmatprep.subr.mxu0 0.0
        %3070 = vmatpush1.msra.mxu0 %v2668
        %3071 = vmatprep.mubr.f32.mxu0 %v2507
        %3072 = vmatmul.mubr.f32.gmra.mrb[0].mxu0 %v2491
        %v3073 = vpop.f32.mrb[0].mxu0
        %v3074 = vadd.f32 %v2929, %v3073
        %v3075 = vpop.f32.mrb[0].mxu0
        %3076 = vmatprep.mubr.f32.mxu0 %v2508
        %3077 = vmatmul.mubr.f32.gmra.mrb[0].mxu0 %v2492
        %v3078 = vpop.f32.mrb[0].mxu0
        %v3079 = vadd.f32 %v2934, %v3078
        %v3080 = vpop.f32.mrb[0].mxu0
        %3081 = vmatprep.mubr.f32.mxu0 %v2509
        %3082 = vmatmul.mubr.f32.gmra.mrb[0].mxu0 %v2493
        %v3083 = vpop.f32.mrb[0].mxu0
        %v3084 = vadd.f32 %v2939, %v3083
        %v3085 = vpop.f32.mrb[0].mxu0
        %3086 = vmatprep.mubr.f32.mxu0 %v2510
        %3087 = vmatmul.mubr.f32.gmra.mrb[0].mxu0 %v2494
        %v3088 = vpop.f32.mrb[0].mxu0
        %v3089 = vadd.f32 %v2944, %v3088
        %v3090 = vpop.f32.mrb[0].mxu0
        %3091 = vmatprep.mubr.f32.mxu0 %v2511
        %3092 = vmatmul.mubr.f32.gmra.mrb[0].mxu0 %v2495
        %v3093 = vpop.f32.mrb[0].mxu0
        %v3094 = vadd.f32 %v2949, %v3093
        %v3095 = vpop.f32.mrb[0].mxu0
        %3096 = vmatprep.mubr.f32.mxu0 %v2512
        %3097 = vmatmul.mubr.f32.gmra.mrb[0].mxu0 %v2496
        %v3098 = vpop.f32.mrb[0].mxu0
        %v3099 = vadd.f32 %v2954, %v3098
        %v3100 = vpop.f32.mrb[0].mxu0
        %3101 = vmatprep.mubr.f32.mxu0 %v2513
        %3102 = vmatmul.mubr.f32.gmra.mrb[0].mxu0 %v2497
        %v3103 = vpop.f32.mrb[0].mxu0
        %v3104 = vadd.f32 %v2959, %v3103
        %v3105 = vpop.f32.mrb[0].mxu0
        %3106 = vmatprep.mubr.f32.mxu0 %v2514
        %3107 = vmatmul.mubr.f32.gmra.mrb[0].mxu0 %v2498
        %v3108 = vpop.f32.mrb[0].mxu0
        %v3109 = vadd.f32 %v2964, %v3108
        %v3110 = vpop.f32.mrb[0].mxu0
        %3111 = vmatprep.mubr.f32.mxu0 %v2515
        %3112 = vmatmul.mubr.f32.gmra.mrb[0].mxu0 %v2499
        %v3113 = vpop.f32.mrb[0].mxu0
        %v3114 = vadd.f32 %v2969, %v3113
        %v3115 = vpop.f32.mrb[0].mxu0
        %3116 = vmatprep.mubr.f32.mxu0 %v2516
        %3117 = vmatmul.mubr.f32.gmra.mrb[0].mxu0 %v2500
        %v3118 = vpop.f32.mrb[0].mxu0
        %v3119 = vadd.f32 %v2974, %v3118
        %v3120 = vpop.f32.mrb[0].mxu0
        %3121 = vmatprep.mubr.f32.mxu0 %v2517
        %3122 = vmatmul.mubr.f32.gmra.mrb[0].mxu0 %v2501
        %v3123 = vpop.f32.mrb[0].mxu0
        %v3124 = vadd.f32 %v2979, %v3123
        %v3125 = vpop.f32.mrb[0].mxu0
        %3126 = vmatprep.mubr.f32.mxu0 %v2518
        %3127 = vmatmul.mubr.f32.gmra.mrb[0].mxu0 %v2502
        %v3128 = vpop.f32.mrb[0].mxu0
        %v3129 = vadd.f32 %v2984, %v3128
        %v3130 = vpop.f32.mrb[0].mxu0
        %3131 = vmatprep.mubr.f32.mxu0 %v2519
        %3132 = vmatmul.mubr.f32.gmra.mrb[0].mxu0 %v2503
        %v3133 = vpop.f32.mrb[0].mxu0
        %v3134 = vadd.f32 %v2989, %v3133
        %v3135 = vpop.f32.mrb[0].mxu0
        %3136 = vmatprep.mubr.f32.mxu0 %v2520
        %3137 = vmatmul.mubr.f32.gmra.mrb[0].mxu0 %v2504
        %v3138 = vpop.f32.mrb[0].mxu0
        %v3139 = vadd.f32 %v2994, %v3138
        %v3140 = vpop.f32.mrb[0].mxu0
        %3141 = vmatprep.mubr.f32.mxu0 %v2521
        %3142 = vmatmul.mubr.f32.gmra.mrb[0].mxu0 %v2505
        %v3143 = vpop.f32.mrb[0].mxu0
        %v3144 = vadd.f32 %v2999, %v3143
        %v3145 = vpop.f32.mrb[0].mxu0
        %3146 = vmatprep.mubr.f32.mxu0 %v2522
        %3147 = vmatmul.mubr.f32.gmra.mrb[0].mxu0 %v2506
        %v3148 = vpop.f32.mrb[0].mxu0
        %v3149 = vadd.f32 %v3004, %v3148
        %v3150 = vpop.f32.mrb[0].mxu0
        %3151 = vdwg.mxu0
        %3152 = vmatprep.subr.mxu0 0.0
        %3153 = vmatpush1.msra.mxu0 %v2669
        %3154 = vmatprep.subr.mxu0 0.0
        %3155 = vmatpush1.msra.mxu0 %v2670
        %3156 = vmatprep.subr.mxu0 0.0
        %3157 = vmatpush1.msra.mxu0 %v2671
        %3158 = vmatprep.subr.mxu0 0.0
        %3159 = vmatpush1.msra.mxu0 %v2672
        %3160 = vmatprep.subr.mxu0 0.0
        %3161 = vmatpush1.msra.mxu0 %v2673
        %3162 = vmatprep.subr.mxu0 0.0
        %3163 = vmatpush1.msra.mxu0 %v2674
        %3164 = vmatprep.subr.mxu0 0.0
        %3165 = vmatpush1.msra.mxu0 %v2675
        %3166 = vmatprep.subr.mxu0 0.0
        %3167 = vmatpush1.msra.mxu0 %v2676
        %3168 = vmatprep.subr.mxu0 0.0
        %3169 = vmatpush1.msra.mxu0 %v2677
        %3170 = vmatprep.subr.mxu0 0.0
        %3171 = vmatpush1.msra.mxu0 %v2678
        %3172 = vmatprep.subr.mxu0 0.0
        %3173 = vmatpush1.msra.mxu0 %v2679
        %3174 = vmatprep.subr.mxu0 0.0
        %3175 = vmatpush1.msra.mxu0 %v2680
        %3176 = vmatprep.subr.mxu0 0.0
        %3177 = vmatpush1.msra.mxu0 %v2681
        %3178 = vmatprep.subr.mxu0 0.0
        %3179 = vmatpush1.msra.mxu0 %v2682
        %3180 = vmatprep.subr.mxu0 0.0
        %3181 = vmatpush1.msra.mxu0 %v2683
        %3182 = vmatprep.subr.mxu0 0.0
        %3183 = vmatpush1.msra.mxu0 %v2684
        %3184 = vmatprep.subr.mxu0 0.0
        %3185 = vmatpush1.msra.mxu0 %v2685
        %3186 = vmatprep.subr.mxu0 0.0
        %3187 = vmatpush1.msra.mxu0 %v2686
        %3188 = vmatprep.subr.mxu0 0.0
        %3189 = vmatpush1.msra.mxu0 %v2687
        %3190 = vmatprep.subr.mxu0 0.0
        %3191 = vmatpush1.msra.mxu0 %v2688
        %3192 = vmatprep.subr.mxu0 0.0
        %3193 = vmatpush1.msra.mxu0 %v2689
        %3194 = vmatprep.subr.mxu0 0.0
        %3195 = vmatpush1.msra.mxu0 %v2690
        %3196 = vmatprep.subr.mxu0 0.0
        %3197 = vmatpush1.msra.mxu0 %v2691
        %3198 = vmatprep.subr.mxu0 0.0
        %3199 = vmatpush1.msra.mxu0 %v2692
        %3200 = vmatprep.subr.mxu0 0.0
        %3201 = vmatpush1.msra.mxu0 %v2693
        %3202 = vmatprep.subr.mxu0 0.0
        %3203 = vmatpush1.msra.mxu0 %v2694
        %3204 = vmatprep.subr.mxu0 0.0
        %3205 = vmatpush1.msra.mxu0 %v2695
        %3206 = vmatprep.subr.mxu0 0.0
        %3207 = vmatpush1.msra.mxu0 %v2696
        %3208 = vmatprep.subr.mxu0 0.0
        %3209 = vmatpush1.msra.mxu0 %v2697
        %3210 = vmatprep.subr.mxu0 0.0
        %3211 = vmatpush1.msra.mxu0 %v2698
        %3212 = vmatprep.subr.mxu0 0.0
        %3213 = vmatpush1.msra.mxu0 %v2699
        %3214 = vmatprep.subr.mxu0 0.0
        %3215 = vmatpush1.msra.mxu0 %v2700
        %3216 = vmatprep.mubr.f32.mxu0 %v2540
        %3217 = vmatmul.mubr.f32.gmra.mrb[0].mxu0 %v2524
        %v3218 = vpop.f32.mrb[0].mxu0
        %v3219 = vadd.f32 %v3074, %v3218
        %v3220 = vpop.f32.mrb[0].mxu0
        %3221 = vmatprep.mubr.f32.mxu0 %v2541
        %3222 = vmatmul.mubr.f32.gmra.mrb[0].mxu0 %v2525
        %v3223 = vpop.f32.mrb[0].mxu0
        %v3224 = vadd.f32 %v3079, %v3223
        %v3225 = vpop.f32.mrb[0].mxu0
        %3226 = vmatprep.mubr.f32.mxu0 %v2542
        %3227 = vmatmul.mubr.f32.gmra.mrb[0].mxu0 %v2526
        %v3228 = vpop.f32.mrb[0].mxu0
        %v3229 = vadd.f32 %v3084, %v3228
        %v3230 = vpop.f32.mrb[0].mxu0
        %3231 = vmatprep.mubr.f32.mxu0 %v2543
        %3232 = vmatmul.mubr.f32.gmra.mrb[0].mxu0 %v2527
        %v3233 = vpop.f32.mrb[0].mxu0
        %v3234 = vadd.f32 %v3089, %v3233
        %v3235 = vpop.f32.mrb[0].mxu0
        %3236 = vmatprep.mubr.f32.mxu0 %v2544
        %3237 = vmatmul.mubr.f32.gmra.mrb[0].mxu0 %v2528
        %v3238 = vpop.f32.mrb[0].mxu0
        %v3239 = vadd.f32 %v3094, %v3238
        %v3240 = vpop.f32.mrb[0].mxu0
        %3241 = vmatprep.mubr.f32.mxu0 %v2545
        %3242 = vmatmul.mubr.f32.gmra.mrb[0].mxu0 %v2529
        %v3243 = vpop.f32.mrb[0].mxu0
        %v3244 = vadd.f32 %v3099, %v3243
        %v3245 = vpop.f32.mrb[0].mxu0
        %3246 = vmatprep.mubr.f32.mxu0 %v2546
        %3247 = vmatmul.mubr.f32.gmra.mrb[0].mxu0 %v2530
        %v3248 = vpop.f32.mrb[0].mxu0
        %v3249 = vadd.f32 %v3104, %v3248
        %v3250 = vpop.f32.mrb[0].mxu0
        %3251 = vmatprep.mubr.f32.mxu0 %v2547
        %3252 = vmatmul.mubr.f32.gmra.mrb[0].mxu0 %v2531
        %v3253 = vpop.f32.mrb[0].mxu0
        %v3254 = vadd.f32 %v3109, %v3253
        %v3255 = vpop.f32.mrb[0].mxu0
        %3256 = vmatprep.mubr.f32.mxu0 %v2548
        %3257 = vmatmul.mubr.f32.gmra.mrb[0].mxu0 %v2532
        %v3258 = vpop.f32.mrb[0].mxu0
        %v3259 = vadd.f32 %v3114, %v3258
        %v3260 = vpop.f32.mrb[0].mxu0
        %3261 = vmatprep.mubr.f32.mxu0 %v2549
        %3262 = vmatmul.mubr.f32.gmra.mrb[0].mxu0 %v2533
        %v3263 = vpop.f32.mrb[0].mxu0
        %v3264 = vadd.f32 %v3119, %v3263
        %v3265 = vpop.f32.mrb[0].mxu0
        %3266 = vmatprep.mubr.f32.mxu0 %v2550
        %3267 = vmatmul.mubr.f32.gmra.mrb[0].mxu0 %v2534
        %v3268 = vpop.f32.mrb[0].mxu0
        %v3269 = vadd.f32 %v3124, %v3268
        %v3270 = vpop.f32.mrb[0].mxu0
        %3271 = vmatprep.mubr.f32.mxu0 %v2551
        %3272 = vmatmul.mubr.f32.gmra.mrb[0].mxu0 %v2535
        %v3273 = vpop.f32.mrb[0].mxu0
        %v3274 = vadd.f32 %v3129, %v3273
        %v3275 = vpop.f32.mrb[0].mxu0
        %3276 = vmatprep.mubr.f32.mxu0 %v2552
        %3277 = vmatmul.mubr.f32.gmra.mrb[0].mxu0 %v2536
        %v3278 = vpop.f32.mrb[0].mxu0
        %v3279 = vadd.f32 %v3134, %v3278
        %v3280 = vpop.f32.mrb[0].mxu0
        %3281 = vmatprep.mubr.f32.mxu0 %v2553
        %3282 = vmatmul.mubr.f32.gmra.mrb[0].mxu0 %v2537
        %v3283 = vpop.f32.mrb[0].mxu0
        %v3284 = vadd.f32 %v3139, %v3283
        %v3285 = vpop.f32.mrb[0].mxu0
        %3286 = vmatprep.mubr.f32.mxu0 %v2554
        %3287 = vmatmul.mubr.f32.gmra.mrb[0].mxu0 %v2538
        %v3288 = vpop.f32.mrb[0].mxu0
        %v3289 = vadd.f32 %v3144, %v3288
        %v3290 = vpop.f32.mrb[0].mxu0
        %3291 = vmatprep.mubr.f32.mxu0 %v2555
        %3292 = vmatmul.mubr.f32.gmra.mrb[0].mxu0 %v2539
        %v3293 = vpop.f32.mrb[0].mxu0
        %v3294 = vadd.f32 %v3149, %v3293
        %v3295 = vpop.f32.mrb[0].mxu0
        %3296 = vdwg.mxu0
        %3297 = vmatprep.subr.mxu0 0.0
        %3298 = vmatpush1.msra.mxu0 %v2701
        %3299 = vmatprep.subr.mxu0 0.0
        %3300 = vmatpush1.msra.mxu0 %v2702
        %3301 = vmatprep.subr.mxu0 0.0
        %3302 = vmatpush1.msra.mxu0 %v2703
        %3303 = vmatprep.subr.mxu0 0.0
        %3304 = vmatpush1.msra.mxu0 %v2704
        %3305 = vmatprep.subr.mxu0 0.0
        %3306 = vmatpush1.msra.mxu0 %v2705
        %3307 = vmatprep.subr.mxu0 0.0
        %3308 = vmatpush1.msra.mxu0 %v2706
        %3309 = vmatprep.subr.mxu0 0.0
        %3310 = vmatpush1.msra.mxu0 %v2707
        %3311 = vmatprep.subr.mxu0 0.0
        %3312 = vmatpush1.msra.mxu0 %v2708
        %3313 = vmatprep.subr.mxu0 0.0
        %3314 = vmatpush1.msra.mxu0 %v2709
        %3315 = vmatprep.subr.mxu0 0.0
        %3316 = vmatpush1.msra.mxu0 %v2710
        %3317 = vmatprep.subr.mxu0 0.0
        %3318 = vmatpush1.msra.mxu0 %v2711
        %3319 = vmatprep.subr.mxu0 0.0
        %3320 = vmatpush1.msra.mxu0 %v2712
        %3321 = vmatprep.subr.mxu0 0.0
        %3322 = vmatpush1.msra.mxu0 %v2713
        %3323 = vmatprep.subr.mxu0 0.0
        %3324 = vmatpush1.msra.mxu0 %v2714
        %3325 = vmatprep.subr.mxu0 0.0
        %3326 = vmatpush1.msra.mxu0 %v2715
        %3327 = vmatprep.subr.mxu0 0.0
        %3328 = vmatpush1.msra.mxu0 %v2716
        %3329 = vmatprep.subr.mxu0 0.0
        %3330 = vmatpush1.msra.mxu0 0.0
        %3331 = vmatprep.subr.mxu0 0.0
        %3332 = vmatpush1.msra.mxu0 0.0
        %3333 = vmatprep.subr.mxu0 0.0
        %3334 = vmatpush1.msra.mxu0 0.0
        %3335 = vmatprep.subr.mxu0 0.0
        %3336 = vmatpush1.msra.mxu0 0.0
        %3337 = vmatprep.subr.mxu0 0.0
        %3338 = vmatpush1.msra.mxu0 0.0
        %3339 = vmatprep.subr.mxu0 0.0
        %3340 = vmatpush1.msra.mxu0 0.0
        %3341 = vmatprep.subr.mxu0 0.0
        %3342 = vmatpush1.msra.mxu0 0.0
        %3343 = vmatprep.subr.mxu0 0.0
        %3344 = vmatpush1.msra.mxu0 0.0
        %3345 = vmatprep.subr.mxu0 0.0
        %3346 = vmatpush1.msra.mxu0 0.0
        %3347 = vmatprep.subr.mxu0 0.0
        %3348 = vmatpush1.msra.mxu0 0.0
        %3349 = vmatprep.subr.mxu0 0.0
        %3350 = vmatpush1.msra.mxu0 0.0
        %3351 = vmatprep.subr.mxu0 0.0
        %3352 = vmatpush1.msra.mxu0 0.0
        %3353 = vmatprep.subr.mxu0 0.0
        %3354 = vmatpush1.msra.mxu0 0.0
        %3355 = vmatprep.subr.mxu0 0.0
        %3356 = vmatpush1.msra.mxu0 0.0
        %3357 = vmatprep.subr.mxu0 0.0
        %3358 = vmatpush1.msra.mxu0 0.0
        %3359 = vmatprep.subr.mxu0 0.0
        %3360 = vmatpush1.msra.mxu0 0.0
        %3361 = vmatprep.mubr.f32.mxu0 0.0
        %3362 = vmatmul.mubr.f32.gmra.mrb[0].mxu0 %v2556
        %v3363 = vpop.f32.mrb[0].mxu0
        %v3364 = vadd.f32 %v3219, %v3363
        %v3365 = vpop.f32.mrb[0].mxu0
        %3366 = vmatprep.mubr.f32.mxu0 0.0
        %3367 = vmatmul.mubr.f32.gmra.mrb[0].mxu0 %v2557
        %v3368 = vpop.f32.mrb[0].mxu0
        %v3369 = vadd.f32 %v3224, %v3368
        %v3370 = vpop.f32.mrb[0].mxu0
        %3371 = vmatprep.mubr.f32.mxu0 0.0
        %3372 = vmatmul.mubr.f32.gmra.mrb[0].mxu0 %v2558
        %v3373 = vpop.f32.mrb[0].mxu0
        %v3374 = vadd.f32 %v3229, %v3373
        %v3375 = vpop.f32.mrb[0].mxu0
        %3376 = vmatprep.mubr.f32.mxu0 0.0
        %3377 = vmatmul.mubr.f32.gmra.mrb[0].mxu0 %v2559
        %v3378 = vpop.f32.mrb[0].mxu0
        %v3379 = vadd.f32 %v3234, %v3378
        %v3380 = vpop.f32.mrb[0].mxu0
        %3381 = vmatprep.mubr.f32.mxu0 0.0
        %3382 = vmatmul.mubr.f32.gmra.mrb[0].mxu0 %v2560
        %v3383 = vpop.f32.mrb[0].mxu0
        %v3384 = vadd.f32 %v3239, %v3383
        %v3385 = vpop.f32.mrb[0].mxu0
        %3386 = vmatprep.mubr.f32.mxu0 0.0
        %3387 = vmatmul.mubr.f32.gmra.mrb[0].mxu0 %v2561
        %v3388 = vpop.f32.mrb[0].mxu0
        %v3389 = vadd.f32 %v3244, %v3388
        %v3390 = vpop.f32.mrb[0].mxu0
        %3391 = vmatprep.mubr.f32.mxu0 0.0
        %3392 = vmatmul.mubr.f32.gmra.mrb[0].mxu0 %v2562
        %v3393 = vpop.f32.mrb[0].mxu0
        %v3394 = vadd.f32 %v3249, %v3393
        %v3395 = vpop.f32.mrb[0].mxu0
        %3396 = vmatprep.mubr.f32.mxu0 0.0
        %3397 = vmatmul.mubr.f32.gmra.mrb[0].mxu0 %v2563
        %v3398 = vpop.f32.mrb[0].mxu0
        %v3399 = vadd.f32 %v3254, %v3398
        %v3400 = vpop.f32.mrb[0].mxu0
        %3401 = vmatprep.mubr.f32.mxu0 0.0
        %3402 = vmatmul.mubr.f32.gmra.mrb[0].mxu0 %v2564
        %v3403 = vpop.f32.mrb[0].mxu0
        %v3404 = vadd.f32 %v3259, %v3403
        %v3405 = vpop.f32.mrb[0].mxu0
        %3406 = vmatprep.mubr.f32.mxu0 0.0
        %3407 = vmatmul.mubr.f32.gmra.mrb[0].mxu0 %v2565
        %v3408 = vpop.f32.mrb[0].mxu0
        %v3409 = vadd.f32 %v3264, %v3408
        %v3410 = vpop.f32.mrb[0].mxu0
        %3411 = vmatprep.mubr.f32.mxu0 0.0
        %3412 = vmatmul.mubr.f32.gmra.mrb[0].mxu0 %v2566
        %v3413 = vpop.f32.mrb[0].mxu0
        %v3414 = vadd.f32 %v3269, %v3413
        %v3415 = vpop.f32.mrb[0].mxu0
        %3416 = vmatprep.mubr.f32.mxu0 0.0
        %3417 = vmatmul.mubr.f32.gmra.mrb[0].mxu0 %v2567
        %v3418 = vpop.f32.mrb[0].mxu0
        %v3419 = vadd.f32 %v3274, %v3418
        %v3420 = vpop.f32.mrb[0].mxu0
        %3421 = vmatprep.mubr.f32.mxu0 0.0
        %3422 = vmatmul.mubr.f32.gmra.mrb[0].mxu0 %v2568
        %v3423 = vpop.f32.mrb[0].mxu0
        %v3424 = vadd.f32 %v3279, %v3423
        %v3425 = vpop.f32.mrb[0].mxu0
        %3426 = vmatprep.mubr.f32.mxu0 0.0
        %3427 = vmatmul.mubr.f32.gmra.mrb[0].mxu0 %v2569
        %v3428 = vpop.f32.mrb[0].mxu0
        %v3429 = vadd.f32 %v3284, %v3428
        %v3430 = vpop.f32.mrb[0].mxu0
        %3431 = vmatprep.mubr.f32.mxu0 0.0
        %3432 = vmatmul.mubr.f32.gmra.mrb[0].mxu0 %v2570
        %v3433 = vpop.f32.mrb[0].mxu0
        %v3434 = vadd.f32 %v3289, %v3433
        %v3435 = vpop.f32.mrb[0].mxu0
        %3436 = vmatprep.mubr.f32.mxu0 0.0
        %3437 = vmatmul.mubr.f32.gmra.mrb[0].mxu0 %v2571
        %v3438 = vpop.f32.mrb[0].mxu0
        %v3439 = vadd.f32 %v3294, %v3438
        %v3440 = vpop.f32.mrb[0].mxu0
        %3441 = vdwg.mxu0
        %s3442 = scalar_lea.vmem %s4, 2
        %v3443 = vld [vmem:[%s3442] sm:$0x1]
        %v3445 = vlaneseq
        %v3446 = vshrl.u32 %v3445, 7
        %v3447 = vsub.s32 0, %v3446
        %v3448 = vrot.slane %v3443, %v3447
        %v3450 = vmul.f32 %v3364, %v3448
        %v3451 = vmul.f32 %v3369, %v3448
        %v3452 = vmul.f32 %v3374, %v3448
        %v3453 = vmul.f32 %v3379, %v3448
        %v3454 = vmul.f32 %v3384, %v3448
        %v3455 = vmul.f32 %v3389, %v3448
        %v3456 = vmul.f32 %v3394, %v3448
        %v3457 = vmul.f32 %v3399, %v3448
        %v3458 = vmul.f32 %v3404, %v3448
        %v3459 = vmul.f32 %v3409, %v3448
        %v3460 = vmul.f32 %v3414, %v3448
        %v3461 = vmul.f32 %v3419, %v3448
        %v3462 = vmul.f32 %v3424, %v3448
        %v3463 = vmul.f32 %v3429, %v3448
        %v3464 = vmul.f32 %v3434, %v3448
        %v3465 = vmul.f32 %v3439, %v3448
        %s3466 = scalar_lea.vmem %s5, 2
        %v3467 = vld [vmem:[%s3466] sm:$0x1]
        %v3469 = vlaneseq
        %v3470 = vshrl.u32 %v3469, 7
        %v3471 = vsub.s32 0, %v3470
        %v3472 = vrot.slane %v3467, %v3471
        %v3474 = vadd.f32 %v3450, %v3472
        %v3475 = vadd.f32 %v3451, %v3472
        %v3476 = vadd.f32 %v3452, %v3472
        %v3477 = vadd.f32 %v3453, %v3472
        %v3478 = vadd.f32 %v3454, %v3472
        %v3479 = vadd.f32 %v3455, %v3472
        %v3480 = vadd.f32 %v3456, %v3472
        %v3481 = vadd.f32 %v3457, %v3472
        %v3482 = vadd.f32 %v3458, %v3472
        %v3483 = vadd.f32 %v3459, %v3472
        %v3484 = vadd.f32 %v3460, %v3472
        %v3485 = vadd.f32 %v3461, %v3472
        %v3486 = vadd.f32 %v3462, %v3472
        %v3487 = vadd.f32 %v3463, %v3472
        %v3488 = vadd.f32 %v3464, %v3472
        %v3489 = vadd.f32 %v3465, %v3472
        %v3490 = vmax.f32 %v3474, 0.0
        %v3491 = vmax.f32 %v3475, 0.0
        %v3492 = vmax.f32 %v3476, 0.0
        %v3493 = vmax.f32 %v3477, 0.0
        %v3494 = vmax.f32 %v3478, 0.0
        %v3495 = vmax.f32 %v3479, 0.0
        %v3496 = vmax.f32 %v3480, 0.0
        %v3497 = vmax.f32 %v3481, 0.0
        %v3498 = vmax.f32 %v3482, 0.0
        %v3499 = vmax.f32 %v3483, 0.0
        %v3500 = vmax.f32 %v3484, 0.0
        %v3501 = vmax.f32 %v3485, 0.0
        %v3502 = vmax.f32 %v3486, 0.0
        %v3503 = vmax.f32 %v3487, 0.0
        %v3504 = vmax.f32 %v3488, 0.0
        %v3505 = vmax.f32 %v3489, 0.0
        %3506 = vst [vmem:[#allocation3 + $0x10] sm:$0xff] %v3490
        %3507 = vst [vmem:[#allocation3 + $0x30] sm:$0xff] %v3491
        %3508 = vst [vmem:[#allocation3 + $0x50] sm:$0xff] %v3492
        %3509 = vst [vmem:[#allocation3 + $0x70] sm:$0xff] %v3493
        %3510 = vst [vmem:[#allocation3 + $0x90] sm:$0xff] %v3494
        %3511 = vst [vmem:[#allocation3 + $0xb0] sm:$0xff] %v3495
        %3512 = vst [vmem:[#allocation3 + $0xd0] sm:$0xff] %v3496
        %3513 = vst [vmem:[#allocation3 + $0xf0] sm:$0xff] %v3497
        %3514 = vst [vmem:[#allocation3 + $0x110] sm:$0xff] %v3498
        %3515 = vst [vmem:[#allocation3 + $0x130] sm:$0xff] %v3499
        %3516 = vst [vmem:[#allocation3 + $0x150] sm:$0xff] %v3500
        %3517 = vst [vmem:[#allocation3 + $0x170] sm:$0xff] %v3501
        %3518 = vst [vmem:[#allocation3 + $0x190] sm:$0xff] %v3502
        %3519 = vst [vmem:[#allocation3 + $0x1b0] sm:$0xff] %v3503
        %3520 = vst [vmem:[#allocation3 + $0x1d0] sm:$0xff] %v3504
        %3521 = vst [vmem:[#allocation3 + $0x1f0] sm:$0xff] %v3505
        %v3522 = vld [vmem:[#allocation2] sm:$0xff]
        %v3523 = vld [vmem:[#allocation2 + $0x8] sm:$0xff]
        %v3524 = vld [vmem:[#allocation2 + $0x38] sm:$0xff]
        %v3525 = vld [vmem:[#allocation2 + $0x40] sm:$0xff]
        %v3526 = vld [vmem:[#allocation2 + $0x70] sm:$0xff]
        %v3527 = vld [vmem:[#allocation2 + $0x78] sm:$0xff]
        %v3528 = vld [vmem:[#allocation2 + $0xa8] sm:$0xff]
        %v3529 = vld [vmem:[#allocation2 + $0xb0] sm:$0xff]
        %v3530 = vld [vmem:[#allocation2 + $0xe0] sm:$0xff]
        %v3531 = vld [vmem:[#allocation2 + $0xe8] sm:$0xff]
        %v3532 = vld [vmem:[#allocation2 + $0x118] sm:$0xff]
        %v3533 = vld [vmem:[#allocation2 + $0x120] sm:$0xff]
        %v3534 = vld [vmem:[#allocation2 + $0x150] sm:$0xff]
        %v3535 = vld [vmem:[#allocation2 + $0x158] sm:$0xff]
        %v3536 = vld [vmem:[#allocation2 + $0x188] sm:$0xff]
        %v3537 = vld [vmem:[#allocation2 + $0x190] sm:$0xff]
        %v3538 = vld [vmem:[#allocation2 + $0x12] sm:$0xff]
        %v3539 = vld [vmem:[#allocation2 + $0x1a] sm:$0xff]
        %v3540 = vld [vmem:[#allocation2 + $0x4a] sm:$0xff]
        %v3541 = vld [vmem:[#allocation2 + $0x52] sm:$0xff]
        %v3542 = vld [vmem:[#allocation2 + $0x82] sm:$0xff]
        %v3543 = vld [vmem:[#allocation2 + $0x8a] sm:$0xff]
        %v3544 = vld [vmem:[#allocation2 + $0xba] sm:$0xff]
        %v3545 = vld [vmem:[#allocation2 + $0xc2] sm:$0xff]
        %v3546 = vld [vmem:[#allocation2 + $0xf2] sm:$0xff]
        %v3547 = vld [vmem:[#allocation2 + $0xfa] sm:$0xff]
        %v3548 = vld [vmem:[#allocation2 + $0x12a] sm:$0xff]
        %v3549 = vld [vmem:[#allocation2 + $0x132] sm:$0xff]
        %v3550 = vld [vmem:[#allocation2 + $0x162] sm:$0xff]
        %v3551 = vld [vmem:[#allocation2 + $0x16a] sm:$0xff]
        %v3552 = vld [vmem:[#allocation2 + $0x19a] sm:$0xff]
        %v3553 = vld [vmem:[#allocation2 + $0x1a2] sm:$0xff]
        %v3554 = vld [vmem:[#allocation2 + $0x24] sm:$0xff]
        %v3555 = vld [vmem:[#allocation2 + $0x2c] sm:$0xff]
        %v3556 = vld [vmem:[#allocation2 + $0x5c] sm:$0xff]
        %v3557 = vld [vmem:[#allocation2 + $0x64] sm:$0xff]
        %v3558 = vld [vmem:[#allocation2 + $0x94] sm:$0xff]
        %v3559 = vld [vmem:[#allocation2 + $0x9c] sm:$0xff]
        %v3560 = vld [vmem:[#allocation2 + $0xcc] sm:$0xff]
        %v3561 = vld [vmem:[#allocation2 + $0xd4] sm:$0xff]
        %v3562 = vld [vmem:[#allocation2 + $0x104] sm:$0xff]
        %v3563 = vld [vmem:[#allocation2 + $0x10c] sm:$0xff]
        %v3564 = vld [vmem:[#allocation2 + $0x13c] sm:$0xff]
        %v3565 = vld [vmem:[#allocation2 + $0x144] sm:$0xff]
        %v3566 = vld [vmem:[#allocation2 + $0x174] sm:$0xff]
        %v3567 = vld [vmem:[#allocation2 + $0x17c] sm:$0xff]
        %v3568 = vld [vmem:[#allocation2 + $0x1ac] sm:$0xff]
        %v3569 = vld [vmem:[#allocation2 + $0x1b4] sm:$0xff]
        %v3570 = vld [vmem:[%s1075] sm:$0xff]
        %v3571 = vld [vmem:[%s1075 + $0x8] sm:$0xff]
        %v3572 = vld [vmem:[%s1075 + $0x38] sm:$0xff]
        %v3573 = vld [vmem:[%s1075 + $0x40] sm:$0xff]
        %v3574 = vld [vmem:[%s1075 + $0x70] sm:$0xff]
        %v3575 = vld [vmem:[%s1075 + $0x78] sm:$0xff]
        %v3576 = vld [vmem:[%s1075 + $0xa8] sm:$0xff]
        %v3577 = vld [vmem:[%s1075 + $0xb0] sm:$0xff]
        %v3578 = vld [vmem:[%s1075 + $0xe0] sm:$0xff]
        %v3579 = vld [vmem:[%s1075 + $0xe8] sm:$0xff]
        %v3580 = vld [vmem:[%s1075 + $0x118] sm:$0xff]
        %v3581 = vld [vmem:[%s1075 + $0x120] sm:$0xff]
        %v3582 = vld [vmem:[%s1075 + $0x150] sm:$0xff]
        %v3583 = vld [vmem:[%s1075 + $0x158] sm:$0xff]
        %v3584 = vld [vmem:[%s1075 + $0x188] sm:$0xff]
        %v3585 = vld [vmem:[%s1075 + $0x190] sm:$0xff]
        %v3586 = vld [vmem:[%s1075 + $0x12] sm:$0xff]
        %v3587 = vld [vmem:[%s1075 + $0x1a] sm:$0xff]
        %v3588 = vld [vmem:[%s1075 + $0x4a] sm:$0xff]
        %v3589 = vld [vmem:[%s1075 + $0x52] sm:$0xff]
        %v3590 = vld [vmem:[%s1075 + $0x82] sm:$0xff]
        %v3591 = vld [vmem:[%s1075 + $0x8a] sm:$0xff]
        %v3592 = vld [vmem:[%s1075 + $0xba] sm:$0xff]
        %v3593 = vld [vmem:[%s1075 + $0xc2] sm:$0xff]
        %v3594 = vld [vmem:[%s1075 + $0xf2] sm:$0xff]
        %v3595 = vld [vmem:[%s1075 + $0xfa] sm:$0xff]
        %v3596 = vld [vmem:[%s1075 + $0x12a] sm:$0xff]
        %v3597 = vld [vmem:[%s1075 + $0x132] sm:$0xff]
        %v3598 = vld [vmem:[%s1075 + $0x162] sm:$0xff]
        %v3599 = vld [vmem:[%s1075 + $0x16a] sm:$0xff]
        %v3600 = vld [vmem:[%s1075 + $0x19a] sm:$0xff]
        %v3601 = vld [vmem:[%s1075 + $0x1a2] sm:$0xff]
        %v3602 = vld [vmem:[%s1075 + $0x24] sm:$0xff]
        %v3603 = vld [vmem:[%s1075 + $0x2c] sm:$0xff]
        %v3604 = vld [vmem:[%s1075 + $0x5c] sm:$0xff]
        %v3605 = vld [vmem:[%s1075 + $0x64] sm:$0xff]
        %v3606 = vld [vmem:[%s1075 + $0x94] sm:$0xff]
        %v3607 = vld [vmem:[%s1075 + $0x9c] sm:$0xff]
        %v3608 = vld [vmem:[%s1075 + $0xcc] sm:$0xff]
        %v3609 = vld [vmem:[%s1075 + $0xd4] sm:$0xff]
        %v3610 = vld [vmem:[%s1075 + $0x104] sm:$0xff]
        %v3611 = vld [vmem:[%s1075 + $0x10c] sm:$0xff]
        %v3612 = vld [vmem:[%s1075 + $0x13c] sm:$0xff]
        %v3613 = vld [vmem:[%s1075 + $0x144] sm:$0xff]
        %v3614 = vld [vmem:[%s1075 + $0x174] sm:$0xff]
        %v3615 = vld [vmem:[%s1075 + $0x17c] sm:$0xff]
        %v3616 = vld [vmem:[%s1075 + $0x1ac] sm:$0xff]
        %v3617 = vld [vmem:[%s1075 + $0x1b4] sm:$0xff]
        %s3618 = scalar_lea.vmem [#allocation2], 2016
        %v3619 = vld [vmem:[%s3618] sm:$0xff]
        %v3620 = vld [vmem:[%s3618 + $0x8] sm:$0xff]
        %v3621 = vld [vmem:[%s3618 + $0x38] sm:$0xff]
        %v3622 = vld [vmem:[%s3618 + $0x40] sm:$0xff]
        %v3623 = vld [vmem:[%s3618 + $0x70] sm:$0xff]
        %v3624 = vld [vmem:[%s3618 + $0x78] sm:$0xff]
        %v3625 = vld [vmem:[%s3618 + $0xa8] sm:$0xff]
        %v3626 = vld [vmem:[%s3618 + $0xb0] sm:$0xff]
        %v3627 = vld [vmem:[%s3618 + $0xe0] sm:$0xff]
        %v3628 = vld [vmem:[%s3618 + $0xe8] sm:$0xff]
        %v3629 = vld [vmem:[%s3618 + $0x118] sm:$0xff]
        %v3630 = vld [vmem:[%s3618 + $0x120] sm:$0xff]
        %v3631 = vld [vmem:[%s3618 + $0x150] sm:$0xff]
        %v3632 = vld [vmem:[%s3618 + $0x158] sm:$0xff]
        %v3633 = vld [vmem:[%s3618 + $0x188] sm:$0xff]
        %v3634 = vld [vmem:[%s3618 + $0x190] sm:$0xff]
        %v3635 = vld [vmem:[%s3618 + $0x12] sm:$0xff]
        %v3636 = vld [vmem:[%s3618 + $0x1a] sm:$0xff]
        %v3637 = vld [vmem:[%s3618 + $0x4a] sm:$0xff]
        %v3638 = vld [vmem:[%s3618 + $0x52] sm:$0xff]
        %v3639 = vld [vmem:[%s3618 + $0x82] sm:$0xff]
        %v3640 = vld [vmem:[%s3618 + $0x8a] sm:$0xff]
        %v3641 = vld [vmem:[%s3618 + $0xba] sm:$0xff]
        %v3642 = vld [vmem:[%s3618 + $0xc2] sm:$0xff]
        %v3643 = vld [vmem:[%s3618 + $0xf2] sm:$0xff]
        %v3644 = vld [vmem:[%s3618 + $0xfa] sm:$0xff]
        %v3645 = vld [vmem:[%s3618 + $0x12a] sm:$0xff]
        %v3646 = vld [vmem:[%s3618 + $0x132] sm:$0xff]
        %v3647 = vld [vmem:[%s3618 + $0x162] sm:$0xff]
        %v3648 = vld [vmem:[%s3618 + $0x16a] sm:$0xff]
        %v3649 = vld [vmem:[%s3618 + $0x19a] sm:$0xff]
        %v3650 = vld [vmem:[%s3618 + $0x1a2] sm:$0xff]
        %v3651 = vld [vmem:[%s3618 + $0x24] sm:$0xff]
        %v3652 = vld [vmem:[%s3618 + $0x2c] sm:$0xff]
        %v3653 = vld [vmem:[%s3618 + $0x5c] sm:$0xff]
        %v3654 = vld [vmem:[%s3618 + $0x64] sm:$0xff]
        %v3655 = vld [vmem:[%s3618 + $0x94] sm:$0xff]
        %v3656 = vld [vmem:[%s3618 + $0x9c] sm:$0xff]
        %v3657 = vld [vmem:[%s3618 + $0xcc] sm:$0xff]
        %v3658 = vld [vmem:[%s3618 + $0xd4] sm:$0xff]
        %v3659 = vld [vmem:[%s3618 + $0x104] sm:$0xff]
        %v3660 = vld [vmem:[%s3618 + $0x10c] sm:$0xff]
        %v3661 = vld [vmem:[%s3618 + $0x13c] sm:$0xff]
        %v3662 = vld [vmem:[%s3618 + $0x144] sm:$0xff]
        %v3663 = vld [vmem:[%s3618 + $0x174] sm:$0xff]
        %v3664 = vld [vmem:[%s3618 + $0x17c] sm:$0xff]
        %v3665 = vld [vmem:[%s3618 + $0x1ac] sm:$0xff]
        %v3666 = vld [vmem:[%s3618 + $0x1b4] sm:$0xff]
        %s3667 = scalar_lea.vmem %s2, 2304
        %v3668 = vld [vmem:[%s3667] sm:$0xff]
        %v3669 = vld [vmem:[%s3667 + $0x8] sm:$0xff]
        %v3670 = vld [vmem:[%s3667 + $0x10] sm:$0xff]
        %v3671 = vld [vmem:[%s3667 + $0x18] sm:$0xff]
        %v3672 = vld [vmem:[%s3667 + $0x20] sm:$0xff]
        %v3673 = vld [vmem:[%s3667 + $0x28] sm:$0xff]
        %v3674 = vld [vmem:[%s3667 + $0x30] sm:$0xff]
        %v3675 = vld [vmem:[%s3667 + $0x38] sm:$0xff]
        %v3676 = vld [vmem:[%s3667 + $0x40] sm:$0xff]
        %v3677 = vld [vmem:[%s3667 + $0x48] sm:$0xff]
        %v3678 = vld [vmem:[%s3667 + $0x50] sm:$0xff]
        %v3679 = vld [vmem:[%s3667 + $0x58] sm:$0xff]
        %v3680 = vld [vmem:[%s3667 + $0x60] sm:$0xff]
        %v3681 = vld [vmem:[%s3667 + $0x68] sm:$0xff]
        %v3682 = vld [vmem:[%s3667 + $0x70] sm:$0xff]
        %v3683 = vld [vmem:[%s3667 + $0x78] sm:$0xff]
        %v3684 = vld [vmem:[%s3667 + $0x80] sm:$0xff]
        %v3685 = vld [vmem:[%s3667 + $0x88] sm:$0xff]
        %v3686 = vld [vmem:[%s3667 + $0x90] sm:$0xff]
        %v3687 = vld [vmem:[%s3667 + $0x98] sm:$0xff]
        %v3688 = vld [vmem:[%s3667 + $0xa0] sm:$0xff]
        %v3689 = vld [vmem:[%s3667 + $0xa8] sm:$0xff]
        %v3690 = vld [vmem:[%s3667 + $0xb0] sm:$0xff]
        %v3691 = vld [vmem:[%s3667 + $0xb8] sm:$0xff]
        %v3692 = vld [vmem:[%s3667 + $0xc0] sm:$0xff]
        %v3693 = vld [vmem:[%s3667 + $0xc8] sm:$0xff]
        %v3694 = vld [vmem:[%s3667 + $0xd0] sm:$0xff]
        %v3695 = vld [vmem:[%s3667 + $0xd8] sm:$0xff]
        %v3696 = vld [vmem:[%s3667 + $0xe0] sm:$0xff]
        %v3697 = vld [vmem:[%s3667 + $0xe8] sm:$0xff]
        %v3698 = vld [vmem:[%s3667 + $0xf0] sm:$0xff]
        %v3699 = vld [vmem:[%s3667 + $0xf8] sm:$0xff]
        %v3700 = vld [vmem:[%s3667 + $0x100] sm:$0xff]
        %v3701 = vld [vmem:[%s3667 + $0x108] sm:$0xff]
        %v3702 = vld [vmem:[%s3667 + $0x110] sm:$0xff]
        %v3703 = vld [vmem:[%s3667 + $0x118] sm:$0xff]
        %v3704 = vld [vmem:[%s3667 + $0x120] sm:$0xff]
        %v3705 = vld [vmem:[%s3667 + $0x128] sm:$0xff]
        %v3706 = vld [vmem:[%s3667 + $0x130] sm:$0xff]
        %v3707 = vld [vmem:[%s3667 + $0x138] sm:$0xff]
        %v3708 = vld [vmem:[%s3667 + $0x140] sm:$0xff]
        %v3709 = vld [vmem:[%s3667 + $0x148] sm:$0xff]
        %v3710 = vld [vmem:[%s3667 + $0x150] sm:$0xff]
        %v3711 = vld [vmem:[%s3667 + $0x158] sm:$0xff]
        %v3712 = vld [vmem:[%s3667 + $0x160] sm:$0xff]
        %v3713 = vld [vmem:[%s3667 + $0x168] sm:$0xff]
        %v3714 = vld [vmem:[%s3667 + $0x170] sm:$0xff]
        %v3715 = vld [vmem:[%s3667 + $0x178] sm:$0xff]
        %v3716 = vld [vmem:[%s3667 + $0x180] sm:$0xff]
        %v3717 = vld [vmem:[%s3667 + $0x188] sm:$0xff]
        %v3718 = vld [vmem:[%s3667 + $0x190] sm:$0xff]
        %v3719 = vld [vmem:[%s3667 + $0x198] sm:$0xff]
        %v3720 = vld [vmem:[%s3667 + $0x1a0] sm:$0xff]
        %v3721 = vld [vmem:[%s3667 + $0x1a8] sm:$0xff]
        %v3722 = vld [vmem:[%s3667 + $0x1b0] sm:$0xff]
        %v3723 = vld [vmem:[%s3667 + $0x1b8] sm:$0xff]
        %v3724 = vld [vmem:[%s3667 + $0x1c0] sm:$0xff]
        %v3725 = vld [vmem:[%s3667 + $0x1c8] sm:$0xff]
        %v3726 = vld [vmem:[%s3667 + $0x1d0] sm:$0xff]
        %v3727 = vld [vmem:[%s3667 + $0x1d8] sm:$0xff]
        %v3728 = vld [vmem:[%s3667 + $0x1e0] sm:$0xff]
        %v3729 = vld [vmem:[%s3667 + $0x1e8] sm:$0xff]
        %v3730 = vld [vmem:[%s3667 + $0x1f0] sm:$0xff]
        %v3731 = vld [vmem:[%s3667 + $0x1f8] sm:$0xff]
        %v3732 = vld [vmem:[%s3667 + $0x200] sm:$0xff]
        %v3733 = vld [vmem:[%s3667 + $0x208] sm:$0xff]
        %v3734 = vld [vmem:[%s3667 + $0x210] sm:$0xff]
        %v3735 = vld [vmem:[%s3667 + $0x218] sm:$0xff]
        %v3736 = vld [vmem:[%s3667 + $0x220] sm:$0xff]
        %v3737 = vld [vmem:[%s3667 + $0x228] sm:$0xff]
        %v3738 = vld [vmem:[%s3667 + $0x230] sm:$0xff]
        %v3739 = vld [vmem:[%s3667 + $0x238] sm:$0xff]
        %v3740 = vld [vmem:[%s3667 + $0x240] sm:$0xff]
        %v3741 = vld [vmem:[%s3667 + $0x248] sm:$0xff]
        %v3742 = vld [vmem:[%s3667 + $0x250] sm:$0xff]
        %v3743 = vld [vmem:[%s3667 + $0x258] sm:$0xff]
        %v3744 = vld [vmem:[%s3667 + $0x260] sm:$0xff]
        %v3745 = vld [vmem:[%s3667 + $0x268] sm:$0xff]
        %v3746 = vld [vmem:[%s3667 + $0x270] sm:$0xff]
        %v3747 = vld [vmem:[%s3667 + $0x278] sm:$0xff]
        %v3748 = vld [vmem:[%s3667 + $0x280] sm:$0xff]
        %v3749 = vld [vmem:[%s3667 + $0x288] sm:$0xff]
        %v3750 = vld [vmem:[%s3667 + $0x290] sm:$0xff]
        %v3751 = vld [vmem:[%s3667 + $0x298] sm:$0xff]
        %v3752 = vld [vmem:[%s3667 + $0x2a0] sm:$0xff]
        %v3753 = vld [vmem:[%s3667 + $0x2a8] sm:$0xff]
        %v3754 = vld [vmem:[%s3667 + $0x2b0] sm:$0xff]
        %v3755 = vld [vmem:[%s3667 + $0x2b8] sm:$0xff]
        %v3756 = vld [vmem:[%s3667 + $0x2c0] sm:$0xff]
        %v3757 = vld [vmem:[%s3667 + $0x2c8] sm:$0xff]
        %v3758 = vld [vmem:[%s3667 + $0x2d0] sm:$0xff]
        %v3759 = vld [vmem:[%s3667 + $0x2d8] sm:$0xff]
        %v3760 = vld [vmem:[%s3667 + $0x2e0] sm:$0xff]
        %v3761 = vld [vmem:[%s3667 + $0x2e8] sm:$0xff]
        %v3762 = vld [vmem:[%s3667 + $0x2f0] sm:$0xff]
        %v3763 = vld [vmem:[%s3667 + $0x2f8] sm:$0xff]
        %v3764 = vld [vmem:[%s3667 + $0x300] sm:$0xff]
        %v3765 = vld [vmem:[%s3667 + $0x308] sm:$0xff]
        %v3766 = vld [vmem:[%s3667 + $0x310] sm:$0xff]
        %v3767 = vld [vmem:[%s3667 + $0x318] sm:$0xff]
        %v3768 = vld [vmem:[%s3667 + $0x320] sm:$0xff]
        %v3769 = vld [vmem:[%s3667 + $0x328] sm:$0xff]
        %v3770 = vld [vmem:[%s3667 + $0x330] sm:$0xff]
        %v3771 = vld [vmem:[%s3667 + $0x338] sm:$0xff]
        %v3772 = vld [vmem:[%s3667 + $0x340] sm:$0xff]
        %v3773 = vld [vmem:[%s3667 + $0x348] sm:$0xff]
        %v3774 = vld [vmem:[%s3667 + $0x350] sm:$0xff]
        %v3775 = vld [vmem:[%s3667 + $0x358] sm:$0xff]
        %v3776 = vld [vmem:[%s3667 + $0x360] sm:$0xff]
        %v3777 = vld [vmem:[%s3667 + $0x368] sm:$0xff]
        %v3778 = vld [vmem:[%s3667 + $0x370] sm:$0xff]
        %v3779 = vld [vmem:[%s3667 + $0x378] sm:$0xff]
        %v3780 = vld [vmem:[%s3667 + $0x380] sm:$0xff]
        %v3781 = vld [vmem:[%s3667 + $0x388] sm:$0xff]
        %v3782 = vld [vmem:[%s3667 + $0x390] sm:$0xff]
        %v3783 = vld [vmem:[%s3667 + $0x398] sm:$0xff]
        %v3784 = vld [vmem:[%s3667 + $0x3a0] sm:$0xff]
        %v3785 = vld [vmem:[%s3667 + $0x3a8] sm:$0xff]
        %v3786 = vld [vmem:[%s3667 + $0x3b0] sm:$0xff]
        %v3787 = vld [vmem:[%s3667 + $0x3b8] sm:$0xff]
        %v3788 = vld [vmem:[%s3667 + $0x3c0] sm:$0xff]
        %v3789 = vld [vmem:[%s3667 + $0x3c8] sm:$0xff]
        %v3790 = vld [vmem:[%s3667 + $0x3d0] sm:$0xff]
        %v3791 = vld [vmem:[%s3667 + $0x3d8] sm:$0xff]
        %v3792 = vld [vmem:[%s3667 + $0x3e0] sm:$0xff]
        %v3793 = vld [vmem:[%s3667 + $0x3e8] sm:$0xff]
        %v3794 = vld [vmem:[%s3667 + $0x3f0] sm:$0xff]
        %v3795 = vld [vmem:[%s3667 + $0x3f8] sm:$0xff]
        %v3796 = vld [vmem:[%s3667 + $0x400] sm:$0xff]
        %v3797 = vld [vmem:[%s3667 + $0x408] sm:$0xff]
        %v3798 = vld [vmem:[%s3667 + $0x410] sm:$0xff]
        %v3799 = vld [vmem:[%s3667 + $0x418] sm:$0xff]
        %v3800 = vld [vmem:[%s3667 + $0x420] sm:$0xff]
        %v3801 = vld [vmem:[%s3667 + $0x428] sm:$0xff]
        %v3802 = vld [vmem:[%s3667 + $0x430] sm:$0xff]
        %v3803 = vld [vmem:[%s3667 + $0x438] sm:$0xff]
        %v3804 = vld [vmem:[%s3667 + $0x440] sm:$0xff]
        %v3805 = vld [vmem:[%s3667 + $0x448] sm:$0xff]
        %v3806 = vld [vmem:[%s3667 + $0x450] sm:$0xff]
        %v3807 = vld [vmem:[%s3667 + $0x458] sm:$0xff]
        %v3808 = vld [vmem:[%s3667 + $0x460] sm:$0xff]
        %v3809 = vld [vmem:[%s3667 + $0x468] sm:$0xff]
        %v3810 = vld [vmem:[%s3667 + $0x470] sm:$0xff]
        %v3811 = vld [vmem:[%s3667 + $0x478] sm:$0xff]
        %3812 = vmatprep.subr.mxu0 0.0
        %3813 = vmatpush1.msra.mxu0 %v3668
        %3814 = vmatprep.subr.mxu0 0.0
        %3815 = vmatpush1.msra.mxu0 %v3669
        %3816 = vmatprep.subr.mxu0 0.0
        %3817 = vmatpush1.msra.mxu0 %v3670
        %3818 = vmatprep.subr.mxu0 0.0
        %3819 = vmatpush1.msra.mxu0 %v3671
        %3820 = vmatprep.subr.mxu0 0.0
        %3821 = vmatpush1.msra.mxu0 %v3672
        %3822 = vmatprep.subr.mxu0 0.0
        %3823 = vmatpush1.msra.mxu0 %v3673
        %3824 = vmatprep.subr.mxu0 0.0
        %3825 = vmatpush1.msra.mxu0 %v3674
        %3826 = vmatprep.subr.mxu0 0.0
        %3827 = vmatpush1.msra.mxu0 %v3675
        %3828 = vmatprep.subr.mxu0 0.0
        %3829 = vmatpush1.msra.mxu0 %v3676
        %3830 = vmatprep.subr.mxu0 0.0
        %3831 = vmatpush1.msra.mxu0 %v3677
        %3832 = vmatprep.subr.mxu0 0.0
        %3833 = vmatpush1.msra.mxu0 %v3678
        %3834 = vmatprep.subr.mxu0 0.0
        %3835 = vmatpush1.msra.mxu0 %v3679
        %3836 = vmatprep.subr.mxu0 0.0
        %3837 = vmatpush1.msra.mxu0 %v3680
        %3838 = vmatprep.subr.mxu0 0.0
        %3839 = vmatpush1.msra.mxu0 %v3681
        %3840 = vmatprep.subr.mxu0 0.0
        %3841 = vmatpush1.msra.mxu0 %v3682
        %3842 = vmatprep.subr.mxu0 0.0
        %3843 = vmatpush1.msra.mxu0 %v3683
        %3844 = vmatprep.subr.mxu0 0.0
        %3845 = vmatpush1.msra.mxu0 %v3684
        %3846 = vmatprep.subr.mxu0 0.0
        %3847 = vmatpush1.msra.mxu0 %v3685
        %3848 = vmatprep.subr.mxu0 0.0
        %3849 = vmatpush1.msra.mxu0 %v3686
        %3850 = vmatprep.subr.mxu0 0.0
        %3851 = vmatpush1.msra.mxu0 %v3687
        %3852 = vmatprep.subr.mxu0 0.0
        %3853 = vmatpush1.msra.mxu0 %v3688
        %3854 = vmatprep.subr.mxu0 0.0
        %3855 = vmatpush1.msra.mxu0 %v3689
        %3856 = vmatprep.subr.mxu0 0.0
        %3857 = vmatpush1.msra.mxu0 %v3690
        %3858 = vmatprep.subr.mxu0 0.0
        %3859 = vmatpush1.msra.mxu0 %v3691
        %3860 = vmatprep.subr.mxu0 0.0
        %3861 = vmatpush1.msra.mxu0 %v3692
        %3862 = vmatprep.subr.mxu0 0.0
        %3863 = vmatpush1.msra.mxu0 %v3693
        %3864 = vmatprep.subr.mxu0 0.0
        %3865 = vmatpush1.msra.mxu0 %v3694
        %3866 = vmatprep.subr.mxu0 0.0
        %3867 = vmatpush1.msra.mxu0 %v3695
        %3868 = vmatprep.subr.mxu0 0.0
        %3869 = vmatpush1.msra.mxu0 %v3696
        %3870 = vmatprep.subr.mxu0 0.0
        %3871 = vmatpush1.msra.mxu0 %v3697
        %3872 = vmatprep.subr.mxu0 0.0
        %3873 = vmatpush1.msra.mxu0 %v3698
        %3874 = vmatprep.subr.mxu0 0.0
        %3875 = vmatpush1.msra.mxu0 %v3699
        %3876 = vmatprep.mubr.f32.mxu0 %v3538
        %3877 = vmatmul.mubr.f32.gmra.mrb[0].mxu0 %v3522
        %v3878 = vpop.f32.mrb[0].mxu0
        %v3879 = vadd.f32 0.0, %v3878
        %v3880 = vpop.f32.mrb[0].mxu0
        %3881 = vmatprep.mubr.f32.mxu0 %v3539
        %3882 = vmatmul.mubr.f32.gmra.mrb[0].mxu0 %v3523
        %v3883 = vpop.f32.mrb[0].mxu0
        %v3884 = vadd.f32 0.0, %v3883
        %v3885 = vpop.f32.mrb[0].mxu0
        %3886 = vmatprep.mubr.f32.mxu0 %v3540
        %3887 = vmatmul.mubr.f32.gmra.mrb[0].mxu0 %v3524
        %v3888 = vpop.f32.mrb[0].mxu0
        %v3889 = vadd.f32 0.0, %v3888
        %v3890 = vpop.f32.mrb[0].mxu0
        %3891 = vmatprep.mubr.f32.mxu0 %v3541
        %3892 = vmatmul.mubr.f32.gmra.mrb[0].mxu0 %v3525
        %v3893 = vpop.f32.mrb[0].mxu0
        %v3894 = vadd.f32 0.0, %v3893
        %v3895 = vpop.f32.mrb[0].mxu0
        %3896 = vmatprep.mubr.f32.mxu0 %v3542
        %3897 = vmatmul.mubr.f32.gmra.mrb[0].mxu0 %v3526
        %v3898 = vpop.f32.mrb[0].mxu0
        %v3899 = vadd.f32 0.0, %v3898
        %v3900 = vpop.f32.mrb[0].mxu0
        %3901 = vmatprep.mubr.f32.mxu0 %v3543
        %3902 = vmatmul.mubr.f32.gmra.mrb[0].mxu0 %v3527
        %v3903 = vpop.f32.mrb[0].mxu0
        %v3904 = vadd.f32 0.0, %v3903
        %v3905 = vpop.f32.mrb[0].mxu0
        %3906 = vmatprep.mubr.f32.mxu0 %v3544
        %3907 = vmatmul.mubr.f32.gmra.mrb[0].mxu0 %v3528
        %v3908 = vpop.f32.mrb[0].mxu0
        %v3909 = vadd.f32 0.0, %v3908
        %v3910 = vpop.f32.mrb[0].mxu0
        %3911 = vmatprep.mubr.f32.mxu0 %v3545
        %3912 = vmatmul.mubr.f32.gmra.mrb[0].mxu0 %v3529
        %v3913 = vpop.f32.mrb[0].mxu0
        %v3914 = vadd.f32 0.0, %v3913
        %v3915 = vpop.f32.mrb[0].mxu0
        %3916 = vmatprep.mubr.f32.mxu0 %v3546
        %3917 = vmatmul.mubr.f32.gmra.mrb[0].mxu0 %v3530
        %v3918 = vpop.f32.mrb[0].mxu0
        %v3919 = vadd.f32 0.0, %v3918
        %v3920 = vpop.f32.mrb[0].mxu0
        %3921 = vmatprep.mubr.f32.mxu0 %v3547
        %3922 = vmatmul.mubr.f32.gmra.mrb[0].mxu0 %v3531
        %v3923 = vpop.f32.mrb[0].mxu0
        %v3924 = vadd.f32 0.0, %v3923
        %v3925 = vpop.f32.mrb[0].mxu0
        %3926 = vmatprep.mubr.f32.mxu0 %v3548
        %3927 = vmatmul.mubr.f32.gmra.mrb[0].mxu0 %v3532
        %v3928 = vpop.f32.mrb[0].mxu0
        %v3929 = vadd.f32 0.0, %v3928
        %v3930 = vpop.f32.mrb[0].mxu0
        %3931 = vmatprep.mubr.f32.mxu0 %v3549
        %3932 = vmatmul.mubr.f32.gmra.mrb[0].mxu0 %v3533
        %v3933 = vpop.f32.mrb[0].mxu0
        %v3934 = vadd.f32 0.0, %v3933
        %v3935 = vpop.f32.mrb[0].mxu0
        %3936 = vmatprep.mubr.f32.mxu0 %v3550
        %3937 = vmatmul.mubr.f32.gmra.mrb[0].mxu0 %v3534
        %v3938 = vpop.f32.mrb[0].mxu0
        %v3939 = vadd.f32 0.0, %v3938
        %v3940 = vpop.f32.mrb[0].mxu0
        %3941 = vmatprep.mubr.f32.mxu0 %v3551
        %3942 = vmatmul.mubr.f32.gmra.mrb[0].mxu0 %v3535
        %v3943 = vpop.f32.mrb[0].mxu0
        %v3944 = vadd.f32 0.0, %v3943
        %v3945 = vpop.f32.mrb[0].mxu0
        %3946 = vmatprep.mubr.f32.mxu0 %v3552
        %3947 = vmatmul.mubr.f32.gmra.mrb[0].mxu0 %v3536
        %v3948 = vpop.f32.mrb[0].mxu0
        %v3949 = vadd.f32 0.0, %v3948
        %v3950 = vpop.f32.mrb[0].mxu0
        %3951 = vmatprep.mubr.f32.mxu0 %v3553
        %3952 = vmatmul.mubr.f32.gmra.mrb[0].mxu0 %v3537
        %v3953 = vpop.f32.mrb[0].mxu0
        %v3954 = vadd.f32 0.0, %v3953
        %v3955 = vpop.f32.mrb[0].mxu0
        %3956 = vdwg.mxu0
        %3957 = vmatprep.subr.mxu0 0.0
        %3958 = vmatpush1.msra.mxu0 %v3700
        %3959 = vmatprep.subr.mxu0 0.0
        %3960 = vmatpush1.msra.mxu0 %v3701
        %3961 = vmatprep.subr.mxu0 0.0
        %3962 = vmatpush1.msra.mxu0 %v3702
        %3963 = vmatprep.subr.mxu0 0.0
        %3964 = vmatpush1.msra.mxu0 %v3703
        %3965 = vmatprep.subr.mxu0 0.0
        %3966 = vmatpush1.msra.mxu0 %v3704
        %3967 = vmatprep.subr.mxu0 0.0
        %3968 = vmatpush1.msra.mxu0 %v3705
        %3969 = vmatprep.subr.mxu0 0.0
        %3970 = vmatpush1.msra.mxu0 %v3706
        %3971 = vmatprep.subr.mxu0 0.0
        %3972 = vmatpush1.msra.mxu0 %v3707
        %3973 = vmatprep.subr.mxu0 0.0
        %3974 = vmatpush1.msra.mxu0 %v3708
        %3975 = vmatprep.subr.mxu0 0.0
        %3976 = vmatpush1.msra.mxu0 %v3709
        %3977 = vmatprep.subr.mxu0 0.0
        %3978 = vmatpush1.msra.mxu0 %v3710
        %3979 = vmatprep.subr.mxu0 0.0
        %3980 = vmatpush1.msra.mxu0 %v3711
        %3981 = vmatprep.subr.mxu0 0.0
        %3982 = vmatpush1.msra.mxu0 %v3712
        %3983 = vmatprep.subr.mxu0 0.0
        %3984 = vmatpush1.msra.mxu0 %v3713
        %3985 = vmatprep.subr.mxu0 0.0
        %3986 = vmatpush1.msra.mxu0 %v3714
        %3987 = vmatprep.subr.mxu0 0.0
        %3988 = vmatpush1.msra.mxu0 %v3715
        %3989 = vmatprep.subr.mxu0 0.0
        %3990 = vmatpush1.msra.mxu0 %v3716
        %3991 = vmatprep.subr.mxu0 0.0
        %3992 = vmatpush1.msra.mxu0 %v3717
        %3993 = vmatprep.subr.mxu0 0.0
        %3994 = vmatpush1.msra.mxu0 %v3718
        %3995 = vmatprep.subr.mxu0 0.0
        %3996 = vmatpush1.msra.mxu0 %v3719
        %3997 = vmatprep.subr.mxu0 0.0
        %3998 = vmatpush1.msra.mxu0 %v3720
        %3999 = vmatprep.subr.mxu0 0.0
        %4000 = vmatpush1.msra.mxu0 %v3721
        %4001 = vmatprep.subr.mxu0 0.0
        %4002 = vmatpush1.msra.mxu0 %v3722
        %4003 = vmatprep.subr.mxu0 0.0
        %4004 = vmatpush1.msra.mxu0 %v3723
        %4005 = vmatprep.subr.mxu0 0.0
        %4006 = vmatpush1.msra.mxu0 %v3724
        %4007 = vmatprep.subr.mxu0 0.0
        %4008 = vmatpush1.msra.mxu0 %v3725
        %4009 = vmatprep.subr.mxu0 0.0
        %4010 = vmatpush1.msra.mxu0 %v3726
        %4011 = vmatprep.subr.mxu0 0.0
        %4012 = vmatpush1.msra.mxu0 %v3727
        %4013 = vmatprep.subr.mxu0 0.0
        %4014 = vmatpush1.msra.mxu0 %v3728
        %4015 = vmatprep.subr.mxu0 0.0
        %4016 = vmatpush1.msra.mxu0 %v3729
        %4017 = vmatprep.subr.mxu0 0.0
        %4018 = vmatpush1.msra.mxu0 %v3730
        %4019 = vmatprep.subr.mxu0 0.0
        %4020 = vmatpush1.msra.mxu0 %v3731
        %4021 = vmatprep.mubr.f32.mxu0 %v3570
        %4022 = vmatmul.mubr.f32.gmra.mrb[0].mxu0 %v3554
        %v4023 = vpop.f32.mrb[0].mxu0
        %v4024 = vadd.f32 %v3879, %v4023
        %v4025 = vpop.f32.mrb[0].mxu0
        %4026 = vmatprep.mubr.f32.mxu0 %v3571
        %4027 = vmatmul.mubr.f32.gmra.mrb[0].mxu0 %v3555
        %v4028 = vpop.f32.mrb[0].mxu0
        %v4029 = vadd.f32 %v3884, %v4028
        %v4030 = vpop.f32.mrb[0].mxu0
        %4031 = vmatprep.mubr.f32.mxu0 %v3572
        %4032 = vmatmul.mubr.f32.gmra.mrb[0].mxu0 %v3556
        %v4033 = vpop.f32.mrb[0].mxu0
        %v4034 = vadd.f32 %v3889, %v4033
        %v4035 = vpop.f32.mrb[0].mxu0
        %4036 = vmatprep.mubr.f32.mxu0 %v3573
        %4037 = vmatmul.mubr.f32.gmra.mrb[0].mxu0 %v3557
        %v4038 = vpop.f32.mrb[0].mxu0
        %v4039 = vadd.f32 %v3894, %v4038
        %v4040 = vpop.f32.mrb[0].mxu0
        %4041 = vmatprep.mubr.f32.mxu0 %v3574
        %4042 = vmatmul.mubr.f32.gmra.mrb[0].mxu0 %v3558
        %v4043 = vpop.f32.mrb[0].mxu0
        %v4044 = vadd.f32 %v3899, %v4043
        %v4045 = vpop.f32.mrb[0].mxu0
        %4046 = vmatprep.mubr.f32.mxu0 %v3575
        %4047 = vmatmul.mubr.f32.gmra.mrb[0].mxu0 %v3559
        %v4048 = vpop.f32.mrb[0].mxu0
        %v4049 = vadd.f32 %v3904, %v4048
        %v4050 = vpop.f32.mrb[0].mxu0
        %4051 = vmatprep.mubr.f32.mxu0 %v3576
        %4052 = vmatmul.mubr.f32.gmra.mrb[0].mxu0 %v3560
        %v4053 = vpop.f32.mrb[0].mxu0
        %v4054 = vadd.f32 %v3909, %v4053
        %v4055 = vpop.f32.mrb[0].mxu0
        %4056 = vmatprep.mubr.f32.mxu0 %v3577
        %4057 = vmatmul.mubr.f32.gmra.mrb[0].mxu0 %v3561
        %v4058 = vpop.f32.mrb[0].mxu0
        %v4059 = vadd.f32 %v3914, %v4058
        %v4060 = vpop.f32.mrb[0].mxu0
        %4061 = vmatprep.mubr.f32.mxu0 %v3578
        %4062 = vmatmul.mubr.f32.gmra.mrb[0].mxu0 %v3562
        %v4063 = vpop.f32.mrb[0].mxu0
        %v4064 = vadd.f32 %v3919, %v4063
        %v4065 = vpop.f32.mrb[0].mxu0
        %4066 = vmatprep.mubr.f32.mxu0 %v3579
        %4067 = vmatmul.mubr.f32.gmra.mrb[0].mxu0 %v3563
        %v4068 = vpop.f32.mrb[0].mxu0
        %v4069 = vadd.f32 %v3924, %v4068
        %v4070 = vpop.f32.mrb[0].mxu0
        %4071 = vmatprep.mubr.f32.mxu0 %v3580
        %4072 = vmatmul.mubr.f32.gmra.mrb[0].mxu0 %v3564
        %v4073 = vpop.f32.mrb[0].mxu0
        %v4074 = vadd.f32 %v3929, %v4073
        %v4075 = vpop.f32.mrb[0].mxu0
        %4076 = vmatprep.mubr.f32.mxu0 %v3581
        %4077 = vmatmul.mubr.f32.gmra.mrb[0].mxu0 %v3565
        %v4078 = vpop.f32.mrb[0].mxu0
        %v4079 = vadd.f32 %v3934, %v4078
        %v4080 = vpop.f32.mrb[0].mxu0
        %4081 = vmatprep.mubr.f32.mxu0 %v3582
        %4082 = vmatmul.mubr.f32.gmra.mrb[0].mxu0 %v3566
        %v4083 = vpop.f32.mrb[0].mxu0
        %v4084 = vadd.f32 %v3939, %v4083
        %v4085 = vpop.f32.mrb[0].mxu0
        %4086 = vmatprep.mubr.f32.mxu0 %v3583
        %4087 = vmatmul.mubr.f32.gmra.mrb[0].mxu0 %v3567
        %v4088 = vpop.f32.mrb[0].mxu0
        %v4089 = vadd.f32 %v3944, %v4088
        %v4090 = vpop.f32.mrb[0].mxu0
        %4091 = vmatprep.mubr.f32.mxu0 %v3584
        %4092 = vmatmul.mubr.f32.gmra.mrb[0].mxu0 %v3568
        %v4093 = vpop.f32.mrb[0].mxu0
        %v4094 = vadd.f32 %v3949, %v4093
        %v4095 = vpop.f32.mrb[0].mxu0
        %4096 = vmatprep.mubr.f32.mxu0 %v3585
        %4097 = vmatmul.mubr.f32.gmra.mrb[0].mxu0 %v3569
        %v4098 = vpop.f32.mrb[0].mxu0
        %v4099 = vadd.f32 %v3954, %v4098
        %v4100 = vpop.f32.mrb[0].mxu0
        %4101 = vdwg.mxu0
        %4102 = vmatprep.subr.mxu0 0.0
        %4103 = vmatpush1.msra.mxu0 %v3732
        %4104 = vmatprep.subr.mxu0 0.0
        %4105 = vmatpush1.msra.mxu0 %v3733
        %4106 = vmatprep.subr.mxu0 0.0
        %4107 = vmatpush1.msra.mxu0 %v3734
        %4108 = vmatprep.subr.mxu0 0.0
        %4109 = vmatpush1.msra.mxu0 %v3735
        %4110 = vmatprep.subr.mxu0 0.0
        %4111 = vmatpush1.msra.mxu0 %v3736
        %4112 = vmatprep.subr.mxu0 0.0
        %4113 = vmatpush1.msra.mxu0 %v3737
        %4114 = vmatprep.subr.mxu0 0.0
        %4115 = vmatpush1.msra.mxu0 %v3738
        %4116 = vmatprep.subr.mxu0 0.0
        %4117 = vmatpush1.msra.mxu0 %v3739
        %4118 = vmatprep.subr.mxu0 0.0
        %4119 = vmatpush1.msra.mxu0 %v3740
        %4120 = vmatprep.subr.mxu0 0.0
        %4121 = vmatpush1.msra.mxu0 %v3741
        %4122 = vmatprep.subr.mxu0 0.0
        %4123 = vmatpush1.msra.mxu0 %v3742
        %4124 = vmatprep.subr.mxu0 0.0
        %4125 = vmatpush1.msra.mxu0 %v3743
        %4126 = vmatprep.subr.mxu0 0.0
        %4127 = vmatpush1.msra.mxu0 %v3744
        %4128 = vmatprep.subr.mxu0 0.0
        %4129 = vmatpush1.msra.mxu0 %v3745
        %4130 = vmatprep.subr.mxu0 0.0
        %4131 = vmatpush1.msra.mxu0 %v3746
        %4132 = vmatprep.subr.mxu0 0.0
        %4133 = vmatpush1.msra.mxu0 %v3747
        %4134 = vmatprep.subr.mxu0 0.0
        %4135 = vmatpush1.msra.mxu0 %v3748
        %4136 = vmatprep.subr.mxu0 0.0
        %4137 = vmatpush1.msra.mxu0 %v3749
        %4138 = vmatprep.subr.mxu0 0.0
        %4139 = vmatpush1.msra.mxu0 %v3750
        %4140 = vmatprep.subr.mxu0 0.0
        %4141 = vmatpush1.msra.mxu0 %v3751
        %4142 = vmatprep.subr.mxu0 0.0
        %4143 = vmatpush1.msra.mxu0 %v3752
        %4144 = vmatprep.subr.mxu0 0.0
        %4145 = vmatpush1.msra.mxu0 %v3753
        %4146 = vmatprep.subr.mxu0 0.0
        %4147 = vmatpush1.msra.mxu0 %v3754
        %4148 = vmatprep.subr.mxu0 0.0
        %4149 = vmatpush1.msra.mxu0 %v3755
        %4150 = vmatprep.subr.mxu0 0.0
        %4151 = vmatpush1.msra.mxu0 %v3756
        %4152 = vmatprep.subr.mxu0 0.0
        %4153 = vmatpush1.msra.mxu0 %v3757
        %4154 = vmatprep.subr.mxu0 0.0
        %4155 = vmatpush1.msra.mxu0 %v3758
        %4156 = vmatprep.subr.mxu0 0.0
        %4157 = vmatpush1.msra.mxu0 %v3759
        %4158 = vmatprep.subr.mxu0 0.0
        %4159 = vmatpush1.msra.mxu0 %v3760
        %4160 = vmatprep.subr.mxu0 0.0
        %4161 = vmatpush1.msra.mxu0 %v3761
        %4162 = vmatprep.subr.mxu0 0.0
        %4163 = vmatpush1.msra.mxu0 %v3762
        %4164 = vmatprep.subr.mxu0 0.0
        %4165 = vmatpush1.msra.mxu0 %v3763
        %4166 = vmatprep.mubr.f32.mxu0 %v3602
        %4167 = vmatmul.mubr.f32.gmra.mrb[0].mxu0 %v3586
        %v4168 = vpop.f32.mrb[0].mxu0
        %v4169 = vadd.f32 %v4024, %v4168
        %v4170 = vpop.f32.mrb[0].mxu0
        %4171 = vmatprep.mubr.f32.mxu0 %v3603
        %4172 = vmatmul.mubr.f32.gmra.mrb[0].mxu0 %v3587
        %v4173 = vpop.f32.mrb[0].mxu0
        %v4174 = vadd.f32 %v4029, %v4173
        %v4175 = vpop.f32.mrb[0].mxu0
        %4176 = vmatprep.mubr.f32.mxu0 %v3604
        %4177 = vmatmul.mubr.f32.gmra.mrb[0].mxu0 %v3588
        %v4178 = vpop.f32.mrb[0].mxu0
        %v4179 = vadd.f32 %v4034, %v4178
        %v4180 = vpop.f32.mrb[0].mxu0
        %4181 = vmatprep.mubr.f32.mxu0 %v3605
        %4182 = vmatmul.mubr.f32.gmra.mrb[0].mxu0 %v3589
        %v4183 = vpop.f32.mrb[0].mxu0
        %v4184 = vadd.f32 %v4039, %v4183
        %v4185 = vpop.f32.mrb[0].mxu0
        %4186 = vmatprep.mubr.f32.mxu0 %v3606
        %4187 = vmatmul.mubr.f32.gmra.mrb[0].mxu0 %v3590
        %v4188 = vpop.f32.mrb[0].mxu0
        %v4189 = vadd.f32 %v4044, %v4188
        %v4190 = vpop.f32.mrb[0].mxu0
        %4191 = vmatprep.mubr.f32.mxu0 %v3607
        %4192 = vmatmul.mubr.f32.gmra.mrb[0].mxu0 %v3591
        %v4193 = vpop.f32.mrb[0].mxu0
        %v4194 = vadd.f32 %v4049, %v4193
        %v4195 = vpop.f32.mrb[0].mxu0
        %4196 = vmatprep.mubr.f32.mxu0 %v3608
        %4197 = vmatmul.mubr.f32.gmra.mrb[0].mxu0 %v3592
        %v4198 = vpop.f32.mrb[0].mxu0
        %v4199 = vadd.f32 %v4054, %v4198
        %v4200 = vpop.f32.mrb[0].mxu0
        %4201 = vmatprep.mubr.f32.mxu0 %v3609
        %4202 = vmatmul.mubr.f32.gmra.mrb[0].mxu0 %v3593
        %v4203 = vpop.f32.mrb[0].mxu0
        %v4204 = vadd.f32 %v4059, %v4203
        %v4205 = vpop.f32.mrb[0].mxu0
        %4206 = vmatprep.mubr.f32.mxu0 %v3610
        %4207 = vmatmul.mubr.f32.gmra.mrb[0].mxu0 %v3594
        %v4208 = vpop.f32.mrb[0].mxu0
        %v4209 = vadd.f32 %v4064, %v4208
        %v4210 = vpop.f32.mrb[0].mxu0
        %4211 = vmatprep.mubr.f32.mxu0 %v3611
        %4212 = vmatmul.mubr.f32.gmra.mrb[0].mxu0 %v3595
        %v4213 = vpop.f32.mrb[0].mxu0
        %v4214 = vadd.f32 %v4069, %v4213
        %v4215 = vpop.f32.mrb[0].mxu0
        %4216 = vmatprep.mubr.f32.mxu0 %v3612
        %4217 = vmatmul.mubr.f32.gmra.mrb[0].mxu0 %v3596
        %v4218 = vpop.f32.mrb[0].mxu0
        %v4219 = vadd.f32 %v4074, %v4218
        %v4220 = vpop.f32.mrb[0].mxu0
        %4221 = vmatprep.mubr.f32.mxu0 %v3613
        %4222 = vmatmul.mubr.f32.gmra.mrb[0].mxu0 %v3597
        %v4223 = vpop.f32.mrb[0].mxu0
        %v4224 = vadd.f32 %v4079, %v4223
        %v4225 = vpop.f32.mrb[0].mxu0
        %4226 = vmatprep.mubr.f32.mxu0 %v3614
        %4227 = vmatmul.mubr.f32.gmra.mrb[0].mxu0 %v3598
        %v4228 = vpop.f32.mrb[0].mxu0
        %v4229 = vadd.f32 %v4084, %v4228
        %v4230 = vpop.f32.mrb[0].mxu0
        %4231 = vmatprep.mubr.f32.mxu0 %v3615
        %4232 = vmatmul.mubr.f32.gmra.mrb[0].mxu0 %v3599
        %v4233 = vpop.f32.mrb[0].mxu0
        %v4234 = vadd.f32 %v4089, %v4233
        %v4235 = vpop.f32.mrb[0].mxu0
        %4236 = vmatprep.mubr.f32.mxu0 %v3616
        %4237 = vmatmul.mubr.f32.gmra.mrb[0].mxu0 %v3600
        %v4238 = vpop.f32.mrb[0].mxu0
        %v4239 = vadd.f32 %v4094, %v4238
        %v4240 = vpop.f32.mrb[0].mxu0
        %4241 = vmatprep.mubr.f32.mxu0 %v3617
        %4242 = vmatmul.mubr.f32.gmra.mrb[0].mxu0 %v3601
        %v4243 = vpop.f32.mrb[0].mxu0
        %v4244 = vadd.f32 %v4099, %v4243
        %v4245 = vpop.f32.mrb[0].mxu0
        %4246 = vdwg.mxu0
        %4247 = vmatprep.subr.mxu0 0.0
        %4248 = vmatpush1.msra.mxu0 %v3764
        %4249 = vmatprep.subr.mxu0 0.0
        %4250 = vmatpush1.msra.mxu0 %v3765
        %4251 = vmatprep.subr.mxu0 0.0
        %4252 = vmatpush1.msra.mxu0 %v3766
        %4253 = vmatprep.subr.mxu0 0.0
        %4254 = vmatpush1.msra.mxu0 %v3767
        %4255 = vmatprep.subr.mxu0 0.0
        %4256 = vmatpush1.msra.mxu0 %v3768
        %4257 = vmatprep.subr.mxu0 0.0
        %4258 = vmatpush1.msra.mxu0 %v3769
        %4259 = vmatprep.subr.mxu0 0.0
        %4260 = vmatpush1.msra.mxu0 %v3770
        %4261 = vmatprep.subr.mxu0 0.0
        %4262 = vmatpush1.msra.mxu0 %v3771
        %4263 = vmatprep.subr.mxu0 0.0
        %4264 = vmatpush1.msra.mxu0 %v3772
        %4265 = vmatprep.subr.mxu0 0.0
        %4266 = vmatpush1.msra.mxu0 %v3773
        %4267 = vmatprep.subr.mxu0 0.0
        %4268 = vmatpush1.msra.mxu0 %v3774
        %4269 = vmatprep.subr.mxu0 0.0
        %4270 = vmatpush1.msra.mxu0 %v3775
        %4271 = vmatprep.subr.mxu0 0.0
        %4272 = vmatpush1.msra.mxu0 %v3776
        %4273 = vmatprep.subr.mxu0 0.0
        %4274 = vmatpush1.msra.mxu0 %v3777
        %4275 = vmatprep.subr.mxu0 0.0
        %4276 = vmatpush1.msra.mxu0 %v3778
        %4277 = vmatprep.subr.mxu0 0.0
        %4278 = vmatpush1.msra.mxu0 %v3779
        %4279 = vmatprep.subr.mxu0 0.0
        %4280 = vmatpush1.msra.mxu0 %v3780
        %4281 = vmatprep.subr.mxu0 0.0
        %4282 = vmatpush1.msra.mxu0 %v3781
        %4283 = vmatprep.subr.mxu0 0.0
        %4284 = vmatpush1.msra.mxu0 %v3782
        %4285 = vmatprep.subr.mxu0 0.0
        %4286 = vmatpush1.msra.mxu0 %v3783
        %4287 = vmatprep.subr.mxu0 0.0
        %4288 = vmatpush1.msra.mxu0 %v3784
        %4289 = vmatprep.subr.mxu0 0.0
        %4290 = vmatpush1.msra.mxu0 %v3785
        %4291 = vmatprep.subr.mxu0 0.0
        %4292 = vmatpush1.msra.mxu0 %v3786
        %4293 = vmatprep.subr.mxu0 0.0
        %4294 = vmatpush1.msra.mxu0 %v3787
        %4295 = vmatprep.subr.mxu0 0.0
        %4296 = vmatpush1.msra.mxu0 %v3788
        %4297 = vmatprep.subr.mxu0 0.0
        %4298 = vmatpush1.msra.mxu0 %v3789
        %4299 = vmatprep.subr.mxu0 0.0
        %4300 = vmatpush1.msra.mxu0 %v3790
        %4301 = vmatprep.subr.mxu0 0.0
        %4302 = vmatpush1.msra.mxu0 %v3791
        %4303 = vmatprep.subr.mxu0 0.0
        %4304 = vmatpush1.msra.mxu0 %v3792
        %4305 = vmatprep.subr.mxu0 0.0
        %4306 = vmatpush1.msra.mxu0 %v3793
        %4307 = vmatprep.subr.mxu0 0.0
        %4308 = vmatpush1.msra.mxu0 %v3794
        %4309 = vmatprep.subr.mxu0 0.0
        %4310 = vmatpush1.msra.mxu0 %v3795
        %4311 = vmatprep.mubr.f32.mxu0 %v3635
        %4312 = vmatmul.mubr.f32.gmra.mrb[0].mxu0 %v3619
        %v4313 = vpop.f32.mrb[0].mxu0
        %v4314 = vadd.f32 %v4169, %v4313
        %v4315 = vpop.f32.mrb[0].mxu0
        %4316 = vmatprep.mubr.f32.mxu0 %v3636
        %4317 = vmatmul.mubr.f32.gmra.mrb[0].mxu0 %v3620
        %v4318 = vpop.f32.mrb[0].mxu0
        %v4319 = vadd.f32 %v4174, %v4318
        %v4320 = vpop.f32.mrb[0].mxu0
        %4321 = vmatprep.mubr.f32.mxu0 %v3637
        %4322 = vmatmul.mubr.f32.gmra.mrb[0].mxu0 %v3621
        %v4323 = vpop.f32.mrb[0].mxu0
        %v4324 = vadd.f32 %v4179, %v4323
        %v4325 = vpop.f32.mrb[0].mxu0
        %4326 = vmatprep.mubr.f32.mxu0 %v3638
        %4327 = vmatmul.mubr.f32.gmra.mrb[0].mxu0 %v3622
        %v4328 = vpop.f32.mrb[0].mxu0
        %v4329 = vadd.f32 %v4184, %v4328
        %v4330 = vpop.f32.mrb[0].mxu0
        %4331 = vmatprep.mubr.f32.mxu0 %v3639
        %4332 = vmatmul.mubr.f32.gmra.mrb[0].mxu0 %v3623
        %v4333 = vpop.f32.mrb[0].mxu0
        %v4334 = vadd.f32 %v4189, %v4333
        %v4335 = vpop.f32.mrb[0].mxu0
        %4336 = vmatprep.mubr.f32.mxu0 %v3640
        %4337 = vmatmul.mubr.f32.gmra.mrb[0].mxu0 %v3624
        %v4338 = vpop.f32.mrb[0].mxu0
        %v4339 = vadd.f32 %v4194, %v4338
        %v4340 = vpop.f32.mrb[0].mxu0
        %4341 = vmatprep.mubr.f32.mxu0 %v3641
        %4342 = vmatmul.mubr.f32.gmra.mrb[0].mxu0 %v3625
        %v4343 = vpop.f32.mrb[0].mxu0
        %v4344 = vadd.f32 %v4199, %v4343
        %v4345 = vpop.f32.mrb[0].mxu0
        %4346 = vmatprep.mubr.f32.mxu0 %v3642
        %4347 = vmatmul.mubr.f32.gmra.mrb[0].mxu0 %v3626
        %v4348 = vpop.f32.mrb[0].mxu0
        %v4349 = vadd.f32 %v4204, %v4348
        %v4350 = vpop.f32.mrb[0].mxu0
        %4351 = vmatprep.mubr.f32.mxu0 %v3643
        %4352 = vmatmul.mubr.f32.gmra.mrb[0].mxu0 %v3627
        %v4353 = vpop.f32.mrb[0].mxu0
        %v4354 = vadd.f32 %v4209, %v4353
        %v4355 = vpop.f32.mrb[0].mxu0
        %4356 = vmatprep.mubr.f32.mxu0 %v3644
        %4357 = vmatmul.mubr.f32.gmra.mrb[0].mxu0 %v3628
        %v4358 = vpop.f32.mrb[0].mxu0
        %v4359 = vadd.f32 %v4214, %v4358
        %v4360 = vpop.f32.mrb[0].mxu0
        %4361 = vmatprep.mubr.f32.mxu0 %v3645
        %4362 = vmatmul.mubr.f32.gmra.mrb[0].mxu0 %v3629
        %v4363 = vpop.f32.mrb[0].mxu0
        %v4364 = vadd.f32 %v4219, %v4363
        %v4365 = vpop.f32.mrb[0].mxu0
        %4366 = vmatprep.mubr.f32.mxu0 %v3646
        %4367 = vmatmul.mubr.f32.gmra.mrb[0].mxu0 %v3630
        %v4368 = vpop.f32.mrb[0].mxu0
        %v4369 = vadd.f32 %v4224, %v4368
        %v4370 = vpop.f32.mrb[0].mxu0
        %4371 = vmatprep.mubr.f32.mxu0 %v3647
        %4372 = vmatmul.mubr.f32.gmra.mrb[0].mxu0 %v3631
        %v4373 = vpop.f32.mrb[0].mxu0
        %v4374 = vadd.f32 %v4229, %v4373
        %v4375 = vpop.f32.mrb[0].mxu0
        %4376 = vmatprep.mubr.f32.mxu0 %v3648
        %4377 = vmatmul.mubr.f32.gmra.mrb[0].mxu0 %v3632
        %v4378 = vpop.f32.mrb[0].mxu0
        %v4379 = vadd.f32 %v4234, %v4378
        %v4380 = vpop.f32.mrb[0].mxu0
        %4381 = vmatprep.mubr.f32.mxu0 %v3649
        %4382 = vmatmul.mubr.f32.gmra.mrb[0].mxu0 %v3633
        %v4383 = vpop.f32.mrb[0].mxu0
        %v4384 = vadd.f32 %v4239, %v4383
        %v4385 = vpop.f32.mrb[0].mxu0
        %4386 = vmatprep.mubr.f32.mxu0 %v3650
        %4387 = vmatmul.mubr.f32.gmra.mrb[0].mxu0 %v3634
        %v4388 = vpop.f32.mrb[0].mxu0
        %v4389 = vadd.f32 %v4244, %v4388
        %v4390 = vpop.f32.mrb[0].mxu0
        %4391 = vdwg.mxu0
        %4392 = vmatprep.subr.mxu0 0.0
        %4393 = vmatpush1.msra.mxu0 %v3796
        %4394 = vmatprep.subr.mxu0 0.0
        %4395 = vmatpush1.msra.mxu0 %v3797
        %4396 = vmatprep.subr.mxu0 0.0
        %4397 = vmatpush1.msra.mxu0 %v3798
        %4398 = vmatprep.subr.mxu0 0.0
        %4399 = vmatpush1.msra.mxu0 %v3799
        %4400 = vmatprep.subr.mxu0 0.0
        %4401 = vmatpush1.msra.mxu0 %v3800
        %4402 = vmatprep.subr.mxu0 0.0
        %4403 = vmatpush1.msra.mxu0 %v3801
        %4404 = vmatprep.subr.mxu0 0.0
        %4405 = vmatpush1.msra.mxu0 %v3802
        %4406 = vmatprep.subr.mxu0 0.0
        %4407 = vmatpush1.msra.mxu0 %v3803
        %4408 = vmatprep.subr.mxu0 0.0
        %4409 = vmatpush1.msra.mxu0 %v3804
        %4410 = vmatprep.subr.mxu0 0.0
        %4411 = vmatpush1.msra.mxu0 %v3805
        %4412 = vmatprep.subr.mxu0 0.0
        %4413 = vmatpush1.msra.mxu0 %v3806
        %4414 = vmatprep.subr.mxu0 0.0
        %4415 = vmatpush1.msra.mxu0 %v3807
        %4416 = vmatprep.subr.mxu0 0.0
        %4417 = vmatpush1.msra.mxu0 %v3808
        %4418 = vmatprep.subr.mxu0 0.0
        %4419 = vmatpush1.msra.mxu0 %v3809
        %4420 = vmatprep.subr.mxu0 0.0
        %4421 = vmatpush1.msra.mxu0 %v3810
        %4422 = vmatprep.subr.mxu0 0.0
        %4423 = vmatpush1.msra.mxu0 %v3811
        %4424 = vmatprep.subr.mxu0 0.0
        %4425 = vmatpush1.msra.mxu0 0.0
        %4426 = vmatprep.subr.mxu0 0.0
        %4427 = vmatpush1.msra.mxu0 0.0
        %4428 = vmatprep.subr.mxu0 0.0
        %4429 = vmatpush1.msra.mxu0 0.0
        %4430 = vmatprep.subr.mxu0 0.0
        %4431 = vmatpush1.msra.mxu0 0.0
        %4432 = vmatprep.subr.mxu0 0.0
        %4433 = vmatpush1.msra.mxu0 0.0
        %4434 = vmatprep.subr.mxu0 0.0
        %4435 = vmatpush1.msra.mxu0 0.0
        %4436 = vmatprep.subr.mxu0 0.0
        %4437 = vmatpush1.msra.mxu0 0.0
        %4438 = vmatprep.subr.mxu0 0.0
        %4439 = vmatpush1.msra.mxu0 0.0
        %4440 = vmatprep.subr.mxu0 0.0
        %4441 = vmatpush1.msra.mxu0 0.0
        %4442 = vmatprep.subr.mxu0 0.0
        %4443 = vmatpush1.msra.mxu0 0.0
        %4444 = vmatprep.subr.mxu0 0.0
        %4445 = vmatpush1.msra.mxu0 0.0
        %4446 = vmatprep.subr.mxu0 0.0
        %4447 = vmatpush1.msra.mxu0 0.0
        %4448 = vmatprep.subr.mxu0 0.0
        %4449 = vmatpush1.msra.mxu0 0.0
        %4450 = vmatprep.subr.mxu0 0.0
        %4451 = vmatpush1.msra.mxu0 0.0
        %4452 = vmatprep.subr.mxu0 0.0
        %4453 = vmatpush1.msra.mxu0 0.0
        %4454 = vmatprep.subr.mxu0 0.0
        %4455 = vmatpush1.msra.mxu0 0.0
        %4456 = vmatprep.mubr.f32.mxu0 0.0
        %4457 = vmatmul.mubr.f32.gmra.mrb[0].mxu0 %v3651
        %v4458 = vpop.f32.mrb[0].mxu0
        %v4459 = vadd.f32 %v4314, %v4458
        %v4460 = vpop.f32.mrb[0].mxu0
        %4461 = vmatprep.mubr.f32.mxu0 0.0
        %4462 = vmatmul.mubr.f32.gmra.mrb[0].mxu0 %v3652
        %v4463 = vpop.f32.mrb[0].mxu0
        %v4464 = vadd.f32 %v4319, %v4463
        %v4465 = vpop.f32.mrb[0].mxu0
        %4466 = vmatprep.mubr.f32.mxu0 0.0
        %4467 = vmatmul.mubr.f32.gmra.mrb[0].mxu0 %v3653
        %v4468 = vpop.f32.mrb[0].mxu0
        %v4469 = vadd.f32 %v4324, %v4468
        %v4470 = vpop.f32.mrb[0].mxu0
        %4471 = vmatprep.mubr.f32.mxu0 0.0
        %4472 = vmatmul.mubr.f32.gmra.mrb[0].mxu0 %v3654
        %v4473 = vpop.f32.mrb[0].mxu0
        %v4474 = vadd.f32 %v4329, %v4473
        %v4475 = vpop.f32.mrb[0].mxu0
        %4476 = vmatprep.mubr.f32.mxu0 0.0
        %4477 = vmatmul.mubr.f32.gmra.mrb[0].mxu0 %v3655
        %v4478 = vpop.f32.mrb[0].mxu0
        %v4479 = vadd.f32 %v4334, %v4478
        %v4480 = vpop.f32.mrb[0].mxu0
        %4481 = vmatprep.mubr.f32.mxu0 0.0
        %4482 = vmatmul.mubr.f32.gmra.mrb[0].mxu0 %v3656
        %v4483 = vpop.f32.mrb[0].mxu0
        %v4484 = vadd.f32 %v4339, %v4483
        %v4485 = vpop.f32.mrb[0].mxu0
        %4486 = vmatprep.mubr.f32.mxu0 0.0
        %4487 = vmatmul.mubr.f32.gmra.mrb[0].mxu0 %v3657
        %v4488 = vpop.f32.mrb[0].mxu0
        %v4489 = vadd.f32 %v4344, %v4488
        %v4490 = vpop.f32.mrb[0].mxu0
        %4491 = vmatprep.mubr.f32.mxu0 0.0
        %4492 = vmatmul.mubr.f32.gmra.mrb[0].mxu0 %v3658
        %v4493 = vpop.f32.mrb[0].mxu0
        %v4494 = vadd.f32 %v4349, %v4493
        %v4495 = vpop.f32.mrb[0].mxu0
        %4496 = vmatprep.mubr.f32.mxu0 0.0
        %4497 = vmatmul.mubr.f32.gmra.mrb[0].mxu0 %v3659
        %v4498 = vpop.f32.mrb[0].mxu0
        %v4499 = vadd.f32 %v4354, %v4498
        %v4500 = vpop.f32.mrb[0].mxu0
        %4501 = vmatprep.mubr.f32.mxu0 0.0
        %4502 = vmatmul.mubr.f32.gmra.mrb[0].mxu0 %v3660
        %v4503 = vpop.f32.mrb[0].mxu0
        %v4504 = vadd.f32 %v4359, %v4503
        %v4505 = vpop.f32.mrb[0].mxu0
        %4506 = vmatprep.mubr.f32.mxu0 0.0
        %4507 = vmatmul.mubr.f32.gmra.mrb[0].mxu0 %v3661
        %v4508 = vpop.f32.mrb[0].mxu0
        %v4509 = vadd.f32 %v4364, %v4508
        %v4510 = vpop.f32.mrb[0].mxu0
        %4511 = vmatprep.mubr.f32.mxu0 0.0
        %4512 = vmatmul.mubr.f32.gmra.mrb[0].mxu0 %v3662
        %v4513 = vpop.f32.mrb[0].mxu0
        %v4514 = vadd.f32 %v4369, %v4513
        %v4515 = vpop.f32.mrb[0].mxu0
        %4516 = vmatprep.mubr.f32.mxu0 0.0
        %4517 = vmatmul.mubr.f32.gmra.mrb[0].mxu0 %v3663
        %v4518 = vpop.f32.mrb[0].mxu0
        %v4519 = vadd.f32 %v4374, %v4518
        %v4520 = vpop.f32.mrb[0].mxu0
        %4521 = vmatprep.mubr.f32.mxu0 0.0
        %4522 = vmatmul.mubr.f32.gmra.mrb[0].mxu0 %v3664
        %v4523 = vpop.f32.mrb[0].mxu0
        %v4524 = vadd.f32 %v4379, %v4523
        %v4525 = vpop.f32.mrb[0].mxu0
        %4526 = vmatprep.mubr.f32.mxu0 0.0
        %4527 = vmatmul.mubr.f32.gmra.mrb[0].mxu0 %v3665
        %v4528 = vpop.f32.mrb[0].mxu0
        %v4529 = vadd.f32 %v4384, %v4528
        %v4530 = vpop.f32.mrb[0].mxu0
        %4531 = vmatprep.mubr.f32.mxu0 0.0
        %4532 = vmatmul.mubr.f32.gmra.mrb[0].mxu0 %v3666
        %v4533 = vpop.f32.mrb[0].mxu0
        %v4534 = vadd.f32 %v4389, %v4533
        %v4535 = vpop.f32.mrb[0].mxu0
        %4536 = vdwg.mxu0
        %s4537 = scalar_lea.vmem %s4, 3
        %v4538 = vld [vmem:[%s4537] sm:$0x1]
        %v4540 = vlaneseq
        %v4541 = vshrl.u32 %v4540, 7
        %v4542 = vsub.s32 0, %v4541
        %v4543 = vrot.slane %v4538, %v4542
        %v4545 = vmul.f32 %v4459, %v4543
        %v4546 = vmul.f32 %v4464, %v4543
        %v4547 = vmul.f32 %v4469, %v4543
        %v4548 = vmul.f32 %v4474, %v4543
        %v4549 = vmul.f32 %v4479, %v4543
        %v4550 = vmul.f32 %v4484, %v4543
        %v4551 = vmul.f32 %v4489, %v4543
        %v4552 = vmul.f32 %v4494, %v4543
        %v4553 = vmul.f32 %v4499, %v4543
        %v4554 = vmul.f32 %v4504, %v4543
        %v4555 = vmul.f32 %v4509, %v4543
        %v4556 = vmul.f32 %v4514, %v4543
        %v4557 = vmul.f32 %v4519, %v4543
        %v4558 = vmul.f32 %v4524, %v4543
        %v4559 = vmul.f32 %v4529, %v4543
        %v4560 = vmul.f32 %v4534, %v4543
        %s4561 = scalar_lea.vmem %s5, 3
        %v4562 = vld [vmem:[%s4561] sm:$0x1]
        %v4564 = vlaneseq
        %v4565 = vshrl.u32 %v4564, 7
        %v4566 = vsub.s32 0, %v4565
        %v4567 = vrot.slane %v4562, %v4566
        %v4569 = vadd.f32 %v4545, %v4567
        %v4570 = vadd.f32 %v4546, %v4567
        %v4571 = vadd.f32 %v4547, %v4567
        %v4572 = vadd.f32 %v4548, %v4567
        %v4573 = vadd.f32 %v4549, %v4567
        %v4574 = vadd.f32 %v4550, %v4567
        %v4575 = vadd.f32 %v4551, %v4567
        %v4576 = vadd.f32 %v4552, %v4567
        %v4577 = vadd.f32 %v4553, %v4567
        %v4578 = vadd.f32 %v4554, %v4567
        %v4579 = vadd.f32 %v4555, %v4567
        %v4580 = vadd.f32 %v4556, %v4567
        %v4581 = vadd.f32 %v4557, %v4567
        %v4582 = vadd.f32 %v4558, %v4567
        %v4583 = vadd.f32 %v4559, %v4567
        %v4584 = vadd.f32 %v4560, %v4567
        %v4585 = vmax.f32 %v4569, 0.0
        %v4586 = vmax.f32 %v4570, 0.0
        %v4587 = vmax.f32 %v4571, 0.0
        %v4588 = vmax.f32 %v4572, 0.0
        %v4589 = vmax.f32 %v4573, 0.0
        %v4590 = vmax.f32 %v4574, 0.0
        %v4591 = vmax.f32 %v4575, 0.0
        %v4592 = vmax.f32 %v4576, 0.0
        %v4593 = vmax.f32 %v4577, 0.0
        %v4594 = vmax.f32 %v4578, 0.0
        %v4595 = vmax.f32 %v4579, 0.0
        %v4596 = vmax.f32 %v4580, 0.0
        %v4597 = vmax.f32 %v4581, 0.0
        %v4598 = vmax.f32 %v4582, 0.0
        %v4599 = vmax.f32 %v4583, 0.0
        %v4600 = vmax.f32 %v4584, 0.0
        %4601 = vst [vmem:[#allocation3 + $0x18] sm:$0xff] %v4585
        %4602 = vst [vmem:[#allocation3 + $0x38] sm:$0xff] %v4586
        %4603 = vst [vmem:[#allocation3 + $0x58] sm:$0xff] %v4587
        %4604 = vst [vmem:[#allocation3 + $0x78] sm:$0xff] %v4588
        %4605 = vst [vmem:[#allocation3 + $0x98] sm:$0xff] %v4589
        %4606 = vst [vmem:[#allocation3 + $0xb8] sm:$0xff] %v4590
        %4607 = vst [vmem:[#allocation3 + $0xd8] sm:$0xff] %v4591
        %4608 = vst [vmem:[#allocation3 + $0xf8] sm:$0xff] %v4592
        %4609 = vst [vmem:[#allocation3 + $0x118] sm:$0xff] %v4593
        %4610 = vst [vmem:[#allocation3 + $0x138] sm:$0xff] %v4594
        %4611 = vst [vmem:[#allocation3 + $0x158] sm:$0xff] %v4595
        %4612 = vst [vmem:[#allocation3 + $0x178] sm:$0xff] %v4596
        %4613 = vst [vmem:[#allocation3 + $0x198] sm:$0xff] %v4597
        %4614 = vst [vmem:[#allocation3 + $0x1b8] sm:$0xff] %v4598
        %4615 = vst [vmem:[#allocation3 + $0x1d8] sm:$0xff] %v4599
        %4616 = vst [vmem:[#allocation3 + $0x1f8] sm:$0xff] %v4600
        %v4617 = vld [vmem:[#allocation3] sm:$0xff]
        %v4618 = vld [vmem:[#allocation3 + $0x8] sm:$0xff]
        %v4619 = vld [vmem:[#allocation3 + $0x10] sm:$0xff]
        %v4620 = vld [vmem:[#allocation3 + $0x18] sm:$0xff]
        %v4621 = vld [vmem:[#allocation3 + $0x20] sm:$0xff]
        %v4622 = vld [vmem:[#allocation3 + $0x28] sm:$0xff]
        %v4623 = vld [vmem:[#allocation3 + $0x30] sm:$0xff]
        %v4624 = vld [vmem:[#allocation3 + $0x38] sm:$0xff]
        %v4625 = vld [vmem:[#allocation3 + $0x40] sm:$0xff]
        %v4626 = vld [vmem:[#allocation3 + $0x48] sm:$0xff]
        %v4627 = vld [vmem:[#allocation3 + $0x50] sm:$0xff]
        %v4628 = vld [vmem:[#allocation3 + $0x58] sm:$0xff]
        %v4629 = vld [vmem:[#allocation3 + $0x60] sm:$0xff]
        %v4630 = vld [vmem:[#allocation3 + $0x68] sm:$0xff]
        %v4631 = vld [vmem:[#allocation3 + $0x70] sm:$0xff]
        %v4632 = vld [vmem:[#allocation3 + $0x78] sm:$0xff]
        %v4633 = vld [vmem:[#allocation3 + $0x80] sm:$0xff]
        %v4634 = vld [vmem:[#allocation3 + $0x88] sm:$0xff]
        %v4635 = vld [vmem:[#allocation3 + $0x90] sm:$0xff]
        %v4636 = vld [vmem:[#allocation3 + $0x98] sm:$0xff]
        %v4637 = vld [vmem:[#allocation3 + $0xa0] sm:$0xff]
        %v4638 = vld [vmem:[#allocation3 + $0xa8] sm:$0xff]
        %v4639 = vld [vmem:[#allocation3 + $0xb0] sm:$0xff]
        %v4640 = vld [vmem:[#allocation3 + $0xb8] sm:$0xff]
        %v4641 = vld [vmem:[#allocation3 + $0xc0] sm:$0xff]
        %v4642 = vld [vmem:[#allocation3 + $0xc8] sm:$0xff]
        %v4643 = vld [vmem:[#allocation3 + $0xd0] sm:$0xff]
        %v4644 = vld [vmem:[#allocation3 + $0xd8] sm:$0xff]
        %v4645 = vld [vmem:[#allocation3 + $0xe0] sm:$0xff]
        %v4646 = vld [vmem:[#allocation3 + $0xe8] sm:$0xff]
        %v4647 = vld [vmem:[#allocation3 + $0xf0] sm:$0xff]
        %v4648 = vld [vmem:[#allocation3 + $0xf8] sm:$0xff]
        %v4649 = vld [vmem:[#allocation3 + $0x100] sm:$0xff]
        %v4650 = vld [vmem:[#allocation3 + $0x108] sm:$0xff]
        %v4651 = vld [vmem:[#allocation3 + $0x110] sm:$0xff]
        %v4652 = vld [vmem:[#allocation3 + $0x118] sm:$0xff]
        %v4653 = vld [vmem:[#allocation3 + $0x120] sm:$0xff]
        %v4654 = vld [vmem:[#allocation3 + $0x128] sm:$0xff]
        %v4655 = vld [vmem:[#allocation3 + $0x130] sm:$0xff]
        %v4656 = vld [vmem:[#allocation3 + $0x138] sm:$0xff]
        %v4657 = vld [vmem:[#allocation3 + $0x140] sm:$0xff]
        %v4658 = vld [vmem:[#allocation3 + $0x148] sm:$0xff]
        %v4659 = vld [vmem:[#allocation3 + $0x150] sm:$0xff]
        %v4660 = vld [vmem:[#allocation3 + $0x158] sm:$0xff]
        %v4661 = vld [vmem:[#allocation3 + $0x160] sm:$0xff]
        %v4662 = vld [vmem:[#allocation3 + $0x168] sm:$0xff]
        %v4663 = vld [vmem:[#allocation3 + $0x170] sm:$0xff]
        %v4664 = vld [vmem:[#allocation3 + $0x178] sm:$0xff]
        %v4665 = vld [vmem:[#allocation3 + $0x180] sm:$0xff]
        %v4666 = vld [vmem:[#allocation3 + $0x188] sm:$0xff]
        %v4667 = vld [vmem:[#allocation3 + $0x190] sm:$0xff]
        %v4668 = vld [vmem:[#allocation3 + $0x198] sm:$0xff]
        %v4669 = vld [vmem:[#allocation3 + $0x1a0] sm:$0xff]
        %v4670 = vld [vmem:[#allocation3 + $0x1a8] sm:$0xff]
        %v4671 = vld [vmem:[#allocation3 + $0x1b0] sm:$0xff]
        %v4672 = vld [vmem:[#allocation3 + $0x1b8] sm:$0xff]
        %v4673 = vld [vmem:[#allocation3 + $0x1c0] sm:$0xff]
        %v4674 = vld [vmem:[#allocation3 + $0x1c8] sm:$0xff]
        %v4675 = vld [vmem:[#allocation3 + $0x1d0] sm:$0xff]
        %v4676 = vld [vmem:[#allocation3 + $0x1d8] sm:$0xff]
        %v4677 = vld [vmem:[#allocation3 + $0x1e0] sm:$0xff]
        %v4678 = vld [vmem:[#allocation3 + $0x1e8] sm:$0xff]
        %v4679 = vld [vmem:[#allocation3 + $0x1f0] sm:$0xff]
        %v4680 = vld [vmem:[#allocation3 + $0x1f8] sm:$0xff]
        %v4681 = vld [vmem:[%s3] sm:$0xff]
        %v4682 = vld [vmem:[%s3 + $0x8] sm:$0xff]
        %v4683 = vld [vmem:[%s3 + $0x10] sm:$0xff]
        %v4684 = vld [vmem:[%s3 + $0x18] sm:$0xff]
        %v4685 = vld [vmem:[%s3 + $0x20] sm:$0xff]
        %v4686 = vld [vmem:[%s3 + $0x28] sm:$0xff]
        %v4687 = vld [vmem:[%s3 + $0x30] sm:$0xff]
        %v4688 = vld [vmem:[%s3 + $0x38] sm:$0xff]
        %v4689 = vld [vmem:[%s3 + $0x40] sm:$0xff]
        %v4690 = vld [vmem:[%s3 + $0x48] sm:$0xff]
        %v4691 = vld [vmem:[%s3 + $0x50] sm:$0xff]
        %v4692 = vld [vmem:[%s3 + $0x58] sm:$0xff]
        %v4693 = vld [vmem:[%s3 + $0x60] sm:$0xff]
        %v4694 = vld [vmem:[%s3 + $0x68] sm:$0xff]
        %v4695 = vld [vmem:[%s3 + $0x70] sm:$0xff]
        %v4696 = vld [vmem:[%s3 + $0x78] sm:$0xff]
        %v4697 = vld [vmem:[%s3 + $0x80] sm:$0xff]
        %v4698 = vld [vmem:[%s3 + $0x88] sm:$0xff]
        %v4699 = vld [vmem:[%s3 + $0x90] sm:$0xff]
        %v4700 = vld [vmem:[%s3 + $0x98] sm:$0xff]
        %v4701 = vld [vmem:[%s3 + $0xa0] sm:$0xff]
        %v4702 = vld [vmem:[%s3 + $0xa8] sm:$0xff]
        %v4703 = vld [vmem:[%s3 + $0xb0] sm:$0xff]
        %v4704 = vld [vmem:[%s3 + $0xb8] sm:$0xff]
        %v4705 = vld [vmem:[%s3 + $0xc0] sm:$0xff]
        %v4706 = vld [vmem:[%s3 + $0xc8] sm:$0xff]
        %v4707 = vld [vmem:[%s3 + $0xd0] sm:$0xff]
        %v4708 = vld [vmem:[%s3 + $0xd8] sm:$0xff]
        %v4709 = vld [vmem:[%s3 + $0xe0] sm:$0xff]
        %v4710 = vld [vmem:[%s3 + $0xe8] sm:$0xff]
        %v4711 = vld [vmem:[%s3 + $0xf0] sm:$0xff]
        %v4712 = vld [vmem:[%s3 + $0xf8] sm:$0xff]
        %v4713 = vld [vmem:[%s3 + $0x100] sm:$0xff]
        %v4714 = vld [vmem:[%s3 + $0x108] sm:$0xff]
        %v4715 = vld [vmem:[%s3 + $0x110] sm:$0xff]
        %v4716 = vld [vmem:[%s3 + $0x118] sm:$0xff]
        %v4717 = vld [vmem:[%s3 + $0x120] sm:$0xff]
        %v4718 = vld [vmem:[%s3 + $0x128] sm:$0xff]
        %v4719 = vld [vmem:[%s3 + $0x130] sm:$0xff]
        %v4720 = vld [vmem:[%s3 + $0x138] sm:$0xff]
        %v4721 = vld [vmem:[%s3 + $0x140] sm:$0xff]
        %v4722 = vld [vmem:[%s3 + $0x148] sm:$0xff]
        %v4723 = vld [vmem:[%s3 + $0x150] sm:$0xff]
        %v4724 = vld [vmem:[%s3 + $0x158] sm:$0xff]
        %v4725 = vld [vmem:[%s3 + $0x160] sm:$0xff]
        %v4726 = vld [vmem:[%s3 + $0x168] sm:$0xff]
        %v4727 = vld [vmem:[%s3 + $0x170] sm:$0xff]
        %v4728 = vld [vmem:[%s3 + $0x178] sm:$0xff]
        %v4729 = vld [vmem:[%s3 + $0x180] sm:$0xff]
        %v4730 = vld [vmem:[%s3 + $0x188] sm:$0xff]
        %v4731 = vld [vmem:[%s3 + $0x190] sm:$0xff]
        %v4732 = vld [vmem:[%s3 + $0x198] sm:$0xff]
        %v4733 = vld [vmem:[%s3 + $0x1a0] sm:$0xff]
        %v4734 = vld [vmem:[%s3 + $0x1a8] sm:$0xff]
        %v4735 = vld [vmem:[%s3 + $0x1b0] sm:$0xff]
        %v4736 = vld [vmem:[%s3 + $0x1b8] sm:$0xff]
        %v4737 = vld [vmem:[%s3 + $0x1c0] sm:$0xff]
        %v4738 = vld [vmem:[%s3 + $0x1c8] sm:$0xff]
        %v4739 = vld [vmem:[%s3 + $0x1d0] sm:$0xff]
        %v4740 = vld [vmem:[%s3 + $0x1d8] sm:$0xff]
        %v4741 = vld [vmem:[%s3 + $0x1e0] sm:$0xff]
        %v4742 = vld [vmem:[%s3 + $0x1e8] sm:$0xff]
        %v4743 = vld [vmem:[%s3 + $0x1f0] sm:$0xff]
        %v4744 = vld [vmem:[%s3 + $0x1f8] sm:$0xff]
        %v4745 = vld [vmem:[%s312] sm:$0x1]
        %v4747 = vlaneseq
        %v4748 = vshrl.u32 %v4747, 7
        %v4749 = vsub.s32 0, %v4748
        %v4750 = vrot.slane %v4745, %v4749
        %4752 = vmatprep.subr.mxu0 0.0
        %4753 = vmatpush1.msra.mxu0 %v4681
        %4754 = vmatprep.subr.mxu0 0.0
        %4755 = vmatpush1.msra.mxu0 %v4682
        %4756 = vmatprep.subr.mxu0 0.0
        %4757 = vmatpush1.msra.mxu0 %v4683
        %4758 = vmatprep.subr.mxu0 0.0
        %4759 = vmatpush1.msra.mxu0 %v4684
        %4760 = vmatprep.subr.mxu0 0.0
        %4761 = vmatpush1.msra.mxu0 %v4685
        %4762 = vmatprep.subr.mxu0 0.0
        %4763 = vmatpush1.msra.mxu0 %v4686
        %4764 = vmatprep.subr.mxu0 0.0
        %4765 = vmatpush1.msra.mxu0 %v4687
        %4766 = vmatprep.subr.mxu0 0.0
        %4767 = vmatpush1.msra.mxu0 %v4688
        %4768 = vmatprep.subr.mxu0 0.0
        %4769 = vmatpush1.msra.mxu0 %v4689
        %4770 = vmatprep.subr.mxu0 0.0
        %4771 = vmatpush1.msra.mxu0 %v4690
        %4772 = vmatprep.subr.mxu0 0.0
        %4773 = vmatpush1.msra.mxu0 %v4691
        %4774 = vmatprep.subr.mxu0 0.0
        %4775 = vmatpush1.msra.mxu0 %v4692
        %4776 = vmatprep.subr.mxu0 0.0
        %4777 = vmatpush1.msra.mxu0 %v4693
        %4778 = vmatprep.subr.mxu0 0.0
        %4779 = vmatpush1.msra.mxu0 %v4694
        %4780 = vmatprep.subr.mxu0 0.0
        %4781 = vmatpush1.msra.mxu0 %v4695
        %4782 = vmatprep.subr.mxu0 0.0
        %4783 = vmatpush1.msra.mxu0 %v4696
        %4784 = vmatprep.subr.mxu0 0.0
        %4785 = vmatpush1.msra.mxu0 %v4697
        %4786 = vmatprep.subr.mxu0 0.0
        %4787 = vmatpush1.msra.mxu0 %v4698
        %4788 = vmatprep.subr.mxu0 0.0
        %4789 = vmatpush1.msra.mxu0 %v4699
        %4790 = vmatprep.subr.mxu0 0.0
        %4791 = vmatpush1.msra.mxu0 %v4700
        %4792 = vmatprep.subr.mxu0 0.0
        %4793 = vmatpush1.msra.mxu0 %v4701
        %4794 = vmatprep.subr.mxu0 0.0
        %4795 = vmatpush1.msra.mxu0 %v4702
        %4796 = vmatprep.subr.mxu0 0.0
        %4797 = vmatpush1.msra.mxu0 %v4703
        %4798 = vmatprep.subr.mxu0 0.0
        %4799 = vmatpush1.msra.mxu0 %v4704
        %4800 = vmatprep.subr.mxu0 0.0
        %4801 = vmatpush1.msra.mxu0 %v4705
        %4802 = vmatprep.subr.mxu0 0.0
        %4803 = vmatpush1.msra.mxu0 %v4706
        %4804 = vmatprep.subr.mxu0 0.0
        %4805 = vmatpush1.msra.mxu0 %v4707
        %4806 = vmatprep.subr.mxu0 0.0
        %4807 = vmatpush1.msra.mxu0 %v4708
        %4808 = vmatprep.subr.mxu0 0.0
        %4809 = vmatpush1.msra.mxu0 %v4709
        %4810 = vmatprep.subr.mxu0 0.0
        %4811 = vmatpush1.msra.mxu0 %v4710
        %4812 = vmatprep.subr.mxu0 0.0
        %4813 = vmatpush1.msra.mxu0 %v4711
        %4814 = vmatprep.subr.mxu0 0.0
        %4815 = vmatpush1.msra.mxu0 %v4712
        %4816 = vmatprep.mubr.f32.mxu0 %v4618
        %4817 = vmatmul.mubr.f32.gmra.mrb[0].mxu0 %v4617
        %v4818 = vpop.f32.mrb[0].mxu0
        %v4819 = vadd.f32 %v4750, %v4818
        %v4820 = vpop.f32.mrb[0].mxu0
        %4821 = vmatprep.mubr.f32.mxu0 %v4622
        %4822 = vmatmul.mubr.f32.gmra.mrb[0].mxu0 %v4621
        %v4823 = vpop.f32.mrb[0].mxu0
        %v4824 = vadd.f32 %v4750, %v4823
        %v4825 = vpop.f32.mrb[0].mxu0
        %4826 = vmatprep.mubr.f32.mxu0 %v4626
        %4827 = vmatmul.mubr.f32.gmra.mrb[0].mxu0 %v4625
        %v4828 = vpop.f32.mrb[0].mxu0
        %v4829 = vadd.f32 %v4750, %v4828
        %v4830 = vpop.f32.mrb[0].mxu0
        %4831 = vmatprep.mubr.f32.mxu0 %v4630
        %4832 = vmatmul.mubr.f32.gmra.mrb[0].mxu0 %v4629
        %v4833 = vpop.f32.mrb[0].mxu0
        %v4834 = vadd.f32 %v4750, %v4833
        %v4835 = vpop.f32.mrb[0].mxu0
        %4836 = vmatprep.mubr.f32.mxu0 %v4634
        %4837 = vmatmul.mubr.f32.gmra.mrb[0].mxu0 %v4633
        %v4838 = vpop.f32.mrb[0].mxu0
        %v4839 = vadd.f32 %v4750, %v4838
        %v4840 = vpop.f32.mrb[0].mxu0
        %4841 = vmatprep.mubr.f32.mxu0 %v4638
        %4842 = vmatmul.mubr.f32.gmra.mrb[0].mxu0 %v4637
        %v4843 = vpop.f32.mrb[0].mxu0
        %v4844 = vadd.f32 %v4750, %v4843
        %v4845 = vpop.f32.mrb[0].mxu0
        %4846 = vmatprep.mubr.f32.mxu0 %v4642
        %4847 = vmatmul.mubr.f32.gmra.mrb[0].mxu0 %v4641
        %v4848 = vpop.f32.mrb[0].mxu0
        %v4849 = vadd.f32 %v4750, %v4848
        %v4850 = vpop.f32.mrb[0].mxu0
        %4851 = vmatprep.mubr.f32.mxu0 %v4646
        %4852 = vmatmul.mubr.f32.gmra.mrb[0].mxu0 %v4645
        %v4853 = vpop.f32.mrb[0].mxu0
        %v4854 = vadd.f32 %v4750, %v4853
        %v4855 = vpop.f32.mrb[0].mxu0
        %4856 = vmatprep.mubr.f32.mxu0 %v4650
        %4857 = vmatmul.mubr.f32.gmra.mrb[0].mxu0 %v4649
        %v4858 = vpop.f32.mrb[0].mxu0
        %v4859 = vadd.f32 %v4750, %v4858
        %v4860 = vpop.f32.mrb[0].mxu0
        %4861 = vmatprep.mubr.f32.mxu0 %v4654
        %4862 = vmatmul.mubr.f32.gmra.mrb[0].mxu0 %v4653
        %v4863 = vpop.f32.mrb[0].mxu0
        %v4864 = vadd.f32 %v4750, %v4863
        %v4865 = vpop.f32.mrb[0].mxu0
        %4866 = vmatprep.mubr.f32.mxu0 %v4658
        %4867 = vmatmul.mubr.f32.gmra.mrb[0].mxu0 %v4657
        %v4868 = vpop.f32.mrb[0].mxu0
        %v4869 = vadd.f32 %v4750, %v4868
        %v4870 = vpop.f32.mrb[0].mxu0
        %4871 = vmatprep.mubr.f32.mxu0 %v4662
        %4872 = vmatmul.mubr.f32.gmra.mrb[0].mxu0 %v4661
        %v4873 = vpop.f32.mrb[0].mxu0
        %v4874 = vadd.f32 %v4750, %v4873
        %v4875 = vpop.f32.mrb[0].mxu0
        %4876 = vmatprep.mubr.f32.mxu0 %v4666
        %4877 = vmatmul.mubr.f32.gmra.mrb[0].mxu0 %v4665
        %v4878 = vpop.f32.mrb[0].mxu0
        %v4879 = vadd.f32 %v4750, %v4878
        %v4880 = vpop.f32.mrb[0].mxu0
        %4881 = vmatprep.mubr.f32.mxu0 %v4670
        %4882 = vmatmul.mubr.f32.gmra.mrb[0].mxu0 %v4669
        %v4883 = vpop.f32.mrb[0].mxu0
        %v4884 = vadd.f32 %v4750, %v4883
        %v4885 = vpop.f32.mrb[0].mxu0
        %4886 = vmatprep.mubr.f32.mxu0 %v4674
        %4887 = vmatmul.mubr.f32.gmra.mrb[0].mxu0 %v4673
        %v4888 = vpop.f32.mrb[0].mxu0
        %v4889 = vadd.f32 %v4750, %v4888
        %v4890 = vpop.f32.mrb[0].mxu0
        %4891 = vmatprep.mubr.f32.mxu0 %v4678
        %4892 = vmatmul.mubr.f32.gmra.mrb[0].mxu0 %v4677
        %v4893 = vpop.f32.mrb[0].mxu0
        %v4894 = vadd.f32 %v4750, %v4893
        %v4895 = vpop.f32.mrb[0].mxu0
        %4896 = vdwg.mxu0
        %4897 = vmatprep.subr.mxu0 0.0
        %4898 = vmatpush1.msra.mxu0 %v4713
        %4899 = vmatprep.subr.mxu0 0.0
        %4900 = vmatpush1.msra.mxu0 %v4714
        %4901 = vmatprep.subr.mxu0 0.0
        %4902 = vmatpush1.msra.mxu0 %v4715
        %4903 = vmatprep.subr.mxu0 0.0
        %4904 = vmatpush1.msra.mxu0 %v4716
        %4905 = vmatprep.subr.mxu0 0.0
        %4906 = vmatpush1.msra.mxu0 %v4717
        %4907 = vmatprep.subr.mxu0 0.0
        %4908 = vmatpush1.msra.mxu0 %v4718
        %4909 = vmatprep.subr.mxu0 0.0
        %4910 = vmatpush1.msra.mxu0 %v4719
        %4911 = vmatprep.subr.mxu0 0.0
        %4912 = vmatpush1.msra.mxu0 %v4720
        %4913 = vmatprep.subr.mxu0 0.0
        %4914 = vmatpush1.msra.mxu0 %v4721
        %4915 = vmatprep.subr.mxu0 0.0
        %4916 = vmatpush1.msra.mxu0 %v4722
        %4917 = vmatprep.subr.mxu0 0.0
        %4918 = vmatpush1.msra.mxu0 %v4723
        %4919 = vmatprep.subr.mxu0 0.0
        %4920 = vmatpush1.msra.mxu0 %v4724
        %4921 = vmatprep.subr.mxu0 0.0
        %4922 = vmatpush1.msra.mxu0 %v4725
        %4923 = vmatprep.subr.mxu0 0.0
        %4924 = vmatpush1.msra.mxu0 %v4726
        %4925 = vmatprep.subr.mxu0 0.0
        %4926 = vmatpush1.msra.mxu0 %v4727
        %4927 = vmatprep.subr.mxu0 0.0
        %4928 = vmatpush1.msra.mxu0 %v4728
        %4929 = vmatprep.subr.mxu0 0.0
        %4930 = vmatpush1.msra.mxu0 %v4729
        %4931 = vmatprep.subr.mxu0 0.0
        %4932 = vmatpush1.msra.mxu0 %v4730
        %4933 = vmatprep.subr.mxu0 0.0
        %4934 = vmatpush1.msra.mxu0 %v4731
        %4935 = vmatprep.subr.mxu0 0.0
        %4936 = vmatpush1.msra.mxu0 %v4732
        %4937 = vmatprep.subr.mxu0 0.0
        %4938 = vmatpush1.msra.mxu0 %v4733
        %4939 = vmatprep.subr.mxu0 0.0
        %4940 = vmatpush1.msra.mxu0 %v4734
        %4941 = vmatprep.subr.mxu0 0.0
        %4942 = vmatpush1.msra.mxu0 %v4735
        %4943 = vmatprep.subr.mxu0 0.0
        %4944 = vmatpush1.msra.mxu0 %v4736
        %4945 = vmatprep.subr.mxu0 0.0
        %4946 = vmatpush1.msra.mxu0 %v4737
        %4947 = vmatprep.subr.mxu0 0.0
        %4948 = vmatpush1.msra.mxu0 %v4738
        %4949 = vmatprep.subr.mxu0 0.0
        %4950 = vmatpush1.msra.mxu0 %v4739
        %4951 = vmatprep.subr.mxu0 0.0
        %4952 = vmatpush1.msra.mxu0 %v4740
        %4953 = vmatprep.subr.mxu0 0.0
        %4954 = vmatpush1.msra.mxu0 %v4741
        %4955 = vmatprep.subr.mxu0 0.0
        %4956 = vmatpush1.msra.mxu0 %v4742
        %4957 = vmatprep.subr.mxu0 0.0
        %4958 = vmatpush1.msra.mxu0 %v4743
        %4959 = vmatprep.subr.mxu0 0.0
        %4960 = vmatpush1.msra.mxu0 %v4744
        %4961 = vmatprep.mubr.f32.mxu0 %v4620
        %4962 = vmatmul.mubr.f32.gmra.mrb[0].mxu0 %v4619
        %v4963 = vpop.f32.mrb[0].mxu0
        %v4964 = vadd.f32 %v4819, %v4963
        %v4965 = vpop.f32.mrb[0].mxu0
        %4966 = vmatprep.mubr.f32.mxu0 %v4624
        %4967 = vmatmul.mubr.f32.gmra.mrb[0].mxu0 %v4623
        %v4968 = vpop.f32.mrb[0].mxu0
        %v4969 = vadd.f32 %v4824, %v4968
        %v4970 = vpop.f32.mrb[0].mxu0
        %4971 = vmatprep.mubr.f32.mxu0 %v4628
        %4972 = vmatmul.mubr.f32.gmra.mrb[0].mxu0 %v4627
        %v4973 = vpop.f32.mrb[0].mxu0
        %v4974 = vadd.f32 %v4829, %v4973
        %v4975 = vpop.f32.mrb[0].mxu0
        %4976 = vmatprep.mubr.f32.mxu0 %v4632
        %4977 = vmatmul.mubr.f32.gmra.mrb[0].mxu0 %v4631
        %v4978 = vpop.f32.mrb[0].mxu0
        %v4979 = vadd.f32 %v4834, %v4978
        %v4980 = vpop.f32.mrb[0].mxu0
        %4981 = vmatprep.mubr.f32.mxu0 %v4636
        %4982 = vmatmul.mubr.f32.gmra.mrb[0].mxu0 %v4635
        %v4983 = vpop.f32.mrb[0].mxu0
        %v4984 = vadd.f32 %v4839, %v4983
        %v4985 = vpop.f32.mrb[0].mxu0
        %4986 = vmatprep.mubr.f32.mxu0 %v4640
        %4987 = vmatmul.mubr.f32.gmra.mrb[0].mxu0 %v4639
        %v4988 = vpop.f32.mrb[0].mxu0
        %v4989 = vadd.f32 %v4844, %v4988
        %v4990 = vpop.f32.mrb[0].mxu0
        %4991 = vmatprep.mubr.f32.mxu0 %v4644
        %4992 = vmatmul.mubr.f32.gmra.mrb[0].mxu0 %v4643
        %v4993 = vpop.f32.mrb[0].mxu0
        %v4994 = vadd.f32 %v4849, %v4993
        %v4995 = vpop.f32.mrb[0].mxu0
        %4996 = vmatprep.mubr.f32.mxu0 %v4648
        %4997 = vmatmul.mubr.f32.gmra.mrb[0].mxu0 %v4647
        %v4998 = vpop.f32.mrb[0].mxu0
        %v4999 = vadd.f32 %v4854, %v4998
        %v5000 = vpop.f32.mrb[0].mxu0
        %5001 = vmatprep.mubr.f32.mxu0 %v4652
        %5002 = vmatmul.mubr.f32.gmra.mrb[0].mxu0 %v4651
        %v5003 = vpop.f32.mrb[0].mxu0
        %v5004 = vadd.f32 %v4859, %v5003
        %v5005 = vpop.f32.mrb[0].mxu0
        %5006 = vmatprep.mubr.f32.mxu0 %v4656
        %5007 = vmatmul.mubr.f32.gmra.mrb[0].mxu0 %v4655
        %v5008 = vpop.f32.mrb[0].mxu0
        %v5009 = vadd.f32 %v4864, %v5008
        %v5010 = vpop.f32.mrb[0].mxu0
        %5011 = vmatprep.mubr.f32.mxu0 %v4660
        %5012 = vmatmul.mubr.f32.gmra.mrb[0].mxu0 %v4659
        %v5013 = vpop.f32.mrb[0].mxu0
        %v5014 = vadd.f32 %v4869, %v5013
        %v5015 = vpop.f32.mrb[0].mxu0
        %5016 = vmatprep.mubr.f32.mxu0 %v4664
        %5017 = vmatmul.mubr.f32.gmra.mrb[0].mxu0 %v4663
        %v5018 = vpop.f32.mrb[0].mxu0
        %v5019 = vadd.f32 %v4874, %v5018
        %v5020 = vpop.f32.mrb[0].mxu0
        %5021 = vmatprep.mubr.f32.mxu0 %v4668
        %5022 = vmatmul.mubr.f32.gmra.mrb[0].mxu0 %v4667
        %v5023 = vpop.f32.mrb[0].mxu0
        %v5024 = vadd.f32 %v4879, %v5023
        %v5025 = vpop.f32.mrb[0].mxu0
        %5026 = vmatprep.mubr.f32.mxu0 %v4672
        %5027 = vmatmul.mubr.f32.gmra.mrb[0].mxu0 %v4671
        %v5028 = vpop.f32.mrb[0].mxu0
        %v5029 = vadd.f32 %v4884, %v5028
        %v5030 = vpop.f32.mrb[0].mxu0
        %5031 = vmatprep.mubr.f32.mxu0 %v4676
        %5032 = vmatmul.mubr.f32.gmra.mrb[0].mxu0 %v4675
        %v5033 = vpop.f32.mrb[0].mxu0
        %v5034 = vadd.f32 %v4889, %v5033
        %v5035 = vpop.f32.mrb[0].mxu0
        %5036 = vmatprep.mubr.f32.mxu0 %v4680
        %5037 = vmatmul.mubr.f32.gmra.mrb[0].mxu0 %v4679
        %v5038 = vpop.f32.mrb[0].mxu0
        %v5039 = vadd.f32 %v4894, %v5038
        %v5040 = vpop.f32.mrb[0].mxu0
        %5041 = vdwg.mxu0
        %v5042 = vld [vmem:[%s6] sm:$0x1]
        %v5044 = vlaneseq
        %v5045 = vshrl.u32 %v5044, 7
        %v5046 = vsub.s32 0, %v5045
        %v5047 = vrot.slane %v5042, %v5046
        %v5049 = vmul.f32 %v4964, %v5047
        %v5050 = vmul.f32 %v4969, %v5047
        %v5051 = vmul.f32 %v4974, %v5047
        %v5052 = vmul.f32 %v4979, %v5047
        %v5053 = vmul.f32 %v4984, %v5047
        %v5054 = vmul.f32 %v4989, %v5047
        %v5055 = vmul.f32 %v4994, %v5047
        %v5056 = vmul.f32 %v4999, %v5047
        %v5057 = vmul.f32 %v5004, %v5047
        %v5058 = vmul.f32 %v5009, %v5047
        %v5059 = vmul.f32 %v5014, %v5047
        %v5060 = vmul.f32 %v5019, %v5047
        %v5061 = vmul.f32 %v5024, %v5047
        %v5062 = vmul.f32 %v5029, %v5047
        %v5063 = vmul.f32 %v5034, %v5047
        %v5064 = vmul.f32 %v5039, %v5047
        %v5065 = vld [vmem:[%s7] sm:$0x1]
        %v5067 = vlaneseq
        %v5068 = vshrl.u32 %v5067, 7
        %v5069 = vsub.s32 0, %v5068
        %v5070 = vrot.slane %v5065, %v5069
        %v5072 = vadd.f32 %v5049, %v5070
        %v5073 = vadd.f32 %v5050, %v5070
        %v5074 = vadd.f32 %v5051, %v5070
        %v5075 = vadd.f32 %v5052, %v5070
        %v5076 = vadd.f32 %v5053, %v5070
        %v5077 = vadd.f32 %v5054, %v5070
        %v5078 = vadd.f32 %v5055, %v5070
        %v5079 = vadd.f32 %v5056, %v5070
        %v5080 = vadd.f32 %v5057, %v5070
        %v5081 = vadd.f32 %v5058, %v5070
        %v5082 = vadd.f32 %v5059, %v5070
        %v5083 = vadd.f32 %v5060, %v5070
        %v5084 = vadd.f32 %v5061, %v5070
        %v5085 = vadd.f32 %v5062, %v5070
        %v5086 = vadd.f32 %v5063, %v5070
        %v5087 = vadd.f32 %v5064, %v5070
        %v5088 = vmax.f32 %v5072, 0.0
        %v5089 = vmax.f32 %v5073, 0.0
        %v5090 = vmax.f32 %v5074, 0.0
        %v5091 = vmax.f32 %v5075, 0.0
        %v5092 = vmax.f32 %v5076, 0.0
        %v5093 = vmax.f32 %v5077, 0.0
        %v5094 = vmax.f32 %v5078, 0.0
        %v5095 = vmax.f32 %v5079, 0.0
        %v5096 = vmax.f32 %v5080, 0.0
        %v5097 = vmax.f32 %v5081, 0.0
        %v5098 = vmax.f32 %v5082, 0.0
        %v5099 = vmax.f32 %v5083, 0.0
        %v5100 = vmax.f32 %v5084, 0.0
        %v5101 = vmax.f32 %v5085, 0.0
        %v5102 = vmax.f32 %v5086, 0.0
        %v5103 = vmax.f32 %v5087, 0.0
        %5104 = vst [vmem:[%s309] sm:$0xff] %v5088
        %5105 = vst [vmem:[%s309 + $0x8] sm:$0xff] %v5089
        %5106 = vst [vmem:[%s309 + $0x10] sm:$0xff] %v5090
        %5107 = vst [vmem:[%s309 + $0x18] sm:$0xff] %v5091
        %5108 = vst [vmem:[%s309 + $0x20] sm:$0xff] %v5092
        %5109 = vst [vmem:[%s309 + $0x28] sm:$0xff] %v5093
        %5110 = vst [vmem:[%s309 + $0x30] sm:$0xff] %v5094
        %5111 = vst [vmem:[%s309 + $0x38] sm:$0xff] %v5095
        %5112 = vst [vmem:[%s309 + $0x40] sm:$0xff] %v5096
        %5113 = vst [vmem:[%s309 + $0x48] sm:$0xff] %v5097
        %5114 = vst [vmem:[%s309 + $0x50] sm:$0xff] %v5098
        %5115 = vst [vmem:[%s309 + $0x58] sm:$0xff] %v5099
        %5116 = vst [vmem:[%s309 + $0x60] sm:$0xff] %v5100
        %5117 = vst [vmem:[%s309 + $0x68] sm:$0xff] %v5101
        %5118 = vst [vmem:[%s309 + $0x70] sm:$0xff] %v5102
        %5119 = vst [vmem:[%s309 + $0x78] sm:$0xff] %v5103
        %s5120 = sand.u32 %s218, 1
        %s5121 = scalar_lea.sflag [#allocation6], %s5120
        %s5122 = sand.u32 %s218, 1
        %s5123 = smul.addr %s5122, 128
        %s5124 = scalar_lea.vmem [#allocation5], %s5123
        // Predicated region
        $region90: #{tpu_custom_call.1} parent=51 // pred_check
          %p5125 = pneg %p228
        $region91: #{tpu_custom_call.1} parent=51 // pred_check_branch
          %5127 = sbr.rel (%p5125) target = $region93
        $region92: #{tpu_custom_call.1} parent=51 // pred_region
          %s5128 = smul.u32 8, %s28
          %s5130 = ssub.s32 2048, 2048
          %5131 = vsyncadd %s5121, %s5130
          %s5132 = smul.addr %s5128, 2
          %s5133 = smul.addr %s27, 32
          %s5134 = sadd.s32 %s5132, %s5133
          %s5135 = smul.addr %s5134, 128
          %s5136 = scalar_lea.hbm %s9, %s5135
          %s5137 = sshll.u32 %s5124, 4
          %s5138 = int_to_ptr.vmem [resolvable:$true] %s5137
          %5143 = dma.vmem_to_hbm [thread:$0]  %s5138, 2048, %s5136, %s5121, 128, 128, 8
        $region93: #{tpu_custom_call.1} parent=51 // pred_fallthru
          _
      $region52: #{tpu_custom_call.1} parent=5 // pred_fallthru
        _
      %p5144 = scmp.le.s32.totalorder 2, %s18
      // Predicated region
      $region94: #{tpu_custom_call.1} parent=5 // pred_check
        %p5145 = pneg %p5144
      $region95: #{tpu_custom_call.1} parent=5 // pred_check_branch
        %5147 = sbr.rel (%p5145) target = $region97
      $region96: #{tpu_custom_call.1} parent=5 // pred_region
        %s5148 = ssub.s32 %s18, 2
        // Predicated region
        $region98: #{tpu_custom_call.1} parent=96 // pred_check
          %p5149 = pneg %p234
        $region99: #{tpu_custom_call.1} parent=96 // pred_check_branch
          %5151 = sbr.rel (%p5149) target = $region101
        $region100: #{tpu_custom_call.1} parent=96 // pred_region
          %s5152 = sand.u32 %s219, 1
          %s5153 = scalar_lea.sflag [#allocation6], %s5152
          %s5154 = sand.u32 %s219, 1
          %s5155 = smul.addr %s5154, 128
          %s5156 = scalar_lea.vmem [#allocation5], %s5155
          %5157 = dma.done %s5153, 2048
        $region101: #{tpu_custom_call.1} parent=96 // pred_fallthru
          _
      $region97: #{tpu_custom_call.1} parent=5 // pred_fallthru
        _
    $region6: #{tpu_custom_call.1} parent=1 // loop_footer
      %s22 = sadd.s32 1, %s18
    $region7: #{tpu_custom_call.1} parent=1 // loop_footer_branch
      %17 = sbr.rel target = $region3
    $region8: #{tpu_custom_call.1} parent=1 // loop_exit
      _
    %5158 = vsyncpa [#allocation6], 1
    %s5159 = scalar_lea.sflag [#allocation6], 1
    %5160 = vsyncpa %s5159, 1
  %5161 = vsyncmov [#allocation4]
  %s5162 = vpop.sfrf %5161
  %p5163 = scmp.eq.s32.totalorder %s5162, 0
  %p5164 = pneg %p5163
  %5166 = shalt.err (%p5164)

</llo_original>
